<compile_context>
chip_gen: v7x
topology: tpu7x:2x2x1
jax: 0.10.0
libtpu: 0.0.40
codegen_flags: <defaults>
</compile_context>

<pallas_src>
import numpy as np
import jax
import jax.numpy as jnp
from jax.experimental import pallas as pl
from jax.experimental.pallas import tpu as pltpu

CT = 32      # conv channel tile: covers 12/20/32 real channels (= conv3 width)
K1 = 32      # conv1 dense im2col depth (9 taps * 3 channels = 27, padded)
LANE = 128   # padded class width for the folded FC tail output


# -------------------------------------------------------------------------
# Fused conv stack: conv1+bn1+lrelu -> maxpool2x2 -> conv2+lrelu -> conv3+bn3+lrelu
# One pallas_call, grid over the batch ("parallel"); every conv is a single
# dense-K bf16 im2col MXU matmul with f32 accumulation.
# -------------------------------------------------------------------------
def conv_stack_kernel(x_ref, w1_ref, s1_ref, t1_ref, w2_ref, s2_ref, t2_ref,
                      w3_ref, s3_ref, t3_ref, o_ref, pad_ref, patch_ref):
    # x_ref    : (1, H*W, K1) bf16        precomputed conv1 im2col patch
    # wN_ref   : bf16 conv weights        (K1, CT) / (9*CT, CT)
    # sN/tN    : (1, CT) f32              fused scale / shift (bias + BN folded)
    # o_ref    : (1, (H/2)*(W/2), CT) bf16
    # pad_ref  : VMEM (H/2+2, W/2+2, CT) f32   halo scratch for conv2/conv3
    # patch_ref: VMEM ((H/2)*(W/2), 9*CT) f32  dense im2col patch scratch
    hop2, wop2, ct = pad_ref.shape
    ho, wo = hop2 - 2, wop2 - 2
    h, w = 2 * ho, 2 * wo

    def lrelu(v):
        return jnp.where(v >= 0.0, v, 0.01 * v)           # LeakyReLU(0.01)

    # Zero only the 1-wide halo border; interior is fully overwritten below.
    # (Cannot rely on program_id == 0 once the batch axis is core-sharded.)
    pad_ref[0:1, :, :] = jnp.zeros((1, wop2, ct), jnp.float32)
    pad_ref[hop2 - 1:hop2, :, :] = jnp.zeros((1, wop2, ct), jnp.float32)
    pad_ref[:, 0:1, :] = jnp.zeros((hop2, 1, ct), jnp.float32)
    pad_ref[:, wop2 - 1:wop2, :] = jnp.zeros((hop2, 1, ct), jnp.float32)

    # ---- conv1 + bn1 + LeakyReLU (im2col already done in the wrapper) ----
    z = jnp.dot(x_ref[0], w1_ref[...], preferred_element_type=jnp.float32)
    y = lrelu(z * s1_ref[...] + t1_ref[...])               # (h*w, ct) f32

    # ---- MaxPool2d(kernel_size=2), fully vectorized ----
    yr = y.reshape(ho, 2 * w, ct)
    vm = jnp.maximum(yr[:, :w, :], yr[:, w:, :])           # vertical pairs
    pooled = vm.reshape(ho, wo, 2, ct).max(axis=2)         # horizontal pairs
    pad_ref[1:1 + ho, 1:1 + wo, :] = pooled

    # nn.Dropout(0.4) is identity at inference.
    # TODO(synk): training-mode Dropout / batch-statistics BatchNorm not implemented.

    def conv3x3(w_ref, s_ref, t_ref):
        # Dense im2col patch (K = 9*CT) assembled in VMEM at static lane
        # offsets, then one bf16 MXU matmul with f32 accumulation.
        for dy in range(3):
            for dx in range(3):
                tap = dy * 3 + dx
                patch_ref[:, tap * ct:(tap + 1) * ct] = (
                    pad_ref[dy:dy + ho, dx:dx + wo, :].reshape(ho * wo, ct))
        zc = jnp.dot(patch_ref[...].astype(jnp.bfloat16), w_ref[...],
                     preferred_element_type=jnp.float32)
        return lrelu(zc * s_ref[...] + t_ref[...])         # (ho*wo, ct) f32

    # ---- conv2 + LeakyReLU ----
    y = conv3x3(w2_ref, s2_ref, t2_ref)

    # ---- conv3 + bn3 + LeakyReLU (reuse halo scratch; border is still zero) --
    pad_ref[1:1 + ho, 1:1 + wo, :] = y.reshape(ho, wo, ct)
    y = conv3x3(w3_ref, s3_ref, t3_ref)

    o_ref[0] = y.astype(o_ref.dtype)


def conv_stack(xcol, h, w, w1, s1, t1, w2, s2, t2, w3, s3, t3):
    n = xcol.shape[0]
    ho, wo = h // 2, w // 2

    def const_spec(a):
        return pl.BlockSpec(a.shape, lambda i: (0,) * a.ndim)

    return pl.pallas_call(
        conv_stack_kernel,
        out_shape=jax.ShapeDtypeStruct((n, ho * wo, CT), jnp.bfloat16),
        grid=(n,),
        in_specs=[
            pl.BlockSpec((1, h * w, xcol.shape[2]), lambda i: (i, 0, 0)),
            const_spec(w1), const_spec(s1), const_spec(t1),
            const_spec(w2), const_spec(s2), const_spec(t2),
            const_spec(w3), const_spec(s3), const_spec(t3),
        ],
        out_specs=pl.BlockSpec((1, ho * wo, CT), lambda i: (i, 0, 0)),
        scratch_shapes=[pltpu.VMEM((ho + 2, wo + 2, CT), jnp.float32),
                        pltpu.VMEM((ho * wo, 9 * CT), jnp.float32)],
        compiler_params=pltpu.CompilerParams(
            dimension_semantics=("parallel",),
            vmem_limit_bytes=32 * 1024 * 1024),
    )(xcol, w1, s1, t1, w2, s2, t2, w3, s3, t3)


# -------------------------------------------------------------------------
# Linear: y = x @ W + b, bf16 weight streaming, f32 accumulation,
# N-parallel grid + K grid so weight DMA pipelines against the MXU.
# -------------------------------------------------------------------------
def linear_kernel(x_ref, w_ref, b_ref, o_ref, acc_ref):
    kk = pl.program_id(1)

    @pl.when(kk == 0)
    def _():
        acc_ref[...] = jnp.zeros_like(acc_ref)

    # astype is a no-op when the activation is already bf16 (big-fc path).
    acc_ref[...] += jnp.dot(x_ref[...].astype(jnp.bfloat16), w_ref[...],
                            preferred_element_type=jnp.float32)

    @pl.when(kk == pl.num_programs(1) - 1)
    def _():
        o_ref[...] = acc_ref[...] + b_ref[...]


def linear(x, w, b, *, tile_n=1024, tile_k=2048, vmem_mib=16):
    m, k_dim = x.shape
    _, n_dim = w.shape
    tn = min(tile_n, n_dim)
    tk = min(tile_k, k_dim)
    assert m % 8 == 0 and k_dim % tk == 0 and n_dim % tn == 0
    return pl.pallas_call(
        linear_kernel,
        out_shape=jax.ShapeDtypeStruct((m, n_dim), jnp.float32),
        grid=(n_dim // tn, k_dim // tk),
        in_specs=[
            pl.BlockSpec((m, tk), lambda j, kk: (0, kk)),
            pl.BlockSpec((tk, tn), lambda j, kk: (kk, j)),
            pl.BlockSpec((1, tn), lambda j, kk: (0, j)),
        ],
        out_specs=pl.BlockSpec((m, tn), lambda j, kk: (0, j)),
        scratch_shapes=[pltpu.VMEM((m, tn), jnp.float32)],
        compiler_params=pltpu.CompilerParams(
            dimension_semantics=("parallel", "arbitrary"),
            vmem_limit_bytes=vmem_mib * 1024 * 1024),
    )(x, w, b)


# -------------------------------------------------------------------------
# Full forward pass (Pallas path)
# -------------------------------------------------------------------------
def conv1_im2col(x_nchw):
    # Dense conv1 im2col in the wrapper (cin=3 -> K=27, padded to K1=32):
    # no dead-lane channel padding of the input ever hits HBM.
    n, cin, h, w = x_nchw.shape
    x = jnp.transpose(x_nchw, (0, 2, 3, 1))                # NCHW -> NHWC (once)
    xp = jnp.pad(x, ((0, 0), (1, 1), (1, 1), (0, 0)))
    cols = [xp[:, dy:dy + h, dx:dx + w, :]
            for dy in range(3) for dx in range(3)]
    patch = jnp.concatenate(cols, axis=-1)                 # (n, h, w, 9*cin)
    patch = jnp.pad(patch, ((0, 0), (0, 0), (0, 0), (0, K1 - 9 * cin)))
    return patch.reshape(n, h * w, K1).astype(jnp.bfloat16)


def convnet_forward(x_nchw, q, num_classes=6):
    n, _, h, w = x_nchw.shape
    xcol = conv1_im2col(x_nchw)

    feat = conv_stack(xcol, h, w,
                      q["w1"], q["s1"], q["t1"],
                      q["w2"], q["s2"], q["t2"],
                      q["w3"], q["s3"], q["t3"])           # (n, ho*wo, CT) bf16

    ho, wo = h // 2, w // 2
    # Flatten in NHWC order (fc weight rows were permuted once to match).
    feat = feat.reshape(n, ho * wo * CT)
    mp = -(-n // 8) * 8                                    # pad M to sublane multiple
    feat = jnp.pad(feat, ((0, mp - n), (0, 0)))

    y = linear(feat, q["fc_w"], q["fc_b"])                 # big fc (bf16 streamed)
    # fc2 -> fc3 -> fc4 -> fco: affine chain in the spec, folded offline into a
    # single (4096, 128) bf16 matrix + bias, pipelined over K.
    y = linear(y, q["fct_w"], q["fct_b"], tile_n=LANE, tile_k=1024, vmem_mib=8)
    return y[:n, :num_classes]


# -------------------------------------------------------------------------
# Parameter prep: pad / permute / fold reference params into kernel layout
# -------------------------------------------------------------------------
def prepare_params(p):
    q = {}

    def prep_conv1(w, s, t):
        kh, kw, cin, cout = w.shape
        wr = w.reshape(kh * kw * cin, cout)                # rows in (dy, dx, ci) order
        wp = jnp.zeros((K1, CT), jnp.float32).at[:kh * kw * cin, :cout].set(wr)
        sp = jnp.zeros((1, CT), jnp.float32).at[0, :cout].set(s)
        tp = jnp.zeros((1, CT), jnp.float32).at[0, :cout].set(t)
        return wp.astype(jnp.bfloat16), sp, tp

    def prep_conv(w, s, t):
        # Per-tap dense packing: row = tap*CT + ci (matches the kernel patch).
        kh, kw, cin, cout = w.shape
        wp = jnp.zeros((kh * kw, CT, CT), jnp.float32)
        wp = wp.at[:, :cin, :cout].set(w.reshape(kh * kw, cin, cout))
        wp = wp.reshape(kh * kw * CT, CT)
        sp = jnp.zeros((1, CT), jnp.float32).at[0, :cout].set(s)
        tp = jnp.zeros((1, CT), jnp.float32).at[0, :cout].set(t)
        return wp.astype(jnp.bfloat16), sp, tp

    q["w1"], q["s1"], q["t1"] = prep_conv1(p["w1"], p["s1"], p["t1"])
    q["w2"], q["s2"], q["t2"] = prep_conv(p["w2"], p["s2"], p["t2"])
    q["w3"], q["s3"], q["t3"] = prep_conv(p["w3"], p["s3"], p["t3"])

    # fc: permute rows from NCHW-flatten order (c*HW + s) to NHWC order (s*C + c).
    k_in, n_out = p["fc_w"].shape
    hw = k_in // CT
    fc_w = p["fc_w"].reshape(CT, hw, n_out).transpose(1, 0, 2).reshape(k_in, n_out)
    q["fc_w"] = fc_w.astype(jnp.bfloat16)
    q["fc_b"] = p["fc_b"].reshape(1, -1)

    # fc2..fco form an affine chain (no nonlinearity in the spec): fold offline.
    hi = jax.lax.Precision.HIGHEST

    def bq(a):                                             # bf16-quantized weight (f32)
        return a.astype(jnp.bfloat16).astype(jnp.float32)

    wt = jnp.dot(jnp.dot(jnp.dot(bq(p["fc2_w"]), bq(p["fc3_w"]), precision=hi),
                         bq(p["fc4_w"]), precision=hi),
                 bq(p["fco_w"]), precision=hi)             # (4096, num_classes)
    bt = jnp.dot(jnp.dot(jnp.dot(p["fc2_b"], bq(p["fc3_w"]), precision=hi)
                         + p["fc3_b"], bq(p["fc4_w"]), precision=hi)
                 + p["fc4_b"], bq(p["fco_w"]), precision=hi) + p["fco_b"]
    n_cls = wt.shape[1]
    # Classes padded to 128 output lanes (dense stores); sliced outside.
    q["fct_w"] = (jnp.zeros((wt.shape[0], LANE), jnp.float32)
                  .at[:, :n_cls].set(wt).astype(jnp.bfloat16))
    q["fct_b"] = jnp.zeros((1, LANE), jnp.float32).at[0, :n_cls].set(bt)

    # TODO(synk): int8 (v5e/v6e) or fp8 (v7x) per-column quantization of fc_w is
    # the remaining lever for the HBM-bound big FC at batch <= 8.
    return q


# -------------------------------------------------------------------------
# Pure-JAX reference (quantization matched to the kernels: bf16 MXU operands,
# f32 accumulation; FC tail kept as 4 separate layers).
# -------------------------------------------------------------------------
def reference_forward(x_nchw, p):
    def conv(x, w):
        return jax.lax.conv_general_dilated(
            x.astype(jnp.bfloat16), w.astype(jnp.bfloat16),
            window_strides=(1, 1), padding=((1, 1), (1, 1)),
            dimension_numbers=("NCHW", "HWIO", "NCHW"),
            preferred_element_type=jnp.float32)

    def lrelu(v):
        return jnp.where(v >= 0, v, 0.01 * v)

    def affine(v, s, t):
        return v * s[None, :, None, None] + t[None, :, None, None]

    y = lrelu(affine(conv(x_nchw, p["w1"]), p["s1"], p["t1"]))
    n, c, h, w = y.shape
    y = y.reshape(n, c, h // 2, 2, w // 2, 2).max(axis=(3, 5))
    y = lrelu(affine(conv(y, p["w2"]), p["s2"], p["t2"]))
    y = lrelu(affine(conv(y, p["w3"]), p["s3"], p["t3"]))
    y = y.reshape(n, -1)                                   # NCHW flatten order
    for name in ["fc", "fc2", "fc3", "fc4", "fco"]:
        wq = p[name + "_w"].astype(jnp.bfloat16)
        y = jnp.dot(y.astype(jnp.bfloat16), wq,
                    preferred_element_type=jnp.float32) + p[name + "_b"]
    return y


# -------------------------------------------------------------------------
# Deterministic parameter init (shapes from ConvNet.__init__, spatial scaled)
# -------------------------------------------------------------------------
def init_params(key, h, w, num_classes=6):
    ks = jax.random.split(key, 20)
    eps = 1e-5

    def conv_w(k, cin, cout):
        return jax.random.normal(k, (3, 3, cin, cout), jnp.float32) / np.sqrt(9 * cin)

    def fc_w(k, din, dout):
        return jax.random.normal(k, (din, dout), jnp.float32) / np.sqrt(din)

    p = {}
    p["w1"] = conv_w(ks[0], 3, 12)
    b1 = jax.random.normal(ks[1], (12,), jnp.float32) * 0.01
    p["w2"] = conv_w(ks[2], 12, 20)
    b2 = jax.random.normal(ks[3], (20,), jnp.float32) * 0.01
    p["w3"] = conv_w(ks[4], 20, 32)
    b3 = jax.random.normal(ks[5], (32,), jnp.float32) * 0.01

    def fold_bn(bias, c):
        # PyTorch BatchNorm2d init: gamma=1, beta=0, running_mean=0, running_var=1.
        gamma = jnp.ones((c,), jnp.float32)
        beta = jnp.zeros((c,), jnp.float32)
        mean = jnp.zeros((c,), jnp.float32)
        var = jnp.ones((c,), jnp.float32)
        s = gamma / jnp.sqrt(var + eps)
        t = beta + (bias - mean) * s
        return s, t

    p["s1"], p["t1"] = fold_bn(b1, 12)                     # conv1 -> bn1
    p["s2"], p["t2"] = jnp.ones((20,), jnp.float32), b2    # conv2, no BN
    p["s3"], p["t3"] = fold_bn(b3, 32)                     # conv3 -> bn3

    fc_in = 32 * (h // 2) * (w // 2)                       # 32*64*64 in full-size model
    dims = [("fc", fc_in, 64 * 64), ("fc2", 64 * 64, 1024),
            ("fc3", 1024, 512), ("fc4", 512, 128), ("fco", 128, num_classes)]
    ki = 6
    for name, din, dout in dims:
        p[name + "_w"] = fc_w(ks[ki], din, dout)
        p[name + "_b"] = jax.random.normal(ks[ki + 1], (dout,), jnp.float32) * 0.01
        ki += 2
    return p


if __name__ == "__main__":
    key = jax.random.PRNGKey(0)
    k_x, k_p = jax.random.split(key)

    B, CIN, H, W = 2, 3, 16, 16                            # small NCHW input
    x = jax.random.normal(k_x, (B, CIN, H, W), jnp.float32)
    p = init_params(k_p, H, W, num_classes=6)
    q = prepare_params(p)

    fwd = jax.jit(convnet_forward, static_argnames=("num_classes",))
    out = fwd(x, q, num_classes=6)
    out = jax.block_until_ready(out)

    ref = reference_forward(x, p)
    np.testing.assert_allclose(np.asarray(out), np.asarray(ref),
                               rtol=2e-2, atol=2e-2)
    assert out.shape == (B, 6)
    print("KERNEL_OK")
</pallas_src>

<mosaic_0001>
module attributes {stable_mosaic.version = 11 : i64} {
  func.func @conv_stack_kernel(%arg0: i32, %arg1: memref<1x256x32xbf16, #tpu.memory_space<vmem>>, %arg2: memref<32x32xbf16, #tpu.memory_space<vmem>>, %arg3: memref<1x32xf32, #tpu.memory_space<vmem>>, %arg4: memref<1x32xf32, #tpu.memory_space<vmem>>, %arg5: memref<288x32xbf16, #tpu.memory_space<vmem>>, %arg6: memref<1x32xf32, #tpu.memory_space<vmem>>, %arg7: memref<1x32xf32, #tpu.memory_space<vmem>>, %arg8: memref<288x32xbf16, #tpu.memory_space<vmem>>, %arg9: memref<1x32xf32, #tpu.memory_space<vmem>>, %arg10: memref<1x32xf32, #tpu.memory_space<vmem>>, %arg11: memref<1x64x32xbf16, #tpu.memory_space<vmem>>, %arg12: memref<10x10x32xf32, #tpu.memory_space<vmem>>, %arg13: memref<64x288xf32, #tpu.memory_space<vmem>>) attributes {dimension_semantics = [#tpu.dimension_semantics<parallel>], iteration_bounds = array<i64: 2>, scalar_prefetch = 0 : i64, scratch_operands = 2 : i64, tpu.core_type = #tpu.core_type<tc>, window_params = [{transform_indices = @transform_0, window_bounds = array<i64: 1, 256, 32>}, {pipeline_mode = #tpu.pipeline_mode<synchronous>, transform_indices = @transform_1, window_bounds = array<i64: 32, 32>}, {pipeline_mode = #tpu.pipeline_mode<synchronous>, transform_indices = @transform_2, window_bounds = array<i64: 1, 32>}, {pipeline_mode = #tpu.pipeline_mode<synchronous>, transform_indices = @transform_3, window_bounds = array<i64: 1, 32>}, {pipeline_mode = #tpu.pipeline_mode<synchronous>, transform_indices = @transform_4, window_bounds = array<i64: 288, 32>}, {pipeline_mode = #tpu.pipeline_mode<synchronous>, transform_indices = @transform_5, window_bounds = array<i64: 1, 32>}, {pipeline_mode = #tpu.pipeline_mode<synchronous>, transform_indices = @transform_6, window_bounds = array<i64: 1, 32>}, {pipeline_mode = #tpu.pipeline_mode<synchronous>, transform_indices = @transform_7, window_bounds = array<i64: 288, 32>}, {pipeline_mode = #tpu.pipeline_mode<synchronous>, transform_indices = @transform_8, window_bounds = array<i64: 1, 32>}, {pipeline_mode = #tpu.pipeline_mode<synchronous>, transform_indices = @transform_9, window_bounds = array<i64: 1, 32>}, {transform_indices = @transform_10, window_bounds = array<i64: 1, 64, 32>}]} {
    %cst = arith.constant 0.000000e+00 : f32
    %0 = vector.broadcast %cst : f32 to vector<1x10x32xf32>
    %c0 = arith.constant 0 : index
    %c0_0 = arith.constant 0 : index
    %c0_1 = arith.constant 0 : index
    %1 = vector.load %arg12[%c0, %c0_0, %c0_1] : memref<10x10x32xf32, #tpu.memory_space<vmem>>, vector<1x10x32xf32>
    tpu.vector_store %arg12[%c0, %c0_0, %c0_1], %0 {strides = array<i32>} : memref<10x10x32xf32, #tpu.memory_space<vmem>>, vector<1x10x32xf32>,
    %cst_2 = arith.constant 0.000000e+00 : f32
    %2 = vector.broadcast %cst_2 : f32 to vector<1x10x32xf32>
    %c9 = arith.constant 9 : index
    %c0_3 = arith.constant 0 : index
    %c0_4 = arith.constant 0 : index
    %3 = vector.load %arg12[%c9, %c0_3, %c0_4] : memref<10x10x32xf32, #tpu.memory_space<vmem>>, vector<1x10x32xf32>
    tpu.vector_store %arg12[%c9, %c0_3, %c0_4], %2 {strides = array<i32>} : memref<10x10x32xf32, #tpu.memory_space<vmem>>, vector<1x10x32xf32>,
    %cst_5 = arith.constant 0.000000e+00 : f32
    %4 = vector.broadcast %cst_5 : f32 to vector<10x1x32xf32>
    %c0_6 = arith.constant 0 : index
    %c0_7 = arith.constant 0 : index
    %c0_8 = arith.constant 0 : index
    %5 = vector.load %arg12[%c0_6, %c0_7, %c0_8] : memref<10x10x32xf32, #tpu.memory_space<vmem>>, vector<10x1x32xf32>
    tpu.vector_store %arg12[%c0_6, %c0_7, %c0_8], %4 {strides = array<i32>} : memref<10x10x32xf32, #tpu.memory_space<vmem>>, vector<10x1x32xf32>,
    %cst_9 = arith.constant 0.000000e+00 : f32
    %6 = vector.broadcast %cst_9 : f32 to vector<10x1x32xf32>
    %c0_10 = arith.constant 0 : index
    %c9_11 = arith.constant 9 : index
    %c0_12 = arith.constant 0 : index
    %7 = vector.load %arg12[%c0_10, %c9_11, %c0_12] : memref<10x10x32xf32, #tpu.memory_space<vmem>>, vector<10x1x32xf32>
    tpu.vector_store %arg12[%c0_10, %c9_11, %c0_12], %6 {strides = array<i32>} : memref<10x10x32xf32, #tpu.memory_space<vmem>>, vector<10x1x32xf32>,
    %c0_13 = arith.constant 0 : index
    %c0_14 = arith.constant 0 : index
    %c0_15 = arith.constant 0 : index
    %8 = vector.load %arg1[%c0_13, %c0_14, %c0_15] : memref<1x256x32xbf16, #tpu.memory_space<vmem>>, vector<1x256x32xbf16>
    %9 = vector.shape_cast %8 : vector<1x256x32xbf16> to vector<256x32xbf16>
    %c0_16 = arith.constant 0 : index
    %c0_17 = arith.constant 0 : index
    %10 = vector.load %arg2[%c0_16, %c0_17] : memref<32x32xbf16, #tpu.memory_space<vmem>>, vector<32x32xbf16>
    %cst_18 = arith.constant dense<0.000000e+00> : vector<256x32xf32>
    %11 = tpu.matmul %9, %10, %cst_18 {dimension_numbers = #tpu.dot_dimension_numbers<[1], [0], [0], [1], [0, 0, 1, 1], [], []>} : vector<256x32xbf16>, vector<32x32xbf16>, vector<256x32xf32> -> vector<256x32xf32>
    %c0_19 = arith.constant 0 : index
    %c0_20 = arith.constant 0 : index
    %12 = vector.load %arg3[%c0_19, %c0_20] : memref<1x32xf32, #tpu.memory_space<vmem>>, vector<1x32xf32>
    %13 = vector.broadcast %12 : vector<1x32xf32> to vector<256x32xf32>
    %14 = arith.mulf %11, %13 : vector<256x32xf32>
    %c0_21 = arith.constant 0 : index
    %c0_22 = arith.constant 0 : index
    %15 = vector.load %arg4[%c0_21, %c0_22] : memref<1x32xf32, #tpu.memory_space<vmem>>, vector<1x32xf32>
    %16 = vector.broadcast %15 : vector<1x32xf32> to vector<256x32xf32>
    %17 = arith.addf %14, %16 : vector<256x32xf32>
    %cst_23 = arith.constant 0.000000e+00 : f32
    %18 = vector.broadcast %cst_23 : f32 to vector<256x32xf32>
    %19 = arith.cmpf oge, %17, %18 : vector<256x32xf32>
    %cst_24 = arith.constant 0.00999999977 : f32
    %20 = vector.broadcast %cst_24 : f32 to vector<256x32xf32>
    %21 = arith.mulf %20, %17 : vector<256x32xf32>
    %22 = arith.select %19, %17, %21 : vector<256x32xi1>, vector<256x32xf32>
    %23 = vector.shape_cast %22 : vector<256x32xf32> to vector<8x32x32xf32>
    %24 = vector.extract_strided_slice %23 {offsets = [0, 0, 0], sizes = [8, 16, 32], strides = [1, 1, 1]} : vector<8x32x32xf32> to vector<8x16x32xf32>
    %25 = vector.extract_strided_slice %23 {offsets = [0, 16, 0], sizes = [8, 16, 32], strides = [1, 1, 1]} : vector<8x32x32xf32> to vector<8x16x32xf32>
    %26 = arith.maximumf %24, %25 : vector<8x16x32xf32>
    %27 = vector.shape_cast %26 : vector<8x16x32xf32> to vector<8x8x2x32xf32>
    %cst_25 = arith.constant dense<0xFF800000> : vector<8x8x32xf32>
    %28 = vector.multi_reduction <maximumf>, %27, %cst_25 [2] : vector<8x8x2x32xf32> to vector<8x8x32xf32>
    %c1 = arith.constant 1 : index
    %c1_26 = arith.constant 1 : index
    %c0_27 = arith.constant 0 : index
    %29 = vector.load %arg12[%c1, %c1_26, %c0_27] : memref<10x10x32xf32, #tpu.memory_space<vmem>>, vector<8x8x32xf32>
    tpu.vector_store %arg12[%c1, %c1_26, %c0_27], %28 {strides = array<i32>} : memref<10x10x32xf32, #tpu.memory_space<vmem>>, vector<8x8x32xf32>,
    %c0_28 = arith.constant 0 : index
    %c0_29 = arith.constant 0 : index
    %c0_30 = arith.constant 0 : index
    %30 = vector.load %arg12[%c0_28, %c0_29, %c0_30] : memref<10x10x32xf32, #tpu.memory_space<vmem>>, vector<8x8x32xf32>
    %31 = vector.shape_cast %30 : vector<8x8x32xf32> to vector<64x32xf32>
    %c0_31 = arith.constant 0 : index
    %c0_32 = arith.constant 0 : index
    %32 = vector.load %arg13[%c0_31, %c0_32] : memref<64x288xf32, #tpu.memory_space<vmem>>, vector<64x32xf32>
    tpu.vector_store %arg13[%c0_31, %c0_32], %31 {strides = array<i32>} : memref<64x288xf32, #tpu.memory_space<vmem>>, vector<64x32xf32>,
    %c0_33 = arith.constant 0 : index
    %c1_34 = arith.constant 1 : index
    %c0_35 = arith.constant 0 : index
    %33 = vector.load %arg12[%c0_33, %c1_34, %c0_35] : memref<10x10x32xf32, #tpu.memory_space<vmem>>, vector<8x8x32xf32>
    %34 = vector.shape_cast %33 : vector<8x8x32xf32> to vector<64x32xf32>
    %c0_36 = arith.constant 0 : index
    %c32 = arith.constant 32 : index
    %35 = vector.load %arg13[%c0_36, %c32] : memref<64x288xf32, #tpu.memory_space<vmem>>, vector<64x32xf32>
    tpu.vector_store %arg13[%c0_36, %c32], %34 {strides = array<i32>} : memref<64x288xf32, #tpu.memory_space<vmem>>, vector<64x32xf32>,
    %c0_37 = arith.constant 0 : index
    %c2 = arith.constant 2 : index
    %c0_38 = arith.constant 0 : index
    %36 = vector.load %arg12[%c0_37, %c2, %c0_38] : memref<10x10x32xf32, #tpu.memory_space<vmem>>, vector<8x8x32xf32>
    %37 = vector.shape_cast %36 : vector<8x8x32xf32> to vector<64x32xf32>
    %c0_39 = arith.constant 0 : index
    %c64 = arith.constant 64 : index
    %38 = vector.load %arg13[%c0_39, %c64] : memref<64x288xf32, #tpu.memory_space<vmem>>, vector<64x32xf32>
    tpu.vector_store %arg13[%c0_39, %c64], %37 {strides = array<i32>} : memref<64x288xf32, #tpu.memory_space<vmem>>, vector<64x32xf32>,
    %c1_40 = arith.constant 1 : index
    %c0_41 = arith.constant 0 : index
    %c0_42 = arith.constant 0 : index
    %39 = vector.load %arg12[%c1_40, %c0_41, %c0_42] : memref<10x10x32xf32, #tpu.memory_space<vmem>>, vector<8x8x32xf32>
    %40 = vector.shape_cast %39 : vector<8x8x32xf32> to vector<64x32xf32>
    %c0_43 = arith.constant 0 : index
    %c96 = arith.constant 96 : index
    %41 = vector.load %arg13[%c0_43, %c96] : memref<64x288xf32, #tpu.memory_space<vmem>>, vector<64x32xf32>
    tpu.vector_store %arg13[%c0_43, %c96], %40 {strides = array<i32>} : memref<64x288xf32, #tpu.memory_space<vmem>>, vector<64x32xf32>,
    %c1_44 = arith.constant 1 : index
    %c1_45 = arith.constant 1 : index
    %c0_46 = arith.constant 0 : index
    %42 = vector.load %arg12[%c1_44, %c1_45, %c0_46] : memref<10x10x32xf32, #tpu.memory_space<vmem>>, vector<8x8x32xf32>
    %43 = vector.shape_cast %42 : vector<8x8x32xf32> to vector<64x32xf32>
    %c0_47 = arith.constant 0 : index
    %c128 = arith.constant 128 : index
    %44 = vector.load %arg13[%c0_47, %c128] : memref<64x288xf32, #tpu.memory_space<vmem>>, vector<64x32xf32>
    tpu.vector_store %arg13[%c0_47, %c128], %43 {strides = array<i32>} : memref<64x288xf32, #tpu.memory_space<vmem>>, vector<64x32xf32>,
    %c1_48 = arith.constant 1 : index
    %c2_49 = arith.constant 2 : index
    %c0_50 = arith.constant 0 : index
    %45 = vector.load %arg12[%c1_48, %c2_49, %c0_50] : memref<10x10x32xf32, #tpu.memory_space<vmem>>, vector<8x8x32xf32>
    %46 = vector.shape_cast %45 : vector<8x8x32xf32> to vector<64x32xf32>
    %c0_51 = arith.constant 0 : index
    %c160 = arith.constant 160 : index
    %47 = vector.load %arg13[%c0_51, %c160] : memref<64x288xf32, #tpu.memory_space<vmem>>, vector<64x32xf32>
    tpu.vector_store %arg13[%c0_51, %c160], %46 {strides = array<i32>} : memref<64x288xf32, #tpu.memory_space<vmem>>, vector<64x32xf32>,
    %c2_52 = arith.constant 2 : index
    %c0_53 = arith.constant 0 : index
    %c0_54 = arith.constant 0 : index
    %48 = vector.load %arg12[%c2_52, %c0_53, %c0_54] : memref<10x10x32xf32, #tpu.memory_space<vmem>>, vector<8x8x32xf32>
    %49 = vector.shape_cast %48 : vector<8x8x32xf32> to vector<64x32xf32>
    %c0_55 = arith.constant 0 : index
    %c192 = arith.constant 192 : index
    %50 = vector.load %arg13[%c0_55, %c192] : memref<64x288xf32, #tpu.memory_space<vmem>>, vector<64x32xf32>
    tpu.vector_store %arg13[%c0_55, %c192], %49 {strides = array<i32>} : memref<64x288xf32, #tpu.memory_space<vmem>>, vector<64x32xf32>,
    %c2_56 = arith.constant 2 : index
    %c1_57 = arith.constant 1 : index
    %c0_58 = arith.constant 0 : index
    %51 = vector.load %arg12[%c2_56, %c1_57, %c0_58] : memref<10x10x32xf32, #tpu.memory_space<vmem>>, vector<8x8x32xf32>
    %52 = vector.shape_cast %51 : vector<8x8x32xf32> to vector<64x32xf32>
    %c0_59 = arith.constant 0 : index
    %c224 = arith.constant 224 : index
    %53 = vector.load %arg13[%c0_59, %c224] : memref<64x288xf32, #tpu.memory_space<vmem>>, vector<64x32xf32>
    tpu.vector_store %arg13[%c0_59, %c224], %52 {strides = array<i32>} : memref<64x288xf32, #tpu.memory_space<vmem>>, vector<64x32xf32>,
    %c2_60 = arith.constant 2 : index
    %c2_61 = arith.constant 2 : index
    %c0_62 = arith.constant 0 : index
    %54 = vector.load %arg12[%c2_60, %c2_61, %c0_62] : memref<10x10x32xf32, #tpu.memory_space<vmem>>, vector<8x8x32xf32>
    %55 = vector.shape_cast %54 : vector<8x8x32xf32> to vector<64x32xf32>
    %c0_63 = arith.constant 0 : index
    %c256 = arith.constant 256 : index
    %56 = vector.load %arg13[%c0_63, %c256] : memref<64x288xf32, #tpu.memory_space<vmem>>, vector<64x32xf32>
    tpu.vector_store %arg13[%c0_63, %c256], %55 {strides = array<i32>} : memref<64x288xf32, #tpu.memory_space<vmem>>, vector<64x32xf32>,
    %c0_64 = arith.constant 0 : index
    %c0_65 = arith.constant 0 : index
    %57 = vector.load %arg13[%c0_64, %c0_65] : memref<64x288xf32, #tpu.memory_space<vmem>>, vector<64x288xf32>
    %58 = arith.truncf %57 : vector<64x288xf32> to vector<64x288xbf16>
    %c0_66 = arith.constant 0 : index
    %c0_67 = arith.constant 0 : index
    %59 = vector.load %arg5[%c0_66, %c0_67] : memref<288x32xbf16, #tpu.memory_space<vmem>>, vector<288x32xbf16>
    %cst_68 = arith.constant dense<0.000000e+00> : vector<64x32xf32>
    %60 = tpu.matmul %58, %59, %cst_68 {dimension_numbers = #tpu.dot_dimension_numbers<[1], [0], [0], [1], [0, 0, 1, 1], [], []>} : vector<64x288xbf16>, vector<288x32xbf16>, vector<64x32xf32> -> vector<64x32xf32>
    %c0_69 = arith.constant 0 : index
    %c0_70 = arith.constant 0 : index
    %61 = vector.load %arg6[%c0_69, %c0_70] : memref<1x32xf32, #tpu.memory_space<vmem>>, vector<1x32xf32>
    %62 = vector.broadcast %61 : vector<1x32xf32> to vector<64x32xf32>
    %63 = arith.mulf %60, %62 : vector<64x32xf32>
    %c0_71 = arith.constant 0 : index
    %c0_72 = arith.constant 0 : index
    %64 = vector.load %arg7[%c0_71, %c0_72] : memref<1x32xf32, #tpu.memory_space<vmem>>, vector<1x32xf32>
    %65 = vector.broadcast %64 : vector<1x32xf32> to vector<64x32xf32>
    %66 = arith.addf %63, %65 : vector<64x32xf32>
    %cst_73 = arith.constant 0.000000e+00 : f32
    %67 = vector.broadcast %cst_73 : f32 to vector<64x32xf32>
    %68 = arith.cmpf oge, %66, %67 : vector<64x32xf32>
    %cst_74 = arith.constant 0.00999999977 : f32
    %69 = vector.broadcast %cst_74 : f32 to vector<64x32xf32>
    %70 = arith.mulf %69, %66 : vector<64x32xf32>
    %71 = arith.select %68, %66, %70 : vector<64x32xi1>, vector<64x32xf32>
    %72 = vector.shape_cast %71 : vector<64x32xf32> to vector<8x8x32xf32>
    %c1_75 = arith.constant 1 : index
    %c1_76 = arith.constant 1 : index
    %c0_77 = arith.constant 0 : index
    %73 = vector.load %arg12[%c1_75, %c1_76, %c0_77] : memref<10x10x32xf32, #tpu.memory_space<vmem>>, vector<8x8x32xf32>
    tpu.vector_store %arg12[%c1_75, %c1_76, %c0_77], %72 {strides = array<i32>} : memref<10x10x32xf32, #tpu.memory_space<vmem>>, vector<8x8x32xf32>,
    %c0_78 = arith.constant 0 : index
    %c0_79 = arith.constant 0 : index
    %c0_80 = arith.constant 0 : index
    %74 = vector.load %arg12[%c0_78, %c0_79, %c0_80] : memref<10x10x32xf32, #tpu.memory_space<vmem>>, vector<8x8x32xf32>
    %75 = vector.shape_cast %74 : vector<8x8x32xf32> to vector<64x32xf32>
    %c0_81 = arith.constant 0 : index
    %c0_82 = arith.constant 0 : index
    %76 = vector.load %arg13[%c0_81, %c0_82] : memref<64x288xf32, #tpu.memory_space<vmem>>, vector<64x32xf32>
    tpu.vector_store %arg13[%c0_81, %c0_82], %75 {strides = array<i32>} : memref<64x288xf32, #tpu.memory_space<vmem>>, vector<64x32xf32>,
    %c0_83 = arith.constant 0 : index
    %c1_84 = arith.constant 1 : index
    %c0_85 = arith.constant 0 : index
    %77 = vector.load %arg12[%c0_83, %c1_84, %c0_85] : memref<10x10x32xf32, #tpu.memory_space<vmem>>, vector<8x8x32xf32>
    %78 = vector.shape_cast %77 : vector<8x8x32xf32> to vector<64x32xf32>
    %c0_86 = arith.constant 0 : index
    %c32_87 = arith.constant 32 : index
    %79 = vector.load %arg13[%c0_86, %c32_87] : memref<64x288xf32, #tpu.memory_space<vmem>>, vector<64x32xf32>
    tpu.vector_store %arg13[%c0_86, %c32_87], %78 {strides = array<i32>} : memref<64x288xf32, #tpu.memory_space<vmem>>, vector<64x32xf32>,
    %c0_88 = arith.constant 0 : index
    %c2_89 = arith.constant 2 : index
    %c0_90 = arith.constant 0 : index
    %80 = vector.load %arg12[%c0_88, %c2_89, %c0_90] : memref<10x10x32xf32, #tpu.memory_space<vmem>>, vector<8x8x32xf32>
    %81 = vector.shape_cast %80 : vector<8x8x32xf32> to vector<64x32xf32>
    %c0_91 = arith.constant 0 : index
    %c64_92 = arith.constant 64 : index
    %82 = vector.load %arg13[%c0_91, %c64_92] : memref<64x288xf32, #tpu.memory_space<vmem>>, vector<64x32xf32>
    tpu.vector_store %arg13[%c0_91, %c64_92], %81 {strides = array<i32>} : memref<64x288xf32, #tpu.memory_space<vmem>>, vector<64x32xf32>,
    %c1_93 = arith.constant 1 : index
    %c0_94 = arith.constant 0 : index
    %c0_95 = arith.constant 0 : index
    %83 = vector.load %arg12[%c1_93, %c0_94, %c0_95] : memref<10x10x32xf32, #tpu.memory_space<vmem>>, vector<8x8x32xf32>
    %84 = vector.shape_cast %83 : vector<8x8x32xf32> to vector<64x32xf32>
    %c0_96 = arith.constant 0 : index
    %c96_97 = arith.constant 96 : index
    %85 = vector.load %arg13[%c0_96, %c96_97] : memref<64x288xf32, #tpu.memory_space<vmem>>, vector<64x32xf32>
    tpu.vector_store %arg13[%c0_96, %c96_97], %84 {strides = array<i32>} : memref<64x288xf32, #tpu.memory_space<vmem>>, vector<64x32xf32>,
    %c1_98 = arith.constant 1 : index
    %c1_99 = arith.constant 1 : index
    %c0_100 = arith.constant 0 : index
    %86 = vector.load %arg12[%c1_98, %c1_99, %c0_100] : memref<10x10x32xf32, #tpu.memory_space<vmem>>, vector<8x8x32xf32>
    %87 = vector.shape_cast %86 : vector<8x8x32xf32> to vector<64x32xf32>
    %c0_101 = arith.constant 0 : index
    %c128_102 = arith.constant 128 : index
    %88 = vector.load %arg13[%c0_101, %c128_102] : memref<64x288xf32, #tpu.memory_space<vmem>>, vector<64x32xf32>
    tpu.vector_store %arg13[%c0_101, %c128_102], %87 {strides = array<i32>} : memref<64x288xf32, #tpu.memory_space<vmem>>, vector<64x32xf32>,
    %c1_103 = arith.constant 1 : index
    %c2_104 = arith.constant 2 : index
    %c0_105 = arith.constant 0 : index
    %89 = vector.load %arg12[%c1_103, %c2_104, %c0_105] : memref<10x10x32xf32, #tpu.memory_space<vmem>>, vector<8x8x32xf32>
    %90 = vector.shape_cast %89 : vector<8x8x32xf32> to vector<64x32xf32>
    %c0_106 = arith.constant 0 : index
    %c160_107 = arith.constant 160 : index
    %91 = vector.load %arg13[%c0_106, %c160_107] : memref<64x288xf32, #tpu.memory_space<vmem>>, vector<64x32xf32>
    tpu.vector_store %arg13[%c0_106, %c160_107], %90 {strides = array<i32>} : memref<64x288xf32, #tpu.memory_space<vmem>>, vector<64x32xf32>,
    %c2_108 = arith.constant 2 : index
    %c0_109 = arith.constant 0 : index
    %c0_110 = arith.constant 0 : index
    %92 = vector.load %arg12[%c2_108, %c0_109, %c0_110] : memref<10x10x32xf32, #tpu.memory_space<vmem>>, vector<8x8x32xf32>
    %93 = vector.shape_cast %92 : vector<8x8x32xf32> to vector<64x32xf32>
    %c0_111 = arith.constant 0 : index
    %c192_112 = arith.constant 192 : index
    %94 = vector.load %arg13[%c0_111, %c192_112] : memref<64x288xf32, #tpu.memory_space<vmem>>, vector<64x32xf32>
    tpu.vector_store %arg13[%c0_111, %c192_112], %93 {strides = array<i32>} : memref<64x288xf32, #tpu.memory_space<vmem>>, vector<64x32xf32>,
    %c2_113 = arith.constant 2 : index
    %c1_114 = arith.constant 1 : index
    %c0_115 = arith.constant 0 : index
    %95 = vector.load %arg12[%c2_113, %c1_114, %c0_115] : memref<10x10x32xf32, #tpu.memory_space<vmem>>, vector<8x8x32xf32>
    %96 = vector.shape_cast %95 : vector<8x8x32xf32> to vector<64x32xf32>
    %c0_116 = arith.constant 0 : index
    %c224_117 = arith.constant 224 : index
    %97 = vector.load %arg13[%c0_116, %c224_117] : memref<64x288xf32, #tpu.memory_space<vmem>>, vector<64x32xf32>
    tpu.vector_store %arg13[%c0_116, %c224_117], %96 {strides = array<i32>} : memref<64x288xf32, #tpu.memory_space<vmem>>, vector<64x32xf32>,
    %c2_118 = arith.constant 2 : index
    %c2_119 = arith.constant 2 : index
    %c0_120 = arith.constant 0 : index
    %98 = vector.load %arg12[%c2_118, %c2_119, %c0_120] : memref<10x10x32xf32, #tpu.memory_space<vmem>>, vector<8x8x32xf32>
    %99 = vector.shape_cast %98 : vector<8x8x32xf32> to vector<64x32xf32>
    %c0_121 = arith.constant 0 : index
    %c256_122 = arith.constant 256 : index
    %100 = vector.load %arg13[%c0_121, %c256_122] : memref<64x288xf32, #tpu.memory_space<vmem>>, vector<64x32xf32>
    tpu.vector_store %arg13[%c0_121, %c256_122], %99 {strides = array<i32>} : memref<64x288xf32, #tpu.memory_space<vmem>>, vector<64x32xf32>,
    %c0_123 = arith.constant 0 : index
    %c0_124 = arith.constant 0 : index
    %101 = vector.load %arg13[%c0_123, %c0_124] : memref<64x288xf32, #tpu.memory_space<vmem>>, vector<64x288xf32>
    %102 = arith.truncf %101 : vector<64x288xf32> to vector<64x288xbf16>
    %c0_125 = arith.constant 0 : index
    %c0_126 = arith.constant 0 : index
    %103 = vector.load %arg8[%c0_125, %c0_126] : memref<288x32xbf16, #tpu.memory_space<vmem>>, vector<288x32xbf16>
    %cst_127 = arith.constant dense<0.000000e+00> : vector<64x32xf32>
    %104 = tpu.matmul %102, %103, %cst_127 {dimension_numbers = #tpu.dot_dimension_numbers<[1], [0], [0], [1], [0, 0, 1, 1], [], []>} : vector<64x288xbf16>, vector<288x32xbf16>, vector<64x32xf32> -> vector<64x32xf32>
    %c0_128 = arith.constant 0 : index
    %c0_129 = arith.constant 0 : index
    %105 = vector.load %arg9[%c0_128, %c0_129] : memref<1x32xf32, #tpu.memory_space<vmem>>, vector<1x32xf32>
    %106 = vector.broadcast %105 : vector<1x32xf32> to vector<64x32xf32>
    %107 = arith.mulf %104, %106 : vector<64x32xf32>
    %c0_130 = arith.constant 0 : index
    %c0_131 = arith.constant 0 : index
    %108 = vector.load %arg10[%c0_130, %c0_131] : memref<1x32xf32, #tpu.memory_space<vmem>>, vector<1x32xf32>
    %109 = vector.broadcast %108 : vector<1x32xf32> to vector<64x32xf32>
    %110 = arith.addf %107, %109 : vector<64x32xf32>
    %cst_132 = arith.constant 0.000000e+00 : f32
    %111 = vector.broadcast %cst_132 : f32 to vector<64x32xf32>
    %112 = arith.cmpf oge, %110, %111 : vector<64x32xf32>
    %cst_133 = arith.constant 0.00999999977 : f32
    %113 = vector.broadcast %cst_133 : f32 to vector<64x32xf32>
    %114 = arith.mulf %113, %110 : vector<64x32xf32>
    %115 = arith.select %112, %110, %114 : vector<64x32xi1>, vector<64x32xf32>
    %116 = arith.truncf %115 : vector<64x32xf32> to vector<64x32xbf16>
    %c0_134 = arith.constant 0 : index
    %c0_135 = arith.constant 0 : index
    %c0_136 = arith.constant 0 : index
    %117 = vector.load %arg11[%c0_134, %c0_135, %c0_136] : memref<1x64x32xbf16, #tpu.memory_space<vmem>>, vector<1x64x32xbf16>
    %118 = vector.shape_cast %117 : vector<1x64x32xbf16> to vector<64x32xbf16>
    %119 = vector.shape_cast %116 : vector<64x32xbf16> to vector<1x64x32xbf16>
    tpu.vector_store %arg11[%c0_134, %c0_135, %c0_136], %119 {strides = array<i32>} : memref<1x64x32xbf16, #tpu.memory_space<vmem>>, vector<1x64x32xbf16>,
    return
  }
  func.func @transform_0(%arg0: i32) -> (i32, i32, i32) {
    %c0_i32 = arith.constant 0 : i32
    %c0_i32_0 = arith.constant 0 : i32
    %c0_i32_1 = arith.constant 0 : i32
    return %arg0, %c0_i32, %c0_i32_0 : i32, i32, i32
  }
  func.func @transform_1(%arg0: i32) -> (i32, i32) {
    %c0_i32 = arith.constant 0 : i32
    %c0_i32_0 = arith.constant 0 : i32
    %c0_i32_1 = arith.constant 0 : i32
    return %c0_i32, %c0_i32_0 : i32, i32
  }
  func.func @transform_2(%arg0: i32) -> (i32, i32) {
    %c0_i32 = arith.constant 0 : i32
    %c0_i32_0 = arith.constant 0 : i32
    %c0_i32_1 = arith.constant 0 : i32
    return %c0_i32, %c0_i32_0 : i32, i32
  }
  func.func @transform_3(%arg0: i32) -> (i32, i32) {
    %c0_i32 = arith.constant 0 : i32
    %c0_i32_0 = arith.constant 0 : i32
    %c0_i32_1 = arith.constant 0 : i32
    return %c0_i32, %c0_i32_0 : i32, i32
  }
  func.func @transform_4(%arg0: i32) -> (i32, i32) {
    %c0_i32 = arith.constant 0 : i32
    %c0_i32_0 = arith.constant 0 : i32
    %c0_i32_1 = arith.constant 0 : i32
    return %c0_i32, %c0_i32_0 : i32, i32
  }
  func.func @transform_5(%arg0: i32) -> (i32, i32) {
    %c0_i32 = arith.constant 0 : i32
    %c0_i32_0 = arith.constant 0 : i32
    %c0_i32_1 = arith.constant 0 : i32
    return %c0_i32, %c0_i32_0 : i32, i32
  }
  func.func @transform_6(%arg0: i32) -> (i32, i32) {
    %c0_i32 = arith.constant 0 : i32
    %c0_i32_0 = arith.constant 0 : i32
    %c0_i32_1 = arith.constant 0 : i32
    return %c0_i32, %c0_i32_0 : i32, i32
  }
  func.func @transform_7(%arg0: i32) -> (i32, i32) {
    %c0_i32 = arith.constant 0 : i32
    %c0_i32_0 = arith.constant 0 : i32
    %c0_i32_1 = arith.constant 0 : i32
    return %c0_i32, %c0_i32_0 : i32, i32
  }
  func.func @transform_8(%arg0: i32) -> (i32, i32) {
    %c0_i32 = arith.constant 0 : i32
    %c0_i32_0 = arith.constant 0 : i32
    %c0_i32_1 = arith.constant 0 : i32
    return %c0_i32, %c0_i32_0 : i32, i32
  }
  func.func @transform_9(%arg0: i32) -> (i32, i32) {
    %c0_i32 = arith.constant 0 : i32
    %c0_i32_0 = arith.constant 0 : i32
    %c0_i32_1 = arith.constant 0 : i32
    return %c0_i32, %c0_i32_0 : i32, i32
  }
  func.func @transform_10(%arg0: i32) -> (i32, i32, i32) {
    %c0_i32 = arith.constant 0 : i32
    %c0_i32_0 = arith.constant 0 : i32
    %c0_i32_1 = arith.constant 0 : i32
    return %arg0, %c0_i32, %c0_i32_0 : i32, i32, i32
  }
}

module attributes {stable_mosaic.version = 11 : i64} {
  func.func @linear_kernel(%arg0: i32, %arg1: i32, %arg2: memref<8x1024xf32, #tpu.memory_space<vmem>>, %arg3: memref<1024x128xbf16, #tpu.memory_space<vmem>>, %arg4: memref<1x128xf32, #tpu.memory_space<vmem>>, %arg5: memref<8x128xf32, #tpu.memory_space<vmem>>, %arg6: memref<8x128xf32, #tpu.memory_space<vmem>>) attributes {dimension_semantics = [#tpu.dimension_semantics<parallel>, #tpu.dimension_semantics<arbitrary>], iteration_bounds = array<i64: 1, 4>, scalar_prefetch = 0 : i64, scratch_operands = 1 : i64, tpu.core_type = #tpu.core_type<tc>, window_params = [{transform_indices = @transform_0, window_bounds = array<i64: 8, 1024>}, {transform_indices = @transform_1, window_bounds = array<i64: 1024, 128>}, {transform_indices = @transform_2, window_bounds = array<i64: 1, 128>}, {transform_indices = @transform_3, window_bounds = array<i64: 8, 128>}]} {
    %c0_i32 = arith.constant 0 : i32
    %0 = arith.cmpi eq, %arg1, %c0_i32 : i32
    %1 = arith.extui %0 : i1 to i32
    %c0_i32_0 = arith.constant 0 : i32
    %2 = arith.cmpi ne, %1, %c0_i32_0 : i32
    scf.if %2 {
      %cst_9 = arith.constant 0.000000e+00 : f32
      %13 = vector.broadcast %cst_9 : f32 to vector<8x128xf32>
      %c0_10 = arith.constant 0 : index
      %c0_11 = arith.constant 0 : index
      %14 = vector.load %arg6[%c0_10, %c0_11] : memref<8x128xf32, #tpu.memory_space<vmem>>, vector<8x128xf32>
      tpu.vector_store %arg6[%c0_10, %c0_11], %13 {strides = array<i32>} : memref<8x128xf32, #tpu.memory_space<vmem>>, vector<8x128xf32>,
    } else {
    }
    %c0 = arith.constant 0 : index
    %c0_1 = arith.constant 0 : index
    %3 = vector.load %arg6[%c0, %c0_1] : memref<8x128xf32, #tpu.memory_space<vmem>>, vector<8x128xf32>
    %c0_2 = arith.constant 0 : index
    %c0_3 = arith.constant 0 : index
    %4 = vector.load %arg2[%c0_2, %c0_3] : memref<8x1024xf32, #tpu.memory_space<vmem>>, vector<8x1024xf32>
    %5 = arith.truncf %4 : vector<8x1024xf32> to vector<8x1024xbf16>
    %c0_4 = arith.constant 0 : index
    %c0_5 = arith.constant 0 : index
    %6 = vector.load %arg3[%c0_4, %c0_5] : memref<1024x128xbf16, #tpu.memory_space<vmem>>, vector<1024x128xbf16>
    %cst = arith.constant dense<0.000000e+00> : vector<8x128xf32>
    %7 = tpu.matmul %5, %6, %cst {dimension_numbers = #tpu.dot_dimension_numbers<[1], [0], [0], [1], [0, 0, 1, 1], [], []>} : vector<8x1024xbf16>, vector<1024x128xbf16>, vector<8x128xf32> -> vector<8x128xf32>
    %8 = arith.addf %3, %7 : vector<8x128xf32>
    %c0_6 = arith.constant 0 : index
    %c0_7 = arith.constant 0 : index
    %9 = vector.load %arg6[%c0_6, %c0_7] : memref<8x128xf32, #tpu.memory_space<vmem>>, vector<8x128xf32>
    tpu.vector_store %arg6[%c0_6, %c0_7], %8 {strides = array<i32>} : memref<8x128xf32, #tpu.memory_space<vmem>>, vector<8x128xf32>,
    %c3_i32 = arith.constant 3 : i32
    %10 = arith.cmpi eq, %arg1, %c3_i32 : i32
    %11 = arith.extui %10 : i1 to i32
    %c0_i32_8 = arith.constant 0 : i32
    %12 = arith.cmpi ne, %11, %c0_i32_8 : i32
    scf.if %12 {
      %c0_9 = arith.constant 0 : index
      %c0_10 = arith.constant 0 : index
      %13 = vector.load %arg6[%c0_9, %c0_10] : memref<8x128xf32, #tpu.memory_space<vmem>>, vector<8x128xf32>
      %c0_11 = arith.constant 0 : index
      %c0_12 = arith.constant 0 : index
      %14 = vector.load %arg4[%c0_11, %c0_12] : memref<1x128xf32, #tpu.memory_space<vmem>>, vector<1x128xf32>
      %15 = vector.broadcast %14 : vector<1x128xf32> to vector<8x128xf32>
      %16 = arith.addf %13, %15 : vector<8x128xf32>
      %c0_13 = arith.constant 0 : index
      %c0_14 = arith.constant 0 : index
      %17 = vector.load %arg5[%c0_13, %c0_14] : memref<8x128xf32, #tpu.memory_space<vmem>>, vector<8x128xf32>
      tpu.vector_store %arg5[%c0_13, %c0_14], %16 {strides = array<i32>} : memref<8x128xf32, #tpu.memory_space<vmem>>, vector<8x128xf32>,
    } else {
    }
    return
  }
  func.func @transform_0(%arg0: i32, %arg1: i32) -> (i32, i32) {
    %c0_i32 = arith.constant 0 : i32
    %c0_i32_0 = arith.constant 0 : i32
    return %c0_i32, %arg1 : i32, i32
  }
  func.func @transform_1(%arg0: i32, %arg1: i32) -> (i32, i32) {
    %c0_i32 = arith.constant 0 : i32
    return %arg1, %arg0 : i32, i32
  }
  func.func @transform_2(%arg0: i32, %arg1: i32) -> (i32, i32) {
    %c0_i32 = arith.constant 0 : i32
    %c0_i32_0 = arith.constant 0 : i32
    return %c0_i32, %arg0 : i32, i32
  }
  func.func @transform_3(%arg0: i32, %arg1: i32) -> (i32, i32) {
    %c0_i32 = arith.constant 0 : i32
    %c0_i32_0 = arith.constant 0 : i32
    return %c0_i32, %arg0 : i32, i32
  }
}

module attributes {stable_mosaic.version = 11 : i64} {
  func.func @linear_kernel(%arg0: i32, %arg1: i32, %arg2: memref<8x2048xbf16, #tpu.memory_space<vmem>>, %arg3: memref<2048x1024xbf16, #tpu.memory_space<vmem>>, %arg4: memref<1x1024xf32, #tpu.memory_space<vmem>>, %arg5: memref<8x1024xf32, #tpu.memory_space<vmem>>, %arg6: memref<8x1024xf32, #tpu.memory_space<vmem>>) attributes {dimension_semantics = [#tpu.dimension_semantics<parallel>, #tpu.dimension_semantics<arbitrary>], iteration_bounds = array<i64: 4, 1>, scalar_prefetch = 0 : i64, scratch_operands = 1 : i64, tpu.core_type = #tpu.core_type<tc>, window_params = [{transform_indices = @transform_0, window_bounds = array<i64: 8, 2048>}, {transform_indices = @transform_1, window_bounds = array<i64: 2048, 1024>}, {transform_indices = @transform_2, window_bounds = array<i64: 1, 1024>}, {transform_indices = @transform_3, window_bounds = array<i64: 8, 1024>}]} {
    %c0_i32 = arith.constant 0 : i32
    %0 = arith.cmpi eq, %arg1, %c0_i32 : i32
    %1 = arith.extui %0 : i1 to i32
    %c0_i32_0 = arith.constant 0 : i32
    %2 = arith.cmpi ne, %1, %c0_i32_0 : i32
    scf.if %2 {
      %cst_10 = arith.constant 0.000000e+00 : f32
      %12 = vector.broadcast %cst_10 : f32 to vector<8x1024xf32>
      %c0_11 = arith.constant 0 : index
      %c0_12 = arith.constant 0 : index
      %13 = vector.load %arg6[%c0_11, %c0_12] : memref<8x1024xf32, #tpu.memory_space<vmem>>, vector<8x1024xf32>
      tpu.vector_store %arg6[%c0_11, %c0_12], %12 {strides = array<i32>} : memref<8x1024xf32, #tpu.memory_space<vmem>>, vector<8x1024xf32>,
    } else {
    }
    %c0 = arith.constant 0 : index
    %c0_1 = arith.constant 0 : index
    %3 = vector.load %arg6[%c0, %c0_1] : memref<8x1024xf32, #tpu.memory_space<vmem>>, vector<8x1024xf32>
    %c0_2 = arith.constant 0 : index
    %c0_3 = arith.constant 0 : index
    %4 = vector.load %arg2[%c0_2, %c0_3] : memref<8x2048xbf16, #tpu.memory_space<vmem>>, vector<8x2048xbf16>
    %c0_4 = arith.constant 0 : index
    %c0_5 = arith.constant 0 : index
    %5 = vector.load %arg3[%c0_4, %c0_5] : memref<2048x1024xbf16, #tpu.memory_space<vmem>>, vector<2048x1024xbf16>
    %cst = arith.constant dense<0.000000e+00> : vector<8x1024xf32>
    %6 = tpu.matmul %4, %5, %cst {dimension_numbers = #tpu.dot_dimension_numbers<[1], [0], [0], [1], [0, 0, 1, 1], [], []>} : vector<8x2048xbf16>, vector<2048x1024xbf16>, vector<8x1024xf32> -> vector<8x1024xf32>
    %7 = arith.addf %3, %6 : vector<8x1024xf32>
    %c0_6 = arith.constant 0 : index
    %c0_7 = arith.constant 0 : index
    %8 = vector.load %arg6[%c0_6, %c0_7] : memref<8x1024xf32, #tpu.memory_space<vmem>>, vector<8x1024xf32>
    tpu.vector_store %arg6[%c0_6, %c0_7], %7 {strides = array<i32>} : memref<8x1024xf32, #tpu.memory_space<vmem>>, vector<8x1024xf32>,
    %c0_i32_8 = arith.constant 0 : i32
    %9 = arith.cmpi eq, %arg1, %c0_i32_8 : i32
    %10 = arith.extui %9 : i1 to i32
    %c0_i32_9 = arith.constant 0 : i32
    %11 = arith.cmpi ne, %10, %c0_i32_9 : i32
    scf.if %11 {
      %c0_10 = arith.constant 0 : index
      %c0_11 = arith.constant 0 : index
      %12 = vector.load %arg6[%c0_10, %c0_11] : memref<8x1024xf32, #tpu.memory_space<vmem>>, vector<8x1024xf32>
      %c0_12 = arith.constant 0 : index
      %c0_13 = arith.constant 0 : index
      %13 = vector.load %arg4[%c0_12, %c0_13] : memref<1x1024xf32, #tpu.memory_space<vmem>>, vector<1x1024xf32>
      %14 = vector.broadcast %13 : vector<1x1024xf32> to vector<8x1024xf32>
      %15 = arith.addf %12, %14 : vector<8x1024xf32>
      %c0_14 = arith.constant 0 : index
      %c0_15 = arith.constant 0 : index
      %16 = vector.load %arg5[%c0_14, %c0_15] : memref<8x1024xf32, #tpu.memory_space<vmem>>, vector<8x1024xf32>
      tpu.vector_store %arg5[%c0_14, %c0_15], %15 {strides = array<i32>} : memref<8x1024xf32, #tpu.memory_space<vmem>>, vector<8x1024xf32>,
    } else {
    }
    return
  }
  func.func @transform_0(%arg0: i32, %arg1: i32) -> (i32, i32) {
    %c0_i32 = arith.constant 0 : i32
    %c0_i32_0 = arith.constant 0 : i32
    return %c0_i32, %arg1 : i32, i32
  }
  func.func @transform_1(%arg0: i32, %arg1: i32) -> (i32, i32) {
    %c0_i32 = arith.constant 0 : i32
    return %arg1, %arg0 : i32, i32
  }
  func.func @transform_2(%arg0: i32, %arg1: i32) -> (i32, i32) {
    %c0_i32 = arith.constant 0 : i32
    %c0_i32_0 = arith.constant 0 : i32
    return %c0_i32, %arg0 : i32, i32
  }
  func.func @transform_3(%arg0: i32, %arg1: i32) -> (i32, i32) {
    %c0_i32 = arith.constant 0 : i32
    %c0_i32_0 = arith.constant 0 : i32
    return %c0_i32, %arg0 : i32, i32
  }
}

</mosaic_0001>

<llo_original>
// kernel: convnet_forward.5
$region0: #{convnet_forward.5}
  #allocation0 [shape = 'u32[]', space=smem, size = 0x4, offset = 0x4, fixed_abs, tag = 'smem constant byte address 0x4 - core index']
  #allocation1 [shape = 'u32[144,128]{1,0:T(1,128)}', space=vmem, size = 0x12000, scoped, tag = 'internal scratch']
  #allocation2 [shape = 'f32[8,128]{1,0:T(8,128)}', space=vmem, size = 0x1000, scoped, tag = 'scratch operand']
  %s0 = inlined_call_operand.vmem [shape: f32[8,4096], index: 0, kind: input, shape index: {}]
  %s1 = inlined_call_operand.vmem [shape: bf16[4096,128], index: 1, kind: input, shape index: {}]
  %s2 = inlined_call_operand.vmem [shape: f32[1,128], index: 2, kind: input, shape index: {}]
  %s3 = inlined_call_operand.vmem [shape: f32[8,128], index: 3, kind: output, shape index: {}]
  %s4 = sld [smem:[#allocation0]]
  $region53: #{convnet_forward.5} parent=0
    _
  %s6 = ssub.s32 1, %s4
  %s7 = scalar_select 0, %s6, %s4
  loop: start=0, step=1, limit=6
  $region2: #{convnet_forward.5} parent=0 // loop_pre_header
    _
  $region3: #{convnet_forward.5} parent=0 // loop_header
    %s9 = sphi 0, %s13
    %p10 = scmp.ge.s32.totalorder %s9, 6
    %s16 = sphi 0, %s28
    %s17 = sphi 0, %s24
    %s18 = sphi 0, %s16
    %s19 = sphi 0, %s17
    %s20 = sphi 0, %s18
    %s21 = sphi 0, %s19
    %s31 = sphi 0, %s33
    %s34 = sphi 0, %s31
    %s35 = sphi 0, %s34
    %s51 = sphi 0, %s35
    %s59 = sphi 0, %s61
    %s62 = sphi 0, %s59
    %s63 = sphi 0, %s62
    %s79 = sphi 0, %s63
    %s85 = sphi 0, %s87
    %s88 = sphi 0, %s85
    %s89 = sphi 0, %s88
    %s105 = sphi 0, %s89
    %s111 = sphi 0, %s113
    %s114 = sphi 0, %s111
    %s115 = sphi 0, %s114
    %s131 = sphi 0, %s115
  $region4: #{convnet_forward.5} parent=0 // loop_header_branch
    %12 = sbr.rel (%p10) target = $region8
  $region5: #{convnet_forward.5} parent=0 // loop_body
    %s14 = ssub.s32 %s9, 1
    %s15 = ssub.s32 %s9, 2
    %s22 = sadd.s32 1, %s17
    %p23 = scmp.ge.s32.totalorder %s22, 4
    %s24 = scalar_select %p23, 0, %s22
    %s25 = sadd.s32 1, %s16
    %s26 = scalar_select %p23, %s25, %s16
    %p27 = scmp.ge.s32.totalorder %s26, 1
    %s28 = scalar_select %p27, 0, %s26
    %s29 = ssub.s32 %s17, %s24
    %p30 = scmp.eq.s32.totalorder %s29, 0
    %s32 = sadd.s32 %s31, 1
    %s33 = scalar_select %p30, %s31, %s32
    %p36 = pneg %p30
    %p37 = scmp.eq.s32.totalorder %s9, 3
    %p38 = por %p36, %p37
    %p39 = scmp.ne.s32.totalorder %s31, %s34
    %p40 = scmp.eq.s32.totalorder %s9, 0
    %p41 = por %p39, %p40
    %p42 = scmp.ne.s32.totalorder %s31, %s34
    %p43 = scmp.eq.s32.totalorder %s14, 3
    %p44 = por %p42, %p43
    %p45 = scmp.ne.s32.totalorder %s34, %s35
    %p46 = scmp.eq.s32.totalorder %s14, 0
    %p47 = por %p45, %p46
    %p48 = scmp.ne.s32.totalorder %s34, %s35
    %p49 = scmp.eq.s32.totalorder %s15, 3
    %p50 = por %p48, %p49
    %p52 = scmp.ne.s32.totalorder %s35, %s51
    %p53 = scmp.eq.s32.totalorder %s15, 0
    %p54 = por %p52, %p53
    %s55 = ssub.s32 %s17, %s24
    %s56 = ssub.s32 %s16, %s28
    %s57 = sor.u32 %s55, %s56
    %p58 = scmp.eq.s32.totalorder %s57, 0
    %s60 = sadd.s32 %s59, 1
    %s61 = scalar_select %p58, %s59, %s60
    %p64 = pneg %p58
    %p65 = scmp.eq.s32.totalorder %s9, 3
    %p66 = por %p64, %p65
    %p67 = scmp.ne.s32.totalorder %s59, %s62
    %p68 = scmp.eq.s32.totalorder %s9, 0
    %p69 = por %p67, %p68
    %p70 = scmp.ne.s32.totalorder %s59, %s62
    %p71 = scmp.eq.s32.totalorder %s14, 3
    %p72 = por %p70, %p71
    %p73 = scmp.ne.s32.totalorder %s62, %s63
    %p74 = scmp.eq.s32.totalorder %s14, 0
    %p75 = por %p73, %p74
    %p76 = scmp.ne.s32.totalorder %s62, %s63
    %p77 = scmp.eq.s32.totalorder %s15, 3
    %p78 = por %p76, %p77
    %p80 = scmp.ne.s32.totalorder %s63, %s79
    %p81 = scmp.eq.s32.totalorder %s15, 0
    %p82 = por %p80, %p81
    %s83 = ssub.s32 %s16, %s28
    %p84 = scmp.eq.s32.totalorder %s83, 0
    %s86 = sadd.s32 %s85, 1
    %s87 = scalar_select %p84, %s85, %s86
    %p90 = pneg %p84
    %p91 = scmp.eq.s32.totalorder %s9, 3
    %p92 = por %p90, %p91
    %p93 = scmp.ne.s32.totalorder %s85, %s88
    %p94 = scmp.eq.s32.totalorder %s9, 0
    %p95 = por %p93, %p94
    %p96 = scmp.ne.s32.totalorder %s85, %s88
    %p97 = scmp.eq.s32.totalorder %s14, 3
    %p98 = por %p96, %p97
    %p99 = scmp.ne.s32.totalorder %s88, %s89
    %p100 = scmp.eq.s32.totalorder %s14, 0
    %p101 = por %p99, %p100
    %p102 = scmp.ne.s32.totalorder %s88, %s89
    %p103 = scmp.eq.s32.totalorder %s15, 3
    %p104 = por %p102, %p103
    %p106 = scmp.ne.s32.totalorder %s89, %s105
    %p107 = scmp.eq.s32.totalorder %s15, 0
    %p108 = por %p106, %p107
    %s109 = ssub.s32 %s16, %s28
    %p110 = scmp.eq.s32.totalorder %s109, 0
    %s112 = sadd.s32 %s111, 1
    %s113 = scalar_select %p110, %s111, %s112
    %p116 = pneg %p110
    %p117 = scmp.eq.s32.totalorder %s9, 3
    %p118 = por %p116, %p117
    %p119 = scmp.ne.s32.totalorder %s111, %s114
    %p120 = scmp.eq.s32.totalorder %s9, 0
    %p121 = por %p119, %p120
    %p122 = scmp.ne.s32.totalorder %s111, %s114
    %p123 = scmp.eq.s32.totalorder %s14, 3
    %p124 = por %p122, %p123
    %p125 = scmp.ne.s32.totalorder %s114, %s115
    %p126 = scmp.eq.s32.totalorder %s14, 0
    %p127 = por %p125, %p126
    %p128 = scmp.ne.s32.totalorder %s114, %s115
    %p129 = scmp.eq.s32.totalorder %s15, 3
    %p130 = por %p128, %p129
    %p132 = scmp.ne.s32.totalorder %s115, %s131
    %p133 = scmp.eq.s32.totalorder %s15, 0
    %p134 = por %p132, %p133
    %p135 = scmp.le.s32.totalorder 1, %s9
    %p136 = scmp.lt.s32.totalorder %s9, 5
    %p137 = pnand %p135, %p136
    %p138 = pneg %p137
    // Predicated region
    $region9: #{convnet_forward.5} parent=5 // pred_check
      _
    $region10: #{convnet_forward.5} parent=5 // pred_check_branch
      %140 = sbr.rel (%p137) target = $region12
    $region11: #{convnet_forward.5} parent=5 // pred_region
      %s141 = ssub.s32 %s9, 1
      // Predicated region
      $region13: #{convnet_forward.5} parent=11 // pred_check
        %p142 = pneg %p101
      $region14: #{convnet_forward.5} parent=11 // pred_check_branch
        %144 = sbr.rel (%p142) target = $region16
      $region15: #{convnet_forward.5} parent=11 // pred_region
        %p145 = scmp.lt.s32.totalorder %s18, 0
        %s146 = scalar_select %p145, %s18, 0
        %s147 = scalar_lea.vmem %s2, %s146
      $region16: #{convnet_forward.5} parent=11 // pred_fallthru
        _
    $region12: #{convnet_forward.5} parent=5 // pred_fallthru
      _
    %p148 = scmp.lt.s32.totalorder %s9, 4
    // Predicated region
    $region17: #{convnet_forward.5} parent=5 // pred_check
      %p149 = pneg %p148
    $region18: #{convnet_forward.5} parent=5 // pred_check_branch
      %151 = sbr.rel (%p149) target = $region20
    $region19: #{convnet_forward.5} parent=5 // pred_region
      // Predicated region
      $region21: #{convnet_forward.5} parent=19 // pred_check
        %p152 = pneg %p41
      $region22: #{convnet_forward.5} parent=19 // pred_check_branch
        %154 = sbr.rel (%p152) target = $region24
      $region23: #{convnet_forward.5} parent=19 // pred_region
        %s155 = smul.u32 8, %s17
        %p156 = scmp.lt.s32.totalorder %s155, 31
        %s157 = scalar_select %p156, %s155, 31
        %s158 = smul.addr %s157, 8
        %s159 = scalar_lea.vmem %s0, %s158
        %s160 = smul.u32 8, %s17
      $region24: #{convnet_forward.5} parent=19 // pred_fallthru
        _
      // Predicated region
      $region25: #{convnet_forward.5} parent=19 // pred_check
        %p161 = pneg %p69
      $region26: #{convnet_forward.5} parent=19 // pred_check_branch
        %163 = sbr.rel (%p161) target = $region28
      $region27: #{convnet_forward.5} parent=19 // pred_region
        %s164 = smul.u32 128, %s17
        %p165 = scmp.lt.s32.totalorder %s164, 511
        %s166 = scalar_select %p165, %s164, 511
        %p167 = scmp.lt.s32.totalorder %s16, 0
        %s168 = scalar_select %p167, %s16, 0
        %s169 = sadd.s32 %s168, %s166
        %s170 = smul.addr %s169, 4
        %s171 = scalar_lea.vmem %s1, %s170
        %s172 = smul.u32 128, %s17
      $region28: #{convnet_forward.5} parent=19 // pred_fallthru
        _
    $region20: #{convnet_forward.5} parent=5 // pred_fallthru
      _
    %p173 = scmp.le.s32.totalorder 1, %s9
    %p174 = scmp.lt.s32.totalorder %s9, 5
    %p175 = pnand %p173, %p174
    %p176 = pneg %p175
    // Predicated region
    $region29: #{convnet_forward.5} parent=5 // pred_check
      _
    $region30: #{convnet_forward.5} parent=5 // pred_check_branch
      %178 = sbr.rel (%p175) target = $region32
    $region31: #{convnet_forward.5} parent=5 // pred_region
      %s179 = ssub.s32 %s9, 1
      %s180 = smul.u32 8, %s19
      %p181 = scmp.lt.s32.totalorder %s180, 31
      %s182 = scalar_select %p181, %s180, 31
      %s183 = smul.addr %s182, 8
      %s184 = scalar_lea.vmem %s0, %s183
      %p185 = pneg %p47
      %p186 = pneg %p44
      %s187 = smul.u32 128, %s19
      %p188 = scmp.lt.s32.totalorder %s187, 511
      %s189 = scalar_select %p188, %s187, 511
      %p190 = scmp.lt.s32.totalorder %s18, 0
      %s191 = scalar_select %p190, %s18, 0
      %s192 = sadd.s32 %s191, %s189
      %s193 = smul.addr %s192, 4
      %s194 = scalar_lea.vmem %s1, %s193
      %p195 = pneg %p75
      %p196 = pneg %p72
      %p197 = scmp.lt.s32.totalorder %s18, 0
      %s198 = scalar_select %p197, %s18, 0
      %s199 = scalar_lea.vmem %s2, %s198
      %p200 = pneg %p101
      %p201 = pneg %p98
      %p202 = pneg %p127
      %p203 = pneg %p124
      %p204 = scmp.lt.s32.totalorder %s18, 0
      %s205 = scalar_select %p204, %s18, 0
      %s206 = smul.addr %s205, 8
      %s207 = scalar_lea.vmem %s3, %s206
      %s208 = smul.u32 8, %s19
      %p209 = scmp.lt.s32.totalorder %s208, 31
      %s210 = scalar_select %p209, %s208, 31
      %s211 = smul.addr %s210, 8
      %s212 = scalar_lea.vmem %s0, %s211
      %s213 = smul.u32 8, %s19
      %s214 = smul.u32 128, %s19
      %p215 = scmp.lt.s32.totalorder %s214, 511
      %s216 = scalar_select %p215, %s214, 511
      %p217 = scmp.lt.s32.totalorder %s18, 0
      %s218 = scalar_select %p217, %s18, 0
      %s219 = sadd.s32 %s218, %s216
      %s220 = smul.addr %s219, 4
      %s221 = scalar_lea.vmem %s1, %s220
      %s222 = smul.u32 128, %s19
      %p223 = scmp.lt.s32.totalorder %s18, 0
      %s224 = scalar_select %p223, %s18, 0
      %s225 = scalar_lea.vmem %s2, %s224
      %p226 = scmp.lt.s32.totalorder %s18, 0
      %s227 = scalar_select %p226, %s18, 0
      %s228 = smul.addr %s227, 8
      %s229 = scalar_lea.vmem %s3, %s228
      %p231 = scmp.eq.s32.totalorder %s19, 0
      // Predicated region
      $region33: #{convnet_forward.5} parent=31 // pred_check
        %p232 = pneg %p231
      $region34: #{convnet_forward.5} parent=31 // pred_check_branch
        %234 = sbr.rel (%p232) target = $region36
      $region35: #{convnet_forward.5} parent=31 // pred_region
        %235 = vst [vmem:[#allocation2] sm:$0xff] 0.0
      $region36: #{convnet_forward.5} parent=31 // pred_fallthru
        _
      %v236 = vld [vmem:[#allocation2] sm:$0xff]
      %v237 = vld [vmem:[%s212] sm:$0xff]
      %v238 = vld [vmem:[%s212 + $0x8] sm:$0xff]
      %v239 = vld [vmem:[%s212 + $0x10] sm:$0xff]
      %v240 = vld [vmem:[%s212 + $0x18] sm:$0xff]
      %v241 = vld [vmem:[%s212 + $0x20] sm:$0xff]
      %v242 = vld [vmem:[%s212 + $0x28] sm:$0xff]
      %v243 = vld [vmem:[%s212 + $0x30] sm:$0xff]
      %v244 = vld [vmem:[%s212 + $0x38] sm:$0xff]
      %v245 = vpack.c.bf16 %v237, %v237
      %v246 = vpack.c.bf16 %v238, %v238
      %v247 = vpack.c.bf16 %v239, %v239
      %v248 = vpack.c.bf16 %v240, %v240
      %v249 = vpack.c.bf16 %v241, %v241
      %v250 = vpack.c.bf16 %v242, %v242
      %v251 = vpack.c.bf16 %v243, %v243
      %v252 = vpack.c.bf16 %v244, %v244
      %v253 = vld [vmem:[%s221] sm:$0xf]
      %v254 = vld [vmem:[%s221 + $0x4] sm:$0xf]
      %v255 = vld [vmem:[%s221 + $0x8] sm:$0xf]
      %v256 = vld [vmem:[%s221 + $0xc] sm:$0xf]
      %v257 = vld [vmem:[%s221 + $0x10] sm:$0xf]
      %v258 = vld [vmem:[%s221 + $0x14] sm:$0xf]
      %v259 = vld [vmem:[%s221 + $0x18] sm:$0xf]
      %v260 = vld [vmem:[%s221 + $0x1c] sm:$0xf]
      %v261 = vld [vmem:[%s221 + $0x20] sm:$0xf]
      %v262 = vld [vmem:[%s221 + $0x24] sm:$0xf]
      %v263 = vld [vmem:[%s221 + $0x28] sm:$0xf]
      %v264 = vld [vmem:[%s221 + $0x2c] sm:$0xf]
      %v265 = vld [vmem:[%s221 + $0x30] sm:$0xf]
      %v266 = vld [vmem:[%s221 + $0x34] sm:$0xf]
      %v267 = vld [vmem:[%s221 + $0x38] sm:$0xf]
      %v268 = vld [vmem:[%s221 + $0x3c] sm:$0xf]
      %v269 = vld [vmem:[%s221 + $0x40] sm:$0xf]
      %v270 = vld [vmem:[%s221 + $0x44] sm:$0xf]
      %v271 = vld [vmem:[%s221 + $0x48] sm:$0xf]
      %v272 = vld [vmem:[%s221 + $0x4c] sm:$0xf]
      %v273 = vld [vmem:[%s221 + $0x50] sm:$0xf]
      %v274 = vld [vmem:[%s221 + $0x54] sm:$0xf]
      %v275 = vld [vmem:[%s221 + $0x58] sm:$0xf]
      %v276 = vld [vmem:[%s221 + $0x5c] sm:$0xf]
      %v277 = vld [vmem:[%s221 + $0x60] sm:$0xf]
      %v278 = vld [vmem:[%s221 + $0x64] sm:$0xf]
      %v279 = vld [vmem:[%s221 + $0x68] sm:$0xf]
      %v280 = vld [vmem:[%s221 + $0x6c] sm:$0xf]
      %v281 = vld [vmem:[%s221 + $0x70] sm:$0xf]
      %v282 = vld [vmem:[%s221 + $0x74] sm:$0xf]
      %v283 = vld [vmem:[%s221 + $0x78] sm:$0xf]
      %v284 = vld [vmem:[%s221 + $0x7c] sm:$0xf]
      %v285 = vld [vmem:[%s221 + $0x80] sm:$0xf]
      %v286 = vld [vmem:[%s221 + $0x84] sm:$0xf]
      %v287 = vld [vmem:[%s221 + $0x88] sm:$0xf]
      %v288 = vld [vmem:[%s221 + $0x8c] sm:$0xf]
      %v289 = vld [vmem:[%s221 + $0x90] sm:$0xf]
      %v290 = vld [vmem:[%s221 + $0x94] sm:$0xf]
      %v291 = vld [vmem:[%s221 + $0x98] sm:$0xf]
      %v292 = vld [vmem:[%s221 + $0x9c] sm:$0xf]
      %v293 = vld [vmem:[%s221 + $0xa0] sm:$0xf]
      %v294 = vld [vmem:[%s221 + $0xa4] sm:$0xf]
      %v295 = vld [vmem:[%s221 + $0xa8] sm:$0xf]
      %v296 = vld [vmem:[%s221 + $0xac] sm:$0xf]
      %v297 = vld [vmem:[%s221 + $0xb0] sm:$0xf]
      %v298 = vld [vmem:[%s221 + $0xb4] sm:$0xf]
      %v299 = vld [vmem:[%s221 + $0xb8] sm:$0xf]
      %v300 = vld [vmem:[%s221 + $0xbc] sm:$0xf]
      %v301 = vld [vmem:[%s221 + $0xc0] sm:$0xf]
      %v302 = vld [vmem:[%s221 + $0xc4] sm:$0xf]
      %v303 = vld [vmem:[%s221 + $0xc8] sm:$0xf]
      %v304 = vld [vmem:[%s221 + $0xcc] sm:$0xf]
      %v305 = vld [vmem:[%s221 + $0xd0] sm:$0xf]
      %v306 = vld [vmem:[%s221 + $0xd4] sm:$0xf]
      %v307 = vld [vmem:[%s221 + $0xd8] sm:$0xf]
      %v308 = vld [vmem:[%s221 + $0xdc] sm:$0xf]
      %v309 = vld [vmem:[%s221 + $0xe0] sm:$0xf]
      %v310 = vld [vmem:[%s221 + $0xe4] sm:$0xf]
      %v311 = vld [vmem:[%s221 + $0xe8] sm:$0xf]
      %v312 = vld [vmem:[%s221 + $0xec] sm:$0xf]
      %v313 = vld [vmem:[%s221 + $0xf0] sm:$0xf]
      %v314 = vld [vmem:[%s221 + $0xf4] sm:$0xf]
      %v315 = vld [vmem:[%s221 + $0xf8] sm:$0xf]
      %v316 = vld [vmem:[%s221 + $0xfc] sm:$0xf]
      %v317 = vld [vmem:[%s221 + $0x100] sm:$0xf]
      %v318 = vld [vmem:[%s221 + $0x104] sm:$0xf]
      %v319 = vld [vmem:[%s221 + $0x108] sm:$0xf]
      %v320 = vld [vmem:[%s221 + $0x10c] sm:$0xf]
      %v321 = vld [vmem:[%s221 + $0x110] sm:$0xf]
      %v322 = vld [vmem:[%s221 + $0x114] sm:$0xf]
      %v323 = vld [vmem:[%s221 + $0x118] sm:$0xf]
      %v324 = vld [vmem:[%s221 + $0x11c] sm:$0xf]
      %v325 = vld [vmem:[%s221 + $0x120] sm:$0xf]
      %v326 = vld [vmem:[%s221 + $0x124] sm:$0xf]
      %v327 = vld [vmem:[%s221 + $0x128] sm:$0xf]
      %v328 = vld [vmem:[%s221 + $0x12c] sm:$0xf]
      %v329 = vld [vmem:[%s221 + $0x130] sm:$0xf]
      %v330 = vld [vmem:[%s221 + $0x134] sm:$0xf]
      %v331 = vld [vmem:[%s221 + $0x138] sm:$0xf]
      %v332 = vld [vmem:[%s221 + $0x13c] sm:$0xf]
      %v333 = vld [vmem:[%s221 + $0x140] sm:$0xf]
      %v334 = vld [vmem:[%s221 + $0x144] sm:$0xf]
      %v335 = vld [vmem:[%s221 + $0x148] sm:$0xf]
      %v336 = vld [vmem:[%s221 + $0x14c] sm:$0xf]
      %v337 = vld [vmem:[%s221 + $0x150] sm:$0xf]
      %v338 = vld [vmem:[%s221 + $0x154] sm:$0xf]
      %v339 = vld [vmem:[%s221 + $0x158] sm:$0xf]
      %v340 = vld [vmem:[%s221 + $0x15c] sm:$0xf]
      %v341 = vld [vmem:[%s221 + $0x160] sm:$0xf]
      %v342 = vld [vmem:[%s221 + $0x164] sm:$0xf]
      %v343 = vld [vmem:[%s221 + $0x168] sm:$0xf]
      %v344 = vld [vmem:[%s221 + $0x16c] sm:$0xf]
      %v345 = vld [vmem:[%s221 + $0x170] sm:$0xf]
      %v346 = vld [vmem:[%s221 + $0x174] sm:$0xf]
      %v347 = vld [vmem:[%s221 + $0x178] sm:$0xf]
      %v348 = vld [vmem:[%s221 + $0x17c] sm:$0xf]
      %v349 = vld [vmem:[%s221 + $0x180] sm:$0xf]
      %v350 = vld [vmem:[%s221 + $0x184] sm:$0xf]
      %v351 = vld [vmem:[%s221 + $0x188] sm:$0xf]
      %v352 = vld [vmem:[%s221 + $0x18c] sm:$0xf]
      %v353 = vld [vmem:[%s221 + $0x190] sm:$0xf]
      %v354 = vld [vmem:[%s221 + $0x194] sm:$0xf]
      %v355 = vld [vmem:[%s221 + $0x198] sm:$0xf]
      %v356 = vld [vmem:[%s221 + $0x19c] sm:$0xf]
      %v357 = vld [vmem:[%s221 + $0x1a0] sm:$0xf]
      %v358 = vld [vmem:[%s221 + $0x1a4] sm:$0xf]
      %v359 = vld [vmem:[%s221 + $0x1a8] sm:$0xf]
      %v360 = vld [vmem:[%s221 + $0x1ac] sm:$0xf]
      %v361 = vld [vmem:[%s221 + $0x1b0] sm:$0xf]
      %v362 = vld [vmem:[%s221 + $0x1b4] sm:$0xf]
      %v363 = vld [vmem:[%s221 + $0x1b8] sm:$0xf]
      %v364 = vld [vmem:[%s221 + $0x1bc] sm:$0xf]
      %v365 = vld [vmem:[%s221 + $0x1c0] sm:$0xf]
      %v366 = vld [vmem:[%s221 + $0x1c4] sm:$0xf]
      %v367 = vld [vmem:[%s221 + $0x1c8] sm:$0xf]
      %v368 = vld [vmem:[%s221 + $0x1cc] sm:$0xf]
      %v369 = vld [vmem:[%s221 + $0x1d0] sm:$0xf]
      %v370 = vld [vmem:[%s221 + $0x1d4] sm:$0xf]
      %v371 = vld [vmem:[%s221 + $0x1d8] sm:$0xf]
      %v372 = vld [vmem:[%s221 + $0x1dc] sm:$0xf]
      %v373 = vld [vmem:[%s221 + $0x1e0] sm:$0xf]
      %v374 = vld [vmem:[%s221 + $0x1e4] sm:$0xf]
      %v375 = vld [vmem:[%s221 + $0x1e8] sm:$0xf]
      %v376 = vld [vmem:[%s221 + $0x1ec] sm:$0xf]
      %v377 = vld [vmem:[%s221 + $0x1f0] sm:$0xf]
      %v378 = vld [vmem:[%s221 + $0x1f4] sm:$0xf]
      %v379 = vld [vmem:[%s221 + $0x1f8] sm:$0xf]
      %v380 = vld [vmem:[%s221 + $0x1fc] sm:$0xf]
      %v509 = vunpack.c.l.b16 %v253
      %v510 = vunpack.c.l.b16 %v254
      %v511 = vunpack.c.l.b16 %v255
      %v512 = vunpack.c.l.b16 %v256
      %v513 = vunpack.c.l.b16 %v257
      %v514 = vunpack.c.l.b16 %v258
      %v515 = vunpack.c.l.b16 %v259
      %v516 = vunpack.c.l.b16 %v260
      %v517 = vunpack.c.l.b16 %v261
      %v518 = vunpack.c.l.b16 %v262
      %v519 = vunpack.c.l.b16 %v263
      %v520 = vunpack.c.l.b16 %v264
      %v521 = vunpack.c.l.b16 %v265
      %v522 = vunpack.c.l.b16 %v266
      %v523 = vunpack.c.l.b16 %v267
      %v524 = vunpack.c.l.b16 %v268
      %v525 = vunpack.c.l.b16 %v269
      %v526 = vunpack.c.l.b16 %v270
      %v527 = vunpack.c.l.b16 %v271
      %v528 = vunpack.c.l.b16 %v272
      %v529 = vunpack.c.l.b16 %v273
      %v530 = vunpack.c.l.b16 %v274
      %v531 = vunpack.c.l.b16 %v275
      %v532 = vunpack.c.l.b16 %v276
      %v533 = vunpack.c.l.b16 %v277
      %v534 = vunpack.c.l.b16 %v278
      %v535 = vunpack.c.l.b16 %v279
      %v536 = vunpack.c.l.b16 %v280
      %v537 = vunpack.c.l.b16 %v281
      %v538 = vunpack.c.l.b16 %v282
      %v539 = vunpack.c.l.b16 %v283
      %v540 = vunpack.c.l.b16 %v284
      %v541 = vunpack.c.l.b16 %v285
      %v542 = vunpack.c.l.b16 %v286
      %v543 = vunpack.c.l.b16 %v287
      %v544 = vunpack.c.l.b16 %v288
      %v545 = vunpack.c.l.b16 %v289
      %v546 = vunpack.c.l.b16 %v290
      %v547 = vunpack.c.l.b16 %v291
      %v548 = vunpack.c.l.b16 %v292
      %v549 = vunpack.c.l.b16 %v293
      %v550 = vunpack.c.l.b16 %v294
      %v551 = vunpack.c.l.b16 %v295
      %v552 = vunpack.c.l.b16 %v296
      %v553 = vunpack.c.l.b16 %v297
      %v554 = vunpack.c.l.b16 %v298
      %v555 = vunpack.c.l.b16 %v299
      %v556 = vunpack.c.l.b16 %v300
      %v557 = vunpack.c.l.b16 %v301
      %v558 = vunpack.c.l.b16 %v302
      %v559 = vunpack.c.l.b16 %v303
      %v560 = vunpack.c.l.b16 %v304
      %v561 = vunpack.c.l.b16 %v305
      %v562 = vunpack.c.l.b16 %v306
      %v563 = vunpack.c.l.b16 %v307
      %v564 = vunpack.c.l.b16 %v308
      %v565 = vunpack.c.l.b16 %v309
      %v566 = vunpack.c.l.b16 %v310
      %v567 = vunpack.c.l.b16 %v311
      %v568 = vunpack.c.l.b16 %v312
      %v569 = vunpack.c.l.b16 %v313
      %v570 = vunpack.c.l.b16 %v314
      %v571 = vunpack.c.l.b16 %v315
      %v572 = vunpack.c.l.b16 %v316
      %v573 = vunpack.c.l.b16 %v317
      %v574 = vunpack.c.l.b16 %v318
      %v575 = vunpack.c.l.b16 %v319
      %v576 = vunpack.c.l.b16 %v320
      %v577 = vunpack.c.l.b16 %v321
      %v578 = vunpack.c.l.b16 %v322
      %v579 = vunpack.c.l.b16 %v323
      %v580 = vunpack.c.l.b16 %v324
      %v581 = vunpack.c.l.b16 %v325
      %v582 = vunpack.c.l.b16 %v326
      %v583 = vunpack.c.l.b16 %v327
      %v584 = vunpack.c.l.b16 %v328
      %v585 = vunpack.c.l.b16 %v329
      %v586 = vunpack.c.l.b16 %v330
      %v587 = vunpack.c.l.b16 %v331
      %v588 = vunpack.c.l.b16 %v332
      %v589 = vunpack.c.l.b16 %v333
      %v590 = vunpack.c.l.b16 %v334
      %v591 = vunpack.c.l.b16 %v335
      %v592 = vunpack.c.l.b16 %v336
      %v593 = vunpack.c.l.b16 %v337
      %v594 = vunpack.c.l.b16 %v338
      %v595 = vunpack.c.l.b16 %v339
      %v596 = vunpack.c.l.b16 %v340
      %v597 = vunpack.c.l.b16 %v341
      %v598 = vunpack.c.l.b16 %v342
      %v599 = vunpack.c.l.b16 %v343
      %v600 = vunpack.c.l.b16 %v344
      %v601 = vunpack.c.l.b16 %v345
      %v602 = vunpack.c.l.b16 %v346
      %v603 = vunpack.c.l.b16 %v347
      %v604 = vunpack.c.l.b16 %v348
      %v605 = vunpack.c.l.b16 %v349
      %v606 = vunpack.c.l.b16 %v350
      %v607 = vunpack.c.l.b16 %v351
      %v608 = vunpack.c.l.b16 %v352
      %v609 = vunpack.c.l.b16 %v353
      %v610 = vunpack.c.l.b16 %v354
      %v611 = vunpack.c.l.b16 %v355
      %v612 = vunpack.c.l.b16 %v356
      %v613 = vunpack.c.l.b16 %v357
      %v614 = vunpack.c.l.b16 %v358
      %v615 = vunpack.c.l.b16 %v359
      %v616 = vunpack.c.l.b16 %v360
      %v617 = vunpack.c.l.b16 %v361
      %v618 = vunpack.c.l.b16 %v362
      %v619 = vunpack.c.l.b16 %v363
      %v620 = vunpack.c.l.b16 %v364
      %v621 = vunpack.c.l.b16 %v365
      %v622 = vunpack.c.l.b16 %v366
      %v623 = vunpack.c.l.b16 %v367
      %v624 = vunpack.c.l.b16 %v368
      %v625 = vunpack.c.l.b16 %v369
      %v626 = vunpack.c.l.b16 %v370
      %v627 = vunpack.c.l.b16 %v371
      %v628 = vunpack.c.l.b16 %v372
      %v629 = vunpack.c.l.b16 %v373
      %v630 = vunpack.c.l.b16 %v374
      %v631 = vunpack.c.l.b16 %v375
      %v632 = vunpack.c.l.b16 %v376
      %v633 = vunpack.c.l.b16 %v377
      %v634 = vunpack.c.l.b16 %v378
      %v635 = vunpack.c.l.b16 %v379
      %v636 = vunpack.c.l.b16 %v380
      %v637 = vpack.c.b16 %v510, %v509
      %v638 = vpack.c.b16 %v512, %v511
      %v639 = vpack.c.b16 %v514, %v513
      %v640 = vpack.c.b16 %v516, %v515
      %v641 = vpack.c.b16 %v518, %v517
      %v642 = vpack.c.b16 %v520, %v519
      %v643 = vpack.c.b16 %v522, %v521
      %v644 = vpack.c.b16 %v524, %v523
      %v645 = vpack.c.b16 %v526, %v525
      %v646 = vpack.c.b16 %v528, %v527
      %v647 = vpack.c.b16 %v530, %v529
      %v648 = vpack.c.b16 %v532, %v531
      %v649 = vpack.c.b16 %v534, %v533
      %v650 = vpack.c.b16 %v536, %v535
      %v651 = vpack.c.b16 %v538, %v537
      %v652 = vpack.c.b16 %v540, %v539
      %v653 = vpack.c.b16 %v542, %v541
      %v654 = vpack.c.b16 %v544, %v543
      %v655 = vpack.c.b16 %v546, %v545
      %v656 = vpack.c.b16 %v548, %v547
      %v657 = vpack.c.b16 %v550, %v549
      %v658 = vpack.c.b16 %v552, %v551
      %v659 = vpack.c.b16 %v554, %v553
      %v660 = vpack.c.b16 %v556, %v555
      %v661 = vpack.c.b16 %v558, %v557
      %v662 = vpack.c.b16 %v560, %v559
      %v663 = vpack.c.b16 %v562, %v561
      %v664 = vpack.c.b16 %v564, %v563
      %v665 = vpack.c.b16 %v566, %v565
      %v666 = vpack.c.b16 %v568, %v567
      %v667 = vpack.c.b16 %v570, %v569
      %v668 = vpack.c.b16 %v572, %v571
      %v669 = vpack.c.b16 %v574, %v573
      %v670 = vpack.c.b16 %v576, %v575
      %v671 = vpack.c.b16 %v578, %v577
      %v672 = vpack.c.b16 %v580, %v579
      %v673 = vpack.c.b16 %v582, %v581
      %v674 = vpack.c.b16 %v584, %v583
      %v675 = vpack.c.b16 %v586, %v585
      %v676 = vpack.c.b16 %v588, %v587
      %v677 = vpack.c.b16 %v590, %v589
      %v678 = vpack.c.b16 %v592, %v591
      %v679 = vpack.c.b16 %v594, %v593
      %v680 = vpack.c.b16 %v596, %v595
      %v681 = vpack.c.b16 %v598, %v597
      %v682 = vpack.c.b16 %v600, %v599
      %v683 = vpack.c.b16 %v602, %v601
      %v684 = vpack.c.b16 %v604, %v603
      %v685 = vpack.c.b16 %v606, %v605
      %v686 = vpack.c.b16 %v608, %v607
      %v687 = vpack.c.b16 %v610, %v609
      %v688 = vpack.c.b16 %v612, %v611
      %v689 = vpack.c.b16 %v614, %v613
      %v690 = vpack.c.b16 %v616, %v615
      %v691 = vpack.c.b16 %v618, %v617
      %v692 = vpack.c.b16 %v620, %v619
      %v693 = vpack.c.b16 %v622, %v621
      %v694 = vpack.c.b16 %v624, %v623
      %v695 = vpack.c.b16 %v626, %v625
      %v696 = vpack.c.b16 %v628, %v627
      %v697 = vpack.c.b16 %v630, %v629
      %v698 = vpack.c.b16 %v632, %v631
      %v699 = vpack.c.b16 %v634, %v633
      %v700 = vpack.c.b16 %v636, %v635
      %765 = vmatprep.subr.bf16.mxu0 0
      %766 = vmatpush1.bf16.msra.mxu0 %v637
      %767 = vmatprep.subr.bf16.mxu0 0
      %768 = vmatpush1.bf16.msra.mxu0 %v638
      %769 = vmatprep.subr.bf16.mxu0 0
      %770 = vmatpush1.bf16.msra.mxu0 %v639
      %771 = vmatprep.subr.bf16.mxu0 0
      %772 = vmatpush1.bf16.msra.mxu0 %v640
      %773 = vmatprep.subr.bf16.mxu0 0
      %774 = vmatpush1.bf16.msra.mxu0 %v641
      %775 = vmatprep.subr.bf16.mxu0 0
      %776 = vmatpush1.bf16.msra.mxu0 %v642
      %777 = vmatprep.subr.bf16.mxu0 0
      %778 = vmatpush1.bf16.msra.mxu0 %v643
      %779 = vmatprep.subr.bf16.mxu0 0
      %780 = vmatpush1.bf16.msra.mxu0 %v644
      %781 = vmatprep.subr.bf16.mxu0 0
      %782 = vmatpush1.bf16.msra.mxu0 %v645
      %783 = vmatprep.subr.bf16.mxu0 0
      %784 = vmatpush1.bf16.msra.mxu0 %v646
      %785 = vmatprep.subr.bf16.mxu0 0
      %786 = vmatpush1.bf16.msra.mxu0 %v647
      %787 = vmatprep.subr.bf16.mxu0 0
      %788 = vmatpush1.bf16.msra.mxu0 %v648
      %789 = vmatprep.subr.bf16.mxu0 0
      %790 = vmatpush1.bf16.msra.mxu0 %v649
      %791 = vmatprep.subr.bf16.mxu0 0
      %792 = vmatpush1.bf16.msra.mxu0 %v650
      %793 = vmatprep.subr.bf16.mxu0 0
      %794 = vmatpush1.bf16.msra.mxu0 %v651
      %795 = vmatprep.subr.bf16.mxu0 0
      %796 = vmatpush1.bf16.msra.mxu0 %v652
      %797 = vmatprep.mubr.bf16.mxu0 %v246
      %798 = vmatmul.mubr.bf16.gmra.mrb[0].mxu0 %v245
      %v799 = vpop.f32.mrb[0].mxu0
      %v800 = vadd.f32 0.0, %v799
      %v801 = vpop.f32.mrb[0].mxu0
      %v802 = vpop.f32.mrb[0].mxu0
      %v803 = vpop.f32.mrb[0].mxu0
      %804 = vdwg.mxu0
      %805 = vmatprep.subr.bf16.mxu0 0
      %806 = vmatpush1.bf16.msra.mxu0 %v653
      %807 = vmatprep.subr.bf16.mxu0 0
      %808 = vmatpush1.bf16.msra.mxu0 %v654
      %809 = vmatprep.subr.bf16.mxu0 0
      %810 = vmatpush1.bf16.msra.mxu0 %v655
      %811 = vmatprep.subr.bf16.mxu0 0
      %812 = vmatpush1.bf16.msra.mxu0 %v656
      %813 = vmatprep.subr.bf16.mxu0 0
      %814 = vmatpush1.bf16.msra.mxu0 %v657
      %815 = vmatprep.subr.bf16.mxu0 0
      %816 = vmatpush1.bf16.msra.mxu0 %v658
      %817 = vmatprep.subr.bf16.mxu0 0
      %818 = vmatpush1.bf16.msra.mxu0 %v659
      %819 = vmatprep.subr.bf16.mxu0 0
      %820 = vmatpush1.bf16.msra.mxu0 %v660
      %821 = vmatprep.subr.bf16.mxu0 0
      %822 = vmatpush1.bf16.msra.mxu0 %v661
      %823 = vmatprep.subr.bf16.mxu0 0
      %824 = vmatpush1.bf16.msra.mxu0 %v662
      %825 = vmatprep.subr.bf16.mxu0 0
      %826 = vmatpush1.bf16.msra.mxu0 %v663
      %827 = vmatprep.subr.bf16.mxu0 0
      %828 = vmatpush1.bf16.msra.mxu0 %v664
      %829 = vmatprep.subr.bf16.mxu0 0
      %830 = vmatpush1.bf16.msra.mxu0 %v665
      %831 = vmatprep.subr.bf16.mxu0 0
      %832 = vmatpush1.bf16.msra.mxu0 %v666
      %833 = vmatprep.subr.bf16.mxu0 0
      %834 = vmatpush1.bf16.msra.mxu0 %v667
      %835 = vmatprep.subr.bf16.mxu0 0
      %836 = vmatpush1.bf16.msra.mxu0 %v668
      %837 = vmatprep.mubr.bf16.mxu0 %v248
      %838 = vmatmul.mubr.bf16.gmra.mrb[0].mxu0 %v247
      %v839 = vpop.f32.mrb[0].mxu0
      %v840 = vadd.f32 %v800, %v839
      %v841 = vpop.f32.mrb[0].mxu0
      %v842 = vpop.f32.mrb[0].mxu0
      %v843 = vpop.f32.mrb[0].mxu0
      %844 = vdwg.mxu0
      %845 = vmatprep.subr.bf16.mxu0 0
      %846 = vmatpush1.bf16.msra.mxu0 %v669
      %847 = vmatprep.subr.bf16.mxu0 0
      %848 = vmatpush1.bf16.msra.mxu0 %v670
      %849 = vmatprep.subr.bf16.mxu0 0
      %850 = vmatpush1.bf16.msra.mxu0 %v671
      %851 = vmatprep.subr.bf16.mxu0 0
      %852 = vmatpush1.bf16.msra.mxu0 %v672
      %853 = vmatprep.subr.bf16.mxu0 0
      %854 = vmatpush1.bf16.msra.mxu0 %v673
      %855 = vmatprep.subr.bf16.mxu0 0
      %856 = vmatpush1.bf16.msra.mxu0 %v674
      %857 = vmatprep.subr.bf16.mxu0 0
      %858 = vmatpush1.bf16.msra.mxu0 %v675
      %859 = vmatprep.subr.bf16.mxu0 0
      %860 = vmatpush1.bf16.msra.mxu0 %v676
      %861 = vmatprep.subr.bf16.mxu0 0
      %862 = vmatpush1.bf16.msra.mxu0 %v677
      %863 = vmatprep.subr.bf16.mxu0 0
      %864 = vmatpush1.bf16.msra.mxu0 %v678
      %865 = vmatprep.subr.bf16.mxu0 0
      %866 = vmatpush1.bf16.msra.mxu0 %v679
      %867 = vmatprep.subr.bf16.mxu0 0
      %868 = vmatpush1.bf16.msra.mxu0 %v680
      %869 = vmatprep.subr.bf16.mxu0 0
      %870 = vmatpush1.bf16.msra.mxu0 %v681
      %871 = vmatprep.subr.bf16.mxu0 0
      %872 = vmatpush1.bf16.msra.mxu0 %v682
      %873 = vmatprep.subr.bf16.mxu0 0
      %874 = vmatpush1.bf16.msra.mxu0 %v683
      %875 = vmatprep.subr.bf16.mxu0 0
      %876 = vmatpush1.bf16.msra.mxu0 %v684
      %877 = vmatprep.mubr.bf16.mxu0 %v250
      %878 = vmatmul.mubr.bf16.gmra.mrb[0].mxu0 %v249
      %v879 = vpop.f32.mrb[0].mxu0
      %v880 = vadd.f32 %v840, %v879
      %v881 = vpop.f32.mrb[0].mxu0
      %v882 = vpop.f32.mrb[0].mxu0
      %v883 = vpop.f32.mrb[0].mxu0
      %884 = vdwg.mxu0
      %885 = vmatprep.subr.bf16.mxu0 0
      %886 = vmatpush1.bf16.msra.mxu0 %v685
      %887 = vmatprep.subr.bf16.mxu0 0
      %888 = vmatpush1.bf16.msra.mxu0 %v686
      %889 = vmatprep.subr.bf16.mxu0 0
      %890 = vmatpush1.bf16.msra.mxu0 %v687
      %891 = vmatprep.subr.bf16.mxu0 0
      %892 = vmatpush1.bf16.msra.mxu0 %v688
      %893 = vmatprep.subr.bf16.mxu0 0
      %894 = vmatpush1.bf16.msra.mxu0 %v689
      %895 = vmatprep.subr.bf16.mxu0 0
      %896 = vmatpush1.bf16.msra.mxu0 %v690
      %897 = vmatprep.subr.bf16.mxu0 0
      %898 = vmatpush1.bf16.msra.mxu0 %v691
      %899 = vmatprep.subr.bf16.mxu0 0
      %900 = vmatpush1.bf16.msra.mxu0 %v692
      %901 = vmatprep.subr.bf16.mxu0 0
      %902 = vmatpush1.bf16.msra.mxu0 %v693
      %903 = vmatprep.subr.bf16.mxu0 0
      %904 = vmatpush1.bf16.msra.mxu0 %v694
      %905 = vmatprep.subr.bf16.mxu0 0
      %906 = vmatpush1.bf16.msra.mxu0 %v695
      %907 = vmatprep.subr.bf16.mxu0 0
      %908 = vmatpush1.bf16.msra.mxu0 %v696
      %909 = vmatprep.subr.bf16.mxu0 0
      %910 = vmatpush1.bf16.msra.mxu0 %v697
      %911 = vmatprep.subr.bf16.mxu0 0
      %912 = vmatpush1.bf16.msra.mxu0 %v698
      %913 = vmatprep.subr.bf16.mxu0 0
      %914 = vmatpush1.bf16.msra.mxu0 %v699
      %915 = vmatprep.subr.bf16.mxu0 0
      %916 = vmatpush1.bf16.msra.mxu0 %v700
      %917 = vmatprep.mubr.bf16.mxu0 %v252
      %918 = vmatmul.mubr.bf16.gmra.mrb[0].mxu0 %v251
      %v919 = vpop.f32.mrb[0].mxu0
      %v920 = vadd.f32 %v880, %v919
      %v921 = vpop.f32.mrb[0].mxu0
      %v922 = vpop.f32.mrb[0].mxu0
      %v923 = vpop.f32.mrb[0].mxu0
      %924 = vdwg.mxu0
      %v925 = vadd.f32 %v236, %v920
      %926 = vst [vmem:[#allocation2] sm:$0xff] %v925
      %p927 = scmp.eq.s32.totalorder %s19, 3
      // Predicated region
      $region37: #{convnet_forward.5} parent=31 // pred_check
        %p928 = pneg %p927
      $region38: #{convnet_forward.5} parent=31 // pred_check_branch
        %930 = sbr.rel (%p928) target = $region40
      $region39: #{convnet_forward.5} parent=31 // pred_region
        %v931 = vld [vmem:[#allocation2] sm:$0xff]
        %v932 = vld [vmem:[%s225] sm:$0x1]
        %v934 = vlaneseq
        %v935 = vshrl.u32 %v934, 7
        %v936 = vsub.s32 0, %v935
        %v937 = vrot.slane %v932, %v936
        %v939 = vadd.f32 %v931, %v937
        %940 = vst [vmem:[%s229] sm:$0xff] %v939
      $region40: #{convnet_forward.5} parent=31 // pred_fallthru
        _
      %p941 = scmp.lt.s32.totalorder %s18, 0
      %s942 = scalar_select %p941, %s18, 0
      %s943 = smul.addr %s942, 8
      %s944 = scalar_lea.vmem %s3, %s943
      // Predicated region
      $region41: #{convnet_forward.5} parent=31 // pred_check
        %p945 = pneg %p124
      $region42: #{convnet_forward.5} parent=31 // pred_check_branch
        %947 = sbr.rel (%p945) target = $region44
      $region43: #{convnet_forward.5} parent=31 // pred_region
        _
      $region44: #{convnet_forward.5} parent=31 // pred_fallthru
        _
      // Predicated region
      $region45: #{convnet_forward.5} parent=31 // pred_check
        %p948 = pneg %p124
      $region46: #{convnet_forward.5} parent=31 // pred_check_branch
        %950 = sbr.rel (%p948) target = $region48
      $region47: #{convnet_forward.5} parent=31 // pred_region
        %p951 = scmp.lt.s32.totalorder %s18, 0
        %s952 = scalar_select %p951, %s18, 0
        %s953 = smul.addr %s952, 8
        %s954 = scalar_lea.vmem %s3, %s953
      $region48: #{convnet_forward.5} parent=31 // pred_fallthru
        _
    $region32: #{convnet_forward.5} parent=5 // pred_fallthru
      _
    %p955 = scmp.le.s32.totalorder 2, %s9
    // Predicated region
    $region49: #{convnet_forward.5} parent=5 // pred_check
      %p956 = pneg %p955
    $region50: #{convnet_forward.5} parent=5 // pred_check_branch
      %958 = sbr.rel (%p956) target = $region52
    $region51: #{convnet_forward.5} parent=5 // pred_region
      %s959 = ssub.s32 %s9, 2
    $region52: #{convnet_forward.5} parent=5 // pred_fallthru
      _
  $region6: #{convnet_forward.5} parent=0 // loop_footer
    %s13 = sadd.s32 1, %s9
  $region7: #{convnet_forward.5} parent=0 // loop_footer_branch
    %8 = sbr.rel target = $region3
  $region8: #{convnet_forward.5} parent=0 // loop_exit
    _

// kernel: convnet_forward.3
$region0: #{convnet_forward.3}
  #allocation0 [shape = 'u32[]', space=smem, size = 0x4, offset = 0x4, fixed_abs, tag = 'smem constant byte address 0x4 - core index']
  #allocation1 [shape = 'u32[144,128]{1,0:T(1,128)}', space=vmem, size = 0x12000, scoped, tag = 'internal scratch']
  #allocation2 [shape = 'f32[10,10,32]{2,1,0:T(8,128)}', space=vmem, size = 0x14000, scoped, tag = 'scratch operand']
  #allocation3 [shape = 'f32[64,288]{1,0:T(8,128)}', space=vmem, size = 0x18000, scoped, tag = 'scratch operand']
  %s0 = inlined_call_operand.vmem [shape: bf16[2,256,32], index: 0, kind: input, shape index: {}]
  %s1 = inlined_call_operand.hbm [shape: bf16[32,32], index: 1, kind: input, shape index: {}]
  %s2 = inlined_call_operand.hbm [shape: f32[1,32], index: 2, kind: input, shape index: {}]
  %s3 = inlined_call_operand.hbm [shape: f32[1,32], index: 3, kind: input, shape index: {}]
  %s4 = inlined_call_operand.vmem [shape: bf16[288,32], index: 4, kind: input, shape index: {}]
  %s5 = inlined_call_operand.hbm [shape: f32[1,32], index: 5, kind: input, shape index: {}]
  %s6 = inlined_call_operand.hbm [shape: f32[1,32], index: 6, kind: input, shape index: {}]
  %s7 = inlined_call_operand.vmem [shape: bf16[288,32], index: 7, kind: input, shape index: {}]
  %s8 = inlined_call_operand.hbm [shape: f32[1,32], index: 8, kind: input, shape index: {}]
  %s9 = inlined_call_operand.hbm [shape: f32[1,32], index: 9, kind: input, shape index: {}]
  %s10 = inlined_call_operand.vmem [shape: bf16[2,64,32], index: 10, kind: output, shape index: {}]
  %s11 = sld [smem:[#allocation0]]
  $region101: #{convnet_forward.3} parent=0
    _
  %s13 = ssub.s32 1, %s11
  %s14 = scalar_select 0, %s13, %s11
  $region1: #{convnet_forward.3} parent=0
    #allocation4 [shape = 'u8[8192]{0}', space=vmem, size = 0x2000, scoped, tag = 'input window, operand 1, single buffered']
    #allocation5 [shape = 's32[2]{0}', space=sflag, size = 0x8, scoped, tag = 'scoped memory for convnet_forward.3']
    #allocation6 [shape = 'u8[512]{0}', space=vmem, size = 0x400, scoped, tag = 'input window, operand 2, single buffered']
    #allocation7 [shape = 's32[1]{0}', space=sflag, size = 0x4, scoped, tag = 'scoped memory for convnet_forward.3']
    #allocation8 [shape = 'u8[512]{0}', space=vmem, size = 0x400, scoped, tag = 'input window, operand 3, single buffered']
    #allocation9 [shape = 'u8[512]{0}', space=vmem, size = 0x400, scoped, tag = 'input window, operand 5, single buffered']
    #allocation10 [shape = 's32[1]{0}', space=sflag, size = 0x4, scoped, tag = 'scoped memory for convnet_forward.3']
    #allocation11 [shape = 'u8[512]{0}', space=vmem, size = 0x400, scoped, tag = 'input window, operand 6, single buffered']
    #allocation12 [shape = 'u8[512]{0}', space=vmem, size = 0x400, scoped, tag = 'input window, operand 8, single buffered']
    #allocation13 [shape = 's32[1]{0}', space=sflag, size = 0x4, scoped, tag = 'scoped memory for convnet_forward.3']
    #allocation14 [shape = 'u8[512]{0}', space=vmem, size = 0x400, scoped, tag = 'input window, operand 9, single buffered']
    %15 = vsyncpa [#allocation5], 0
    %16 = vsyncpa [#allocation7], 0
    %17 = vsyncpa [#allocation10], 0
    %18 = vsyncpa [#allocation13], 0
    loop: start=0, step=1, limit=4
    $region2: #{convnet_forward.3} parent=1 // loop_pre_header
      _
    $region3: #{convnet_forward.3} parent=1 // loop_header
      %s20 = sphi 0, %s24
      %p21 = scmp.ge.s32.totalorder %s20, 4
      %s30 = sphi 0, %s32
      %s33 = sphi 0, %s30
      %s34 = sphi 0, %s33
      %s50 = sphi 0, %s34
      %s54 = sphi 0, %s54
      %s56 = sphi 0, %s54
      %s57 = sphi 0, %s56
      %s71 = sphi 0, %s57
      %s75 = sphi 0, %s75
      %s77 = sphi 0, %s75
      %s78 = sphi 0, %s77
      %s92 = sphi 0, %s78
      %s96 = sphi 0, %s96
      %s98 = sphi 0, %s96
      %s99 = sphi 0, %s98
      %s113 = sphi 0, %s99
      %s117 = sphi 0, %s117
      %s119 = sphi 0, %s117
      %s120 = sphi 0, %s119
      %s134 = sphi 0, %s120
      %s138 = sphi 0, %s138
      %s140 = sphi 0, %s138
      %s141 = sphi 0, %s140
      %s155 = sphi 0, %s141
      %s159 = sphi 0, %s159
      %s161 = sphi 0, %s159
      %s162 = sphi 0, %s161
      %s176 = sphi 0, %s162
      %s180 = sphi 0, %s180
      %s182 = sphi 0, %s180
      %s183 = sphi 0, %s182
      %s197 = sphi 0, %s183
      %s201 = sphi 0, %s201
      %s203 = sphi 0, %s201
      %s204 = sphi 0, %s203
      %s218 = sphi 0, %s204
      %s222 = sphi 0, %s222
      %s224 = sphi 0, %s222
      %s225 = sphi 0, %s224
      %s239 = sphi 0, %s225
      %s245 = sphi 0, %s247
      %s248 = sphi 0, %s245
      %s249 = sphi 0, %s248
      %s265 = sphi 0, %s249
    $region4: #{convnet_forward.3} parent=1 // loop_header_branch
      %23 = sbr.rel (%p21) target = $region8
    $region5: #{convnet_forward.3} parent=1 // loop_body
      %s25 = ssub.s32 %s20, 1
      %s26 = ssub.s32 %s20, 2
      %s27 = sadd.s32 %s20, 1
      %s28 = ssub.s32 %s20, %s27
      %p29 = scmp.eq.s32.totalorder %s28, 0
      %s31 = sadd.s32 %s30, 1
      %s32 = scalar_select %p29, %s30, %s31
      %p35 = pneg %p29
      %p36 = scmp.eq.s32.totalorder %s20, 1
      %p37 = por %p35, %p36
      %p38 = scmp.ne.s32.totalorder %s30, %s33
      %p39 = scmp.eq.s32.totalorder %s20, 0
      %p40 = por %p38, %p39
      %p41 = scmp.ne.s32.totalorder %s30, %s33
      %p42 = scmp.eq.s32.totalorder %s25, 1
      %p43 = por %p41, %p42
      %p44 = scmp.ne.s32.totalorder %s33, %s34
      %p45 = scmp.eq.s32.totalorder %s25, 0
      %p46 = por %p44, %p45
      %p47 = scmp.ne.s32.totalorder %s33, %s34
      %p48 = scmp.eq.s32.totalorder %s26, 1
      %p49 = por %p47, %p48
      %p51 = scmp.ne.s32.totalorder %s34, %s50
      %p52 = scmp.eq.s32.totalorder %s26, 0
      %p53 = por %p51, %p52
      %s55 = sadd.s32 %s54, 1
      %p58 = scmp.eq.s32.totalorder %s20, 1
      %p59 = scmp.ne.s32.totalorder %s54, %s56
      %p60 = scmp.eq.s32.totalorder %s20, 0
      %p61 = por %p59, %p60
      %p62 = scmp.ne.s32.totalorder %s54, %s56
      %p63 = scmp.eq.s32.totalorder %s25, 1
      %p64 = por %p62, %p63
      %p65 = scmp.ne.s32.totalorder %s56, %s57
      %p66 = scmp.eq.s32.totalorder %s25, 0
      %p67 = por %p65, %p66
      %p68 = scmp.ne.s32.totalorder %s56, %s57
      %p69 = scmp.eq.s32.totalorder %s26, 1
      %p70 = por %p68, %p69
      %p72 = scmp.ne.s32.totalorder %s57, %s71
      %p73 = scmp.eq.s32.totalorder %s26, 0
      %p74 = por %p72, %p73
      %s76 = sadd.s32 %s75, 1
      %p79 = scmp.eq.s32.totalorder %s20, 1
      %p80 = scmp.ne.s32.totalorder %s75, %s77
      %p81 = scmp.eq.s32.totalorder %s20, 0
      %p82 = por %p80, %p81
      %p83 = scmp.ne.s32.totalorder %s75, %s77
      %p84 = scmp.eq.s32.totalorder %s25, 1
      %p85 = por %p83, %p84
      %p86 = scmp.ne.s32.totalorder %s77, %s78
      %p87 = scmp.eq.s32.totalorder %s25, 0
      %p88 = por %p86, %p87
      %p89 = scmp.ne.s32.totalorder %s77, %s78
      %p90 = scmp.eq.s32.totalorder %s26, 1
      %p91 = por %p89, %p90
      %p93 = scmp.ne.s32.totalorder %s78, %s92
      %p94 = scmp.eq.s32.totalorder %s26, 0
      %p95 = por %p93, %p94
      %s97 = sadd.s32 %s96, 1
      %p100 = scmp.eq.s32.totalorder %s20, 1
      %p101 = scmp.ne.s32.totalorder %s96, %s98
      %p102 = scmp.eq.s32.totalorder %s20, 0
      %p103 = por %p101, %p102
      %p104 = scmp.ne.s32.totalorder %s96, %s98
      %p105 = scmp.eq.s32.totalorder %s25, 1
      %p106 = por %p104, %p105
      %p107 = scmp.ne.s32.totalorder %s98, %s99
      %p108 = scmp.eq.s32.totalorder %s25, 0
      %p109 = por %p107, %p108
      %p110 = scmp.ne.s32.totalorder %s98, %s99
      %p111 = scmp.eq.s32.totalorder %s26, 1
      %p112 = por %p110, %p111
      %p114 = scmp.ne.s32.totalorder %s99, %s113
      %p115 = scmp.eq.s32.totalorder %s26, 0
      %p116 = por %p114, %p115
      %s118 = sadd.s32 %s117, 1
      %p121 = scmp.eq.s32.totalorder %s20, 1
      %p122 = scmp.ne.s32.totalorder %s117, %s119
      %p123 = scmp.eq.s32.totalorder %s20, 0
      %p124 = por %p122, %p123
      %p125 = scmp.ne.s32.totalorder %s117, %s119
      %p126 = scmp.eq.s32.totalorder %s25, 1
      %p127 = por %p125, %p126
      %p128 = scmp.ne.s32.totalorder %s119, %s120
      %p129 = scmp.eq.s32.totalorder %s25, 0
      %p130 = por %p128, %p129
      %p131 = scmp.ne.s32.totalorder %s119, %s120
      %p132 = scmp.eq.s32.totalorder %s26, 1
      %p133 = por %p131, %p132
      %p135 = scmp.ne.s32.totalorder %s120, %s134
      %p136 = scmp.eq.s32.totalorder %s26, 0
      %p137 = por %p135, %p136
      %s139 = sadd.s32 %s138, 1
      %p142 = scmp.eq.s32.totalorder %s20, 1
      %p143 = scmp.ne.s32.totalorder %s138, %s140
      %p144 = scmp.eq.s32.totalorder %s20, 0
      %p145 = por %p143, %p144
      %p146 = scmp.ne.s32.totalorder %s138, %s140
      %p147 = scmp.eq.s32.totalorder %s25, 1
      %p148 = por %p146, %p147
      %p149 = scmp.ne.s32.totalorder %s140, %s141
      %p150 = scmp.eq.s32.totalorder %s25, 0
      %p151 = por %p149, %p150
      %p152 = scmp.ne.s32.totalorder %s140, %s141
      %p153 = scmp.eq.s32.totalorder %s26, 1
      %p154 = por %p152, %p153
      %p156 = scmp.ne.s32.totalorder %s141, %s155
      %p157 = scmp.eq.s32.totalorder %s26, 0
      %p158 = por %p156, %p157
      %s160 = sadd.s32 %s159, 1
      %p163 = scmp.eq.s32.totalorder %s20, 1
      %p164 = scmp.ne.s32.totalorder %s159, %s161
      %p165 = scmp.eq.s32.totalorder %s20, 0
      %p166 = por %p164, %p165
      %p167 = scmp.ne.s32.totalorder %s159, %s161
      %p168 = scmp.eq.s32.totalorder %s25, 1
      %p169 = por %p167, %p168
      %p170 = scmp.ne.s32.totalorder %s161, %s162
      %p171 = scmp.eq.s32.totalorder %s25, 0
      %p172 = por %p170, %p171
      %p173 = scmp.ne.s32.totalorder %s161, %s162
      %p174 = scmp.eq.s32.totalorder %s26, 1
      %p175 = por %p173, %p174
      %p177 = scmp.ne.s32.totalorder %s162, %s176
      %p178 = scmp.eq.s32.totalorder %s26, 0
      %p179 = por %p177, %p178
      %s181 = sadd.s32 %s180, 1
      %p184 = scmp.eq.s32.totalorder %s20, 1
      %p185 = scmp.ne.s32.totalorder %s180, %s182
      %p186 = scmp.eq.s32.totalorder %s20, 0
      %p187 = por %p185, %p186
      %p188 = scmp.ne.s32.totalorder %s180, %s182
      %p189 = scmp.eq.s32.totalorder %s25, 1
      %p190 = por %p188, %p189
      %p191 = scmp.ne.s32.totalorder %s182, %s183
      %p192 = scmp.eq.s32.totalorder %s25, 0
      %p193 = por %p191, %p192
      %p194 = scmp.ne.s32.totalorder %s182, %s183
      %p195 = scmp.eq.s32.totalorder %s26, 1
      %p196 = por %p194, %p195
      %p198 = scmp.ne.s32.totalorder %s183, %s197
      %p199 = scmp.eq.s32.totalorder %s26, 0
      %p200 = por %p198, %p199
      %s202 = sadd.s32 %s201, 1
      %p205 = scmp.eq.s32.totalorder %s20, 1
      %p206 = scmp.ne.s32.totalorder %s201, %s203
      %p207 = scmp.eq.s32.totalorder %s20, 0
      %p208 = por %p206, %p207
      %p209 = scmp.ne.s32.totalorder %s201, %s203
      %p210 = scmp.eq.s32.totalorder %s25, 1
      %p211 = por %p209, %p210
      %p212 = scmp.ne.s32.totalorder %s203, %s204
      %p213 = scmp.eq.s32.totalorder %s25, 0
      %p214 = por %p212, %p213
      %p215 = scmp.ne.s32.totalorder %s203, %s204
      %p216 = scmp.eq.s32.totalorder %s26, 1
      %p217 = por %p215, %p216
      %p219 = scmp.ne.s32.totalorder %s204, %s218
      %p220 = scmp.eq.s32.totalorder %s26, 0
      %p221 = por %p219, %p220
      %s223 = sadd.s32 %s222, 1
      %p226 = scmp.eq.s32.totalorder %s20, 1
      %p227 = scmp.ne.s32.totalorder %s222, %s224
      %p228 = scmp.eq.s32.totalorder %s20, 0
      %p229 = por %p227, %p228
      %p230 = scmp.ne.s32.totalorder %s222, %s224
      %p231 = scmp.eq.s32.totalorder %s25, 1
      %p232 = por %p230, %p231
      %p233 = scmp.ne.s32.totalorder %s224, %s225
      %p234 = scmp.eq.s32.totalorder %s25, 0
      %p235 = por %p233, %p234
      %p236 = scmp.ne.s32.totalorder %s224, %s225
      %p237 = scmp.eq.s32.totalorder %s26, 1
      %p238 = por %p236, %p237
      %p240 = scmp.ne.s32.totalorder %s225, %s239
      %p241 = scmp.eq.s32.totalorder %s26, 0
      %p242 = por %p240, %p241
      %s243 = ssub.s32 %s20, %s27
      %p244 = scmp.eq.s32.totalorder %s243, 0
      %s246 = sadd.s32 %s245, 1
      %s247 = scalar_select %p244, %s245, %s246
      %p250 = pneg %p244
      %p251 = scmp.eq.s32.totalorder %s20, 1
      %p252 = por %p250, %p251
      %p253 = scmp.ne.s32.totalorder %s245, %s248
      %p254 = scmp.eq.s32.totalorder %s20, 0
      %p255 = por %p253, %p254
      %p256 = scmp.ne.s32.totalorder %s245, %s248
      %p257 = scmp.eq.s32.totalorder %s25, 1
      %p258 = por %p256, %p257
      %p259 = scmp.ne.s32.totalorder %s248, %s249
      %p260 = scmp.eq.s32.totalorder %s25, 0
      %p261 = por %p259, %p260
      %p262 = scmp.ne.s32.totalorder %s248, %s249
      %p263 = scmp.eq.s32.totalorder %s26, 1
      %p264 = por %p262, %p263
      %p266 = scmp.ne.s32.totalorder %s249, %s265
      %p267 = scmp.eq.s32.totalorder %s26, 0
      %p268 = por %p266, %p267
      %p269 = scmp.le.s32.totalorder 1, %s20
      %p270 = scmp.lt.s32.totalorder %s20, 3
      %p271 = pnand %p269, %p270
      %p272 = pneg %p271
      // Predicated region
      $region9: #{convnet_forward.3} parent=5 // pred_check
        _
      $region10: #{convnet_forward.3} parent=5 // pred_check_branch
        %274 = sbr.rel (%p271) target = $region12
      $region11: #{convnet_forward.3} parent=5 // pred_region
        %s275 = ssub.s32 %s20, 1
        // Predicated region
        $region13: #{convnet_forward.3} parent=11 // pred_check
          %p276 = pneg %p67
        $region14: #{convnet_forward.3} parent=11 // pred_check_branch
          %278 = sbr.rel (%p276) target = $region16
        $region15: #{convnet_forward.3} parent=11 // pred_region
          %s280 = ssub.s32 256, 256
          %281 = vsyncadd [#allocation5], %s280
          %s282 = sshll.u32 [#allocation4], 4
          %s283 = int_to_ptr.vmem [resolvable:$true] %s282
          %288 = dma.hbm_to_vmem [thread:$0]  %s1, 256, %s283, [#allocation5], 64, 64, 4
        $region16: #{convnet_forward.3} parent=11 // pred_fallthru
          _
        // Predicated region
        $region17: #{convnet_forward.3} parent=11 // pred_check
          %p289 = pneg %p88
        $region18: #{convnet_forward.3} parent=11 // pred_check_branch
          %291 = sbr.rel (%p289) target = $region20
        $region19: #{convnet_forward.3} parent=11 // pred_region
          %s293 = ssub.s32 16, 16
          %294 = vsyncadd [#allocation7], %s293
          %s296 = sshll.u32 [#allocation6], 4
          %s297 = int_to_ptr.vmem [resolvable:$true] %s296
          %299 = dma.hbm_to_vmem [thread:$0]  %s2, 16, %s297, [#allocation7]
        $region20: #{convnet_forward.3} parent=11 // pred_fallthru
          _
        // Predicated region
        $region21: #{convnet_forward.3} parent=11 // pred_check
          %p300 = pneg %p109
        $region22: #{convnet_forward.3} parent=11 // pred_check_branch
          %302 = sbr.rel (%p300) target = $region24
        $region23: #{convnet_forward.3} parent=11 // pred_region
          %s304 = ssub.s32 16, 16
          %305 = vsyncadd [#allocation7], %s304
          %s307 = sshll.u32 [#allocation8], 4
          %s308 = int_to_ptr.vmem [resolvable:$true] %s307
          %310 = dma.hbm_to_vmem [thread:$0]  %s3, 16, %s308, [#allocation7]
        $region24: #{convnet_forward.3} parent=11 // pred_fallthru
          _
        // Predicated region
        $region25: #{convnet_forward.3} parent=11 // pred_check
          %p311 = pneg %p130
        $region26: #{convnet_forward.3} parent=11 // pred_check_branch
          %313 = sbr.rel (%p311) target = $region28
        $region27: #{convnet_forward.3} parent=11 // pred_region
          _
        $region28: #{convnet_forward.3} parent=11 // pred_fallthru
          _
        // Predicated region
        $region29: #{convnet_forward.3} parent=11 // pred_check
          %p314 = pneg %p151
        $region30: #{convnet_forward.3} parent=11 // pred_check_branch
          %316 = sbr.rel (%p314) target = $region32
        $region31: #{convnet_forward.3} parent=11 // pred_region
          %s318 = ssub.s32 16, 16
          %319 = vsyncadd [#allocation10], %s318
          %s321 = sshll.u32 [#allocation9], 4
          %s322 = int_to_ptr.vmem [resolvable:$true] %s321
          %324 = dma.hbm_to_vmem [thread:$0]  %s5, 16, %s322, [#allocation10]
        $region32: #{convnet_forward.3} parent=11 // pred_fallthru
          _
        // Predicated region
        $region33: #{convnet_forward.3} parent=11 // pred_check
          %p325 = pneg %p172
        $region34: #{convnet_forward.3} parent=11 // pred_check_branch
          %327 = sbr.rel (%p325) target = $region36
        $region35: #{convnet_forward.3} parent=11 // pred_region
          %s329 = ssub.s32 16, 16
          %330 = vsyncadd [#allocation10], %s329
          %s332 = sshll.u32 [#allocation11], 4
          %s333 = int_to_ptr.vmem [resolvable:$true] %s332
          %335 = dma.hbm_to_vmem [thread:$0]  %s6, 16, %s333, [#allocation10]
        $region36: #{convnet_forward.3} parent=11 // pred_fallthru
          _
        // Predicated region
        $region37: #{convnet_forward.3} parent=11 // pred_check
          %p336 = pneg %p193
        $region38: #{convnet_forward.3} parent=11 // pred_check_branch
          %338 = sbr.rel (%p336) target = $region40
        $region39: #{convnet_forward.3} parent=11 // pred_region
          _
        $region40: #{convnet_forward.3} parent=11 // pred_fallthru
          _
        // Predicated region
        $region41: #{convnet_forward.3} parent=11 // pred_check
          %p339 = pneg %p214
        $region42: #{convnet_forward.3} parent=11 // pred_check_branch
          %341 = sbr.rel (%p339) target = $region44
        $region43: #{convnet_forward.3} parent=11 // pred_region
          %s343 = ssub.s32 16, 16
          %344 = vsyncadd [#allocation13], %s343
          %s346 = sshll.u32 [#allocation12], 4
          %s347 = int_to_ptr.vmem [resolvable:$true] %s346
          %349 = dma.hbm_to_vmem [thread:$0]  %s8, 16, %s347, [#allocation13]
        $region44: #{convnet_forward.3} parent=11 // pred_fallthru
          _
        // Predicated region
        $region45: #{convnet_forward.3} parent=11 // pred_check
          %p350 = pneg %p235
        $region46: #{convnet_forward.3} parent=11 // pred_check_branch
          %352 = sbr.rel (%p350) target = $region48
        $region47: #{convnet_forward.3} parent=11 // pred_region
          %s354 = ssub.s32 16, 16
          %355 = vsyncadd [#allocation13], %s354
          %s357 = sshll.u32 [#allocation14], 4
          %s358 = int_to_ptr.vmem [resolvable:$true] %s357
          %360 = dma.hbm_to_vmem [thread:$0]  %s9, 16, %s358, [#allocation13]
        $region48: #{convnet_forward.3} parent=11 // pred_fallthru
          _
      $region12: #{convnet_forward.3} parent=5 // pred_fallthru
        _
      %p361 = scmp.lt.s32.totalorder %s20, 2
      // Predicated region
      $region49: #{convnet_forward.3} parent=5 // pred_check
        %p362 = pneg %p361
      $region50: #{convnet_forward.3} parent=5 // pred_check_branch
        %364 = sbr.rel (%p362) target = $region52
      $region51: #{convnet_forward.3} parent=5 // pred_region
        // Predicated region
        $region53: #{convnet_forward.3} parent=51 // pred_check
          %p365 = pneg %p40
        $region54: #{convnet_forward.3} parent=51 // pred_check_branch
          %367 = sbr.rel (%p365) target = $region56
        $region55: #{convnet_forward.3} parent=51 // pred_region
          %p368 = scmp.lt.s32.totalorder %s20, 1
          %s369 = scalar_select %p368, %s20, 1
          %s370 = smul.addr %s369, 32
          %s371 = smul.addr %s370, 4
          %s372 = scalar_lea.vmem %s0, %s371
        $region56: #{convnet_forward.3} parent=51 // pred_fallthru
          _
      $region52: #{convnet_forward.3} parent=5 // pred_fallthru
        _
      %p373 = scmp.le.s32.totalorder 1, %s20
      %p374 = scmp.lt.s32.totalorder %s20, 3
      %p375 = pnand %p373, %p374
      %p376 = pneg %p375
      // Predicated region
      $region57: #{convnet_forward.3} parent=5 // pred_check
        _
      $region58: #{convnet_forward.3} parent=5 // pred_check_branch
        %378 = sbr.rel (%p375) target = $region60
      $region59: #{convnet_forward.3} parent=5 // pred_region
        %s379 = ssub.s32 %s20, 1
        // Predicated region
        $region61: #{convnet_forward.3} parent=59 // pred_check
          %p380 = pneg %p67
        $region62: #{convnet_forward.3} parent=59 // pred_check_branch
          %382 = sbr.rel (%p380) target = $region64
        $region63: #{convnet_forward.3} parent=59 // pred_region
          %383 = dma.done [#allocation5], 256
        $region64: #{convnet_forward.3} parent=59 // pred_fallthru
          _
        // Predicated region
        $region65: #{convnet_forward.3} parent=59 // pred_check
          %p384 = pneg %p88
        $region66: #{convnet_forward.3} parent=59 // pred_check_branch
          %386 = sbr.rel (%p384) target = $region68
        $region67: #{convnet_forward.3} parent=59 // pred_region
          %387 = dma.done [#allocation7], 16
        $region68: #{convnet_forward.3} parent=59 // pred_fallthru
          _
        // Predicated region
        $region69: #{convnet_forward.3} parent=59 // pred_check
          %p388 = pneg %p109
        $region70: #{convnet_forward.3} parent=59 // pred_check_branch
          %390 = sbr.rel (%p388) target = $region72
        $region71: #{convnet_forward.3} parent=59 // pred_region
          %391 = dma.done [#allocation7], 16
        $region72: #{convnet_forward.3} parent=59 // pred_fallthru
          _
        // Predicated region
        $region73: #{convnet_forward.3} parent=59 // pred_check
          %p392 = pneg %p151
        $region74: #{convnet_forward.3} parent=59 // pred_check_branch
          %394 = sbr.rel (%p392) target = $region76
        $region75: #{convnet_forward.3} parent=59 // pred_region
          %395 = dma.done [#allocation10], 16
        $region76: #{convnet_forward.3} parent=59 // pred_fallthru
          _
        // Predicated region
        $region77: #{convnet_forward.3} parent=59 // pred_check
          %p396 = pneg %p172
        $region78: #{convnet_forward.3} parent=59 // pred_check_branch
          %398 = sbr.rel (%p396) target = $region80
        $region79: #{convnet_forward.3} parent=59 // pred_region
          %399 = dma.done [#allocation10], 16
        $region80: #{convnet_forward.3} parent=59 // pred_fallthru
          _
        // Predicated region
        $region81: #{convnet_forward.3} parent=59 // pred_check
          %p400 = pneg %p214
        $region82: #{convnet_forward.3} parent=59 // pred_check_branch
          %402 = sbr.rel (%p400) target = $region84
        $region83: #{convnet_forward.3} parent=59 // pred_region
          %403 = dma.done [#allocation13], 16
        $region84: #{convnet_forward.3} parent=59 // pred_fallthru
          _
        // Predicated region
        $region85: #{convnet_forward.3} parent=59 // pred_check
          %p404 = pneg %p235
        $region86: #{convnet_forward.3} parent=59 // pred_check_branch
          %406 = sbr.rel (%p404) target = $region88
        $region87: #{convnet_forward.3} parent=59 // pred_region
          %407 = dma.done [#allocation13], 16
        $region88: #{convnet_forward.3} parent=59 // pred_fallthru
          _
        %p408 = scmp.lt.s32.totalorder %s25, 1
        %s409 = scalar_select %p408, %s25, 1
        %s410 = smul.addr %s409, 32
        %s411 = smul.addr %s410, 4
        %s412 = scalar_lea.vmem %s0, %s411
        %p413 = pneg %p46
        %p414 = pneg %p43
        %p415 = pneg %p67
        %p416 = pneg %p64
        %p417 = pneg %p88
        %p418 = pneg %p85
        %p419 = pneg %p109
        %p420 = pneg %p106
        %p421 = pneg %p130
        %p422 = pneg %p127
        %p423 = pneg %p151
        %p424 = pneg %p148
        %p425 = pneg %p172
        %p426 = pneg %p169
        %p427 = pneg %p193
        %p428 = pneg %p190
        %p429 = pneg %p214
        %p430 = pneg %p211
        %p431 = pneg %p235
        %p432 = pneg %p232
        %p433 = pneg %p261
        %p434 = pneg %p258
        %p435 = scmp.lt.s32.totalorder %s25, 1
        %s436 = scalar_select %p435, %s25, 1
        %s437 = smul.addr %s436, 8
        %s438 = smul.addr %s437, 4
        %s439 = scalar_lea.vmem %s10, %s438
        %p440 = scmp.lt.s32.totalorder %s25, 1
        %s441 = scalar_select %p440, %s25, 1
        %s442 = smul.addr %s441, 32
        %s443 = smul.addr %s442, 4
        %s444 = scalar_lea.vmem %s0, %s443
        %p445 = scmp.lt.s32.totalorder %s25, 1
        %s446 = scalar_select %p445, %s25, 1
        %s447 = smul.addr %s446, 8
        %s448 = smul.addr %s447, 4
        %s449 = scalar_lea.vmem %s10, %s448
        %vm451 = vcmask 261120
        %452 = vst.msk [vmem:[#allocation2] sm:$0xff] %vm451, 0.0
        %vm453 = vcmask 254976
        %454 = vst.msk [vmem:[#allocation2 + $0x8] sm:$0x3] %vm453, 0.0
        %s455 = scalar_lea.vmem [#allocation2], 144
        %456 = vst.msk [vmem:[%s455] sm:$0xff] %vm451, 0.0
        %457 = vst.msk [vmem:[%s455 + $0x8] sm:$0x3] %vm453, 0.0
        %vm458 = vcmask 253952
        %459 = vst.msk [vmem:[#allocation2] sm:$0x1] %vm458, 0.0
        %460 = vst.msk [vmem:[#allocation2 + $0x10] sm:$0x1] %vm458, 0.0
        %461 = vst.msk [vmem:[#allocation2 + $0x20] sm:$0x1] %vm458, 0.0
        %462 = vst.msk [vmem:[#allocation2 + $0x30] sm:$0x1] %vm458, 0.0
        %463 = vst.msk [vmem:[#allocation2 + $0x40] sm:$0x1] %vm458, 0.0
        %464 = vst.msk [vmem:[#allocation2 + $0x50] sm:$0x1] %vm458, 0.0
        %465 = vst.msk [vmem:[#allocation2 + $0x60] sm:$0x1] %vm458, 0.0
        %466 = vst.msk [vmem:[#allocation2 + $0x70] sm:$0x1] %vm458, 0.0
        %467 = vst.msk [vmem:[#allocation2 + $0x80] sm:$0x1] %vm458, 0.0
        %468 = vst.msk [vmem:[#allocation2 + $0x90] sm:$0x1] %vm458, 0.0
        %469 = vst.msk [vmem:[#allocation2 + $0x9] sm:$0x1] %vm458, 0.0
        %470 = vst.msk [vmem:[#allocation2 + $0x19] sm:$0x1] %vm458, 0.0
        %471 = vst.msk [vmem:[#allocation2 + $0x29] sm:$0x1] %vm458, 0.0
        %472 = vst.msk [vmem:[#allocation2 + $0x39] sm:$0x1] %vm458, 0.0
        %473 = vst.msk [vmem:[#allocation2 + $0x49] sm:$0x1] %vm458, 0.0
        %474 = vst.msk [vmem:[#allocation2 + $0x59] sm:$0x1] %vm458, 0.0
        %475 = vst.msk [vmem:[#allocation2 + $0x69] sm:$0x1] %vm458, 0.0
        %476 = vst.msk [vmem:[#allocation2 + $0x79] sm:$0x1] %vm458, 0.0
        %477 = vst.msk [vmem:[#allocation2 + $0x89] sm:$0x1] %vm458, 0.0
        %478 = vst.msk [vmem:[#allocation2 + $0x99] sm:$0x1] %vm458, 0.0
        %v479 = vld [vmem:[%s444] sm:$0xf]
        %v480 = vld [vmem:[%s444 + $0x4] sm:$0xf]
        %v481 = vld [vmem:[%s444 + $0x8] sm:$0xf]
        %v482 = vld [vmem:[%s444 + $0xc] sm:$0xf]
        %v483 = vld [vmem:[%s444 + $0x10] sm:$0xf]
        %v484 = vld [vmem:[%s444 + $0x14] sm:$0xf]
        %v485 = vld [vmem:[%s444 + $0x18] sm:$0xf]
        %v486 = vld [vmem:[%s444 + $0x1c] sm:$0xf]
        %v487 = vld [vmem:[%s444 + $0x20] sm:$0xf]
        %v488 = vld [vmem:[%s444 + $0x24] sm:$0xf]
        %v489 = vld [vmem:[%s444 + $0x28] sm:$0xf]
        %v490 = vld [vmem:[%s444 + $0x2c] sm:$0xf]
        %v491 = vld [vmem:[%s444 + $0x30] sm:$0xf]
        %v492 = vld [vmem:[%s444 + $0x34] sm:$0xf]
        %v493 = vld [vmem:[%s444 + $0x38] sm:$0xf]
        %v494 = vld [vmem:[%s444 + $0x3c] sm:$0xf]
        %v495 = vld [vmem:[%s444 + $0x40] sm:$0xf]
        %v496 = vld [vmem:[%s444 + $0x44] sm:$0xf]
        %v497 = vld [vmem:[%s444 + $0x48] sm:$0xf]
        %v498 = vld [vmem:[%s444 + $0x4c] sm:$0xf]
        %v499 = vld [vmem:[%s444 + $0x50] sm:$0xf]
        %v500 = vld [vmem:[%s444 + $0x54] sm:$0xf]
        %v501 = vld [vmem:[%s444 + $0x58] sm:$0xf]
        %v502 = vld [vmem:[%s444 + $0x5c] sm:$0xf]
        %v503 = vld [vmem:[%s444 + $0x60] sm:$0xf]
        %v504 = vld [vmem:[%s444 + $0x64] sm:$0xf]
        %v505 = vld [vmem:[%s444 + $0x68] sm:$0xf]
        %v506 = vld [vmem:[%s444 + $0x6c] sm:$0xf]
        %v507 = vld [vmem:[%s444 + $0x70] sm:$0xf]
        %v508 = vld [vmem:[%s444 + $0x74] sm:$0xf]
        %v509 = vld [vmem:[%s444 + $0x78] sm:$0xf]
        %v510 = vld [vmem:[%s444 + $0x7c] sm:$0xf]
        %v511 = vld [vmem:[#allocation4] sm:$0xf]
        %v512 = vld [vmem:[#allocation4 + $0x4] sm:$0xf]
        %v513 = vld [vmem:[#allocation4 + $0x8] sm:$0xf]
        %v514 = vld [vmem:[#allocation4 + $0xc] sm:$0xf]
        %v547 = vunpack.c.l.b16 %v479
        %v548 = vunpack.c.l.b16 %v480
        %v549 = vunpack.c.l.b16 %v481
        %v550 = vunpack.c.l.b16 %v482
        %v551 = vunpack.c.l.b16 %v483
        %v552 = vunpack.c.l.b16 %v484
        %v553 = vunpack.c.l.b16 %v485
        %v554 = vunpack.c.l.b16 %v486
        %v555 = vunpack.c.l.b16 %v487
        %v556 = vunpack.c.l.b16 %v488
        %v557 = vunpack.c.l.b16 %v489
        %v558 = vunpack.c.l.b16 %v490
        %v559 = vunpack.c.l.b16 %v491
        %v560 = vunpack.c.l.b16 %v492
        %v561 = vunpack.c.l.b16 %v493
        %v562 = vunpack.c.l.b16 %v494
        %v563 = vunpack.c.l.b16 %v495
        %v564 = vunpack.c.l.b16 %v496
        %v565 = vunpack.c.l.b16 %v497
        %v566 = vunpack.c.l.b16 %v498
        %v567 = vunpack.c.l.b16 %v499
        %v568 = vunpack.c.l.b16 %v500
        %v569 = vunpack.c.l.b16 %v501
        %v570 = vunpack.c.l.b16 %v502
        %v571 = vunpack.c.l.b16 %v503
        %v572 = vunpack.c.l.b16 %v504
        %v573 = vunpack.c.l.b16 %v505
        %v574 = vunpack.c.l.b16 %v506
        %v575 = vunpack.c.l.b16 %v507
        %v576 = vunpack.c.l.b16 %v508
        %v577 = vunpack.c.l.b16 %v509
        %v578 = vunpack.c.l.b16 %v510
        %v579 = vpack.c.b16 %v548, %v547
        %v580 = vpack.c.b16 %v550, %v549
        %v581 = vpack.c.b16 %v552, %v551
        %v582 = vpack.c.b16 %v554, %v553
        %v583 = vpack.c.b16 %v556, %v555
        %v584 = vpack.c.b16 %v558, %v557
        %v585 = vpack.c.b16 %v560, %v559
        %v586 = vpack.c.b16 %v562, %v561
        %v587 = vpack.c.b16 %v564, %v563
        %v588 = vpack.c.b16 %v566, %v565
        %v589 = vpack.c.b16 %v568, %v567
        %v590 = vpack.c.b16 %v570, %v569
        %v591 = vpack.c.b16 %v572, %v571
        %v592 = vpack.c.b16 %v574, %v573
        %v593 = vpack.c.b16 %v576, %v575
        %v594 = vpack.c.b16 %v578, %v577
        %v599 = vunpack.c.l.b16 %v511
        %v600 = vunpack.c.l.b16 %v512
        %v601 = vunpack.c.l.b16 %v513
        %v602 = vunpack.c.l.b16 %v514
        %v603 = vpack.c.b16 %v600, %v599
        %v604 = vpack.c.b16 %v602, %v601
        %v608 = vsel %vm451, %v579, 0
        %v611 = vsel %vm451, %v580, 0
        %v614 = vsel %vm451, %v581, 0
        %v617 = vsel %vm451, %v582, 0
        %v620 = vsel %vm451, %v583, 0
        %v623 = vsel %vm451, %v584, 0
        %v626 = vsel %vm451, %v585, 0
        %v629 = vsel %vm451, %v586, 0
        %v632 = vsel %vm451, %v587, 0
        %v635 = vsel %vm451, %v588, 0
        %v638 = vsel %vm451, %v589, 0
        %v641 = vsel %vm451, %v590, 0
        %v644 = vsel %vm451, %v591, 0
        %v647 = vsel %vm451, %v592, 0
        %v650 = vsel %vm451, %v593, 0
        %v653 = vsel %vm451, %v594, 0
        %655 = vmatprep.subr.bf16.mxu0 0
        %656 = vmatpush1.bf16.msra.mxu0 %v603
        %657 = vmatprep.subr.bf16.mxu0 0
        %658 = vmatpush1.bf16.msra.mxu0 %v604
        %659 = vmatprep.subr.bf16.mxu0 0
        %660 = vmatpush1.bf16.msra.mxu0 0
        %661 = vmatprep.subr.bf16.mxu0 0
        %662 = vmatpush1.bf16.msra.mxu0 0
        %663 = vmatprep.subr.bf16.mxu0 0
        %664 = vmatpush1.bf16.msra.mxu0 0
        %665 = vmatprep.subr.bf16.mxu0 0
        %666 = vmatpush1.bf16.msra.mxu0 0
        %667 = vmatprep.subr.bf16.mxu0 0
        %668 = vmatpush1.bf16.msra.mxu0 0
        %669 = vmatprep.subr.bf16.mxu0 0
        %670 = vmatpush1.bf16.msra.mxu0 0
        %671 = vmatprep.subr.bf16.mxu0 0
        %672 = vmatpush1.bf16.msra.mxu0 0
        %673 = vmatprep.subr.bf16.mxu0 0
        %674 = vmatpush1.bf16.msra.mxu0 0
        %675 = vmatprep.subr.bf16.mxu0 0
        %676 = vmatpush1.bf16.msra.mxu0 0
        %677 = vmatprep.subr.bf16.mxu0 0
        %678 = vmatpush1.bf16.msra.mxu0 0
        %679 = vmatprep.subr.bf16.mxu0 0
        %680 = vmatpush1.bf16.msra.mxu0 0
        %681 = vmatprep.subr.bf16.mxu0 0
        %682 = vmatpush1.bf16.msra.mxu0 0
        %683 = vmatprep.subr.bf16.mxu0 0
        %684 = vmatpush1.bf16.msra.mxu0 0
        %685 = vmatprep.subr.bf16.mxu0 0
        %686 = vmatpush1.bf16.msra.mxu0 0
        %687 = vmatprep.mubr.bf16.mxu0 0
        %688 = vmatmul.mubr.bf16.gmra.mrb[0].mxu0 %v608
        %v689 = vpop.f32.mrb[0].mxu0
        %v690 = vadd.f32 0.0, %v689
        %v691 = vpop.f32.mrb[0].mxu0
        %v692 = vpop.f32.mrb[0].mxu0
        %v693 = vadd.f32 0.0, %v692
        %v694 = vpop.f32.mrb[0].mxu0
        %695 = vmatprep.mubr.bf16.mxu0 0
        %696 = vmatmul.mubr.bf16.gmra.mrb[0].mxu0 %v611
        %v697 = vpop.f32.mrb[0].mxu0
        %v698 = vadd.f32 0.0, %v697
        %v699 = vpop.f32.mrb[0].mxu0
        %v700 = vpop.f32.mrb[0].mxu0
        %v701 = vadd.f32 0.0, %v700
        %v702 = vpop.f32.mrb[0].mxu0
        %703 = vmatprep.mubr.bf16.mxu0 0
        %704 = vmatmul.mubr.bf16.gmra.mrb[0].mxu0 %v614
        %v705 = vpop.f32.mrb[0].mxu0
        %v706 = vadd.f32 0.0, %v705
        %v707 = vpop.f32.mrb[0].mxu0
        %v708 = vpop.f32.mrb[0].mxu0
        %v709 = vadd.f32 0.0, %v708
        %v710 = vpop.f32.mrb[0].mxu0
        %711 = vmatprep.mubr.bf16.mxu0 0
        %712 = vmatmul.mubr.bf16.gmra.mrb[0].mxu0 %v617
        %v713 = vpop.f32.mrb[0].mxu0
        %v714 = vadd.f32 0.0, %v713
        %v715 = vpop.f32.mrb[0].mxu0
        %v716 = vpop.f32.mrb[0].mxu0
        %v717 = vadd.f32 0.0, %v716
        %v718 = vpop.f32.mrb[0].mxu0
        %719 = vmatprep.mubr.bf16.mxu0 0
        %720 = vmatmul.mubr.bf16.gmra.mrb[0].mxu0 %v620
        %v721 = vpop.f32.mrb[0].mxu0
        %v722 = vadd.f32 0.0, %v721
        %v723 = vpop.f32.mrb[0].mxu0
        %v724 = vpop.f32.mrb[0].mxu0
        %v725 = vadd.f32 0.0, %v724
        %v726 = vpop.f32.mrb[0].mxu0
        %727 = vmatprep.mubr.bf16.mxu0 0
        %728 = vmatmul.mubr.bf16.gmra.mrb[0].mxu0 %v623
        %v729 = vpop.f32.mrb[0].mxu0
        %v730 = vadd.f32 0.0, %v729
        %v731 = vpop.f32.mrb[0].mxu0
        %v732 = vpop.f32.mrb[0].mxu0
        %v733 = vadd.f32 0.0, %v732
        %v734 = vpop.f32.mrb[0].mxu0
        %735 = vmatprep.mubr.bf16.mxu0 0
        %736 = vmatmul.mubr.bf16.gmra.mrb[0].mxu0 %v626
        %v737 = vpop.f32.mrb[0].mxu0
        %v738 = vadd.f32 0.0, %v737
        %v739 = vpop.f32.mrb[0].mxu0
        %v740 = vpop.f32.mrb[0].mxu0
        %v741 = vadd.f32 0.0, %v740
        %v742 = vpop.f32.mrb[0].mxu0
        %743 = vmatprep.mubr.bf16.mxu0 0
        %744 = vmatmul.mubr.bf16.gmra.mrb[0].mxu0 %v629
        %v745 = vpop.f32.mrb[0].mxu0
        %v746 = vadd.f32 0.0, %v745
        %v747 = vpop.f32.mrb[0].mxu0
        %v748 = vpop.f32.mrb[0].mxu0
        %v749 = vadd.f32 0.0, %v748
        %v750 = vpop.f32.mrb[0].mxu0
        %751 = vmatprep.mubr.bf16.mxu0 0
        %752 = vmatmul.mubr.bf16.gmra.mrb[0].mxu0 %v632
        %v753 = vpop.f32.mrb[0].mxu0
        %v754 = vadd.f32 0.0, %v753
        %v755 = vpop.f32.mrb[0].mxu0
        %v756 = vpop.f32.mrb[0].mxu0
        %v757 = vadd.f32 0.0, %v756
        %v758 = vpop.f32.mrb[0].mxu0
        %759 = vmatprep.mubr.bf16.mxu0 0
        %760 = vmatmul.mubr.bf16.gmra.mrb[0].mxu0 %v635
        %v761 = vpop.f32.mrb[0].mxu0
        %v762 = vadd.f32 0.0, %v761
        %v763 = vpop.f32.mrb[0].mxu0
        %v764 = vpop.f32.mrb[0].mxu0
        %v765 = vadd.f32 0.0, %v764
        %v766 = vpop.f32.mrb[0].mxu0
        %767 = vmatprep.mubr.bf16.mxu0 0
        %768 = vmatmul.mubr.bf16.gmra.mrb[0].mxu0 %v638
        %v769 = vpop.f32.mrb[0].mxu0
        %v770 = vadd.f32 0.0, %v769
        %v771 = vpop.f32.mrb[0].mxu0
        %v772 = vpop.f32.mrb[0].mxu0
        %v773 = vadd.f32 0.0, %v772
        %v774 = vpop.f32.mrb[0].mxu0
        %775 = vmatprep.mubr.bf16.mxu0 0
        %776 = vmatmul.mubr.bf16.gmra.mrb[0].mxu0 %v641
        %v777 = vpop.f32.mrb[0].mxu0
        %v778 = vadd.f32 0.0, %v777
        %v779 = vpop.f32.mrb[0].mxu0
        %v780 = vpop.f32.mrb[0].mxu0
        %v781 = vadd.f32 0.0, %v780
        %v782 = vpop.f32.mrb[0].mxu0
        %783 = vmatprep.mubr.bf16.mxu0 0
        %784 = vmatmul.mubr.bf16.gmra.mrb[0].mxu0 %v644
        %v785 = vpop.f32.mrb[0].mxu0
        %v786 = vadd.f32 0.0, %v785
        %v787 = vpop.f32.mrb[0].mxu0
        %v788 = vpop.f32.mrb[0].mxu0
        %v789 = vadd.f32 0.0, %v788
        %v790 = vpop.f32.mrb[0].mxu0
        %791 = vmatprep.mubr.bf16.mxu0 0
        %792 = vmatmul.mubr.bf16.gmra.mrb[0].mxu0 %v647
        %v793 = vpop.f32.mrb[0].mxu0
        %v794 = vadd.f32 0.0, %v793
        %v795 = vpop.f32.mrb[0].mxu0
        %v796 = vpop.f32.mrb[0].mxu0
        %v797 = vadd.f32 0.0, %v796
        %v798 = vpop.f32.mrb[0].mxu0
        %799 = vmatprep.mubr.bf16.mxu0 0
        %800 = vmatmul.mubr.bf16.gmra.mrb[0].mxu0 %v650
        %v801 = vpop.f32.mrb[0].mxu0
        %v802 = vadd.f32 0.0, %v801
        %v803 = vpop.f32.mrb[0].mxu0
        %v804 = vpop.f32.mrb[0].mxu0
        %v805 = vadd.f32 0.0, %v804
        %v806 = vpop.f32.mrb[0].mxu0
        %807 = vmatprep.mubr.bf16.mxu0 0
        %808 = vmatmul.mubr.bf16.gmra.mrb[0].mxu0 %v653
        %v809 = vpop.f32.mrb[0].mxu0
        %v810 = vadd.f32 0.0, %v809
        %v811 = vpop.f32.mrb[0].mxu0
        %v812 = vpop.f32.mrb[0].mxu0
        %v813 = vadd.f32 0.0, %v812
        %v814 = vpop.f32.mrb[0].mxu0
        %815 = vdwg.mxu0
        %v816 = vld [vmem:[#allocation6] sm:$0x1]
        %v818 = vlaneseq
        %v819 = vshrl.u32 %v818, 7
        %v820 = vsub.s32 0, %v819
        %v821 = vrot.slane %v816, %v820
        %v823 = vmul.f32 %v690, %v821
        %v824 = vmul.f32 %v693, %v821
        %v825 = vmul.f32 %v698, %v821
        %v826 = vmul.f32 %v701, %v821
        %v827 = vmul.f32 %v706, %v821
        %v828 = vmul.f32 %v709, %v821
        %v829 = vmul.f32 %v714, %v821
        %v830 = vmul.f32 %v717, %v821
        %v831 = vmul.f32 %v722, %v821
        %v832 = vmul.f32 %v725, %v821
        %v833 = vmul.f32 %v730, %v821
        %v834 = vmul.f32 %v733, %v821
        %v835 = vmul.f32 %v738, %v821
        %v836 = vmul.f32 %v741, %v821
        %v837 = vmul.f32 %v746, %v821
        %v838 = vmul.f32 %v749, %v821
        %v839 = vmul.f32 %v754, %v821
        %v840 = vmul.f32 %v757, %v821
        %v841 = vmul.f32 %v762, %v821
        %v842 = vmul.f32 %v765, %v821
        %v843 = vmul.f32 %v770, %v821
        %v844 = vmul.f32 %v773, %v821
        %v845 = vmul.f32 %v778, %v821
        %v846 = vmul.f32 %v781, %v821
        %v847 = vmul.f32 %v786, %v821
        %v848 = vmul.f32 %v789, %v821
        %v849 = vmul.f32 %v794, %v821
        %v850 = vmul.f32 %v797, %v821
        %v851 = vmul.f32 %v802, %v821
        %v852 = vmul.f32 %v805, %v821
        %v853 = vmul.f32 %v810, %v821
        %v854 = vmul.f32 %v813, %v821
        %v855 = vld [vmem:[#allocation8] sm:$0x1]
        %v857 = vlaneseq
        %v858 = vshrl.u32 %v857, 7
        %v859 = vsub.s32 0, %v858
        %v860 = vrot.slane %v855, %v859
        %v862 = vadd.f32 %v823, %v860
        %v863 = vadd.f32 %v824, %v860
        %v864 = vadd.f32 %v825, %v860
        %v865 = vadd.f32 %v826, %v860
        %v866 = vadd.f32 %v827, %v860
        %v867 = vadd.f32 %v828, %v860
        %v868 = vadd.f32 %v829, %v860
        %v869 = vadd.f32 %v830, %v860
        %v870 = vadd.f32 %v831, %v860
        %v871 = vadd.f32 %v832, %v860
        %v872 = vadd.f32 %v833, %v860
        %v873 = vadd.f32 %v834, %v860
        %v874 = vadd.f32 %v835, %v860
        %v875 = vadd.f32 %v836, %v860
        %v876 = vadd.f32 %v837, %v860
        %v877 = vadd.f32 %v838, %v860
        %v878 = vadd.f32 %v839, %v860
        %v879 = vadd.f32 %v840, %v860
        %v880 = vadd.f32 %v841, %v860
        %v881 = vadd.f32 %v842, %v860
        %v882 = vadd.f32 %v843, %v860
        %v883 = vadd.f32 %v844, %v860
        %v884 = vadd.f32 %v845, %v860
        %v885 = vadd.f32 %v846, %v860
        %v886 = vadd.f32 %v847, %v860
        %v887 = vadd.f32 %v848, %v860
        %v888 = vadd.f32 %v849, %v860
        %v889 = vadd.f32 %v850, %v860
        %v890 = vadd.f32 %v851, %v860
        %v891 = vadd.f32 %v852, %v860
        %v892 = vadd.f32 %v853, %v860
        %v893 = vadd.f32 %v854, %v860
        %vm894 = vcmp.ge.f32.partialorder %v862, 0.0
        %vm895 = vcmp.ge.f32.partialorder %v863, 0.0
        %vm896 = vcmp.ge.f32.partialorder %v864, 0.0
        %vm897 = vcmp.ge.f32.partialorder %v865, 0.0
        %vm898 = vcmp.ge.f32.partialorder %v866, 0.0
        %vm899 = vcmp.ge.f32.partialorder %v867, 0.0
        %vm900 = vcmp.ge.f32.partialorder %v868, 0.0
        %vm901 = vcmp.ge.f32.partialorder %v869, 0.0
        %vm902 = vcmp.ge.f32.partialorder %v870, 0.0
        %vm903 = vcmp.ge.f32.partialorder %v871, 0.0
        %vm904 = vcmp.ge.f32.partialorder %v872, 0.0
        %vm905 = vcmp.ge.f32.partialorder %v873, 0.0
        %vm906 = vcmp.ge.f32.partialorder %v874, 0.0
        %vm907 = vcmp.ge.f32.partialorder %v875, 0.0
        %vm908 = vcmp.ge.f32.partialorder %v876, 0.0
        %vm909 = vcmp.ge.f32.partialorder %v877, 0.0
        %vm910 = vcmp.ge.f32.partialorder %v878, 0.0
        %vm911 = vcmp.ge.f32.partialorder %v879, 0.0
        %vm912 = vcmp.ge.f32.partialorder %v880, 0.0
        %vm913 = vcmp.ge.f32.partialorder %v881, 0.0
        %vm914 = vcmp.ge.f32.partialorder %v882, 0.0
        %vm915 = vcmp.ge.f32.partialorder %v883, 0.0
        %vm916 = vcmp.ge.f32.partialorder %v884, 0.0
        %vm917 = vcmp.ge.f32.partialorder %v885, 0.0
        %vm918 = vcmp.ge.f32.partialorder %v886, 0.0
        %vm919 = vcmp.ge.f32.partialorder %v887, 0.0
        %vm920 = vcmp.ge.f32.partialorder %v888, 0.0
        %vm921 = vcmp.ge.f32.partialorder %v889, 0.0
        %vm922 = vcmp.ge.f32.partialorder %v890, 0.0
        %vm923 = vcmp.ge.f32.partialorder %v891, 0.0
        %vm924 = vcmp.ge.f32.partialorder %v892, 0.0
        %vm925 = vcmp.ge.f32.partialorder %v893, 0.0
        %v926 = vmul.f32 %v862, 0.01
        %v927 = vmul.f32 %v863, 0.01
        %v928 = vmul.f32 %v864, 0.01
        %v929 = vmul.f32 %v865, 0.01
        %v930 = vmul.f32 %v866, 0.01
        %v931 = vmul.f32 %v867, 0.01
        %v932 = vmul.f32 %v868, 0.01
        %v933 = vmul.f32 %v869, 0.01
        %v934 = vmul.f32 %v870, 0.01
        %v935 = vmul.f32 %v871, 0.01
        %v936 = vmul.f32 %v872, 0.01
        %v937 = vmul.f32 %v873, 0.01
        %v938 = vmul.f32 %v874, 0.01
        %v939 = vmul.f32 %v875, 0.01
        %v940 = vmul.f32 %v876, 0.01
        %v941 = vmul.f32 %v877, 0.01
        %v942 = vmul.f32 %v878, 0.01
        %v943 = vmul.f32 %v879, 0.01
        %v944 = vmul.f32 %v880, 0.01
        %v945 = vmul.f32 %v881, 0.01
        %v946 = vmul.f32 %v882, 0.01
        %v947 = vmul.f32 %v883, 0.01
        %v948 = vmul.f32 %v884, 0.01
        %v949 = vmul.f32 %v885, 0.01
        %v950 = vmul.f32 %v886, 0.01
        %v951 = vmul.f32 %v887, 0.01
        %v952 = vmul.f32 %v888, 0.01
        %v953 = vmul.f32 %v889, 0.01
        %v954 = vmul.f32 %v890, 0.01
        %v955 = vmul.f32 %v891, 0.01
        %v956 = vmul.f32 %v892, 0.01
        %v957 = vmul.f32 %v893, 0.01
        %v958 = vsel %vm894, %v862, %v926
        %v959 = vsel %vm895, %v863, %v927
        %v960 = vsel %vm896, %v864, %v928
        %v961 = vsel %vm897, %v865, %v929
        %v962 = vsel %vm898, %v866, %v930
        %v963 = vsel %vm899, %v867, %v931
        %v964 = vsel %vm900, %v868, %v932
        %v965 = vsel %vm901, %v869, %v933
        %v966 = vsel %vm902, %v870, %v934
        %v967 = vsel %vm903, %v871, %v935
        %v968 = vsel %vm904, %v872, %v936
        %v969 = vsel %vm905, %v873, %v937
        %v970 = vsel %vm906, %v874, %v938
        %v971 = vsel %vm907, %v875, %v939
        %v972 = vsel %vm908, %v876, %v940
        %v973 = vsel %vm909, %v877, %v941
        %v974 = vsel %vm910, %v878, %v942
        %v975 = vsel %vm911, %v879, %v943
        %v976 = vsel %vm912, %v880, %v944
        %v977 = vsel %vm913, %v881, %v945
        %v978 = vsel %vm914, %v882, %v946
        %v979 = vsel %vm915, %v883, %v947
        %v980 = vsel %vm916, %v884, %v948
        %v981 = vsel %vm917, %v885, %v949
        %v982 = vsel %vm918, %v886, %v950
        %v983 = vsel %vm919, %v887, %v951
        %v984 = vsel %vm920, %v888, %v952
        %v985 = vsel %vm921, %v889, %v953
        %v986 = vsel %vm922, %v890, %v954
        %v987 = vsel %vm923, %v891, %v955
        %v988 = vsel %vm924, %v892, %v956
        %v989 = vsel %vm925, %v893, %v957
        %v990 = vmax.f32 %v958, %v960
        %v991 = vmax.f32 %v959, %v961
        %v992 = vmax.f32 %v962, %v964
        %v993 = vmax.f32 %v963, %v965
        %v994 = vmax.f32 %v966, %v968
        %v995 = vmax.f32 %v967, %v969
        %v996 = vmax.f32 %v970, %v972
        %v997 = vmax.f32 %v971, %v973
        %v998 = vmax.f32 %v974, %v976
        %v999 = vmax.f32 %v975, %v977
        %v1000 = vmax.f32 %v978, %v980
        %v1001 = vmax.f32 %v979, %v981
        %v1002 = vmax.f32 %v982, %v984
        %v1003 = vmax.f32 %v983, %v985
        %v1004 = vmax.f32 %v986, %v988
        %v1005 = vmax.f32 %v987, %v989
        %v1022 = vcombine.high %v990, %v990
        %v1024 = vunpack.c.l.s4 1983009808
        %v1025 = vunpack.c.0.s8 %v1024
        %v1026 = vlaneseq
        %v1027 = vshrl.u32 %v1026, 7
        %v1028 = vsub.s32 %v1025, %v1027
        %v1029 = vrot.slane %v990, %v1028
        %v1031 = vunpack.c.l.s4 1983009808
        %v1032 = vunpack.c.0.s8 %v1031
        %v1033 = vlaneseq
        %v1034 = vshrl.u32 %v1033, 7
        %v1035 = vsub.s32 %v1032, %v1034
        %v1036 = vrot.slane %v1022, %v1035
        %v1037 = vcombine.high %v1029, %v1029
        %v1038 = vcombine.high %v1036, %v1036
        %v1039 = vcombine.high %v991, %v991
        %v1041 = vunpack.c.l.s4 1983009808
        %v1042 = vunpack.c.0.s8 %v1041
        %v1043 = vlaneseq
        %v1044 = vshrl.u32 %v1043, 7
        %v1045 = vsub.s32 %v1042, %v1044
        %v1046 = vrot.slane %v991, %v1045
        %v1048 = vunpack.c.l.s4 1983009808
        %v1049 = vunpack.c.0.s8 %v1048
        %v1050 = vlaneseq
        %v1051 = vshrl.u32 %v1050, 7
        %v1052 = vsub.s32 %v1049, %v1051
        %v1053 = vrot.slane %v1039, %v1052
        %v1054 = vcombine.high %v1046, %v1046
        %v1055 = vcombine.high %v1053, %v1053
        %v1056 = vcombine.high %v992, %v992
        %v1058 = vunpack.c.l.s4 1983009808
        %v1059 = vunpack.c.0.s8 %v1058
        %v1060 = vlaneseq
        %v1061 = vshrl.u32 %v1060, 7
        %v1062 = vsub.s32 %v1059, %v1061
        %v1063 = vrot.slane %v992, %v1062
        %v1065 = vunpack.c.l.s4 1983009808
        %v1066 = vunpack.c.0.s8 %v1065
        %v1067 = vlaneseq
        %v1068 = vshrl.u32 %v1067, 7
        %v1069 = vsub.s32 %v1066, %v1068
        %v1070 = vrot.slane %v1056, %v1069
        %v1071 = vcombine.high %v1063, %v1063
        %v1072 = vcombine.high %v1070, %v1070
        %v1073 = vcombine.high %v993, %v993
        %v1075 = vunpack.c.l.s4 1983009808
        %v1076 = vunpack.c.0.s8 %v1075
        %v1077 = vlaneseq
        %v1078 = vshrl.u32 %v1077, 7
        %v1079 = vsub.s32 %v1076, %v1078
        %v1080 = vrot.slane %v993, %v1079
        %v1082 = vunpack.c.l.s4 1983009808
        %v1083 = vunpack.c.0.s8 %v1082
        %v1084 = vlaneseq
        %v1085 = vshrl.u32 %v1084, 7
        %v1086 = vsub.s32 %v1083, %v1085
        %v1087 = vrot.slane %v1073, %v1086
        %v1088 = vcombine.high %v1080, %v1080
        %v1089 = vcombine.high %v1087, %v1087
        %v1090 = vcombine.high %v994, %v994
        %v1092 = vunpack.c.l.s4 1983009808
        %v1093 = vunpack.c.0.s8 %v1092
        %v1094 = vlaneseq
        %v1095 = vshrl.u32 %v1094, 7
        %v1096 = vsub.s32 %v1093, %v1095
        %v1097 = vrot.slane %v994, %v1096
        %v1099 = vunpack.c.l.s4 1983009808
        %v1100 = vunpack.c.0.s8 %v1099
        %v1101 = vlaneseq
        %v1102 = vshrl.u32 %v1101, 7
        %v1103 = vsub.s32 %v1100, %v1102
        %v1104 = vrot.slane %v1090, %v1103
        %v1105 = vcombine.high %v1097, %v1097
        %v1106 = vcombine.high %v1104, %v1104
        %v1107 = vcombine.high %v995, %v995
        %v1109 = vunpack.c.l.s4 1983009808
        %v1110 = vunpack.c.0.s8 %v1109
        %v1111 = vlaneseq
        %v1112 = vshrl.u32 %v1111, 7
        %v1113 = vsub.s32 %v1110, %v1112
        %v1114 = vrot.slane %v995, %v1113
        %v1116 = vunpack.c.l.s4 1983009808
        %v1117 = vunpack.c.0.s8 %v1116
        %v1118 = vlaneseq
        %v1119 = vshrl.u32 %v1118, 7
        %v1120 = vsub.s32 %v1117, %v1119
        %v1121 = vrot.slane %v1107, %v1120
        %v1122 = vcombine.high %v1114, %v1114
        %v1123 = vcombine.high %v1121, %v1121
        %v1124 = vcombine.high %v996, %v996
        %v1126 = vunpack.c.l.s4 1983009808
        %v1127 = vunpack.c.0.s8 %v1126
        %v1128 = vlaneseq
        %v1129 = vshrl.u32 %v1128, 7
        %v1130 = vsub.s32 %v1127, %v1129
        %v1131 = vrot.slane %v996, %v1130
        %v1133 = vunpack.c.l.s4 1983009808
        %v1134 = vunpack.c.0.s8 %v1133
        %v1135 = vlaneseq
        %v1136 = vshrl.u32 %v1135, 7
        %v1137 = vsub.s32 %v1134, %v1136
        %v1138 = vrot.slane %v1124, %v1137
        %v1139 = vcombine.high %v1131, %v1131
        %v1140 = vcombine.high %v1138, %v1138
        %v1141 = vcombine.high %v997, %v997
        %v1143 = vunpack.c.l.s4 1983009808
        %v1144 = vunpack.c.0.s8 %v1143
        %v1145 = vlaneseq
        %v1146 = vshrl.u32 %v1145, 7
        %v1147 = vsub.s32 %v1144, %v1146
        %v1148 = vrot.slane %v997, %v1147
        %v1150 = vunpack.c.l.s4 1983009808
        %v1151 = vunpack.c.0.s8 %v1150
        %v1152 = vlaneseq
        %v1153 = vshrl.u32 %v1152, 7
        %v1154 = vsub.s32 %v1151, %v1153
        %v1155 = vrot.slane %v1141, %v1154
        %v1156 = vcombine.high %v1148, %v1148
        %v1157 = vcombine.high %v1155, %v1155
        %v1158 = vcombine.high %v998, %v998
        %v1160 = vunpack.c.l.s4 1983009808
        %v1161 = vunpack.c.0.s8 %v1160
        %v1162 = vlaneseq
        %v1163 = vshrl.u32 %v1162, 7
        %v1164 = vsub.s32 %v1161, %v1163
        %v1165 = vrot.slane %v998, %v1164
        %v1167 = vunpack.c.l.s4 1983009808
        %v1168 = vunpack.c.0.s8 %v1167
        %v1169 = vlaneseq
        %v1170 = vshrl.u32 %v1169, 7
        %v1171 = vsub.s32 %v1168, %v1170
        %v1172 = vrot.slane %v1158, %v1171
        %v1173 = vcombine.high %v1165, %v1165
        %v1174 = vcombine.high %v1172, %v1172
        %v1175 = vcombine.high %v999, %v999
        %v1177 = vunpack.c.l.s4 1983009808
        %v1178 = vunpack.c.0.s8 %v1177
        %v1179 = vlaneseq
        %v1180 = vshrl.u32 %v1179, 7
        %v1181 = vsub.s32 %v1178, %v1180
        %v1182 = vrot.slane %v999, %v1181
        %v1184 = vunpack.c.l.s4 1983009808
        %v1185 = vunpack.c.0.s8 %v1184
        %v1186 = vlaneseq
        %v1187 = vshrl.u32 %v1186, 7
        %v1188 = vsub.s32 %v1185, %v1187
        %v1189 = vrot.slane %v1175, %v1188
        %v1190 = vcombine.high %v1182, %v1182
        %v1191 = vcombine.high %v1189, %v1189
        %v1192 = vcombine.high %v1000, %v1000
        %v1194 = vunpack.c.l.s4 1983009808
        %v1195 = vunpack.c.0.s8 %v1194
        %v1196 = vlaneseq
        %v1197 = vshrl.u32 %v1196, 7
        %v1198 = vsub.s32 %v1195, %v1197
        %v1199 = vrot.slane %v1000, %v1198
        %v1201 = vunpack.c.l.s4 1983009808
        %v1202 = vunpack.c.0.s8 %v1201
        %v1203 = vlaneseq
        %v1204 = vshrl.u32 %v1203, 7
        %v1205 = vsub.s32 %v1202, %v1204
        %v1206 = vrot.slane %v1192, %v1205
        %v1207 = vcombine.high %v1199, %v1199
        %v1208 = vcombine.high %v1206, %v1206
        %v1209 = vcombine.high %v1001, %v1001
        %v1211 = vunpack.c.l.s4 1983009808
        %v1212 = vunpack.c.0.s8 %v1211
        %v1213 = vlaneseq
        %v1214 = vshrl.u32 %v1213, 7
        %v1215 = vsub.s32 %v1212, %v1214
        %v1216 = vrot.slane %v1001, %v1215
        %v1218 = vunpack.c.l.s4 1983009808
        %v1219 = vunpack.c.0.s8 %v1218
        %v1220 = vlaneseq
        %v1221 = vshrl.u32 %v1220, 7
        %v1222 = vsub.s32 %v1219, %v1221
        %v1223 = vrot.slane %v1209, %v1222
        %v1224 = vcombine.high %v1216, %v1216
        %v1225 = vcombine.high %v1223, %v1223
        %v1226 = vcombine.high %v1002, %v1002
        %v1228 = vunpack.c.l.s4 1983009808
        %v1229 = vunpack.c.0.s8 %v1228
        %v1230 = vlaneseq
        %v1231 = vshrl.u32 %v1230, 7
        %v1232 = vsub.s32 %v1229, %v1231
        %v1233 = vrot.slane %v1002, %v1232
        %v1235 = vunpack.c.l.s4 1983009808
        %v1236 = vunpack.c.0.s8 %v1235
        %v1237 = vlaneseq
        %v1238 = vshrl.u32 %v1237, 7
        %v1239 = vsub.s32 %v1236, %v1238
        %v1240 = vrot.slane %v1226, %v1239
        %v1241 = vcombine.high %v1233, %v1233
        %v1242 = vcombine.high %v1240, %v1240
        %v1243 = vcombine.high %v1003, %v1003
        %v1245 = vunpack.c.l.s4 1983009808
        %v1246 = vunpack.c.0.s8 %v1245
        %v1247 = vlaneseq
        %v1248 = vshrl.u32 %v1247, 7
        %v1249 = vsub.s32 %v1246, %v1248
        %v1250 = vrot.slane %v1003, %v1249
        %v1252 = vunpack.c.l.s4 1983009808
        %v1253 = vunpack.c.0.s8 %v1252
        %v1254 = vlaneseq
        %v1255 = vshrl.u32 %v1254, 7
        %v1256 = vsub.s32 %v1253, %v1255
        %v1257 = vrot.slane %v1243, %v1256
        %v1258 = vcombine.high %v1250, %v1250
        %v1259 = vcombine.high %v1257, %v1257
        %v1260 = vcombine.high %v1004, %v1004
        %v1262 = vunpack.c.l.s4 1983009808
        %v1263 = vunpack.c.0.s8 %v1262
        %v1264 = vlaneseq
        %v1265 = vshrl.u32 %v1264, 7
        %v1266 = vsub.s32 %v1263, %v1265
        %v1267 = vrot.slane %v1004, %v1266
        %v1269 = vunpack.c.l.s4 1983009808
        %v1270 = vunpack.c.0.s8 %v1269
        %v1271 = vlaneseq
        %v1272 = vshrl.u32 %v1271, 7
        %v1273 = vsub.s32 %v1270, %v1272
        %v1274 = vrot.slane %v1260, %v1273
        %v1275 = vcombine.high %v1267, %v1267
        %v1276 = vcombine.high %v1274, %v1274
        %v1277 = vcombine.high %v1005, %v1005
        %v1279 = vunpack.c.l.s4 1983009808
        %v1280 = vunpack.c.0.s8 %v1279
        %v1281 = vlaneseq
        %v1282 = vshrl.u32 %v1281, 7
        %v1283 = vsub.s32 %v1280, %v1282
        %v1284 = vrot.slane %v1005, %v1283
        %v1286 = vunpack.c.l.s4 1983009808
        %v1287 = vunpack.c.0.s8 %v1286
        %v1288 = vlaneseq
        %v1289 = vshrl.u32 %v1288, 7
        %v1290 = vsub.s32 %v1287, %v1289
        %v1291 = vrot.slane %v1277, %v1290
        %v1292 = vcombine.high %v1284, %v1284
        %v1293 = vcombine.high %v1291, %v1291
        %v1358 = vsel %vm453, %v1029, -inf
        %v1359 = vrot.slane %v1358, 4
        %v1360 = vmax.f32 %v1358, %v1359
        %v1361 = vrot.slane %v1360, 2
        %v1362 = vmax.f32 %v1360, %v1361
        %v1363 = vrot.slane %v1362, 1
        %v1364 = vmax.f32 %v1362, %v1363
        %v1365 = vsel %vm453, %v1037, -inf
        %v1366 = vrot.slane %v1365, 4
        %v1367 = vmax.f32 %v1365, %v1366
        %v1368 = vrot.slane %v1367, 2
        %v1369 = vmax.f32 %v1367, %v1368
        %v1370 = vrot.slane %v1369, 1
        %v1371 = vmax.f32 %v1369, %v1370
        %v1372 = vsel %vm453, %v1036, -inf
        %v1373 = vrot.slane %v1372, 4
        %v1374 = vmax.f32 %v1372, %v1373
        %v1375 = vrot.slane %v1374, 2
        %v1376 = vmax.f32 %v1374, %v1375
        %v1377 = vrot.slane %v1376, 1
        %v1378 = vmax.f32 %v1376, %v1377
        %v1379 = vsel %vm453, %v1038, -inf
        %v1380 = vrot.slane %v1379, 4
        %v1381 = vmax.f32 %v1379, %v1380
        %v1382 = vrot.slane %v1381, 2
        %v1383 = vmax.f32 %v1381, %v1382
        %v1384 = vrot.slane %v1383, 1
        %v1385 = vmax.f32 %v1383, %v1384
        %v1386 = vsel %vm453, %v1046, -inf
        %v1387 = vrot.slane %v1386, 4
        %v1388 = vmax.f32 %v1386, %v1387
        %v1389 = vrot.slane %v1388, 2
        %v1390 = vmax.f32 %v1388, %v1389
        %v1391 = vrot.slane %v1390, 1
        %v1392 = vmax.f32 %v1390, %v1391
        %v1393 = vsel %vm453, %v1054, -inf
        %v1394 = vrot.slane %v1393, 4
        %v1395 = vmax.f32 %v1393, %v1394
        %v1396 = vrot.slane %v1395, 2
        %v1397 = vmax.f32 %v1395, %v1396
        %v1398 = vrot.slane %v1397, 1
        %v1399 = vmax.f32 %v1397, %v1398
        %v1400 = vsel %vm453, %v1053, -inf
        %v1401 = vrot.slane %v1400, 4
        %v1402 = vmax.f32 %v1400, %v1401
        %v1403 = vrot.slane %v1402, 2
        %v1404 = vmax.f32 %v1402, %v1403
        %v1405 = vrot.slane %v1404, 1
        %v1406 = vmax.f32 %v1404, %v1405
        %v1407 = vsel %vm453, %v1055, -inf
        %v1408 = vrot.slane %v1407, 4
        %v1409 = vmax.f32 %v1407, %v1408
        %v1410 = vrot.slane %v1409, 2
        %v1411 = vmax.f32 %v1409, %v1410
        %v1412 = vrot.slane %v1411, 1
        %v1413 = vmax.f32 %v1411, %v1412
        %v1414 = vsel %vm453, %v1063, -inf
        %v1415 = vrot.slane %v1414, 4
        %v1416 = vmax.f32 %v1414, %v1415
        %v1417 = vrot.slane %v1416, 2
        %v1418 = vmax.f32 %v1416, %v1417
        %v1419 = vrot.slane %v1418, 1
        %v1420 = vmax.f32 %v1418, %v1419
        %v1421 = vsel %vm453, %v1071, -inf
        %v1422 = vrot.slane %v1421, 4
        %v1423 = vmax.f32 %v1421, %v1422
        %v1424 = vrot.slane %v1423, 2
        %v1425 = vmax.f32 %v1423, %v1424
        %v1426 = vrot.slane %v1425, 1
        %v1427 = vmax.f32 %v1425, %v1426
        %v1428 = vsel %vm453, %v1070, -inf
        %v1429 = vrot.slane %v1428, 4
        %v1430 = vmax.f32 %v1428, %v1429
        %v1431 = vrot.slane %v1430, 2
        %v1432 = vmax.f32 %v1430, %v1431
        %v1433 = vrot.slane %v1432, 1
        %v1434 = vmax.f32 %v1432, %v1433
        %v1435 = vsel %vm453, %v1072, -inf
        %v1436 = vrot.slane %v1435, 4
        %v1437 = vmax.f32 %v1435, %v1436
        %v1438 = vrot.slane %v1437, 2
        %v1439 = vmax.f32 %v1437, %v1438
        %v1440 = vrot.slane %v1439, 1
        %v1441 = vmax.f32 %v1439, %v1440
        %v1442 = vsel %vm453, %v1080, -inf
        %v1443 = vrot.slane %v1442, 4
        %v1444 = vmax.f32 %v1442, %v1443
        %v1445 = vrot.slane %v1444, 2
        %v1446 = vmax.f32 %v1444, %v1445
        %v1447 = vrot.slane %v1446, 1
        %v1448 = vmax.f32 %v1446, %v1447
        %v1449 = vsel %vm453, %v1088, -inf
        %v1450 = vrot.slane %v1449, 4
        %v1451 = vmax.f32 %v1449, %v1450
        %v1452 = vrot.slane %v1451, 2
        %v1453 = vmax.f32 %v1451, %v1452
        %v1454 = vrot.slane %v1453, 1
        %v1455 = vmax.f32 %v1453, %v1454
        %v1456 = vsel %vm453, %v1087, -inf
        %v1457 = vrot.slane %v1456, 4
        %v1458 = vmax.f32 %v1456, %v1457
        %v1459 = vrot.slane %v1458, 2
        %v1460 = vmax.f32 %v1458, %v1459
        %v1461 = vrot.slane %v1460, 1
        %v1462 = vmax.f32 %v1460, %v1461
        %v1463 = vsel %vm453, %v1089, -inf
        %v1464 = vrot.slane %v1463, 4
        %v1465 = vmax.f32 %v1463, %v1464
        %v1466 = vrot.slane %v1465, 2
        %v1467 = vmax.f32 %v1465, %v1466
        %v1468 = vrot.slane %v1467, 1
        %v1469 = vmax.f32 %v1467, %v1468
        %v1470 = vsel %vm453, %v1097, -inf
        %v1471 = vrot.slane %v1470, 4
        %v1472 = vmax.f32 %v1470, %v1471
        %v1473 = vrot.slane %v1472, 2
        %v1474 = vmax.f32 %v1472, %v1473
        %v1475 = vrot.slane %v1474, 1
        %v1476 = vmax.f32 %v1474, %v1475
        %v1477 = vsel %vm453, %v1105, -inf
        %v1478 = vrot.slane %v1477, 4
        %v1479 = vmax.f32 %v1477, %v1478
        %v1480 = vrot.slane %v1479, 2
        %v1481 = vmax.f32 %v1479, %v1480
        %v1482 = vrot.slane %v1481, 1
        %v1483 = vmax.f32 %v1481, %v1482
        %v1484 = vsel %vm453, %v1104, -inf
        %v1485 = vrot.slane %v1484, 4
        %v1486 = vmax.f32 %v1484, %v1485
        %v1487 = vrot.slane %v1486, 2
        %v1488 = vmax.f32 %v1486, %v1487
        %v1489 = vrot.slane %v1488, 1
        %v1490 = vmax.f32 %v1488, %v1489
        %v1491 = vsel %vm453, %v1106, -inf
        %v1492 = vrot.slane %v1491, 4
        %v1493 = vmax.f32 %v1491, %v1492
        %v1494 = vrot.slane %v1493, 2
        %v1495 = vmax.f32 %v1493, %v1494
        %v1496 = vrot.slane %v1495, 1
        %v1497 = vmax.f32 %v1495, %v1496
        %v1498 = vsel %vm453, %v1114, -inf
        %v1499 = vrot.slane %v1498, 4
        %v1500 = vmax.f32 %v1498, %v1499
        %v1501 = vrot.slane %v1500, 2
        %v1502 = vmax.f32 %v1500, %v1501
        %v1503 = vrot.slane %v1502, 1
        %v1504 = vmax.f32 %v1502, %v1503
        %v1505 = vsel %vm453, %v1122, -inf
        %v1506 = vrot.slane %v1505, 4
        %v1507 = vmax.f32 %v1505, %v1506
        %v1508 = vrot.slane %v1507, 2
        %v1509 = vmax.f32 %v1507, %v1508
        %v1510 = vrot.slane %v1509, 1
        %v1511 = vmax.f32 %v1509, %v1510
        %v1512 = vsel %vm453, %v1121, -inf
        %v1513 = vrot.slane %v1512, 4
        %v1514 = vmax.f32 %v1512, %v1513
        %v1515 = vrot.slane %v1514, 2
        %v1516 = vmax.f32 %v1514, %v1515
        %v1517 = vrot.slane %v1516, 1
        %v1518 = vmax.f32 %v1516, %v1517
        %v1519 = vsel %vm453, %v1123, -inf
        %v1520 = vrot.slane %v1519, 4
        %v1521 = vmax.f32 %v1519, %v1520
        %v1522 = vrot.slane %v1521, 2
        %v1523 = vmax.f32 %v1521, %v1522
        %v1524 = vrot.slane %v1523, 1
        %v1525 = vmax.f32 %v1523, %v1524
        %v1526 = vsel %vm453, %v1131, -inf
        %v1527 = vrot.slane %v1526, 4
        %v1528 = vmax.f32 %v1526, %v1527
        %v1529 = vrot.slane %v1528, 2
        %v1530 = vmax.f32 %v1528, %v1529
        %v1531 = vrot.slane %v1530, 1
        %v1532 = vmax.f32 %v1530, %v1531
        %v1533 = vsel %vm453, %v1139, -inf
        %v1534 = vrot.slane %v1533, 4
        %v1535 = vmax.f32 %v1533, %v1534
        %v1536 = vrot.slane %v1535, 2
        %v1537 = vmax.f32 %v1535, %v1536
        %v1538 = vrot.slane %v1537, 1
        %v1539 = vmax.f32 %v1537, %v1538
        %v1540 = vsel %vm453, %v1138, -inf
        %v1541 = vrot.slane %v1540, 4
        %v1542 = vmax.f32 %v1540, %v1541
        %v1543 = vrot.slane %v1542, 2
        %v1544 = vmax.f32 %v1542, %v1543
        %v1545 = vrot.slane %v1544, 1
        %v1546 = vmax.f32 %v1544, %v1545
        %v1547 = vsel %vm453, %v1140, -inf
        %v1548 = vrot.slane %v1547, 4
        %v1549 = vmax.f32 %v1547, %v1548
        %v1550 = vrot.slane %v1549, 2
        %v1551 = vmax.f32 %v1549, %v1550
        %v1552 = vrot.slane %v1551, 1
        %v1553 = vmax.f32 %v1551, %v1552
        %v1554 = vsel %vm453, %v1148, -inf
        %v1555 = vrot.slane %v1554, 4
        %v1556 = vmax.f32 %v1554, %v1555
        %v1557 = vrot.slane %v1556, 2
        %v1558 = vmax.f32 %v1556, %v1557
        %v1559 = vrot.slane %v1558, 1
        %v1560 = vmax.f32 %v1558, %v1559
        %v1561 = vsel %vm453, %v1156, -inf
        %v1562 = vrot.slane %v1561, 4
        %v1563 = vmax.f32 %v1561, %v1562
        %v1564 = vrot.slane %v1563, 2
        %v1565 = vmax.f32 %v1563, %v1564
        %v1566 = vrot.slane %v1565, 1
        %v1567 = vmax.f32 %v1565, %v1566
        %v1568 = vsel %vm453, %v1155, -inf
        %v1569 = vrot.slane %v1568, 4
        %v1570 = vmax.f32 %v1568, %v1569
        %v1571 = vrot.slane %v1570, 2
        %v1572 = vmax.f32 %v1570, %v1571
        %v1573 = vrot.slane %v1572, 1
        %v1574 = vmax.f32 %v1572, %v1573
        %v1575 = vsel %vm453, %v1157, -inf
        %v1576 = vrot.slane %v1575, 4
        %v1577 = vmax.f32 %v1575, %v1576
        %v1578 = vrot.slane %v1577, 2
        %v1579 = vmax.f32 %v1577, %v1578
        %v1580 = vrot.slane %v1579, 1
        %v1581 = vmax.f32 %v1579, %v1580
        %v1582 = vsel %vm453, %v1165, -inf
        %v1583 = vrot.slane %v1582, 4
        %v1584 = vmax.f32 %v1582, %v1583
        %v1585 = vrot.slane %v1584, 2
        %v1586 = vmax.f32 %v1584, %v1585
        %v1587 = vrot.slane %v1586, 1
        %v1588 = vmax.f32 %v1586, %v1587
        %v1589 = vsel %vm453, %v1173, -inf
        %v1590 = vrot.slane %v1589, 4
        %v1591 = vmax.f32 %v1589, %v1590
        %v1592 = vrot.slane %v1591, 2
        %v1593 = vmax.f32 %v1591, %v1592
        %v1594 = vrot.slane %v1593, 1
        %v1595 = vmax.f32 %v1593, %v1594
        %v1596 = vsel %vm453, %v1172, -inf
        %v1597 = vrot.slane %v1596, 4
        %v1598 = vmax.f32 %v1596, %v1597
        %v1599 = vrot.slane %v1598, 2
        %v1600 = vmax.f32 %v1598, %v1599
        %v1601 = vrot.slane %v1600, 1
        %v1602 = vmax.f32 %v1600, %v1601
        %v1603 = vsel %vm453, %v1174, -inf
        %v1604 = vrot.slane %v1603, 4
        %v1605 = vmax.f32 %v1603, %v1604
        %v1606 = vrot.slane %v1605, 2
        %v1607 = vmax.f32 %v1605, %v1606
        %v1608 = vrot.slane %v1607, 1
        %v1609 = vmax.f32 %v1607, %v1608
        %v1610 = vsel %vm453, %v1182, -inf
        %v1611 = vrot.slane %v1610, 4
        %v1612 = vmax.f32 %v1610, %v1611
        %v1613 = vrot.slane %v1612, 2
        %v1614 = vmax.f32 %v1612, %v1613
        %v1615 = vrot.slane %v1614, 1
        %v1616 = vmax.f32 %v1614, %v1615
        %v1617 = vsel %vm453, %v1190, -inf
        %v1618 = vrot.slane %v1617, 4
        %v1619 = vmax.f32 %v1617, %v1618
        %v1620 = vrot.slane %v1619, 2
        %v1621 = vmax.f32 %v1619, %v1620
        %v1622 = vrot.slane %v1621, 1
        %v1623 = vmax.f32 %v1621, %v1622
        %v1624 = vsel %vm453, %v1189, -inf
        %v1625 = vrot.slane %v1624, 4
        %v1626 = vmax.f32 %v1624, %v1625
        %v1627 = vrot.slane %v1626, 2
        %v1628 = vmax.f32 %v1626, %v1627
        %v1629 = vrot.slane %v1628, 1
        %v1630 = vmax.f32 %v1628, %v1629
        %v1631 = vsel %vm453, %v1191, -inf
        %v1632 = vrot.slane %v1631, 4
        %v1633 = vmax.f32 %v1631, %v1632
        %v1634 = vrot.slane %v1633, 2
        %v1635 = vmax.f32 %v1633, %v1634
        %v1636 = vrot.slane %v1635, 1
        %v1637 = vmax.f32 %v1635, %v1636
        %v1638 = vsel %vm453, %v1199, -inf
        %v1639 = vrot.slane %v1638, 4
        %v1640 = vmax.f32 %v1638, %v1639
        %v1641 = vrot.slane %v1640, 2
        %v1642 = vmax.f32 %v1640, %v1641
        %v1643 = vrot.slane %v1642, 1
        %v1644 = vmax.f32 %v1642, %v1643
        %v1645 = vsel %vm453, %v1207, -inf
        %v1646 = vrot.slane %v1645, 4
        %v1647 = vmax.f32 %v1645, %v1646
        %v1648 = vrot.slane %v1647, 2
        %v1649 = vmax.f32 %v1647, %v1648
        %v1650 = vrot.slane %v1649, 1
        %v1651 = vmax.f32 %v1649, %v1650
        %v1652 = vsel %vm453, %v1206, -inf
        %v1653 = vrot.slane %v1652, 4
        %v1654 = vmax.f32 %v1652, %v1653
        %v1655 = vrot.slane %v1654, 2
        %v1656 = vmax.f32 %v1654, %v1655
        %v1657 = vrot.slane %v1656, 1
        %v1658 = vmax.f32 %v1656, %v1657
        %v1659 = vsel %vm453, %v1208, -inf
        %v1660 = vrot.slane %v1659, 4
        %v1661 = vmax.f32 %v1659, %v1660
        %v1662 = vrot.slane %v1661, 2
        %v1663 = vmax.f32 %v1661, %v1662
        %v1664 = vrot.slane %v1663, 1
        %v1665 = vmax.f32 %v1663, %v1664
        %v1666 = vsel %vm453, %v1216, -inf
        %v1667 = vrot.slane %v1666, 4
        %v1668 = vmax.f32 %v1666, %v1667
        %v1669 = vrot.slane %v1668, 2
        %v1670 = vmax.f32 %v1668, %v1669
        %v1671 = vrot.slane %v1670, 1
        %v1672 = vmax.f32 %v1670, %v1671
        %v1673 = vsel %vm453, %v1224, -inf
        %v1674 = vrot.slane %v1673, 4
        %v1675 = vmax.f32 %v1673, %v1674
        %v1676 = vrot.slane %v1675, 2
        %v1677 = vmax.f32 %v1675, %v1676
        %v1678 = vrot.slane %v1677, 1
        %v1679 = vmax.f32 %v1677, %v1678
        %v1680 = vsel %vm453, %v1223, -inf
        %v1681 = vrot.slane %v1680, 4
        %v1682 = vmax.f32 %v1680, %v1681
        %v1683 = vrot.slane %v1682, 2
        %v1684 = vmax.f32 %v1682, %v1683
        %v1685 = vrot.slane %v1684, 1
        %v1686 = vmax.f32 %v1684, %v1685
        %v1687 = vsel %vm453, %v1225, -inf
        %v1688 = vrot.slane %v1687, 4
        %v1689 = vmax.f32 %v1687, %v1688
        %v1690 = vrot.slane %v1689, 2
        %v1691 = vmax.f32 %v1689, %v1690
        %v1692 = vrot.slane %v1691, 1
        %v1693 = vmax.f32 %v1691, %v1692
        %v1694 = vsel %vm453, %v1233, -inf
        %v1695 = vrot.slane %v1694, 4
        %v1696 = vmax.f32 %v1694, %v1695
        %v1697 = vrot.slane %v1696, 2
        %v1698 = vmax.f32 %v1696, %v1697
        %v1699 = vrot.slane %v1698, 1
        %v1700 = vmax.f32 %v1698, %v1699
        %v1701 = vsel %vm453, %v1241, -inf
        %v1702 = vrot.slane %v1701, 4
        %v1703 = vmax.f32 %v1701, %v1702
        %v1704 = vrot.slane %v1703, 2
        %v1705 = vmax.f32 %v1703, %v1704
        %v1706 = vrot.slane %v1705, 1
        %v1707 = vmax.f32 %v1705, %v1706
        %v1708 = vsel %vm453, %v1240, -inf
        %v1709 = vrot.slane %v1708, 4
        %v1710 = vmax.f32 %v1708, %v1709
        %v1711 = vrot.slane %v1710, 2
        %v1712 = vmax.f32 %v1710, %v1711
        %v1713 = vrot.slane %v1712, 1
        %v1714 = vmax.f32 %v1712, %v1713
        %v1715 = vsel %vm453, %v1242, -inf
        %v1716 = vrot.slane %v1715, 4
        %v1717 = vmax.f32 %v1715, %v1716
        %v1718 = vrot.slane %v1717, 2
        %v1719 = vmax.f32 %v1717, %v1718
        %v1720 = vrot.slane %v1719, 1
        %v1721 = vmax.f32 %v1719, %v1720
        %v1722 = vsel %vm453, %v1250, -inf
        %v1723 = vrot.slane %v1722, 4
        %v1724 = vmax.f32 %v1722, %v1723
        %v1725 = vrot.slane %v1724, 2
        %v1726 = vmax.f32 %v1724, %v1725
        %v1727 = vrot.slane %v1726, 1
        %v1728 = vmax.f32 %v1726, %v1727
        %v1729 = vsel %vm453, %v1258, -inf
        %v1730 = vrot.slane %v1729, 4
        %v1731 = vmax.f32 %v1729, %v1730
        %v1732 = vrot.slane %v1731, 2
        %v1733 = vmax.f32 %v1731, %v1732
        %v1734 = vrot.slane %v1733, 1
        %v1735 = vmax.f32 %v1733, %v1734
        %v1736 = vsel %vm453, %v1257, -inf
        %v1737 = vrot.slane %v1736, 4
        %v1738 = vmax.f32 %v1736, %v1737
        %v1739 = vrot.slane %v1738, 2
        %v1740 = vmax.f32 %v1738, %v1739
        %v1741 = vrot.slane %v1740, 1
        %v1742 = vmax.f32 %v1740, %v1741
        %v1743 = vsel %vm453, %v1259, -inf
        %v1744 = vrot.slane %v1743, 4
        %v1745 = vmax.f32 %v1743, %v1744
        %v1746 = vrot.slane %v1745, 2
        %v1747 = vmax.f32 %v1745, %v1746
        %v1748 = vrot.slane %v1747, 1
        %v1749 = vmax.f32 %v1747, %v1748
        %v1750 = vsel %vm453, %v1267, -inf
        %v1751 = vrot.slane %v1750, 4
        %v1752 = vmax.f32 %v1750, %v1751
        %v1753 = vrot.slane %v1752, 2
        %v1754 = vmax.f32 %v1752, %v1753
        %v1755 = vrot.slane %v1754, 1
        %v1756 = vmax.f32 %v1754, %v1755
        %v1757 = vsel %vm453, %v1275, -inf
        %v1758 = vrot.slane %v1757, 4
        %v1759 = vmax.f32 %v1757, %v1758
        %v1760 = vrot.slane %v1759, 2
        %v1761 = vmax.f32 %v1759, %v1760
        %v1762 = vrot.slane %v1761, 1
        %v1763 = vmax.f32 %v1761, %v1762
        %v1764 = vsel %vm453, %v1274, -inf
        %v1765 = vrot.slane %v1764, 4
        %v1766 = vmax.f32 %v1764, %v1765
        %v1767 = vrot.slane %v1766, 2
        %v1768 = vmax.f32 %v1766, %v1767
        %v1769 = vrot.slane %v1768, 1
        %v1770 = vmax.f32 %v1768, %v1769
        %v1771 = vsel %vm453, %v1276, -inf
        %v1772 = vrot.slane %v1771, 4
        %v1773 = vmax.f32 %v1771, %v1772
        %v1774 = vrot.slane %v1773, 2
        %v1775 = vmax.f32 %v1773, %v1774
        %v1776 = vrot.slane %v1775, 1
        %v1777 = vmax.f32 %v1775, %v1776
        %v1778 = vsel %vm453, %v1284, -inf
        %v1779 = vrot.slane %v1778, 4
        %v1780 = vmax.f32 %v1778, %v1779
        %v1781 = vrot.slane %v1780, 2
        %v1782 = vmax.f32 %v1780, %v1781
        %v1783 = vrot.slane %v1782, 1
        %v1784 = vmax.f32 %v1782, %v1783
        %v1785 = vsel %vm453, %v1292, -inf
        %v1786 = vrot.slane %v1785, 4
        %v1787 = vmax.f32 %v1785, %v1786
        %v1788 = vrot.slane %v1787, 2
        %v1789 = vmax.f32 %v1787, %v1788
        %v1790 = vrot.slane %v1789, 1
        %v1791 = vmax.f32 %v1789, %v1790
        %v1792 = vsel %vm453, %v1291, -inf
        %v1793 = vrot.slane %v1792, 4
        %v1794 = vmax.f32 %v1792, %v1793
        %v1795 = vrot.slane %v1794, 2
        %v1796 = vmax.f32 %v1794, %v1795
        %v1797 = vrot.slane %v1796, 1
        %v1798 = vmax.f32 %v1796, %v1797
        %v1799 = vsel %vm453, %v1293, -inf
        %v1800 = vrot.slane %v1799, 4
        %v1801 = vmax.f32 %v1799, %v1800
        %v1802 = vrot.slane %v1801, 2
        %v1803 = vmax.f32 %v1801, %v1802
        %v1804 = vrot.slane %v1803, 1
        %v1805 = vmax.f32 %v1803, %v1804
        %vm1870 = vcmask 1041409
        %v1871 = vsel %vm1870, %v1371, %v1364
        %vm1872 = vcmask 1042434
        %v1873 = vsel %vm1872, %v1378, %v1871
        %vm1874 = vcmask 1043459
        %v1875 = vsel %vm1874, %v1385, %v1873
        %vm1876 = vcmask 1044484
        %v1877 = vsel %vm1876, %v1392, %v1875
        %vm1878 = vcmask 1045509
        %v1879 = vsel %vm1878, %v1399, %v1877
        %vm1880 = vcmask 1046534
        %v1881 = vsel %vm1880, %v1406, %v1879
        %vm1882 = vcmask 1047559
        %v1883 = vsel %vm1882, %v1413, %v1881
        %v1884 = vsel %vm1870, %v1427, %v1420
        %v1885 = vsel %vm1872, %v1434, %v1884
        %v1886 = vsel %vm1874, %v1441, %v1885
        %v1887 = vsel %vm1876, %v1448, %v1886
        %v1888 = vsel %vm1878, %v1455, %v1887
        %v1889 = vsel %vm1880, %v1462, %v1888
        %v1890 = vsel %vm1882, %v1469, %v1889
        %v1891 = vsel %vm1870, %v1483, %v1476
        %v1892 = vsel %vm1872, %v1490, %v1891
        %v1893 = vsel %vm1874, %v1497, %v1892
        %v1894 = vsel %vm1876, %v1504, %v1893
        %v1895 = vsel %vm1878, %v1511, %v1894
        %v1896 = vsel %vm1880, %v1518, %v1895
        %v1897 = vsel %vm1882, %v1525, %v1896
        %v1898 = vsel %vm1870, %v1539, %v1532
        %v1899 = vsel %vm1872, %v1546, %v1898
        %v1900 = vsel %vm1874, %v1553, %v1899
        %v1901 = vsel %vm1876, %v1560, %v1900
        %v1902 = vsel %vm1878, %v1567, %v1901
        %v1903 = vsel %vm1880, %v1574, %v1902
        %v1904 = vsel %vm1882, %v1581, %v1903
        %v1905 = vsel %vm1870, %v1595, %v1588
        %v1906 = vsel %vm1872, %v1602, %v1905
        %v1907 = vsel %vm1874, %v1609, %v1906
        %v1908 = vsel %vm1876, %v1616, %v1907
        %v1909 = vsel %vm1878, %v1623, %v1908
        %v1910 = vsel %vm1880, %v1630, %v1909
        %v1911 = vsel %vm1882, %v1637, %v1910
        %v1912 = vsel %vm1870, %v1651, %v1644
        %v1913 = vsel %vm1872, %v1658, %v1912
        %v1914 = vsel %vm1874, %v1665, %v1913
        %v1915 = vsel %vm1876, %v1672, %v1914
        %v1916 = vsel %vm1878, %v1679, %v1915
        %v1917 = vsel %vm1880, %v1686, %v1916
        %v1918 = vsel %vm1882, %v1693, %v1917
        %v1919 = vsel %vm1870, %v1707, %v1700
        %v1920 = vsel %vm1872, %v1714, %v1919
        %v1921 = vsel %vm1874, %v1721, %v1920
        %v1922 = vsel %vm1876, %v1728, %v1921
        %v1923 = vsel %vm1878, %v1735, %v1922
        %v1924 = vsel %vm1880, %v1742, %v1923
        %v1925 = vsel %vm1882, %v1749, %v1924
        %v1926 = vsel %vm1870, %v1763, %v1756
        %v1927 = vsel %vm1872, %v1770, %v1926
        %v1928 = vsel %vm1874, %v1777, %v1927
        %v1929 = vsel %vm1876, %v1784, %v1928
        %v1930 = vsel %vm1878, %v1791, %v1929
        %v1931 = vsel %vm1880, %v1798, %v1930
        %v1932 = vsel %vm1882, %v1805, %v1931
        %s1941 = scalar_lea.vmem [#allocation2], 16
        %1942 = vst.msk [vmem:[%s1941 + $0x1] sm:$0xff] %vm451, %v1883
        %1943 = vst.msk [vmem:[%s1941 + $0x11] sm:$0xff] %vm451, %v1890
        %1944 = vst.msk [vmem:[%s1941 + $0x21] sm:$0xff] %vm451, %v1897
        %1945 = vst.msk [vmem:[%s1941 + $0x31] sm:$0xff] %vm451, %v1904
        %1946 = vst.msk [vmem:[%s1941 + $0x41] sm:$0xff] %vm451, %v1911
        %1947 = vst.msk [vmem:[%s1941 + $0x51] sm:$0xff] %vm451, %v1918
        %1948 = vst.msk [vmem:[%s1941 + $0x61] sm:$0xff] %vm451, %v1925
        %1949 = vst.msk [vmem:[%s1941 + $0x71] sm:$0xff] %vm451, %v1932
        %v1950 = vld [vmem:[#allocation2] sm:$0xff]
        %v1951 = vld [vmem:[#allocation2 + $0x10] sm:$0xff]
        %v1952 = vld [vmem:[#allocation2 + $0x20] sm:$0xff]
        %v1953 = vld [vmem:[#allocation2 + $0x30] sm:$0xff]
        %v1954 = vld [vmem:[#allocation2 + $0x40] sm:$0xff]
        %v1955 = vld [vmem:[#allocation2 + $0x50] sm:$0xff]
        %v1956 = vld [vmem:[#allocation2 + $0x60] sm:$0xff]
        %v1957 = vld [vmem:[#allocation2 + $0x70] sm:$0xff]
        %1958 = vst.msk [vmem:[#allocation3] sm:$0xff] %vm451, %v1950
        %1959 = vst.msk [vmem:[#allocation3 + $0x18] sm:$0xff] %vm451, %v1951
        %1960 = vst.msk [vmem:[#allocation3 + $0x30] sm:$0xff] %vm451, %v1952
        %1961 = vst.msk [vmem:[#allocation3 + $0x48] sm:$0xff] %vm451, %v1953
        %1962 = vst.msk [vmem:[#allocation3 + $0x60] sm:$0xff] %vm451, %v1954
        %1963 = vst.msk [vmem:[#allocation3 + $0x78] sm:$0xff] %vm451, %v1955
        %1964 = vst.msk [vmem:[#allocation3 + $0x90] sm:$0xff] %vm451, %v1956
        %1965 = vst.msk [vmem:[#allocation3 + $0xa8] sm:$0xff] %vm451, %v1957
        %v1966 = vld [vmem:[#allocation2 + $0x1] sm:$0xff]
        %v1967 = vld [vmem:[#allocation2 + $0x11] sm:$0xff]
        %v1968 = vld [vmem:[#allocation2 + $0x21] sm:$0xff]
        %v1969 = vld [vmem:[#allocation2 + $0x31] sm:$0xff]
        %v1970 = vld [vmem:[#allocation2 + $0x41] sm:$0xff]
        %v1971 = vld [vmem:[#allocation2 + $0x51] sm:$0xff]
        %v1972 = vld [vmem:[#allocation2 + $0x61] sm:$0xff]
        %v1973 = vld [vmem:[#allocation2 + $0x71] sm:$0xff]
        %1982 = vrot.lane.b32.xlu0 %v1966, 32
        %v1983 = vpop.permute.xlu0 %1982
        %1984 = vrot.lane.b32.xlu0 %v1967, 32
        %v1985 = vpop.permute.xlu0 %1984
        %1986 = vrot.lane.b32.xlu0 %v1968, 32
        %v1987 = vpop.permute.xlu0 %1986
        %1988 = vrot.lane.b32.xlu0 %v1969, 32
        %v1989 = vpop.permute.xlu0 %1988
        %1990 = vrot.lane.b32.xlu0 %v1970, 32
        %v1991 = vpop.permute.xlu0 %1990
        %1992 = vrot.lane.b32.xlu0 %v1971, 32
        %v1993 = vpop.permute.xlu0 %1992
        %1994 = vrot.lane.b32.xlu0 %v1972, 32
        %v1995 = vpop.permute.xlu0 %1994
        %1996 = vrot.lane.b32.xlu0 %v1973, 32
        %v1997 = vpop.permute.xlu0 %1996
        %vm2006 = vcmask 523520
        %2007 = vst.msk [vmem:[#allocation3] sm:$0xff] %vm2006, %v1983
        %2008 = vst.msk [vmem:[#allocation3 + $0x18] sm:$0xff] %vm2006, %v1985
        %2009 = vst.msk [vmem:[#allocation3 + $0x30] sm:$0xff] %vm2006, %v1987
        %2010 = vst.msk [vmem:[#allocation3 + $0x48] sm:$0xff] %vm2006, %v1989
        %2011 = vst.msk [vmem:[#allocation3 + $0x60] sm:$0xff] %vm2006, %v1991
        %2012 = vst.msk [vmem:[#allocation3 + $0x78] sm:$0xff] %vm2006, %v1993
        %2013 = vst.msk [vmem:[#allocation3 + $0x90] sm:$0xff] %vm2006, %v1995
        %2014 = vst.msk [vmem:[#allocation3 + $0xa8] sm:$0xff] %vm2006, %v1997
        %v2015 = vld [vmem:[#allocation2 + $0x2] sm:$0xff]
        %v2016 = vld [vmem:[#allocation2 + $0x12] sm:$0xff]
        %v2017 = vld [vmem:[#allocation2 + $0x22] sm:$0xff]
        %v2018 = vld [vmem:[#allocation2 + $0x32] sm:$0xff]
        %v2019 = vld [vmem:[#allocation2 + $0x42] sm:$0xff]
        %v2020 = vld [vmem:[#allocation2 + $0x52] sm:$0xff]
        %v2021 = vld [vmem:[#allocation2 + $0x62] sm:$0xff]
        %v2022 = vld [vmem:[#allocation2 + $0x72] sm:$0xff]
        %2031 = vrot.lane.b32.xlu0 %v2015, 64
        %v2032 = vpop.permute.xlu0 %2031
        %2033 = vrot.lane.b32.xlu0 %v2016, 64
        %v2034 = vpop.permute.xlu0 %2033
        %2035 = vrot.lane.b32.xlu0 %v2017, 64
        %v2036 = vpop.permute.xlu0 %2035
        %2037 = vrot.lane.b32.xlu0 %v2018, 64
        %v2038 = vpop.permute.xlu0 %2037
        %2039 = vrot.lane.b32.xlu0 %v2019, 64
        %v2040 = vpop.permute.xlu0 %2039
        %2041 = vrot.lane.b32.xlu0 %v2020, 64
        %v2042 = vpop.permute.xlu0 %2041
        %2043 = vrot.lane.b32.xlu0 %v2021, 64
        %v2044 = vpop.permute.xlu0 %2043
        %2045 = vrot.lane.b32.xlu0 %v2022, 64
        %v2046 = vpop.permute.xlu0 %2045
        %vm2055 = vcmask 785920
        %2056 = vst.msk [vmem:[#allocation3] sm:$0xff] %vm2055, %v2032
        %2057 = vst.msk [vmem:[#allocation3 + $0x18] sm:$0xff] %vm2055, %v2034
        %2058 = vst.msk [vmem:[#allocation3 + $0x30] sm:$0xff] %vm2055, %v2036
        %2059 = vst.msk [vmem:[#allocation3 + $0x48] sm:$0xff] %vm2055, %v2038
        %2060 = vst.msk [vmem:[#allocation3 + $0x60] sm:$0xff] %vm2055, %v2040
        %2061 = vst.msk [vmem:[#allocation3 + $0x78] sm:$0xff] %vm2055, %v2042
        %2062 = vst.msk [vmem:[#allocation3 + $0x90] sm:$0xff] %vm2055, %v2044
        %2063 = vst.msk [vmem:[#allocation3 + $0xa8] sm:$0xff] %vm2055, %v2046
        %v2064 = vld [vmem:[%s1941] sm:$0xff]
        %v2065 = vld [vmem:[%s1941 + $0x10] sm:$0xff]
        %v2066 = vld [vmem:[%s1941 + $0x20] sm:$0xff]
        %v2067 = vld [vmem:[%s1941 + $0x30] sm:$0xff]
        %v2068 = vld [vmem:[%s1941 + $0x40] sm:$0xff]
        %v2069 = vld [vmem:[%s1941 + $0x50] sm:$0xff]
        %v2070 = vld [vmem:[%s1941 + $0x60] sm:$0xff]
        %v2071 = vld [vmem:[%s1941 + $0x70] sm:$0xff]
        %2080 = vrot.lane.b32.xlu0 %v2064, 96
        %v2081 = vpop.permute.xlu0 %2080
        %2082 = vrot.lane.b32.xlu0 %v2065, 96
        %v2083 = vpop.permute.xlu0 %2082
        %2084 = vrot.lane.b32.xlu0 %v2066, 96
        %v2085 = vpop.permute.xlu0 %2084
        %2086 = vrot.lane.b32.xlu0 %v2067, 96
        %v2087 = vpop.permute.xlu0 %2086
        %2088 = vrot.lane.b32.xlu0 %v2068, 96
        %v2089 = vpop.permute.xlu0 %2088
        %2090 = vrot.lane.b32.xlu0 %v2069, 96
        %v2091 = vpop.permute.xlu0 %2090
        %2092 = vrot.lane.b32.xlu0 %v2070, 96
        %v2093 = vpop.permute.xlu0 %2092
        %2094 = vrot.lane.b32.xlu0 %v2071, 96
        %v2095 = vpop.permute.xlu0 %2094
        %vm2104 = vcmask 1048320
        %2105 = vst.msk [vmem:[#allocation3] sm:$0xff] %vm2104, %v2081
        %2106 = vst.msk [vmem:[#allocation3 + $0x18] sm:$0xff] %vm2104, %v2083
        %2107 = vst.msk [vmem:[#allocation3 + $0x30] sm:$0xff] %vm2104, %v2085
        %2108 = vst.msk [vmem:[#allocation3 + $0x48] sm:$0xff] %vm2104, %v2087
        %2109 = vst.msk [vmem:[#allocation3 + $0x60] sm:$0xff] %vm2104, %v2089
        %2110 = vst.msk [vmem:[#allocation3 + $0x78] sm:$0xff] %vm2104, %v2091
        %2111 = vst.msk [vmem:[#allocation3 + $0x90] sm:$0xff] %vm2104, %v2093
        %2112 = vst.msk [vmem:[#allocation3 + $0xa8] sm:$0xff] %vm2104, %v2095
        %v2113 = vld [vmem:[%s1941 + $0x1] sm:$0xff]
        %v2114 = vld [vmem:[%s1941 + $0x11] sm:$0xff]
        %v2115 = vld [vmem:[%s1941 + $0x21] sm:$0xff]
        %v2116 = vld [vmem:[%s1941 + $0x31] sm:$0xff]
        %v2117 = vld [vmem:[%s1941 + $0x41] sm:$0xff]
        %v2118 = vld [vmem:[%s1941 + $0x51] sm:$0xff]
        %v2119 = vld [vmem:[%s1941 + $0x61] sm:$0xff]
        %v2120 = vld [vmem:[%s1941 + $0x71] sm:$0xff]
        %2121 = vst.msk [vmem:[#allocation3 + $0x8] sm:$0xff] %vm451, %v2113
        %2122 = vst.msk [vmem:[#allocation3 + $0x20] sm:$0xff] %vm451, %v2114
        %2123 = vst.msk [vmem:[#allocation3 + $0x38] sm:$0xff] %vm451, %v2115
        %2124 = vst.msk [vmem:[#allocation3 + $0x50] sm:$0xff] %vm451, %v2116
        %2125 = vst.msk [vmem:[#allocation3 + $0x68] sm:$0xff] %vm451, %v2117
        %2126 = vst.msk [vmem:[#allocation3 + $0x80] sm:$0xff] %vm451, %v2118
        %2127 = vst.msk [vmem:[#allocation3 + $0x98] sm:$0xff] %vm451, %v2119
        %2128 = vst.msk [vmem:[#allocation3 + $0xb0] sm:$0xff] %vm451, %v2120
        %v2129 = vld [vmem:[%s1941 + $0x2] sm:$0xff]
        %v2130 = vld [vmem:[%s1941 + $0x12] sm:$0xff]
        %v2131 = vld [vmem:[%s1941 + $0x22] sm:$0xff]
        %v2132 = vld [vmem:[%s1941 + $0x32] sm:$0xff]
        %v2133 = vld [vmem:[%s1941 + $0x42] sm:$0xff]
        %v2134 = vld [vmem:[%s1941 + $0x52] sm:$0xff]
        %v2135 = vld [vmem:[%s1941 + $0x62] sm:$0xff]
        %v2136 = vld [vmem:[%s1941 + $0x72] sm:$0xff]
        %2145 = vrot.lane.b32.xlu0 %v2129, 32
        %v2146 = vpop.permute.xlu0 %2145
        %2147 = vrot.lane.b32.xlu0 %v2130, 32
        %v2148 = vpop.permute.xlu0 %2147
        %2149 = vrot.lane.b32.xlu0 %v2131, 32
        %v2150 = vpop.permute.xlu0 %2149
        %2151 = vrot.lane.b32.xlu0 %v2132, 32
        %v2152 = vpop.permute.xlu0 %2151
        %2153 = vrot.lane.b32.xlu0 %v2133, 32
        %v2154 = vpop.permute.xlu0 %2153
        %2155 = vrot.lane.b32.xlu0 %v2134, 32
        %v2156 = vpop.permute.xlu0 %2155
        %2157 = vrot.lane.b32.xlu0 %v2135, 32
        %v2158 = vpop.permute.xlu0 %2157
        %2159 = vrot.lane.b32.xlu0 %v2136, 32
        %v2160 = vpop.permute.xlu0 %2159
        %2169 = vst.msk [vmem:[#allocation3 + $0x8] sm:$0xff] %vm2006, %v2146
        %2170 = vst.msk [vmem:[#allocation3 + $0x20] sm:$0xff] %vm2006, %v2148
        %2171 = vst.msk [vmem:[#allocation3 + $0x38] sm:$0xff] %vm2006, %v2150
        %2172 = vst.msk [vmem:[#allocation3 + $0x50] sm:$0xff] %vm2006, %v2152
        %2173 = vst.msk [vmem:[#allocation3 + $0x68] sm:$0xff] %vm2006, %v2154
        %2174 = vst.msk [vmem:[#allocation3 + $0x80] sm:$0xff] %vm2006, %v2156
        %2175 = vst.msk [vmem:[#allocation3 + $0x98] sm:$0xff] %vm2006, %v2158
        %2176 = vst.msk [vmem:[#allocation3 + $0xb0] sm:$0xff] %vm2006, %v2160
        %s2177 = scalar_lea.vmem [#allocation2], 32
        %v2178 = vld [vmem:[%s2177] sm:$0xff]
        %v2179 = vld [vmem:[%s2177 + $0x10] sm:$0xff]
        %v2180 = vld [vmem:[%s2177 + $0x20] sm:$0xff]
        %v2181 = vld [vmem:[%s2177 + $0x30] sm:$0xff]
        %v2182 = vld [vmem:[%s2177 + $0x40] sm:$0xff]
        %v2183 = vld [vmem:[%s2177 + $0x50] sm:$0xff]
        %v2184 = vld [vmem:[%s2177 + $0x60] sm:$0xff]
        %v2185 = vld [vmem:[%s2177 + $0x70] sm:$0xff]
        %2194 = vrot.lane.b32.xlu0 %v2178, 64
        %v2195 = vpop.permute.xlu0 %2194
        %2196 = vrot.lane.b32.xlu0 %v2179, 64
        %v2197 = vpop.permute.xlu0 %2196
        %2198 = vrot.lane.b32.xlu0 %v2180, 64
        %v2199 = vpop.permute.xlu0 %2198
        %2200 = vrot.lane.b32.xlu0 %v2181, 64
        %v2201 = vpop.permute.xlu0 %2200
        %2202 = vrot.lane.b32.xlu0 %v2182, 64
        %v2203 = vpop.permute.xlu0 %2202
        %2204 = vrot.lane.b32.xlu0 %v2183, 64
        %v2205 = vpop.permute.xlu0 %2204
        %2206 = vrot.lane.b32.xlu0 %v2184, 64
        %v2207 = vpop.permute.xlu0 %2206
        %2208 = vrot.lane.b32.xlu0 %v2185, 64
        %v2209 = vpop.permute.xlu0 %2208
        %2218 = vst.msk [vmem:[#allocation3 + $0x8] sm:$0xff] %vm2055, %v2195
        %2219 = vst.msk [vmem:[#allocation3 + $0x20] sm:$0xff] %vm2055, %v2197
        %2220 = vst.msk [vmem:[#allocation3 + $0x38] sm:$0xff] %vm2055, %v2199
        %2221 = vst.msk [vmem:[#allocation3 + $0x50] sm:$0xff] %vm2055, %v2201
        %2222 = vst.msk [vmem:[#allocation3 + $0x68] sm:$0xff] %vm2055, %v2203
        %2223 = vst.msk [vmem:[#allocation3 + $0x80] sm:$0xff] %vm2055, %v2205
        %2224 = vst.msk [vmem:[#allocation3 + $0x98] sm:$0xff] %vm2055, %v2207
        %2225 = vst.msk [vmem:[#allocation3 + $0xb0] sm:$0xff] %vm2055, %v2209
        %v2226 = vld [vmem:[%s2177 + $0x1] sm:$0xff]
        %v2227 = vld [vmem:[%s2177 + $0x11] sm:$0xff]
        %v2228 = vld [vmem:[%s2177 + $0x21] sm:$0xff]
        %v2229 = vld [vmem:[%s2177 + $0x31] sm:$0xff]
        %v2230 = vld [vmem:[%s2177 + $0x41] sm:$0xff]
        %v2231 = vld [vmem:[%s2177 + $0x51] sm:$0xff]
        %v2232 = vld [vmem:[%s2177 + $0x61] sm:$0xff]
        %v2233 = vld [vmem:[%s2177 + $0x71] sm:$0xff]
        %2242 = vrot.lane.b32.xlu0 %v2226, 96
        %v2243 = vpop.permute.xlu0 %2242
        %2244 = vrot.lane.b32.xlu0 %v2227, 96
        %v2245 = vpop.permute.xlu0 %2244
        %2246 = vrot.lane.b32.xlu0 %v2228, 96
        %v2247 = vpop.permute.xlu0 %2246
        %2248 = vrot.lane.b32.xlu0 %v2229, 96
        %v2249 = vpop.permute.xlu0 %2248
        %2250 = vrot.lane.b32.xlu0 %v2230, 96
        %v2251 = vpop.permute.xlu0 %2250
        %2252 = vrot.lane.b32.xlu0 %v2231, 96
        %v2253 = vpop.permute.xlu0 %2252
        %2254 = vrot.lane.b32.xlu0 %v2232, 96
        %v2255 = vpop.permute.xlu0 %2254
        %2256 = vrot.lane.b32.xlu0 %v2233, 96
        %v2257 = vpop.permute.xlu0 %2256
        %2266 = vst.msk [vmem:[#allocation3 + $0x8] sm:$0xff] %vm2104, %v2243
        %2267 = vst.msk [vmem:[#allocation3 + $0x20] sm:$0xff] %vm2104, %v2245
        %2268 = vst.msk [vmem:[#allocation3 + $0x38] sm:$0xff] %vm2104, %v2247
        %2269 = vst.msk [vmem:[#allocation3 + $0x50] sm:$0xff] %vm2104, %v2249
        %2270 = vst.msk [vmem:[#allocation3 + $0x68] sm:$0xff] %vm2104, %v2251
        %2271 = vst.msk [vmem:[#allocation3 + $0x80] sm:$0xff] %vm2104, %v2253
        %2272 = vst.msk [vmem:[#allocation3 + $0x98] sm:$0xff] %vm2104, %v2255
        %2273 = vst.msk [vmem:[#allocation3 + $0xb0] sm:$0xff] %vm2104, %v2257
        %v2274 = vld [vmem:[%s2177 + $0x2] sm:$0xff]
        %v2275 = vld [vmem:[%s2177 + $0x12] sm:$0xff]
        %v2276 = vld [vmem:[%s2177 + $0x22] sm:$0xff]
        %v2277 = vld [vmem:[%s2177 + $0x32] sm:$0xff]
        %v2278 = vld [vmem:[%s2177 + $0x42] sm:$0xff]
        %v2279 = vld [vmem:[%s2177 + $0x52] sm:$0xff]
        %v2280 = vld [vmem:[%s2177 + $0x62] sm:$0xff]
        %v2281 = vld [vmem:[%s2177 + $0x72] sm:$0xff]
        %2282 = vst.msk [vmem:[#allocation3 + $0x10] sm:$0xff] %vm451, %v2274
        %2283 = vst.msk [vmem:[#allocation3 + $0x28] sm:$0xff] %vm451, %v2275
        %2284 = vst.msk [vmem:[#allocation3 + $0x40] sm:$0xff] %vm451, %v2276
        %2285 = vst.msk [vmem:[#allocation3 + $0x58] sm:$0xff] %vm451, %v2277
        %2286 = vst.msk [vmem:[#allocation3 + $0x70] sm:$0xff] %vm451, %v2278
        %2287 = vst.msk [vmem:[#allocation3 + $0x88] sm:$0xff] %vm451, %v2279
        %2288 = vst.msk [vmem:[#allocation3 + $0xa0] sm:$0xff] %vm451, %v2280
        %2289 = vst.msk [vmem:[#allocation3 + $0xb8] sm:$0xff] %vm451, %v2281
        %v2290 = vld [vmem:[#allocation3] sm:$0xff]
        %v2291 = vld [vmem:[#allocation3 + $0x8] sm:$0xff]
        %v2292 = vld [vmem:[#allocation3 + $0x10] sm:$0xff]
        %v2293 = vld [vmem:[#allocation3 + $0x18] sm:$0xff]
        %v2294 = vld [vmem:[#allocation3 + $0x20] sm:$0xff]
        %v2295 = vld [vmem:[#allocation3 + $0x28] sm:$0xff]
        %v2296 = vld [vmem:[#allocation3 + $0x30] sm:$0xff]
        %v2297 = vld [vmem:[#allocation3 + $0x38] sm:$0xff]
        %v2298 = vld [vmem:[#allocation3 + $0x40] sm:$0xff]
        %v2299 = vld [vmem:[#allocation3 + $0x48] sm:$0xff]
        %v2300 = vld [vmem:[#allocation3 + $0x50] sm:$0xff]
        %v2301 = vld [vmem:[#allocation3 + $0x58] sm:$0xff]
        %v2302 = vld [vmem:[#allocation3 + $0x60] sm:$0xff]
        %v2303 = vld [vmem:[#allocation3 + $0x68] sm:$0xff]
        %v2304 = vld [vmem:[#allocation3 + $0x70] sm:$0xff]
        %v2305 = vld [vmem:[#allocation3 + $0x78] sm:$0xff]
        %v2306 = vld [vmem:[#allocation3 + $0x80] sm:$0xff]
        %v2307 = vld [vmem:[#allocation3 + $0x88] sm:$0xff]
        %v2308 = vld [vmem:[#allocation3 + $0x90] sm:$0xff]
        %v2309 = vld [vmem:[#allocation3 + $0x98] sm:$0xff]
        %v2310 = vld [vmem:[#allocation3 + $0xa0] sm:$0xff]
        %v2311 = vld [vmem:[#allocation3 + $0xa8] sm:$0xff]
        %v2312 = vld [vmem:[#allocation3 + $0xb0] sm:$0xff]
        %v2313 = vld [vmem:[#allocation3 + $0xb8] sm:$0xff]
        %v2314 = vpack.c.bf16 %v2293, %v2290
        %v2315 = vpack.c.bf16 %v2294, %v2291
        %v2316 = vpack.c.bf16 %v2295, %v2292
        %v2317 = vpack.c.bf16 %v2299, %v2296
        %v2318 = vpack.c.bf16 %v2300, %v2297
        %v2319 = vpack.c.bf16 %v2301, %v2298
        %v2320 = vpack.c.bf16 %v2305, %v2302
        %v2321 = vpack.c.bf16 %v2306, %v2303
        %v2322 = vpack.c.bf16 %v2307, %v2304
        %v2323 = vpack.c.bf16 %v2311, %v2308
        %v2324 = vpack.c.bf16 %v2312, %v2309
        %v2325 = vpack.c.bf16 %v2313, %v2310
        %v2326 = vld [vmem:[%s4] sm:$0xf]
        %v2327 = vld [vmem:[%s4 + $0x4] sm:$0xf]
        %v2328 = vld [vmem:[%s4 + $0x8] sm:$0xf]
        %v2329 = vld [vmem:[%s4 + $0xc] sm:$0xf]
        %v2330 = vld [vmem:[%s4 + $0x10] sm:$0xf]
        %v2331 = vld [vmem:[%s4 + $0x14] sm:$0xf]
        %v2332 = vld [vmem:[%s4 + $0x18] sm:$0xf]
        %v2333 = vld [vmem:[%s4 + $0x1c] sm:$0xf]
        %v2334 = vld [vmem:[%s4 + $0x20] sm:$0xf]
        %v2335 = vld [vmem:[%s4 + $0x24] sm:$0xf]
        %v2336 = vld [vmem:[%s4 + $0x28] sm:$0xf]
        %v2337 = vld [vmem:[%s4 + $0x2c] sm:$0xf]
        %v2338 = vld [vmem:[%s4 + $0x30] sm:$0xf]
        %v2339 = vld [vmem:[%s4 + $0x34] sm:$0xf]
        %v2340 = vld [vmem:[%s4 + $0x38] sm:$0xf]
        %v2341 = vld [vmem:[%s4 + $0x3c] sm:$0xf]
        %v2342 = vld [vmem:[%s4 + $0x40] sm:$0xf]
        %v2343 = vld [vmem:[%s4 + $0x44] sm:$0xf]
        %v2344 = vld [vmem:[%s4 + $0x48] sm:$0xf]
        %v2345 = vld [vmem:[%s4 + $0x4c] sm:$0xf]
        %v2346 = vld [vmem:[%s4 + $0x50] sm:$0xf]
        %v2347 = vld [vmem:[%s4 + $0x54] sm:$0xf]
        %v2348 = vld [vmem:[%s4 + $0x58] sm:$0xf]
        %v2349 = vld [vmem:[%s4 + $0x5c] sm:$0xf]
        %v2350 = vld [vmem:[%s4 + $0x60] sm:$0xf]
        %v2351 = vld [vmem:[%s4 + $0x64] sm:$0xf]
        %v2352 = vld [vmem:[%s4 + $0x68] sm:$0xf]
        %v2353 = vld [vmem:[%s4 + $0x6c] sm:$0xf]
        %v2354 = vld [vmem:[%s4 + $0x70] sm:$0xf]
        %v2355 = vld [vmem:[%s4 + $0x74] sm:$0xf]
        %v2356 = vld [vmem:[%s4 + $0x78] sm:$0xf]
        %v2357 = vld [vmem:[%s4 + $0x7c] sm:$0xf]
        %v2358 = vld [vmem:[%s4 + $0x80] sm:$0xf]
        %v2359 = vld [vmem:[%s4 + $0x84] sm:$0xf]
        %v2360 = vld [vmem:[%s4 + $0x88] sm:$0xf]
        %v2361 = vld [vmem:[%s4 + $0x8c] sm:$0xf]
        %v2398 = vunpack.c.l.b16 %v2326
        %v2399 = vunpack.c.l.b16 %v2327
        %v2400 = vunpack.c.l.b16 %v2328
        %v2401 = vunpack.c.l.b16 %v2329
        %v2402 = vunpack.c.l.b16 %v2330
        %v2403 = vunpack.c.l.b16 %v2331
        %v2404 = vunpack.c.l.b16 %v2332
        %v2405 = vunpack.c.l.b16 %v2333
        %v2406 = vunpack.c.l.b16 %v2334
        %v2407 = vunpack.c.l.b16 %v2335
        %v2408 = vunpack.c.l.b16 %v2336
        %v2409 = vunpack.c.l.b16 %v2337
        %v2410 = vunpack.c.l.b16 %v2338
        %v2411 = vunpack.c.l.b16 %v2339
        %v2412 = vunpack.c.l.b16 %v2340
        %v2413 = vunpack.c.l.b16 %v2341
        %v2414 = vunpack.c.l.b16 %v2342
        %v2415 = vunpack.c.l.b16 %v2343
        %v2416 = vunpack.c.l.b16 %v2344
        %v2417 = vunpack.c.l.b16 %v2345
        %v2418 = vunpack.c.l.b16 %v2346
        %v2419 = vunpack.c.l.b16 %v2347
        %v2420 = vunpack.c.l.b16 %v2348
        %v2421 = vunpack.c.l.b16 %v2349
        %v2422 = vunpack.c.l.b16 %v2350
        %v2423 = vunpack.c.l.b16 %v2351
        %v2424 = vunpack.c.l.b16 %v2352
        %v2425 = vunpack.c.l.b16 %v2353
        %v2426 = vunpack.c.l.b16 %v2354
        %v2427 = vunpack.c.l.b16 %v2355
        %v2428 = vunpack.c.l.b16 %v2356
        %v2429 = vunpack.c.l.b16 %v2357
        %v2430 = vunpack.c.l.b16 %v2358
        %v2431 = vunpack.c.l.b16 %v2359
        %v2432 = vunpack.c.l.b16 %v2360
        %v2433 = vunpack.c.l.b16 %v2361
        %v2434 = vpack.c.b16 %v2399, %v2398
        %v2435 = vpack.c.b16 %v2401, %v2400
        %v2436 = vpack.c.b16 %v2403, %v2402
        %v2437 = vpack.c.b16 %v2405, %v2404
        %v2438 = vpack.c.b16 %v2407, %v2406
        %v2439 = vpack.c.b16 %v2409, %v2408
        %v2440 = vpack.c.b16 %v2411, %v2410
        %v2441 = vpack.c.b16 %v2413, %v2412
        %v2442 = vpack.c.b16 %v2415, %v2414
        %v2443 = vpack.c.b16 %v2417, %v2416
        %v2444 = vpack.c.b16 %v2419, %v2418
        %v2445 = vpack.c.b16 %v2421, %v2420
        %v2446 = vpack.c.b16 %v2423, %v2422
        %v2447 = vpack.c.b16 %v2425, %v2424
        %v2448 = vpack.c.b16 %v2427, %v2426
        %v2449 = vpack.c.b16 %v2429, %v2428
        %v2450 = vpack.c.b16 %v2431, %v2430
        %v2451 = vpack.c.b16 %v2433, %v2432
        %v2471 = vsel %vm451, %v2316, 0
        %v2474 = vsel %vm451, %v2319, 0
        %v2477 = vsel %vm451, %v2322, 0
        %v2480 = vsel %vm451, %v2325, 0
        %2482 = vmatprep.subr.bf16.mxu0 0
        %2483 = vmatpush1.bf16.msra.mxu0 %v2434
        %2484 = vmatprep.subr.bf16.mxu0 0
        %2485 = vmatpush1.bf16.msra.mxu0 %v2435
        %2486 = vmatprep.subr.bf16.mxu0 0
        %2487 = vmatpush1.bf16.msra.mxu0 %v2436
        %2488 = vmatprep.subr.bf16.mxu0 0
        %2489 = vmatpush1.bf16.msra.mxu0 %v2437
        %2490 = vmatprep.subr.bf16.mxu0 0
        %2491 = vmatpush1.bf16.msra.mxu0 %v2438
        %2492 = vmatprep.subr.bf16.mxu0 0
        %2493 = vmatpush1.bf16.msra.mxu0 %v2439
        %2494 = vmatprep.subr.bf16.mxu0 0
        %2495 = vmatpush1.bf16.msra.mxu0 %v2440
        %2496 = vmatprep.subr.bf16.mxu0 0
        %2497 = vmatpush1.bf16.msra.mxu0 %v2441
        %2498 = vmatprep.subr.bf16.mxu0 0
        %2499 = vmatpush1.bf16.msra.mxu0 %v2442
        %2500 = vmatprep.subr.bf16.mxu0 0
        %2501 = vmatpush1.bf16.msra.mxu0 %v2443
        %2502 = vmatprep.subr.bf16.mxu0 0
        %2503 = vmatpush1.bf16.msra.mxu0 %v2444
        %2504 = vmatprep.subr.bf16.mxu0 0
        %2505 = vmatpush1.bf16.msra.mxu0 %v2445
        %2506 = vmatprep.subr.bf16.mxu0 0
        %2507 = vmatpush1.bf16.msra.mxu0 %v2446
        %2508 = vmatprep.subr.bf16.mxu0 0
        %2509 = vmatpush1.bf16.msra.mxu0 %v2447
        %2510 = vmatprep.subr.bf16.mxu0 0
        %2511 = vmatpush1.bf16.msra.mxu0 %v2448
        %2512 = vmatprep.subr.bf16.mxu0 0
        %2513 = vmatpush1.bf16.msra.mxu0 %v2449
        %2514 = vmatprep.mubr.bf16.mxu0 %v2315
        %2515 = vmatmul.mubr.bf16.gmra.mrb[0].mxu0 %v2314
        %v2516 = vpop.f32.mrb[0].mxu0
        %v2517 = vadd.f32 0.0, %v2516
        %v2518 = vpop.f32.mrb[0].mxu0
        %v2519 = vpop.f32.mrb[0].mxu0
        %v2520 = vadd.f32 0.0, %v2519
        %v2521 = vpop.f32.mrb[0].mxu0
        %2522 = vmatprep.mubr.bf16.mxu0 %v2318
        %2523 = vmatmul.mubr.bf16.gmra.mrb[0].mxu0 %v2317
        %v2524 = vpop.f32.mrb[0].mxu0
        %v2525 = vadd.f32 0.0, %v2524
        %v2526 = vpop.f32.mrb[0].mxu0
        %v2527 = vpop.f32.mrb[0].mxu0
        %v2528 = vadd.f32 0.0, %v2527
        %v2529 = vpop.f32.mrb[0].mxu0
        %2530 = vmatprep.mubr.bf16.mxu0 %v2321
        %2531 = vmatmul.mubr.bf16.gmra.mrb[0].mxu0 %v2320
        %v2532 = vpop.f32.mrb[0].mxu0
        %v2533 = vadd.f32 0.0, %v2532
        %v2534 = vpop.f32.mrb[0].mxu0
        %v2535 = vpop.f32.mrb[0].mxu0
        %v2536 = vadd.f32 0.0, %v2535
        %v2537 = vpop.f32.mrb[0].mxu0
        %2538 = vmatprep.mubr.bf16.mxu0 %v2324
        %2539 = vmatmul.mubr.bf16.gmra.mrb[0].mxu0 %v2323
        %v2540 = vpop.f32.mrb[0].mxu0
        %v2541 = vadd.f32 0.0, %v2540
        %v2542 = vpop.f32.mrb[0].mxu0
        %v2543 = vpop.f32.mrb[0].mxu0
        %v2544 = vadd.f32 0.0, %v2543
        %v2545 = vpop.f32.mrb[0].mxu0
        %2546 = vdwg.mxu0
        %2547 = vmatprep.subr.bf16.mxu0 0
        %2548 = vmatpush1.bf16.msra.mxu0 %v2450
        %2549 = vmatprep.subr.bf16.mxu0 0
        %2550 = vmatpush1.bf16.msra.mxu0 %v2451
        %2551 = vmatprep.subr.bf16.mxu0 0
        %2552 = vmatpush1.bf16.msra.mxu0 0
        %2553 = vmatprep.subr.bf16.mxu0 0
        %2554 = vmatpush1.bf16.msra.mxu0 0
        %2555 = vmatprep.subr.bf16.mxu0 0
        %2556 = vmatpush1.bf16.msra.mxu0 0
        %2557 = vmatprep.subr.bf16.mxu0 0
        %2558 = vmatpush1.bf16.msra.mxu0 0
        %2559 = vmatprep.subr.bf16.mxu0 0
        %2560 = vmatpush1.bf16.msra.mxu0 0
        %2561 = vmatprep.subr.bf16.mxu0 0
        %2562 = vmatpush1.bf16.msra.mxu0 0
        %2563 = vmatprep.subr.bf16.mxu0 0
        %2564 = vmatpush1.bf16.msra.mxu0 0
        %2565 = vmatprep.subr.bf16.mxu0 0
        %2566 = vmatpush1.bf16.msra.mxu0 0
        %2567 = vmatprep.subr.bf16.mxu0 0
        %2568 = vmatpush1.bf16.msra.mxu0 0
        %2569 = vmatprep.subr.bf16.mxu0 0
        %2570 = vmatpush1.bf16.msra.mxu0 0
        %2571 = vmatprep.subr.bf16.mxu0 0
        %2572 = vmatpush1.bf16.msra.mxu0 0
        %2573 = vmatprep.subr.bf16.mxu0 0
        %2574 = vmatpush1.bf16.msra.mxu0 0
        %2575 = vmatprep.subr.bf16.mxu0 0
        %2576 = vmatpush1.bf16.msra.mxu0 0
        %2577 = vmatprep.subr.bf16.mxu0 0
        %2578 = vmatpush1.bf16.msra.mxu0 0
        %2579 = vmatprep.mubr.bf16.mxu0 0
        %2580 = vmatmul.mubr.bf16.gmra.mrb[0].mxu0 %v2471
        %v2581 = vpop.f32.mrb[0].mxu0
        %v2582 = vadd.f32 %v2517, %v2581
        %v2583 = vpop.f32.mrb[0].mxu0
        %v2584 = vpop.f32.mrb[0].mxu0
        %v2585 = vadd.f32 %v2520, %v2584
        %v2586 = vpop.f32.mrb[0].mxu0
        %2587 = vmatprep.mubr.bf16.mxu0 0
        %2588 = vmatmul.mubr.bf16.gmra.mrb[0].mxu0 %v2474
        %v2589 = vpop.f32.mrb[0].mxu0
        %v2590 = vadd.f32 %v2525, %v2589
        %v2591 = vpop.f32.mrb[0].mxu0
        %v2592 = vpop.f32.mrb[0].mxu0
        %v2593 = vadd.f32 %v2528, %v2592
        %v2594 = vpop.f32.mrb[0].mxu0
        %2595 = vmatprep.mubr.bf16.mxu0 0
        %2596 = vmatmul.mubr.bf16.gmra.mrb[0].mxu0 %v2477
        %v2597 = vpop.f32.mrb[0].mxu0
        %v2598 = vadd.f32 %v2533, %v2597
        %v2599 = vpop.f32.mrb[0].mxu0
        %v2600 = vpop.f32.mrb[0].mxu0
        %v2601 = vadd.f32 %v2536, %v2600
        %v2602 = vpop.f32.mrb[0].mxu0
        %2603 = vmatprep.mubr.bf16.mxu0 0
        %2604 = vmatmul.mubr.bf16.gmra.mrb[0].mxu0 %v2480
        %v2605 = vpop.f32.mrb[0].mxu0
        %v2606 = vadd.f32 %v2541, %v2605
        %v2607 = vpop.f32.mrb[0].mxu0
        %v2608 = vpop.f32.mrb[0].mxu0
        %v2609 = vadd.f32 %v2544, %v2608
        %v2610 = vpop.f32.mrb[0].mxu0
        %2611 = vdwg.mxu0
        %v2612 = vld [vmem:[#allocation9] sm:$0x1]
        %v2614 = vlaneseq
        %v2615 = vshrl.u32 %v2614, 7
        %v2616 = vsub.s32 0, %v2615
        %v2617 = vrot.slane %v2612, %v2616
        %v2619 = vmul.f32 %v2582, %v2617
        %v2620 = vmul.f32 %v2585, %v2617
        %v2621 = vmul.f32 %v2590, %v2617
        %v2622 = vmul.f32 %v2593, %v2617
        %v2623 = vmul.f32 %v2598, %v2617
        %v2624 = vmul.f32 %v2601, %v2617
        %v2625 = vmul.f32 %v2606, %v2617
        %v2626 = vmul.f32 %v2609, %v2617
        %v2627 = vld [vmem:[#allocation11] sm:$0x1]
        %v2629 = vlaneseq
        %v2630 = vshrl.u32 %v2629, 7
        %v2631 = vsub.s32 0, %v2630
        %v2632 = vrot.slane %v2627, %v2631
        %v2634 = vadd.f32 %v2619, %v2632
        %v2635 = vadd.f32 %v2620, %v2632
        %v2636 = vadd.f32 %v2621, %v2632
        %v2637 = vadd.f32 %v2622, %v2632
        %v2638 = vadd.f32 %v2623, %v2632
        %v2639 = vadd.f32 %v2624, %v2632
        %v2640 = vadd.f32 %v2625, %v2632
        %v2641 = vadd.f32 %v2626, %v2632
        %vm2642 = vcmp.ge.f32.partialorder %v2634, 0.0
        %vm2643 = vcmp.ge.f32.partialorder %v2635, 0.0
        %vm2644 = vcmp.ge.f32.partialorder %v2636, 0.0
        %vm2645 = vcmp.ge.f32.partialorder %v2637, 0.0
        %vm2646 = vcmp.ge.f32.partialorder %v2638, 0.0
        %vm2647 = vcmp.ge.f32.partialorder %v2639, 0.0
        %vm2648 = vcmp.ge.f32.partialorder %v2640, 0.0
        %vm2649 = vcmp.ge.f32.partialorder %v2641, 0.0
        %v2650 = vmul.f32 %v2634, 0.01
        %v2651 = vmul.f32 %v2635, 0.01
        %v2652 = vmul.f32 %v2636, 0.01
        %v2653 = vmul.f32 %v2637, 0.01
        %v2654 = vmul.f32 %v2638, 0.01
        %v2655 = vmul.f32 %v2639, 0.01
        %v2656 = vmul.f32 %v2640, 0.01
        %v2657 = vmul.f32 %v2641, 0.01
        %v2658 = vsel %vm2642, %v2634, %v2650
        %v2659 = vsel %vm2643, %v2635, %v2651
        %v2660 = vsel %vm2644, %v2636, %v2652
        %v2661 = vsel %vm2645, %v2637, %v2653
        %v2662 = vsel %vm2646, %v2638, %v2654
        %v2663 = vsel %vm2647, %v2639, %v2655
        %v2664 = vsel %vm2648, %v2640, %v2656
        %v2665 = vsel %vm2649, %v2641, %v2657
        %2666 = vst.msk [vmem:[%s1941 + $0x1] sm:$0xff] %vm451, %v2658
        %2667 = vst.msk [vmem:[%s1941 + $0x11] sm:$0xff] %vm451, %v2659
        %2668 = vst.msk [vmem:[%s1941 + $0x21] sm:$0xff] %vm451, %v2660
        %2669 = vst.msk [vmem:[%s1941 + $0x31] sm:$0xff] %vm451, %v2661
        %2670 = vst.msk [vmem:[%s1941 + $0x41] sm:$0xff] %vm451, %v2662
        %2671 = vst.msk [vmem:[%s1941 + $0x51] sm:$0xff] %vm451, %v2663
        %2672 = vst.msk [vmem:[%s1941 + $0x61] sm:$0xff] %vm451, %v2664
        %2673 = vst.msk [vmem:[%s1941 + $0x71] sm:$0xff] %vm451, %v2665
        %v2674 = vld [vmem:[#allocation2] sm:$0xff]
        %v2675 = vld [vmem:[#allocation2 + $0x10] sm:$0xff]
        %v2676 = vld [vmem:[#allocation2 + $0x20] sm:$0xff]
        %v2677 = vld [vmem:[#allocation2 + $0x30] sm:$0xff]
        %v2678 = vld [vmem:[#allocation2 + $0x40] sm:$0xff]
        %v2679 = vld [vmem:[#allocation2 + $0x50] sm:$0xff]
        %v2680 = vld [vmem:[#allocation2 + $0x60] sm:$0xff]
        %v2681 = vld [vmem:[#allocation2 + $0x70] sm:$0xff]
        %2682 = vst.msk [vmem:[#allocation3] sm:$0xff] %vm451, %v2674
        %2683 = vst.msk [vmem:[#allocation3 + $0x18] sm:$0xff] %vm451, %v2675
        %2684 = vst.msk [vmem:[#allocation3 + $0x30] sm:$0xff] %vm451, %v2676
        %2685 = vst.msk [vmem:[#allocation3 + $0x48] sm:$0xff] %vm451, %v2677
        %2686 = vst.msk [vmem:[#allocation3 + $0x60] sm:$0xff] %vm451, %v2678
        %2687 = vst.msk [vmem:[#allocation3 + $0x78] sm:$0xff] %vm451, %v2679
        %2688 = vst.msk [vmem:[#allocation3 + $0x90] sm:$0xff] %vm451, %v2680
        %2689 = vst.msk [vmem:[#allocation3 + $0xa8] sm:$0xff] %vm451, %v2681
        %v2690 = vld [vmem:[#allocation2 + $0x1] sm:$0xff]
        %v2691 = vld [vmem:[#allocation2 + $0x11] sm:$0xff]
        %v2692 = vld [vmem:[#allocation2 + $0x21] sm:$0xff]
        %v2693 = vld [vmem:[#allocation2 + $0x31] sm:$0xff]
        %v2694 = vld [vmem:[#allocation2 + $0x41] sm:$0xff]
        %v2695 = vld [vmem:[#allocation2 + $0x51] sm:$0xff]
        %v2696 = vld [vmem:[#allocation2 + $0x61] sm:$0xff]
        %v2697 = vld [vmem:[#allocation2 + $0x71] sm:$0xff]
        %2706 = vrot.lane.b32.xlu0 %v2690, 32
        %v2707 = vpop.permute.xlu0 %2706
        %2708 = vrot.lane.b32.xlu0 %v2691, 32
        %v2709 = vpop.permute.xlu0 %2708
        %2710 = vrot.lane.b32.xlu0 %v2692, 32
        %v2711 = vpop.permute.xlu0 %2710
        %2712 = vrot.lane.b32.xlu0 %v2693, 32
        %v2713 = vpop.permute.xlu0 %2712
        %2714 = vrot.lane.b32.xlu0 %v2694, 32
        %v2715 = vpop.permute.xlu0 %2714
        %2716 = vrot.lane.b32.xlu0 %v2695, 32
        %v2717 = vpop.permute.xlu0 %2716
        %2718 = vrot.lane.b32.xlu0 %v2696, 32
        %v2719 = vpop.permute.xlu0 %2718
        %2720 = vrot.lane.b32.xlu0 %v2697, 32
        %v2721 = vpop.permute.xlu0 %2720
        %2730 = vst.msk [vmem:[#allocation3] sm:$0xff] %vm2006, %v2707
        %2731 = vst.msk [vmem:[#allocation3 + $0x18] sm:$0xff] %vm2006, %v2709
        %2732 = vst.msk [vmem:[#allocation3 + $0x30] sm:$0xff] %vm2006, %v2711
        %2733 = vst.msk [vmem:[#allocation3 + $0x48] sm:$0xff] %vm2006, %v2713
        %2734 = vst.msk [vmem:[#allocation3 + $0x60] sm:$0xff] %vm2006, %v2715
        %2735 = vst.msk [vmem:[#allocation3 + $0x78] sm:$0xff] %vm2006, %v2717
        %2736 = vst.msk [vmem:[#allocation3 + $0x90] sm:$0xff] %vm2006, %v2719
        %2737 = vst.msk [vmem:[#allocation3 + $0xa8] sm:$0xff] %vm2006, %v2721
        %v2738 = vld [vmem:[#allocation2 + $0x2] sm:$0xff]
        %v2739 = vld [vmem:[#allocation2 + $0x12] sm:$0xff]
        %v2740 = vld [vmem:[#allocation2 + $0x22] sm:$0xff]
        %v2741 = vld [vmem:[#allocation2 + $0x32] sm:$0xff]
        %v2742 = vld [vmem:[#allocation2 + $0x42] sm:$0xff]
        %v2743 = vld [vmem:[#allocation2 + $0x52] sm:$0xff]
        %v2744 = vld [vmem:[#allocation2 + $0x62] sm:$0xff]
        %v2745 = vld [vmem:[#allocation2 + $0x72] sm:$0xff]
        %2754 = vrot.lane.b32.xlu0 %v2738, 64
        %v2755 = vpop.permute.xlu0 %2754
        %2756 = vrot.lane.b32.xlu0 %v2739, 64
        %v2757 = vpop.permute.xlu0 %2756
        %2758 = vrot.lane.b32.xlu0 %v2740, 64
        %v2759 = vpop.permute.xlu0 %2758
        %2760 = vrot.lane.b32.xlu0 %v2741, 64
        %v2761 = vpop.permute.xlu0 %2760
        %2762 = vrot.lane.b32.xlu0 %v2742, 64
        %v2763 = vpop.permute.xlu0 %2762
        %2764 = vrot.lane.b32.xlu0 %v2743, 64
        %v2765 = vpop.permute.xlu0 %2764
        %2766 = vrot.lane.b32.xlu0 %v2744, 64
        %v2767 = vpop.permute.xlu0 %2766
        %2768 = vrot.lane.b32.xlu0 %v2745, 64
        %v2769 = vpop.permute.xlu0 %2768
        %2778 = vst.msk [vmem:[#allocation3] sm:$0xff] %vm2055, %v2755
        %2779 = vst.msk [vmem:[#allocation3 + $0x18] sm:$0xff] %vm2055, %v2757
        %2780 = vst.msk [vmem:[#allocation3 + $0x30] sm:$0xff] %vm2055, %v2759
        %2781 = vst.msk [vmem:[#allocation3 + $0x48] sm:$0xff] %vm2055, %v2761
        %2782 = vst.msk [vmem:[#allocation3 + $0x60] sm:$0xff] %vm2055, %v2763
        %2783 = vst.msk [vmem:[#allocation3 + $0x78] sm:$0xff] %vm2055, %v2765
        %2784 = vst.msk [vmem:[#allocation3 + $0x90] sm:$0xff] %vm2055, %v2767
        %2785 = vst.msk [vmem:[#allocation3 + $0xa8] sm:$0xff] %vm2055, %v2769
        %v2786 = vld [vmem:[%s1941] sm:$0xff]
        %v2787 = vld [vmem:[%s1941 + $0x10] sm:$0xff]
        %v2788 = vld [vmem:[%s1941 + $0x20] sm:$0xff]
        %v2789 = vld [vmem:[%s1941 + $0x30] sm:$0xff]
        %v2790 = vld [vmem:[%s1941 + $0x40] sm:$0xff]
        %v2791 = vld [vmem:[%s1941 + $0x50] sm:$0xff]
        %v2792 = vld [vmem:[%s1941 + $0x60] sm:$0xff]
        %v2793 = vld [vmem:[%s1941 + $0x70] sm:$0xff]
        %2802 = vrot.lane.b32.xlu0 %v2786, 96
        %v2803 = vpop.permute.xlu0 %2802
        %2804 = vrot.lane.b32.xlu0 %v2787, 96
        %v2805 = vpop.permute.xlu0 %2804
        %2806 = vrot.lane.b32.xlu0 %v2788, 96
        %v2807 = vpop.permute.xlu0 %2806
        %2808 = vrot.lane.b32.xlu0 %v2789, 96
        %v2809 = vpop.permute.xlu0 %2808
        %2810 = vrot.lane.b32.xlu0 %v2790, 96
        %v2811 = vpop.permute.xlu0 %2810
        %2812 = vrot.lane.b32.xlu0 %v2791, 96
        %v2813 = vpop.permute.xlu0 %2812
        %2814 = vrot.lane.b32.xlu0 %v2792, 96
        %v2815 = vpop.permute.xlu0 %2814
        %2816 = vrot.lane.b32.xlu0 %v2793, 96
        %v2817 = vpop.permute.xlu0 %2816
        %2826 = vst.msk [vmem:[#allocation3] sm:$0xff] %vm2104, %v2803
        %2827 = vst.msk [vmem:[#allocation3 + $0x18] sm:$0xff] %vm2104, %v2805
        %2828 = vst.msk [vmem:[#allocation3 + $0x30] sm:$0xff] %vm2104, %v2807
        %2829 = vst.msk [vmem:[#allocation3 + $0x48] sm:$0xff] %vm2104, %v2809
        %2830 = vst.msk [vmem:[#allocation3 + $0x60] sm:$0xff] %vm2104, %v2811
        %2831 = vst.msk [vmem:[#allocation3 + $0x78] sm:$0xff] %vm2104, %v2813
        %2832 = vst.msk [vmem:[#allocation3 + $0x90] sm:$0xff] %vm2104, %v2815
        %2833 = vst.msk [vmem:[#allocation3 + $0xa8] sm:$0xff] %vm2104, %v2817
        %v2834 = vld [vmem:[%s1941 + $0x1] sm:$0xff]
        %v2835 = vld [vmem:[%s1941 + $0x11] sm:$0xff]
        %v2836 = vld [vmem:[%s1941 + $0x21] sm:$0xff]
        %v2837 = vld [vmem:[%s1941 + $0x31] sm:$0xff]
        %v2838 = vld [vmem:[%s1941 + $0x41] sm:$0xff]
        %v2839 = vld [vmem:[%s1941 + $0x51] sm:$0xff]
        %v2840 = vld [vmem:[%s1941 + $0x61] sm:$0xff]
        %v2841 = vld [vmem:[%s1941 + $0x71] sm:$0xff]
        %2842 = vst.msk [vmem:[#allocation3 + $0x8] sm:$0xff] %vm451, %v2834
        %2843 = vst.msk [vmem:[#allocation3 + $0x20] sm:$0xff] %vm451, %v2835
        %2844 = vst.msk [vmem:[#allocation3 + $0x38] sm:$0xff] %vm451, %v2836
        %2845 = vst.msk [vmem:[#allocation3 + $0x50] sm:$0xff] %vm451, %v2837
        %2846 = vst.msk [vmem:[#allocation3 + $0x68] sm:$0xff] %vm451, %v2838
        %2847 = vst.msk [vmem:[#allocation3 + $0x80] sm:$0xff] %vm451, %v2839
        %2848 = vst.msk [vmem:[#allocation3 + $0x98] sm:$0xff] %vm451, %v2840
        %2849 = vst.msk [vmem:[#allocation3 + $0xb0] sm:$0xff] %vm451, %v2841
        %v2850 = vld [vmem:[%s1941 + $0x2] sm:$0xff]
        %v2851 = vld [vmem:[%s1941 + $0x12] sm:$0xff]
        %v2852 = vld [vmem:[%s1941 + $0x22] sm:$0xff]
        %v2853 = vld [vmem:[%s1941 + $0x32] sm:$0xff]
        %v2854 = vld [vmem:[%s1941 + $0x42] sm:$0xff]
        %v2855 = vld [vmem:[%s1941 + $0x52] sm:$0xff]
        %v2856 = vld [vmem:[%s1941 + $0x62] sm:$0xff]
        %v2857 = vld [vmem:[%s1941 + $0x72] sm:$0xff]
        %2866 = vrot.lane.b32.xlu0 %v2850, 32
        %v2867 = vpop.permute.xlu0 %2866
        %2868 = vrot.lane.b32.xlu0 %v2851, 32
        %v2869 = vpop.permute.xlu0 %2868
        %2870 = vrot.lane.b32.xlu0 %v2852, 32
        %v2871 = vpop.permute.xlu0 %2870
        %2872 = vrot.lane.b32.xlu0 %v2853, 32
        %v2873 = vpop.permute.xlu0 %2872
        %2874 = vrot.lane.b32.xlu0 %v2854, 32
        %v2875 = vpop.permute.xlu0 %2874
        %2876 = vrot.lane.b32.xlu0 %v2855, 32
        %v2877 = vpop.permute.xlu0 %2876
        %2878 = vrot.lane.b32.xlu0 %v2856, 32
        %v2879 = vpop.permute.xlu0 %2878
        %2880 = vrot.lane.b32.xlu0 %v2857, 32
        %v2881 = vpop.permute.xlu0 %2880
        %2890 = vst.msk [vmem:[#allocation3 + $0x8] sm:$0xff] %vm2006, %v2867
        %2891 = vst.msk [vmem:[#allocation3 + $0x20] sm:$0xff] %vm2006, %v2869
        %2892 = vst.msk [vmem:[#allocation3 + $0x38] sm:$0xff] %vm2006, %v2871
        %2893 = vst.msk [vmem:[#allocation3 + $0x50] sm:$0xff] %vm2006, %v2873
        %2894 = vst.msk [vmem:[#allocation3 + $0x68] sm:$0xff] %vm2006, %v2875
        %2895 = vst.msk [vmem:[#allocation3 + $0x80] sm:$0xff] %vm2006, %v2877
        %2896 = vst.msk [vmem:[#allocation3 + $0x98] sm:$0xff] %vm2006, %v2879
        %2897 = vst.msk [vmem:[#allocation3 + $0xb0] sm:$0xff] %vm2006, %v2881
        %v2898 = vld [vmem:[%s2177] sm:$0xff]
        %v2899 = vld [vmem:[%s2177 + $0x10] sm:$0xff]
        %v2900 = vld [vmem:[%s2177 + $0x20] sm:$0xff]
        %v2901 = vld [vmem:[%s2177 + $0x30] sm:$0xff]
        %v2902 = vld [vmem:[%s2177 + $0x40] sm:$0xff]
        %v2903 = vld [vmem:[%s2177 + $0x50] sm:$0xff]
        %v2904 = vld [vmem:[%s2177 + $0x60] sm:$0xff]
        %v2905 = vld [vmem:[%s2177 + $0x70] sm:$0xff]
        %2914 = vrot.lane.b32.xlu0 %v2898, 64
        %v2915 = vpop.permute.xlu0 %2914
        %2916 = vrot.lane.b32.xlu0 %v2899, 64
        %v2917 = vpop.permute.xlu0 %2916
        %2918 = vrot.lane.b32.xlu0 %v2900, 64
        %v2919 = vpop.permute.xlu0 %2918
        %2920 = vrot.lane.b32.xlu0 %v2901, 64
        %v2921 = vpop.permute.xlu0 %2920
        %2922 = vrot.lane.b32.xlu0 %v2902, 64
        %v2923 = vpop.permute.xlu0 %2922
        %2924 = vrot.lane.b32.xlu0 %v2903, 64
        %v2925 = vpop.permute.xlu0 %2924
        %2926 = vrot.lane.b32.xlu0 %v2904, 64
        %v2927 = vpop.permute.xlu0 %2926
        %2928 = vrot.lane.b32.xlu0 %v2905, 64
        %v2929 = vpop.permute.xlu0 %2928
        %2938 = vst.msk [vmem:[#allocation3 + $0x8] sm:$0xff] %vm2055, %v2915
        %2939 = vst.msk [vmem:[#allocation3 + $0x20] sm:$0xff] %vm2055, %v2917
        %2940 = vst.msk [vmem:[#allocation3 + $0x38] sm:$0xff] %vm2055, %v2919
        %2941 = vst.msk [vmem:[#allocation3 + $0x50] sm:$0xff] %vm2055, %v2921
        %2942 = vst.msk [vmem:[#allocation3 + $0x68] sm:$0xff] %vm2055, %v2923
        %2943 = vst.msk [vmem:[#allocation3 + $0x80] sm:$0xff] %vm2055, %v2925
        %2944 = vst.msk [vmem:[#allocation3 + $0x98] sm:$0xff] %vm2055, %v2927
        %2945 = vst.msk [vmem:[#allocation3 + $0xb0] sm:$0xff] %vm2055, %v2929
        %v2946 = vld [vmem:[%s2177 + $0x1] sm:$0xff]
        %v2947 = vld [vmem:[%s2177 + $0x11] sm:$0xff]
        %v2948 = vld [vmem:[%s2177 + $0x21] sm:$0xff]
        %v2949 = vld [vmem:[%s2177 + $0x31] sm:$0xff]
        %v2950 = vld [vmem:[%s2177 + $0x41] sm:$0xff]
        %v2951 = vld [vmem:[%s2177 + $0x51] sm:$0xff]
        %v2952 = vld [vmem:[%s2177 + $0x61] sm:$0xff]
        %v2953 = vld [vmem:[%s2177 + $0x71] sm:$0xff]
        %2962 = vrot.lane.b32.xlu0 %v2946, 96
        %v2963 = vpop.permute.xlu0 %2962
        %2964 = vrot.lane.b32.xlu0 %v2947, 96
        %v2965 = vpop.permute.xlu0 %2964
        %2966 = vrot.lane.b32.xlu0 %v2948, 96
        %v2967 = vpop.permute.xlu0 %2966
        %2968 = vrot.lane.b32.xlu0 %v2949, 96
        %v2969 = vpop.permute.xlu0 %2968
        %2970 = vrot.lane.b32.xlu0 %v2950, 96
        %v2971 = vpop.permute.xlu0 %2970
        %2972 = vrot.lane.b32.xlu0 %v2951, 96
        %v2973 = vpop.permute.xlu0 %2972
        %2974 = vrot.lane.b32.xlu0 %v2952, 96
        %v2975 = vpop.permute.xlu0 %2974
        %2976 = vrot.lane.b32.xlu0 %v2953, 96
        %v2977 = vpop.permute.xlu0 %2976
        %2986 = vst.msk [vmem:[#allocation3 + $0x8] sm:$0xff] %vm2104, %v2963
        %2987 = vst.msk [vmem:[#allocation3 + $0x20] sm:$0xff] %vm2104, %v2965
        %2988 = vst.msk [vmem:[#allocation3 + $0x38] sm:$0xff] %vm2104, %v2967
        %2989 = vst.msk [vmem:[#allocation3 + $0x50] sm:$0xff] %vm2104, %v2969
        %2990 = vst.msk [vmem:[#allocation3 + $0x68] sm:$0xff] %vm2104, %v2971
        %2991 = vst.msk [vmem:[#allocation3 + $0x80] sm:$0xff] %vm2104, %v2973
        %2992 = vst.msk [vmem:[#allocation3 + $0x98] sm:$0xff] %vm2104, %v2975
        %2993 = vst.msk [vmem:[#allocation3 + $0xb0] sm:$0xff] %vm2104, %v2977
        %v2994 = vld [vmem:[%s2177 + $0x2] sm:$0xff]
        %v2995 = vld [vmem:[%s2177 + $0x12] sm:$0xff]
        %v2996 = vld [vmem:[%s2177 + $0x22] sm:$0xff]
        %v2997 = vld [vmem:[%s2177 + $0x32] sm:$0xff]
        %v2998 = vld [vmem:[%s2177 + $0x42] sm:$0xff]
        %v2999 = vld [vmem:[%s2177 + $0x52] sm:$0xff]
        %v3000 = vld [vmem:[%s2177 + $0x62] sm:$0xff]
        %v3001 = vld [vmem:[%s2177 + $0x72] sm:$0xff]
        %3002 = vst.msk [vmem:[#allocation3 + $0x10] sm:$0xff] %vm451, %v2994
        %3003 = vst.msk [vmem:[#allocation3 + $0x28] sm:$0xff] %vm451, %v2995
        %3004 = vst.msk [vmem:[#allocation3 + $0x40] sm:$0xff] %vm451, %v2996
        %3005 = vst.msk [vmem:[#allocation3 + $0x58] sm:$0xff] %vm451, %v2997
        %3006 = vst.msk [vmem:[#allocation3 + $0x70] sm:$0xff] %vm451, %v2998
        %3007 = vst.msk [vmem:[#allocation3 + $0x88] sm:$0xff] %vm451, %v2999
        %3008 = vst.msk [vmem:[#allocation3 + $0xa0] sm:$0xff] %vm451, %v3000
        %3009 = vst.msk [vmem:[#allocation3 + $0xb8] sm:$0xff] %vm451, %v3001
        %v3010 = vld [vmem:[#allocation3] sm:$0xff]
        %v3011 = vld [vmem:[#allocation3 + $0x8] sm:$0xff]
        %v3012 = vld [vmem:[#allocation3 + $0x10] sm:$0xff]
        %v3013 = vld [vmem:[#allocation3 + $0x18] sm:$0xff]
        %v3014 = vld [vmem:[#allocation3 + $0x20] sm:$0xff]
        %v3015 = vld [vmem:[#allocation3 + $0x28] sm:$0xff]
        %v3016 = vld [vmem:[#allocation3 + $0x30] sm:$0xff]
        %v3017 = vld [vmem:[#allocation3 + $0x38] sm:$0xff]
        %v3018 = vld [vmem:[#allocation3 + $0x40] sm:$0xff]
        %v3019 = vld [vmem:[#allocation3 + $0x48] sm:$0xff]
        %v3020 = vld [vmem:[#allocation3 + $0x50] sm:$0xff]
        %v3021 = vld [vmem:[#allocation3 + $0x58] sm:$0xff]
        %v3022 = vld [vmem:[#allocation3 + $0x60] sm:$0xff]
        %v3023 = vld [vmem:[#allocation3 + $0x68] sm:$0xff]
        %v3024 = vld [vmem:[#allocation3 + $0x70] sm:$0xff]
        %v3025 = vld [vmem:[#allocation3 + $0x78] sm:$0xff]
        %v3026 = vld [vmem:[#allocation3 + $0x80] sm:$0xff]
        %v3027 = vld [vmem:[#allocation3 + $0x88] sm:$0xff]
        %v3028 = vld [vmem:[#allocation3 + $0x90] sm:$0xff]
        %v3029 = vld [vmem:[#allocation3 + $0x98] sm:$0xff]
        %v3030 = vld [vmem:[#allocation3 + $0xa0] sm:$0xff]
        %v3031 = vld [vmem:[#allocation3 + $0xa8] sm:$0xff]
        %v3032 = vld [vmem:[#allocation3 + $0xb0] sm:$0xff]
        %v3033 = vld [vmem:[#allocation3 + $0xb8] sm:$0xff]
        %v3034 = vpack.c.bf16 %v3013, %v3010
        %v3035 = vpack.c.bf16 %v3014, %v3011
        %v3036 = vpack.c.bf16 %v3015, %v3012
        %v3037 = vpack.c.bf16 %v3019, %v3016
        %v3038 = vpack.c.bf16 %v3020, %v3017
        %v3039 = vpack.c.bf16 %v3021, %v3018
        %v3040 = vpack.c.bf16 %v3025, %v3022
        %v3041 = vpack.c.bf16 %v3026, %v3023
        %v3042 = vpack.c.bf16 %v3027, %v3024
        %v3043 = vpack.c.bf16 %v3031, %v3028
        %v3044 = vpack.c.bf16 %v3032, %v3029
        %v3045 = vpack.c.bf16 %v3033, %v3030
        %v3046 = vld [vmem:[%s7] sm:$0xf]
        %v3047 = vld [vmem:[%s7 + $0x4] sm:$0xf]
        %v3048 = vld [vmem:[%s7 + $0x8] sm:$0xf]
        %v3049 = vld [vmem:[%s7 + $0xc] sm:$0xf]
        %v3050 = vld [vmem:[%s7 + $0x10] sm:$0xf]
        %v3051 = vld [vmem:[%s7 + $0x14] sm:$0xf]
        %v3052 = vld [vmem:[%s7 + $0x18] sm:$0xf]
        %v3053 = vld [vmem:[%s7 + $0x1c] sm:$0xf]
        %v3054 = vld [vmem:[%s7 + $0x20] sm:$0xf]
        %v3055 = vld [vmem:[%s7 + $0x24] sm:$0xf]
        %v3056 = vld [vmem:[%s7 + $0x28] sm:$0xf]
        %v3057 = vld [vmem:[%s7 + $0x2c] sm:$0xf]
        %v3058 = vld [vmem:[%s7 + $0x30] sm:$0xf]
        %v3059 = vld [vmem:[%s7 + $0x34] sm:$0xf]
        %v3060 = vld [vmem:[%s7 + $0x38] sm:$0xf]
        %v3061 = vld [vmem:[%s7 + $0x3c] sm:$0xf]
        %v3062 = vld [vmem:[%s7 + $0x40] sm:$0xf]
        %v3063 = vld [vmem:[%s7 + $0x44] sm:$0xf]
        %v3064 = vld [vmem:[%s7 + $0x48] sm:$0xf]
        %v3065 = vld [vmem:[%s7 + $0x4c] sm:$0xf]
        %v3066 = vld [vmem:[%s7 + $0x50] sm:$0xf]
        %v3067 = vld [vmem:[%s7 + $0x54] sm:$0xf]
        %v3068 = vld [vmem:[%s7 + $0x58] sm:$0xf]
        %v3069 = vld [vmem:[%s7 + $0x5c] sm:$0xf]
        %v3070 = vld [vmem:[%s7 + $0x60] sm:$0xf]
        %v3071 = vld [vmem:[%s7 + $0x64] sm:$0xf]
        %v3072 = vld [vmem:[%s7 + $0x68] sm:$0xf]
        %v3073 = vld [vmem:[%s7 + $0x6c] sm:$0xf]
        %v3074 = vld [vmem:[%s7 + $0x70] sm:$0xf]
        %v3075 = vld [vmem:[%s7 + $0x74] sm:$0xf]
        %v3076 = vld [vmem:[%s7 + $0x78] sm:$0xf]
        %v3077 = vld [vmem:[%s7 + $0x7c] sm:$0xf]
        %v3078 = vld [vmem:[%s7 + $0x80] sm:$0xf]
        %v3079 = vld [vmem:[%s7 + $0x84] sm:$0xf]
        %v3080 = vld [vmem:[%s7 + $0x88] sm:$0xf]
        %v3081 = vld [vmem:[%s7 + $0x8c] sm:$0xf]
        %v3118 = vunpack.c.l.b16 %v3046
        %v3119 = vunpack.c.l.b16 %v3047
        %v3120 = vunpack.c.l.b16 %v3048
        %v3121 = vunpack.c.l.b16 %v3049
        %v3122 = vunpack.c.l.b16 %v3050
        %v3123 = vunpack.c.l.b16 %v3051
        %v3124 = vunpack.c.l.b16 %v3052
        %v3125 = vunpack.c.l.b16 %v3053
        %v3126 = vunpack.c.l.b16 %v3054
        %v3127 = vunpack.c.l.b16 %v3055
        %v3128 = vunpack.c.l.b16 %v3056
        %v3129 = vunpack.c.l.b16 %v3057
        %v3130 = vunpack.c.l.b16 %v3058
        %v3131 = vunpack.c.l.b16 %v3059
        %v3132 = vunpack.c.l.b16 %v3060
        %v3133 = vunpack.c.l.b16 %v3061
        %v3134 = vunpack.c.l.b16 %v3062
        %v3135 = vunpack.c.l.b16 %v3063
        %v3136 = vunpack.c.l.b16 %v3064
        %v3137 = vunpack.c.l.b16 %v3065
        %v3138 = vunpack.c.l.b16 %v3066
        %v3139 = vunpack.c.l.b16 %v3067
        %v3140 = vunpack.c.l.b16 %v3068
        %v3141 = vunpack.c.l.b16 %v3069
        %v3142 = vunpack.c.l.b16 %v3070
        %v3143 = vunpack.c.l.b16 %v3071
        %v3144 = vunpack.c.l.b16 %v3072
        %v3145 = vunpack.c.l.b16 %v3073
        %v3146 = vunpack.c.l.b16 %v3074
        %v3147 = vunpack.c.l.b16 %v3075
        %v3148 = vunpack.c.l.b16 %v3076
        %v3149 = vunpack.c.l.b16 %v3077
        %v3150 = vunpack.c.l.b16 %v3078
        %v3151 = vunpack.c.l.b16 %v3079
        %v3152 = vunpack.c.l.b16 %v3080
        %v3153 = vunpack.c.l.b16 %v3081
        %v3154 = vpack.c.b16 %v3119, %v3118
        %v3155 = vpack.c.b16 %v3121, %v3120
        %v3156 = vpack.c.b16 %v3123, %v3122
        %v3157 = vpack.c.b16 %v3125, %v3124
        %v3158 = vpack.c.b16 %v3127, %v3126
        %v3159 = vpack.c.b16 %v3129, %v3128
        %v3160 = vpack.c.b16 %v3131, %v3130
        %v3161 = vpack.c.b16 %v3133, %v3132
        %v3162 = vpack.c.b16 %v3135, %v3134
        %v3163 = vpack.c.b16 %v3137, %v3136
        %v3164 = vpack.c.b16 %v3139, %v3138
        %v3165 = vpack.c.b16 %v3141, %v3140
        %v3166 = vpack.c.b16 %v3143, %v3142
        %v3167 = vpack.c.b16 %v3145, %v3144
        %v3168 = vpack.c.b16 %v3147, %v3146
        %v3169 = vpack.c.b16 %v3149, %v3148
        %v3170 = vpack.c.b16 %v3151, %v3150
        %v3171 = vpack.c.b16 %v3153, %v3152
        %v3191 = vsel %vm451, %v3036, 0
        %v3194 = vsel %vm451, %v3039, 0
        %v3197 = vsel %vm451, %v3042, 0
        %v3200 = vsel %vm451, %v3045, 0
        %3202 = vmatprep.subr.bf16.mxu0 0
        %3203 = vmatpush1.bf16.msra.mxu0 %v3154
        %3204 = vmatprep.subr.bf16.mxu0 0
        %3205 = vmatpush1.bf16.msra.mxu0 %v3155
        %3206 = vmatprep.subr.bf16.mxu0 0
        %3207 = vmatpush1.bf16.msra.mxu0 %v3156
        %3208 = vmatprep.subr.bf16.mxu0 0
        %3209 = vmatpush1.bf16.msra.mxu0 %v3157
        %3210 = vmatprep.subr.bf16.mxu0 0
        %3211 = vmatpush1.bf16.msra.mxu0 %v3158
        %3212 = vmatprep.subr.bf16.mxu0 0
        %3213 = vmatpush1.bf16.msra.mxu0 %v3159
        %3214 = vmatprep.subr.bf16.mxu0 0
        %3215 = vmatpush1.bf16.msra.mxu0 %v3160
        %3216 = vmatprep.subr.bf16.mxu0 0
        %3217 = vmatpush1.bf16.msra.mxu0 %v3161
        %3218 = vmatprep.subr.bf16.mxu0 0
        %3219 = vmatpush1.bf16.msra.mxu0 %v3162
        %3220 = vmatprep.subr.bf16.mxu0 0
        %3221 = vmatpush1.bf16.msra.mxu0 %v3163
        %3222 = vmatprep.subr.bf16.mxu0 0
        %3223 = vmatpush1.bf16.msra.mxu0 %v3164
        %3224 = vmatprep.subr.bf16.mxu0 0
        %3225 = vmatpush1.bf16.msra.mxu0 %v3165
        %3226 = vmatprep.subr.bf16.mxu0 0
        %3227 = vmatpush1.bf16.msra.mxu0 %v3166
        %3228 = vmatprep.subr.bf16.mxu0 0
        %3229 = vmatpush1.bf16.msra.mxu0 %v3167
        %3230 = vmatprep.subr.bf16.mxu0 0
        %3231 = vmatpush1.bf16.msra.mxu0 %v3168
        %3232 = vmatprep.subr.bf16.mxu0 0
        %3233 = vmatpush1.bf16.msra.mxu0 %v3169
        %3234 = vmatprep.mubr.bf16.mxu0 %v3035
        %3235 = vmatmul.mubr.bf16.gmra.mrb[0].mxu0 %v3034
        %v3236 = vpop.f32.mrb[0].mxu0
        %v3237 = vadd.f32 0.0, %v3236
        %v3238 = vpop.f32.mrb[0].mxu0
        %v3239 = vpop.f32.mrb[0].mxu0
        %v3240 = vadd.f32 0.0, %v3239
        %v3241 = vpop.f32.mrb[0].mxu0
        %3242 = vmatprep.mubr.bf16.mxu0 %v3038
        %3243 = vmatmul.mubr.bf16.gmra.mrb[0].mxu0 %v3037
        %v3244 = vpop.f32.mrb[0].mxu0
        %v3245 = vadd.f32 0.0, %v3244
        %v3246 = vpop.f32.mrb[0].mxu0
        %v3247 = vpop.f32.mrb[0].mxu0
        %v3248 = vadd.f32 0.0, %v3247
        %v3249 = vpop.f32.mrb[0].mxu0
        %3250 = vmatprep.mubr.bf16.mxu0 %v3041
        %3251 = vmatmul.mubr.bf16.gmra.mrb[0].mxu0 %v3040
        %v3252 = vpop.f32.mrb[0].mxu0
        %v3253 = vadd.f32 0.0, %v3252
        %v3254 = vpop.f32.mrb[0].mxu0
        %v3255 = vpop.f32.mrb[0].mxu0
        %v3256 = vadd.f32 0.0, %v3255
        %v3257 = vpop.f32.mrb[0].mxu0
        %3258 = vmatprep.mubr.bf16.mxu0 %v3044
        %3259 = vmatmul.mubr.bf16.gmra.mrb[0].mxu0 %v3043
        %v3260 = vpop.f32.mrb[0].mxu0
        %v3261 = vadd.f32 0.0, %v3260
        %v3262 = vpop.f32.mrb[0].mxu0
        %v3263 = vpop.f32.mrb[0].mxu0
        %v3264 = vadd.f32 0.0, %v3263
        %v3265 = vpop.f32.mrb[0].mxu0
        %3266 = vdwg.mxu0
        %3267 = vmatprep.subr.bf16.mxu0 0
        %3268 = vmatpush1.bf16.msra.mxu0 %v3170
        %3269 = vmatprep.subr.bf16.mxu0 0
        %3270 = vmatpush1.bf16.msra.mxu0 %v3171
        %3271 = vmatprep.subr.bf16.mxu0 0
        %3272 = vmatpush1.bf16.msra.mxu0 0
        %3273 = vmatprep.subr.bf16.mxu0 0
        %3274 = vmatpush1.bf16.msra.mxu0 0
        %3275 = vmatprep.subr.bf16.mxu0 0
        %3276 = vmatpush1.bf16.msra.mxu0 0
        %3277 = vmatprep.subr.bf16.mxu0 0
        %3278 = vmatpush1.bf16.msra.mxu0 0
        %3279 = vmatprep.subr.bf16.mxu0 0
        %3280 = vmatpush1.bf16.msra.mxu0 0
        %3281 = vmatprep.subr.bf16.mxu0 0
        %3282 = vmatpush1.bf16.msra.mxu0 0
        %3283 = vmatprep.subr.bf16.mxu0 0
        %3284 = vmatpush1.bf16.msra.mxu0 0
        %3285 = vmatprep.subr.bf16.mxu0 0
        %3286 = vmatpush1.bf16.msra.mxu0 0
        %3287 = vmatprep.subr.bf16.mxu0 0
        %3288 = vmatpush1.bf16.msra.mxu0 0
        %3289 = vmatprep.subr.bf16.mxu0 0
        %3290 = vmatpush1.bf16.msra.mxu0 0
        %3291 = vmatprep.subr.bf16.mxu0 0
        %3292 = vmatpush1.bf16.msra.mxu0 0
        %3293 = vmatprep.subr.bf16.mxu0 0
        %3294 = vmatpush1.bf16.msra.mxu0 0
        %3295 = vmatprep.subr.bf16.mxu0 0
        %3296 = vmatpush1.bf16.msra.mxu0 0
        %3297 = vmatprep.subr.bf16.mxu0 0
        %3298 = vmatpush1.bf16.msra.mxu0 0
        %3299 = vmatprep.mubr.bf16.mxu0 0
        %3300 = vmatmul.mubr.bf16.gmra.mrb[0].mxu0 %v3191
        %v3301 = vpop.f32.mrb[0].mxu0
        %v3302 = vadd.f32 %v3237, %v3301
        %v3303 = vpop.f32.mrb[0].mxu0
        %v3304 = vpop.f32.mrb[0].mxu0
        %v3305 = vadd.f32 %v3240, %v3304
        %v3306 = vpop.f32.mrb[0].mxu0
        %3307 = vmatprep.mubr.bf16.mxu0 0
        %3308 = vmatmul.mubr.bf16.gmra.mrb[0].mxu0 %v3194
        %v3309 = vpop.f32.mrb[0].mxu0
        %v3310 = vadd.f32 %v3245, %v3309
        %v3311 = vpop.f32.mrb[0].mxu0
        %v3312 = vpop.f32.mrb[0].mxu0
        %v3313 = vadd.f32 %v3248, %v3312
        %v3314 = vpop.f32.mrb[0].mxu0
        %3315 = vmatprep.mubr.bf16.mxu0 0
        %3316 = vmatmul.mubr.bf16.gmra.mrb[0].mxu0 %v3197
        %v3317 = vpop.f32.mrb[0].mxu0
        %v3318 = vadd.f32 %v3253, %v3317
        %v3319 = vpop.f32.mrb[0].mxu0
        %v3320 = vpop.f32.mrb[0].mxu0
        %v3321 = vadd.f32 %v3256, %v3320
        %v3322 = vpop.f32.mrb[0].mxu0
        %3323 = vmatprep.mubr.bf16.mxu0 0
        %3324 = vmatmul.mubr.bf16.gmra.mrb[0].mxu0 %v3200
        %v3325 = vpop.f32.mrb[0].mxu0
        %v3326 = vadd.f32 %v3261, %v3325
        %v3327 = vpop.f32.mrb[0].mxu0
        %v3328 = vpop.f32.mrb[0].mxu0
        %v3329 = vadd.f32 %v3264, %v3328
        %v3330 = vpop.f32.mrb[0].mxu0
        %3331 = vdwg.mxu0
        %v3332 = vld [vmem:[#allocation12] sm:$0x1]
        %v3334 = vlaneseq
        %v3335 = vshrl.u32 %v3334, 7
        %v3336 = vsub.s32 0, %v3335
        %v3337 = vrot.slane %v3332, %v3336
        %v3339 = vmul.f32 %v3302, %v3337
        %v3340 = vmul.f32 %v3305, %v3337
        %v3341 = vmul.f32 %v3310, %v3337
        %v3342 = vmul.f32 %v3313, %v3337
        %v3343 = vmul.f32 %v3318, %v3337
        %v3344 = vmul.f32 %v3321, %v3337
        %v3345 = vmul.f32 %v3326, %v3337
        %v3346 = vmul.f32 %v3329, %v3337
        %v3347 = vld [vmem:[#allocation14] sm:$0x1]
        %v3349 = vlaneseq
        %v3350 = vshrl.u32 %v3349, 7
        %v3351 = vsub.s32 0, %v3350
        %v3352 = vrot.slane %v3347, %v3351
        %v3354 = vadd.f32 %v3339, %v3352
        %v3355 = vadd.f32 %v3340, %v3352
        %v3356 = vadd.f32 %v3341, %v3352
        %v3357 = vadd.f32 %v3342, %v3352
        %v3358 = vadd.f32 %v3343, %v3352
        %v3359 = vadd.f32 %v3344, %v3352
        %v3360 = vadd.f32 %v3345, %v3352
        %v3361 = vadd.f32 %v3346, %v3352
        %vm3362 = vcmp.ge.f32.partialorder %v3354, 0.0
        %vm3363 = vcmp.ge.f32.partialorder %v3355, 0.0
        %vm3364 = vcmp.ge.f32.partialorder %v3356, 0.0
        %vm3365 = vcmp.ge.f32.partialorder %v3357, 0.0
        %vm3366 = vcmp.ge.f32.partialorder %v3358, 0.0
        %vm3367 = vcmp.ge.f32.partialorder %v3359, 0.0
        %vm3368 = vcmp.ge.f32.partialorder %v3360, 0.0
        %vm3369 = vcmp.ge.f32.partialorder %v3361, 0.0
        %v3370 = vmul.f32 %v3354, 0.01
        %v3371 = vmul.f32 %v3355, 0.01
        %v3372 = vmul.f32 %v3356, 0.01
        %v3373 = vmul.f32 %v3357, 0.01
        %v3374 = vmul.f32 %v3358, 0.01
        %v3375 = vmul.f32 %v3359, 0.01
        %v3376 = vmul.f32 %v3360, 0.01
        %v3377 = vmul.f32 %v3361, 0.01
        %v3378 = vsel %vm3362, %v3354, %v3370
        %v3379 = vsel %vm3363, %v3355, %v3371
        %v3380 = vsel %vm3364, %v3356, %v3372
        %v3381 = vsel %vm3365, %v3357, %v3373
        %v3382 = vsel %vm3366, %v3358, %v3374
        %v3383 = vsel %vm3367, %v3359, %v3375
        %v3384 = vsel %vm3368, %v3360, %v3376
        %v3385 = vsel %vm3369, %v3361, %v3377
        %v3386 = vpack.c.bf16 %v3379, %v3378
        %v3387 = vpack.c.bf16 %v3381, %v3380
        %v3388 = vpack.c.bf16 %v3383, %v3382
        %v3389 = vpack.c.bf16 %v3385, %v3384
        %v3394 = vunpack.c.l.b16 %v3386
        %v3395 = vunpack.c.h.b16 %v3386
        %v3396 = vunpack.c.l.b16 %v3387
        %v3397 = vunpack.c.h.b16 %v3387
        %v3398 = vunpack.c.l.b16 %v3388
        %v3399 = vunpack.c.h.b16 %v3388
        %v3400 = vunpack.c.l.b16 %v3389
        %v3401 = vunpack.c.h.b16 %v3389
        %v3402 = vpack.c.b16 %v3394, %v3394
        %v3403 = vpack.c.b16 %v3395, %v3395
        %v3404 = vpack.c.b16 %v3396, %v3396
        %v3405 = vpack.c.b16 %v3397, %v3397
        %v3406 = vpack.c.b16 %v3398, %v3398
        %v3407 = vpack.c.b16 %v3399, %v3399
        %v3408 = vpack.c.b16 %v3400, %v3400
        %v3409 = vpack.c.b16 %v3401, %v3401
        %vm3418 = vcmask 257024
        %3419 = vst.msk [vmem:[%s449] sm:$0xf] %vm3418, %v3402
        %3420 = vst.msk [vmem:[%s449 + $0x4] sm:$0xf] %vm3418, %v3403
        %3421 = vst.msk [vmem:[%s449 + $0x8] sm:$0xf] %vm3418, %v3404
        %3422 = vst.msk [vmem:[%s449 + $0xc] sm:$0xf] %vm3418, %v3405
        %3423 = vst.msk [vmem:[%s449 + $0x10] sm:$0xf] %vm3418, %v3406
        %3424 = vst.msk [vmem:[%s449 + $0x14] sm:$0xf] %vm3418, %v3407
        %3425 = vst.msk [vmem:[%s449 + $0x18] sm:$0xf] %vm3418, %v3408
        %3426 = vst.msk [vmem:[%s449 + $0x1c] sm:$0xf] %vm3418, %v3409
        %p3427 = scmp.lt.s32.totalorder %s25, 1
        %s3428 = scalar_select %p3427, %s25, 1
        %s3429 = smul.addr %s3428, 8
        %s3430 = smul.addr %s3429, 4
        %s3431 = scalar_lea.vmem %s10, %s3430
        // Predicated region
        $region89: #{convnet_forward.3} parent=59 // pred_check
          %p3432 = pneg %p258
        $region90: #{convnet_forward.3} parent=59 // pred_check_branch
          %3434 = sbr.rel (%p3432) target = $region92
        $region91: #{convnet_forward.3} parent=59 // pred_region
          _
        $region92: #{convnet_forward.3} parent=59 // pred_fallthru
          _
      $region60: #{convnet_forward.3} parent=5 // pred_fallthru
        _
      %p3435 = scmp.le.s32.totalorder 2, %s20
      // Predicated region
      $region93: #{convnet_forward.3} parent=5 // pred_check
        %p3436 = pneg %p3435
      $region94: #{convnet_forward.3} parent=5 // pred_check_branch
        %3438 = sbr.rel (%p3436) target = $region96
      $region95: #{convnet_forward.3} parent=5 // pred_region
        %s3439 = ssub.s32 %s20, 2
        // Predicated region
        $region97: #{convnet_forward.3} parent=95 // pred_check
          %p3440 = pneg %p264
        $region98: #{convnet_forward.3} parent=95 // pred_check_branch
          %3442 = sbr.rel (%p3440) target = $region100
        $region99: #{convnet_forward.3} parent=95 // pred_region
          %p3443 = scmp.lt.s32.totalorder %s26, 1
          %s3444 = scalar_select %p3443, %s26, 1
          %s3445 = smul.addr %s3444, 8
          %s3446 = smul.addr %s3445, 4
          %s3447 = scalar_lea.vmem %s10, %s3446
        $region100: #{convnet_forward.3} parent=95 // pred_fallthru
          _
      $region96: #{convnet_forward.3} parent=5 // pred_fallthru
        _
    $region6: #{convnet_forward.3} parent=1 // loop_footer
      %s24 = sadd.s32 1, %s20
    $region7: #{convnet_forward.3} parent=1 // loop_footer_branch
      %19 = sbr.rel target = $region3
    $region8: #{convnet_forward.3} parent=1 // loop_exit
      _
    %3448 = vsyncpa [#allocation5], 1
    %s3449 = scalar_lea.sflag [#allocation5], 1
    %3450 = vsyncpa %s3449, 1
    %3451 = vsyncpa [#allocation7], 1
    %3452 = vsyncpa [#allocation10], 1
    %3453 = vsyncpa [#allocation13], 1

// kernel: convnet_forward.4
$region0: #{convnet_forward.4}
  #allocation0 [shape = 'u32[]', space=smem, size = 0x4, offset = 0x4, fixed_abs, tag = 'smem constant byte address 0x4 - core index']
  #allocation1 [shape = 'u32[144,128]{1,0:T(1,128)}', space=vmem, size = 0x12000, scoped, tag = 'internal scratch']
  #allocation2 [shape = 'f32[8,1024]{1,0:T(8,128)}', space=vmem, size = 0x8000, scoped, tag = 'scratch operand']
  %s0 = inlined_call_operand.vmem [shape: bf16[8,2048], index: 0, kind: input, shape index: {}]
  %s1 = inlined_call_operand.hbm [shape: bf16[2048,4096], index: 1, kind: input, shape index: {}]
  %s2 = inlined_call_operand.hbm [shape: f32[1,4096], index: 2, kind: input, shape index: {}]
  %s3 = inlined_call_operand.vmem [shape: f32[8,4096], index: 3, kind: output, shape index: {}]
  %s4 = sld [smem:[#allocation0]]
  $region61: #{convnet_forward.4} parent=0
    _
  %s6 = ssub.s32 1, %s4
  %s7 = scalar_select 0, %s6, %s4
  $region1: #{convnet_forward.4} parent=0
    #allocation3 [shape = 'u8[8388608]{0}', space=vmem, size = 0x800000, scoped, tag = 'input window, operand 1']
    #allocation4 [shape = 's32[2]{0}', space=sflag, size = 0x8, scoped, tag = 'scoped memory for convnet_forward.4']
    #allocation5 [shape = 'u8[8192]{0}', space=vmem, size = 0x2000, scoped, tag = 'input window, operand 2']
    #allocation6 [shape = 's32[2]{0}', space=sflag, size = 0x8, scoped, tag = 'scoped memory for convnet_forward.4']
    %8 = vsyncpa [#allocation4], 0
    %s9 = scalar_lea.sflag [#allocation4], 1
    %10 = vsyncpa %s9, 0
    %11 = vsyncpa [#allocation6], 0
    %s12 = scalar_lea.sflag [#allocation6], 1
    %13 = vsyncpa %s12, 0
    loop: start=0, step=1, limit=6
    $region2: #{convnet_forward.4} parent=1 // loop_pre_header
      _
    $region3: #{convnet_forward.4} parent=1 // loop_header
      %s15 = sphi 0, %s19
      %p16 = scmp.ge.s32.totalorder %s15, 6
      %s22 = sphi 0, %s34
      %s23 = sphi 0, %s30
      %s24 = sphi 0, %s22
      %s25 = sphi 0, %s23
      %s26 = sphi 0, %s24
      %s27 = sphi 0, %s25
      %s37 = sphi 0, %s39
      %s40 = sphi 0, %s37
      %s41 = sphi 0, %s40
      %s57 = sphi 0, %s41
      %s65 = sphi 0, %s67
      %s68 = sphi 0, %s65
      %s69 = sphi 0, %s68
      %s85 = sphi 0, %s69
      %s91 = sphi 0, %s93
      %s94 = sphi 0, %s91
      %s95 = sphi 0, %s94
      %s111 = sphi 0, %s95
      %s117 = sphi 0, %s119
      %s120 = sphi 0, %s117
      %s121 = sphi 0, %s120
      %s137 = sphi 0, %s121
    $region4: #{convnet_forward.4} parent=1 // loop_header_branch
      %18 = sbr.rel (%p16) target = $region8
    $region5: #{convnet_forward.4} parent=1 // loop_body
      %s20 = ssub.s32 %s15, 1
      %s21 = ssub.s32 %s15, 2
      %s28 = sadd.s32 1, %s23
      %p29 = scmp.ge.s32.totalorder %s28, 1
      %s30 = scalar_select %p29, 0, %s28
      %s31 = sadd.s32 1, %s22
      %s32 = scalar_select %p29, %s31, %s22
      %p33 = scmp.ge.s32.totalorder %s32, 4
      %s34 = scalar_select %p33, 0, %s32
      %s35 = ssub.s32 %s23, %s30
      %p36 = scmp.eq.s32.totalorder %s35, 0
      %s38 = sadd.s32 %s37, 1
      %s39 = scalar_select %p36, %s37, %s38
      %p42 = pneg %p36
      %p43 = scmp.eq.s32.totalorder %s15, 3
      %p44 = por %p42, %p43
      %p45 = scmp.ne.s32.totalorder %s37, %s40
      %p46 = scmp.eq.s32.totalorder %s15, 0
      %p47 = por %p45, %p46
      %p48 = scmp.ne.s32.totalorder %s37, %s40
      %p49 = scmp.eq.s32.totalorder %s20, 3
      %p50 = por %p48, %p49
      %p51 = scmp.ne.s32.totalorder %s40, %s41
      %p52 = scmp.eq.s32.totalorder %s20, 0
      %p53 = por %p51, %p52
      %p54 = scmp.ne.s32.totalorder %s40, %s41
      %p55 = scmp.eq.s32.totalorder %s21, 3
      %p56 = por %p54, %p55
      %p58 = scmp.ne.s32.totalorder %s41, %s57
      %p59 = scmp.eq.s32.totalorder %s21, 0
      %p60 = por %p58, %p59
      %s61 = ssub.s32 %s23, %s30
      %s62 = ssub.s32 %s22, %s34
      %s63 = sor.u32 %s61, %s62
      %p64 = scmp.eq.s32.totalorder %s63, 0
      %s66 = sadd.s32 %s65, 1
      %s67 = scalar_select %p64, %s65, %s66
      %p70 = pneg %p64
      %p71 = scmp.eq.s32.totalorder %s15, 3
      %p72 = por %p70, %p71
      %p73 = scmp.ne.s32.totalorder %s65, %s68
      %p74 = scmp.eq.s32.totalorder %s15, 0
      %p75 = por %p73, %p74
      %p76 = scmp.ne.s32.totalorder %s65, %s68
      %p77 = scmp.eq.s32.totalorder %s20, 3
      %p78 = por %p76, %p77
      %p79 = scmp.ne.s32.totalorder %s68, %s69
      %p80 = scmp.eq.s32.totalorder %s20, 0
      %p81 = por %p79, %p80
      %p82 = scmp.ne.s32.totalorder %s68, %s69
      %p83 = scmp.eq.s32.totalorder %s21, 3
      %p84 = por %p82, %p83
      %p86 = scmp.ne.s32.totalorder %s69, %s85
      %p87 = scmp.eq.s32.totalorder %s21, 0
      %p88 = por %p86, %p87
      %s89 = ssub.s32 %s22, %s34
      %p90 = scmp.eq.s32.totalorder %s89, 0
      %s92 = sadd.s32 %s91, 1
      %s93 = scalar_select %p90, %s91, %s92
      %p96 = pneg %p90
      %p97 = scmp.eq.s32.totalorder %s15, 3
      %p98 = por %p96, %p97
      %p99 = scmp.ne.s32.totalorder %s91, %s94
      %p100 = scmp.eq.s32.totalorder %s15, 0
      %p101 = por %p99, %p100
      %p102 = scmp.ne.s32.totalorder %s91, %s94
      %p103 = scmp.eq.s32.totalorder %s20, 3
      %p104 = por %p102, %p103
      %p105 = scmp.ne.s32.totalorder %s94, %s95
      %p106 = scmp.eq.s32.totalorder %s20, 0
      %p107 = por %p105, %p106
      %p108 = scmp.ne.s32.totalorder %s94, %s95
      %p109 = scmp.eq.s32.totalorder %s21, 3
      %p110 = por %p108, %p109
      %p112 = scmp.ne.s32.totalorder %s95, %s111
      %p113 = scmp.eq.s32.totalorder %s21, 0
      %p114 = por %p112, %p113
      %s115 = ssub.s32 %s22, %s34
      %p116 = scmp.eq.s32.totalorder %s115, 0
      %s118 = sadd.s32 %s117, 1
      %s119 = scalar_select %p116, %s117, %s118
      %p122 = pneg %p116
      %p123 = scmp.eq.s32.totalorder %s15, 3
      %p124 = por %p122, %p123
      %p125 = scmp.ne.s32.totalorder %s117, %s120
      %p126 = scmp.eq.s32.totalorder %s15, 0
      %p127 = por %p125, %p126
      %p128 = scmp.ne.s32.totalorder %s117, %s120
      %p129 = scmp.eq.s32.totalorder %s20, 3
      %p130 = por %p128, %p129
      %p131 = scmp.ne.s32.totalorder %s120, %s121
      %p132 = scmp.eq.s32.totalorder %s20, 0
      %p133 = por %p131, %p132
      %p134 = scmp.ne.s32.totalorder %s120, %s121
      %p135 = scmp.eq.s32.totalorder %s21, 3
      %p136 = por %p134, %p135
      %p138 = scmp.ne.s32.totalorder %s121, %s137
      %p139 = scmp.eq.s32.totalorder %s21, 0
      %p140 = por %p138, %p139
      %p141 = scmp.le.s32.totalorder 1, %s15
      %p142 = scmp.lt.s32.totalorder %s15, 5
      %p143 = pnand %p141, %p142
      %p144 = pneg %p143
      // Predicated region
      $region9: #{convnet_forward.4} parent=5 // pred_check
        _
      $region10: #{convnet_forward.4} parent=5 // pred_check_branch
        %146 = sbr.rel (%p143) target = $region12
      $region11: #{convnet_forward.4} parent=5 // pred_region
        %s147 = ssub.s32 %s15, 1
        // Predicated region
        $region13: #{convnet_forward.4} parent=11 // pred_check
          %p148 = pneg %p53
        $region14: #{convnet_forward.4} parent=11 // pred_check_branch
          %150 = sbr.rel (%p148) target = $region16
        $region15: #{convnet_forward.4} parent=11 // pred_region
          %s151 = smul.u32 16, %s25
          %p152 = scmp.lt.s32.totalorder %s151, 15
          %s153 = scalar_select %p152, %s151, 15
          %s154 = smul.addr %s153, 4
          %s155 = scalar_lea.vmem %s0, %s154
          %s156 = smul.u32 16, %s25
        $region16: #{convnet_forward.4} parent=11 // pred_fallthru
          _
      $region12: #{convnet_forward.4} parent=5 // pred_fallthru
        _
      %p157 = scmp.lt.s32.totalorder %s15, 4
      // Predicated region
      $region17: #{convnet_forward.4} parent=5 // pred_check
        %p158 = pneg %p157
      $region18: #{convnet_forward.4} parent=5 // pred_check_branch
        %160 = sbr.rel (%p158) target = $region20
      $region19: #{convnet_forward.4} parent=5 // pred_region
        // Predicated region
        $region21: #{convnet_forward.4} parent=19 // pred_check
          %p161 = pneg %p75
        $region22: #{convnet_forward.4} parent=19 // pred_check_branch
          %163 = sbr.rel (%p161) target = $region24
        $region23: #{convnet_forward.4} parent=19 // pred_region
          %s164 = sand.u32 %s65, 1
          %s165 = scalar_lea.sflag [#allocation4], %s164
          %s166 = sand.u32 %s65, 1
          %s167 = smul.addr %s166, 8192
          %s168 = scalar_lea.vmem [#allocation3], %s167
          %s169 = smul.u32 256, %s23
          %s170 = smul.u32 8, %s22
          %s172 = ssub.s32 131072, 131072
          %173 = vsyncadd %s165, %s172
          %s174 = smul.addr %s169, 32
          %s175 = sadd.s32 %s170, %s174
          %s176 = smul.addr %s175, 64
          %s177 = scalar_lea.hbm %s1, %s176
          %s178 = sshll.u32 %s168, 4
          %s179 = int_to_ptr.vmem [resolvable:$true] %s178
          %184 = dma.hbm_to_vmem [thread:$0]  %s177, 131072, %s179, %s165, 2048, 512, 32
        $region24: #{convnet_forward.4} parent=19 // pred_fallthru
          _
        // Predicated region
        $region25: #{convnet_forward.4} parent=19 // pred_check
          %p185 = pneg %p101
        $region26: #{convnet_forward.4} parent=19 // pred_check_branch
          %187 = sbr.rel (%p185) target = $region28
        $region27: #{convnet_forward.4} parent=19 // pred_region
          %s188 = sand.u32 %s91, 1
          %s189 = scalar_lea.sflag [#allocation6], %s188
          %s190 = sand.u32 %s91, 1
          %s191 = smul.addr %s190, 8
          %s192 = scalar_lea.vmem [#allocation5], %s191
          %s193 = smul.u32 8, %s22
          %s195 = ssub.s32 128, 128
          %196 = vsyncadd %s189, %s195
          %s197 = smul.addr %s193, 16
          %s198 = scalar_lea.hbm %s2, %s197
          %s200 = sshll.u32 %s192, 4
          %s201 = int_to_ptr.vmem [resolvable:$true] %s200
          %203 = dma.hbm_to_vmem [thread:$0]  %s198, 128, %s201, %s189
        $region28: #{convnet_forward.4} parent=19 // pred_fallthru
          _
      $region20: #{convnet_forward.4} parent=5 // pred_fallthru
        _
      %p204 = scmp.le.s32.totalorder 1, %s15
      %p205 = scmp.lt.s32.totalorder %s15, 5
      %p206 = pnand %p204, %p205
      %p207 = pneg %p206
      // Predicated region
      $region29: #{convnet_forward.4} parent=5 // pred_check
        _
      $region30: #{convnet_forward.4} parent=5 // pred_check_branch
        %209 = sbr.rel (%p206) target = $region32
      $region31: #{convnet_forward.4} parent=5 // pred_region
        %s210 = ssub.s32 %s15, 1
        %s211 = sand.u32 %s68, 1
        %s212 = scalar_lea.sflag [#allocation4], %s211
        %s213 = sand.u32 %s68, 1
        %s214 = smul.addr %s213, 8192
        %s215 = scalar_lea.vmem [#allocation3], %s214
        // Predicated region
        $region33: #{convnet_forward.4} parent=31 // pred_check
          %p216 = pneg %p81
        $region34: #{convnet_forward.4} parent=31 // pred_check_branch
          %218 = sbr.rel (%p216) target = $region36
        $region35: #{convnet_forward.4} parent=31 // pred_region
          %219 = dma.done %s212, 131072
        $region36: #{convnet_forward.4} parent=31 // pred_fallthru
          _
        %s220 = sand.u32 %s94, 1
        %s221 = scalar_lea.sflag [#allocation6], %s220
        %s222 = sand.u32 %s94, 1
        %s223 = smul.addr %s222, 8
        %s224 = scalar_lea.vmem [#allocation5], %s223
        // Predicated region
        $region37: #{convnet_forward.4} parent=31 // pred_check
          %p225 = pneg %p107
        $region38: #{convnet_forward.4} parent=31 // pred_check_branch
          %227 = sbr.rel (%p225) target = $region40
        $region39: #{convnet_forward.4} parent=31 // pred_region
          %228 = dma.done %s221, 128
        $region40: #{convnet_forward.4} parent=31 // pred_fallthru
          _
        %s229 = smul.u32 16, %s25
        %p230 = scmp.lt.s32.totalorder %s229, 15
        %s231 = scalar_select %p230, %s229, 15
        %s232 = smul.addr %s231, 4
        %s233 = scalar_lea.vmem %s0, %s232
        %p234 = pneg %p53
        %p235 = pneg %p50
        %s236 = sand.u32 %s68, 1
        %s237 = scalar_lea.sflag [#allocation4], %s236
        %s238 = sand.u32 %s68, 1
        %s239 = smul.addr %s238, 8192
        %s240 = scalar_lea.vmem [#allocation3], %s239
        %p241 = pneg %p81
        %p242 = pneg %p78
        %s243 = sand.u32 %s94, 1
        %s244 = scalar_lea.sflag [#allocation6], %s243
        %s245 = sand.u32 %s94, 1
        %s246 = smul.addr %s245, 8
        %s247 = scalar_lea.vmem [#allocation5], %s246
        %p248 = pneg %p107
        %p249 = pneg %p104
        %p250 = pneg %p133
        %p251 = pneg %p130
        %s252 = smul.u32 8, %s24
        %p253 = scmp.lt.s32.totalorder %s252, 31
        %s254 = scalar_select %p253, %s252, 31
        %s255 = smul.addr %s254, 8
        %s256 = scalar_lea.vmem %s3, %s255
        %s257 = smul.u32 16, %s25
        %p258 = scmp.lt.s32.totalorder %s257, 15
        %s259 = scalar_select %p258, %s257, 15
        %s260 = smul.addr %s259, 4
        %s261 = scalar_lea.vmem %s0, %s260
        %s262 = smul.u32 16, %s25
        %s263 = smul.u32 256, %s25
        %s264 = smul.u32 8, %s24
        %s265 = smul.u32 8, %s24
        %s266 = smul.u32 8, %s24
        %p267 = scmp.lt.s32.totalorder %s266, 31
        %s268 = scalar_select %p267, %s266, 31
        %s269 = smul.addr %s268, 8
        %s270 = scalar_lea.vmem %s3, %s269
        %s271 = smul.u32 8, %s24
        %p272 = scmp.eq.s32.totalorder %s25, 0
        // Predicated region
        $region41: #{convnet_forward.4} parent=31 // pred_check
          %p273 = pneg %p272
        $region42: #{convnet_forward.4} parent=31 // pred_check_branch
          %275 = sbr.rel (%p273) target = $region44
        $region43: #{convnet_forward.4} parent=31 // pred_region
          %276 = vst [vmem:[#allocation2] sm:$0xff] 0.0
          %277 = vst [vmem:[#allocation2 + $0x8] sm:$0xff] 0.0
          %278 = vst [vmem:[#allocation2 + $0x10] sm:$0xff] 0.0
          %279 = vst [vmem:[#allocation2 + $0x18] sm:$0xff] 0.0
          %280 = vst [vmem:[#allocation2 + $0x20] sm:$0xff] 0.0
          %281 = vst [vmem:[#allocation2 + $0x28] sm:$0xff] 0.0
          %282 = vst [vmem:[#allocation2 + $0x30] sm:$0xff] 0.0
          %283 = vst [vmem:[#allocation2 + $0x38] sm:$0xff] 0.0
        $region44: #{convnet_forward.4} parent=31 // pred_fallthru
          _
        %v284 = vld [vmem:[#allocation2] sm:$0xff]
        %v285 = vld [vmem:[#allocation2 + $0x8] sm:$0xff]
        %v286 = vld [vmem:[#allocation2 + $0x10] sm:$0xff]
        %v287 = vld [vmem:[#allocation2 + $0x18] sm:$0xff]
        %v288 = vld [vmem:[#allocation2 + $0x20] sm:$0xff]
        %v289 = vld [vmem:[#allocation2 + $0x28] sm:$0xff]
        %v290 = vld [vmem:[#allocation2 + $0x30] sm:$0xff]
        %v291 = vld [vmem:[#allocation2 + $0x38] sm:$0xff]
        %v292 = vld [vmem:[%s261] sm:$0xff]
        %v293 = vld [vmem:[%s261 + $0x8] sm:$0xff]
        %v294 = vld [vmem:[%s261 + $0x10] sm:$0xff]
        %v295 = vld [vmem:[%s261 + $0x18] sm:$0xff]
        %v296 = vld [vmem:[%s261 + $0x20] sm:$0xff]
        %v297 = vld [vmem:[%s261 + $0x28] sm:$0xff]
        %v298 = vld [vmem:[%s261 + $0x30] sm:$0xff]
        %v299 = vld [vmem:[%s261 + $0x38] sm:$0xff]
        %v300 = vld [vmem:[%s215] sm:$0xff]
        %v301 = vld [vmem:[%s215 + $0x8] sm:$0xff]
        %v302 = vld [vmem:[%s215 + $0x10] sm:$0xff]
        %v303 = vld [vmem:[%s215 + $0x18] sm:$0xff]
        %v304 = vld [vmem:[%s215 + $0x20] sm:$0xff]
        %v305 = vld [vmem:[%s215 + $0x28] sm:$0xff]
        %v306 = vld [vmem:[%s215 + $0x30] sm:$0xff]
        %v307 = vld [vmem:[%s215 + $0x38] sm:$0xff]
        %v308 = vld [vmem:[%s215 + $0x40] sm:$0xff]
        %v309 = vld [vmem:[%s215 + $0x48] sm:$0xff]
        %v310 = vld [vmem:[%s215 + $0x50] sm:$0xff]
        %v311 = vld [vmem:[%s215 + $0x58] sm:$0xff]
        %v312 = vld [vmem:[%s215 + $0x60] sm:$0xff]
        %v313 = vld [vmem:[%s215 + $0x68] sm:$0xff]
        %v314 = vld [vmem:[%s215 + $0x70] sm:$0xff]
        %v315 = vld [vmem:[%s215 + $0x78] sm:$0xff]
        %v316 = vld [vmem:[%s215 + $0x80] sm:$0xff]
        %v317 = vld [vmem:[%s215 + $0x88] sm:$0xff]
        %v318 = vld [vmem:[%s215 + $0x90] sm:$0xff]
        %v319 = vld [vmem:[%s215 + $0x98] sm:$0xff]
        %v320 = vld [vmem:[%s215 + $0xa0] sm:$0xff]
        %v321 = vld [vmem:[%s215 + $0xa8] sm:$0xff]
        %v322 = vld [vmem:[%s215 + $0xb0] sm:$0xff]
        %v323 = vld [vmem:[%s215 + $0xb8] sm:$0xff]
        %v324 = vld [vmem:[%s215 + $0xc0] sm:$0xff]
        %v325 = vld [vmem:[%s215 + $0xc8] sm:$0xff]
        %v326 = vld [vmem:[%s215 + $0xd0] sm:$0xff]
        %v327 = vld [vmem:[%s215 + $0xd8] sm:$0xff]
        %v328 = vld [vmem:[%s215 + $0xe0] sm:$0xff]
        %v329 = vld [vmem:[%s215 + $0xe8] sm:$0xff]
        %v330 = vld [vmem:[%s215 + $0xf0] sm:$0xff]
        %v331 = vld [vmem:[%s215 + $0xf8] sm:$0xff]
        %v332 = vld [vmem:[%s215 + $0x100] sm:$0xff]
        %v333 = vld [vmem:[%s215 + $0x108] sm:$0xff]
        %v334 = vld [vmem:[%s215 + $0x110] sm:$0xff]
        %v335 = vld [vmem:[%s215 + $0x118] sm:$0xff]
        %v336 = vld [vmem:[%s215 + $0x120] sm:$0xff]
        %v337 = vld [vmem:[%s215 + $0x128] sm:$0xff]
        %v338 = vld [vmem:[%s215 + $0x130] sm:$0xff]
        %v339 = vld [vmem:[%s215 + $0x138] sm:$0xff]
        %v340 = vld [vmem:[%s215 + $0x140] sm:$0xff]
        %v341 = vld [vmem:[%s215 + $0x148] sm:$0xff]
        %v342 = vld [vmem:[%s215 + $0x150] sm:$0xff]
        %v343 = vld [vmem:[%s215 + $0x158] sm:$0xff]
        %v344 = vld [vmem:[%s215 + $0x160] sm:$0xff]
        %v345 = vld [vmem:[%s215 + $0x168] sm:$0xff]
        %v346 = vld [vmem:[%s215 + $0x170] sm:$0xff]
        %v347 = vld [vmem:[%s215 + $0x178] sm:$0xff]
        %v348 = vld [vmem:[%s215 + $0x180] sm:$0xff]
        %v349 = vld [vmem:[%s215 + $0x188] sm:$0xff]
        %v350 = vld [vmem:[%s215 + $0x190] sm:$0xff]
        %v351 = vld [vmem:[%s215 + $0x198] sm:$0xff]
        %v352 = vld [vmem:[%s215 + $0x1a0] sm:$0xff]
        %v353 = vld [vmem:[%s215 + $0x1a8] sm:$0xff]
        %v354 = vld [vmem:[%s215 + $0x1b0] sm:$0xff]
        %v355 = vld [vmem:[%s215 + $0x1b8] sm:$0xff]
        %v356 = vld [vmem:[%s215 + $0x1c0] sm:$0xff]
        %v357 = vld [vmem:[%s215 + $0x1c8] sm:$0xff]
        %v358 = vld [vmem:[%s215 + $0x1d0] sm:$0xff]
        %v359 = vld [vmem:[%s215 + $0x1d8] sm:$0xff]
        %v360 = vld [vmem:[%s215 + $0x1e0] sm:$0xff]
        %v361 = vld [vmem:[%s215 + $0x1e8] sm:$0xff]
        %v362 = vld [vmem:[%s215 + $0x1f0] sm:$0xff]
        %v363 = vld [vmem:[%s215 + $0x1f8] sm:$0xff]
        %v364 = vld [vmem:[%s215 + $0x200] sm:$0xff]
        %v365 = vld [vmem:[%s215 + $0x208] sm:$0xff]
        %v366 = vld [vmem:[%s215 + $0x210] sm:$0xff]
        %v367 = vld [vmem:[%s215 + $0x218] sm:$0xff]
        %v368 = vld [vmem:[%s215 + $0x220] sm:$0xff]
        %v369 = vld [vmem:[%s215 + $0x228] sm:$0xff]
        %v370 = vld [vmem:[%s215 + $0x230] sm:$0xff]
        %v371 = vld [vmem:[%s215 + $0x238] sm:$0xff]
        %v372 = vld [vmem:[%s215 + $0x240] sm:$0xff]
        %v373 = vld [vmem:[%s215 + $0x248] sm:$0xff]
        %v374 = vld [vmem:[%s215 + $0x250] sm:$0xff]
        %v375 = vld [vmem:[%s215 + $0x258] sm:$0xff]
        %v376 = vld [vmem:[%s215 + $0x260] sm:$0xff]
        %v377 = vld [vmem:[%s215 + $0x268] sm:$0xff]
        %v378 = vld [vmem:[%s215 + $0x270] sm:$0xff]
        %v379 = vld [vmem:[%s215 + $0x278] sm:$0xff]
        %v380 = vld [vmem:[%s215 + $0x280] sm:$0xff]
        %v381 = vld [vmem:[%s215 + $0x288] sm:$0xff]
        %v382 = vld [vmem:[%s215 + $0x290] sm:$0xff]
        %v383 = vld [vmem:[%s215 + $0x298] sm:$0xff]
        %v384 = vld [vmem:[%s215 + $0x2a0] sm:$0xff]
        %v385 = vld [vmem:[%s215 + $0x2a8] sm:$0xff]
        %v386 = vld [vmem:[%s215 + $0x2b0] sm:$0xff]
        %v387 = vld [vmem:[%s215 + $0x2b8] sm:$0xff]
        %v388 = vld [vmem:[%s215 + $0x2c0] sm:$0xff]
        %v389 = vld [vmem:[%s215 + $0x2c8] sm:$0xff]
        %v390 = vld [vmem:[%s215 + $0x2d0] sm:$0xff]
        %v391 = vld [vmem:[%s215 + $0x2d8] sm:$0xff]
        %v392 = vld [vmem:[%s215 + $0x2e0] sm:$0xff]
        %v393 = vld [vmem:[%s215 + $0x2e8] sm:$0xff]
        %v394 = vld [vmem:[%s215 + $0x2f0] sm:$0xff]
        %v395 = vld [vmem:[%s215 + $0x2f8] sm:$0xff]
        %v396 = vld [vmem:[%s215 + $0x300] sm:$0xff]
        %v397 = vld [vmem:[%s215 + $0x308] sm:$0xff]
        %v398 = vld [vmem:[%s215 + $0x310] sm:$0xff]
        %v399 = vld [vmem:[%s215 + $0x318] sm:$0xff]
        %v400 = vld [vmem:[%s215 + $0x320] sm:$0xff]
        %v401 = vld [vmem:[%s215 + $0x328] sm:$0xff]
        %v402 = vld [vmem:[%s215 + $0x330] sm:$0xff]
        %v403 = vld [vmem:[%s215 + $0x338] sm:$0xff]
        %v404 = vld [vmem:[%s215 + $0x340] sm:$0xff]
        %v405 = vld [vmem:[%s215 + $0x348] sm:$0xff]
        %v406 = vld [vmem:[%s215 + $0x350] sm:$0xff]
        %v407 = vld [vmem:[%s215 + $0x358] sm:$0xff]
        %v408 = vld [vmem:[%s215 + $0x360] sm:$0xff]
        %v409 = vld [vmem:[%s215 + $0x368] sm:$0xff]
        %v410 = vld [vmem:[%s215 + $0x370] sm:$0xff]
        %v411 = vld [vmem:[%s215 + $0x378] sm:$0xff]
        %v412 = vld [vmem:[%s215 + $0x380] sm:$0xff]
        %v413 = vld [vmem:[%s215 + $0x388] sm:$0xff]
        %v414 = vld [vmem:[%s215 + $0x390] sm:$0xff]
        %v415 = vld [vmem:[%s215 + $0x398] sm:$0xff]
        %v416 = vld [vmem:[%s215 + $0x3a0] sm:$0xff]
        %v417 = vld [vmem:[%s215 + $0x3a8] sm:$0xff]
        %v418 = vld [vmem:[%s215 + $0x3b0] sm:$0xff]
        %v419 = vld [vmem:[%s215 + $0x3b8] sm:$0xff]
        %v420 = vld [vmem:[%s215 + $0x3c0] sm:$0xff]
        %v421 = vld [vmem:[%s215 + $0x3c8] sm:$0xff]
        %v422 = vld [vmem:[%s215 + $0x3d0] sm:$0xff]
        %v423 = vld [vmem:[%s215 + $0x3d8] sm:$0xff]
        %v424 = vld [vmem:[%s215 + $0x3e0] sm:$0xff]
        %v425 = vld [vmem:[%s215 + $0x3e8] sm:$0xff]
        %v426 = vld [vmem:[%s215 + $0x3f0] sm:$0xff]
        %v427 = vld [vmem:[%s215 + $0x3f8] sm:$0xff]
        %v428 = vld [vmem:[%s215 + $0x400] sm:$0xff]
        %v429 = vld [vmem:[%s215 + $0x408] sm:$0xff]
        %v430 = vld [vmem:[%s215 + $0x410] sm:$0xff]
        %v431 = vld [vmem:[%s215 + $0x418] sm:$0xff]
        %v432 = vld [vmem:[%s215 + $0x420] sm:$0xff]
        %v433 = vld [vmem:[%s215 + $0x428] sm:$0xff]
        %v434 = vld [vmem:[%s215 + $0x430] sm:$0xff]
        %v435 = vld [vmem:[%s215 + $0x438] sm:$0xff]
        %v436 = vld [vmem:[%s215 + $0x440] sm:$0xff]
        %v437 = vld [vmem:[%s215 + $0x448] sm:$0xff]
        %v438 = vld [vmem:[%s215 + $0x450] sm:$0xff]
        %v439 = vld [vmem:[%s215 + $0x458] sm:$0xff]
        %v440 = vld [vmem:[%s215 + $0x460] sm:$0xff]
        %v441 = vld [vmem:[%s215 + $0x468] sm:$0xff]
        %v442 = vld [vmem:[%s215 + $0x470] sm:$0xff]
        %v443 = vld [vmem:[%s215 + $0x478] sm:$0xff]
        %v444 = vld [vmem:[%s215 + $0x480] sm:$0xff]
        %v445 = vld [vmem:[%s215 + $0x488] sm:$0xff]
        %v446 = vld [vmem:[%s215 + $0x490] sm:$0xff]
        %v447 = vld [vmem:[%s215 + $0x498] sm:$0xff]
        %v448 = vld [vmem:[%s215 + $0x4a0] sm:$0xff]
        %v449 = vld [vmem:[%s215 + $0x4a8] sm:$0xff]
        %v450 = vld [vmem:[%s215 + $0x4b0] sm:$0xff]
        %v451 = vld [vmem:[%s215 + $0x4b8] sm:$0xff]
        %v452 = vld [vmem:[%s215 + $0x4c0] sm:$0xff]
        %v453 = vld [vmem:[%s215 + $0x4c8] sm:$0xff]
        %v454 = vld [vmem:[%s215 + $0x4d0] sm:$0xff]
        %v455 = vld [vmem:[%s215 + $0x4d8] sm:$0xff]
        %v456 = vld [vmem:[%s215 + $0x4e0] sm:$0xff]
        %v457 = vld [vmem:[%s215 + $0x4e8] sm:$0xff]
        %v458 = vld [vmem:[%s215 + $0x4f0] sm:$0xff]
        %v459 = vld [vmem:[%s215 + $0x4f8] sm:$0xff]
        %v460 = vld [vmem:[%s215 + $0x500] sm:$0xff]
        %v461 = vld [vmem:[%s215 + $0x508] sm:$0xff]
        %v462 = vld [vmem:[%s215 + $0x510] sm:$0xff]
        %v463 = vld [vmem:[%s215 + $0x518] sm:$0xff]
        %v464 = vld [vmem:[%s215 + $0x520] sm:$0xff]
        %v465 = vld [vmem:[%s215 + $0x528] sm:$0xff]
        %v466 = vld [vmem:[%s215 + $0x530] sm:$0xff]
        %v467 = vld [vmem:[%s215 + $0x538] sm:$0xff]
        %v468 = vld [vmem:[%s215 + $0x540] sm:$0xff]
        %v469 = vld [vmem:[%s215 + $0x548] sm:$0xff]
        %v470 = vld [vmem:[%s215 + $0x550] sm:$0xff]
        %v471 = vld [vmem:[%s215 + $0x558] sm:$0xff]
        %v472 = vld [vmem:[%s215 + $0x560] sm:$0xff]
        %v473 = vld [vmem:[%s215 + $0x568] sm:$0xff]
        %v474 = vld [vmem:[%s215 + $0x570] sm:$0xff]
        %v475 = vld [vmem:[%s215 + $0x578] sm:$0xff]
        %v476 = vld [vmem:[%s215 + $0x580] sm:$0xff]
        %v477 = vld [vmem:[%s215 + $0x588] sm:$0xff]
        %v478 = vld [vmem:[%s215 + $0x590] sm:$0xff]
        %v479 = vld [vmem:[%s215 + $0x598] sm:$0xff]
        %v480 = vld [vmem:[%s215 + $0x5a0] sm:$0xff]
        %v481 = vld [vmem:[%s215 + $0x5a8] sm:$0xff]
        %v482 = vld [vmem:[%s215 + $0x5b0] sm:$0xff]
        %v483 = vld [vmem:[%s215 + $0x5b8] sm:$0xff]
        %v484 = vld [vmem:[%s215 + $0x5c0] sm:$0xff]
        %v485 = vld [vmem:[%s215 + $0x5c8] sm:$0xff]
        %v486 = vld [vmem:[%s215 + $0x5d0] sm:$0xff]
        %v487 = vld [vmem:[%s215 + $0x5d8] sm:$0xff]
        %v488 = vld [vmem:[%s215 + $0x5e0] sm:$0xff]
        %v489 = vld [vmem:[%s215 + $0x5e8] sm:$0xff]
        %v490 = vld [vmem:[%s215 + $0x5f0] sm:$0xff]
        %v491 = vld [vmem:[%s215 + $0x5f8] sm:$0xff]
        %v492 = vld [vmem:[%s215 + $0x600] sm:$0xff]
        %v493 = vld [vmem:[%s215 + $0x608] sm:$0xff]
        %v494 = vld [vmem:[%s215 + $0x610] sm:$0xff]
        %v495 = vld [vmem:[%s215 + $0x618] sm:$0xff]
        %v496 = vld [vmem:[%s215 + $0x620] sm:$0xff]
        %v497 = vld [vmem:[%s215 + $0x628] sm:$0xff]
        %v498 = vld [vmem:[%s215 + $0x630] sm:$0xff]
        %v499 = vld [vmem:[%s215 + $0x638] sm:$0xff]
        %v500 = vld [vmem:[%s215 + $0x640] sm:$0xff]
        %v501 = vld [vmem:[%s215 + $0x648] sm:$0xff]
        %v502 = vld [vmem:[%s215 + $0x650] sm:$0xff]
        %v503 = vld [vmem:[%s215 + $0x658] sm:$0xff]
        %v504 = vld [vmem:[%s215 + $0x660] sm:$0xff]
        %v505 = vld [vmem:[%s215 + $0x668] sm:$0xff]
        %v506 = vld [vmem:[%s215 + $0x670] sm:$0xff]
        %v507 = vld [vmem:[%s215 + $0x678] sm:$0xff]
        %v508 = vld [vmem:[%s215 + $0x680] sm:$0xff]
        %v509 = vld [vmem:[%s215 + $0x688] sm:$0xff]
        %v510 = vld [vmem:[%s215 + $0x690] sm:$0xff]
        %v511 = vld [vmem:[%s215 + $0x698] sm:$0xff]
        %v512 = vld [vmem:[%s215 + $0x6a0] sm:$0xff]
        %v513 = vld [vmem:[%s215 + $0x6a8] sm:$0xff]
        %v514 = vld [vmem:[%s215 + $0x6b0] sm:$0xff]
        %v515 = vld [vmem:[%s215 + $0x6b8] sm:$0xff]
        %v516 = vld [vmem:[%s215 + $0x6c0] sm:$0xff]
        %v517 = vld [vmem:[%s215 + $0x6c8] sm:$0xff]
        %v518 = vld [vmem:[%s215 + $0x6d0] sm:$0xff]
        %v519 = vld [vmem:[%s215 + $0x6d8] sm:$0xff]
        %v520 = vld [vmem:[%s215 + $0x6e0] sm:$0xff]
        %v521 = vld [vmem:[%s215 + $0x6e8] sm:$0xff]
        %v522 = vld [vmem:[%s215 + $0x6f0] sm:$0xff]
        %v523 = vld [vmem:[%s215 + $0x6f8] sm:$0xff]
        %v524 = vld [vmem:[%s215 + $0x700] sm:$0xff]
        %v525 = vld [vmem:[%s215 + $0x708] sm:$0xff]
        %v526 = vld [vmem:[%s215 + $0x710] sm:$0xff]
        %v527 = vld [vmem:[%s215 + $0x718] sm:$0xff]
        %v528 = vld [vmem:[%s215 + $0x720] sm:$0xff]
        %v529 = vld [vmem:[%s215 + $0x728] sm:$0xff]
        %v530 = vld [vmem:[%s215 + $0x730] sm:$0xff]
        %v531 = vld [vmem:[%s215 + $0x738] sm:$0xff]
        %v532 = vld [vmem:[%s215 + $0x740] sm:$0xff]
        %v533 = vld [vmem:[%s215 + $0x748] sm:$0xff]
        %v534 = vld [vmem:[%s215 + $0x750] sm:$0xff]
        %v535 = vld [vmem:[%s215 + $0x758] sm:$0xff]
        %v536 = vld [vmem:[%s215 + $0x760] sm:$0xff]
        %v537 = vld [vmem:[%s215 + $0x768] sm:$0xff]
        %v538 = vld [vmem:[%s215 + $0x770] sm:$0xff]
        %v539 = vld [vmem:[%s215 + $0x778] sm:$0xff]
        %v540 = vld [vmem:[%s215 + $0x780] sm:$0xff]
        %v541 = vld [vmem:[%s215 + $0x788] sm:$0xff]
        %v542 = vld [vmem:[%s215 + $0x790] sm:$0xff]
        %v543 = vld [vmem:[%s215 + $0x798] sm:$0xff]
        %v544 = vld [vmem:[%s215 + $0x7a0] sm:$0xff]
        %v545 = vld [vmem:[%s215 + $0x7a8] sm:$0xff]
        %v546 = vld [vmem:[%s215 + $0x7b0] sm:$0xff]
        %v547 = vld [vmem:[%s215 + $0x7b8] sm:$0xff]
        %v548 = vld [vmem:[%s215 + $0x7c0] sm:$0xff]
        %v549 = vld [vmem:[%s215 + $0x7c8] sm:$0xff]
        %v550 = vld [vmem:[%s215 + $0x7d0] sm:$0xff]
        %v551 = vld [vmem:[%s215 + $0x7d8] sm:$0xff]
        %v552 = vld [vmem:[%s215 + $0x7e0] sm:$0xff]
        %v553 = vld [vmem:[%s215 + $0x7e8] sm:$0xff]
        %v554 = vld [vmem:[%s215 + $0x7f0] sm:$0xff]
        %v555 = vld [vmem:[%s215 + $0x7f8] sm:$0xff]
        %v556 = vld [vmem:[%s215 + $0x800] sm:$0xff]
        %v557 = vld [vmem:[%s215 + $0x808] sm:$0xff]
        %v558 = vld [vmem:[%s215 + $0x810] sm:$0xff]
        %v559 = vld [vmem:[%s215 + $0x818] sm:$0xff]
        %v560 = vld [vmem:[%s215 + $0x820] sm:$0xff]
        %v561 = vld [vmem:[%s215 + $0x828] sm:$0xff]
        %v562 = vld [vmem:[%s215 + $0x830] sm:$0xff]
        %v563 = vld [vmem:[%s215 + $0x838] sm:$0xff]
        %v564 = vld [vmem:[%s215 + $0x840] sm:$0xff]
        %v565 = vld [vmem:[%s215 + $0x848] sm:$0xff]
        %v566 = vld [vmem:[%s215 + $0x850] sm:$0xff]
        %v567 = vld [vmem:[%s215 + $0x858] sm:$0xff]
        %v568 = vld [vmem:[%s215 + $0x860] sm:$0xff]
        %v569 = vld [vmem:[%s215 + $0x868] sm:$0xff]
        %v570 = vld [vmem:[%s215 + $0x870] sm:$0xff]
        %v571 = vld [vmem:[%s215 + $0x878] sm:$0xff]
        %v572 = vld [vmem:[%s215 + $0x880] sm:$0xff]
        %v573 = vld [vmem:[%s215 + $0x888] sm:$0xff]
        %v574 = vld [vmem:[%s215 + $0x890] sm:$0xff]
        %v575 = vld [vmem:[%s215 + $0x898] sm:$0xff]
        %v576 = vld [vmem:[%s215 + $0x8a0] sm:$0xff]
        %v577 = vld [vmem:[%s215 + $0x8a8] sm:$0xff]
        %v578 = vld [vmem:[%s215 + $0x8b0] sm:$0xff]
        %v579 = vld [vmem:[%s215 + $0x8b8] sm:$0xff]
        %v580 = vld [vmem:[%s215 + $0x8c0] sm:$0xff]
        %v581 = vld [vmem:[%s215 + $0x8c8] sm:$0xff]
        %v582 = vld [vmem:[%s215 + $0x8d0] sm:$0xff]
        %v583 = vld [vmem:[%s215 + $0x8d8] sm:$0xff]
        %v584 = vld [vmem:[%s215 + $0x8e0] sm:$0xff]
        %v585 = vld [vmem:[%s215 + $0x8e8] sm:$0xff]
        %v586 = vld [vmem:[%s215 + $0x8f0] sm:$0xff]
        %v587 = vld [vmem:[%s215 + $0x8f8] sm:$0xff]
        %v588 = vld [vmem:[%s215 + $0x900] sm:$0xff]
        %v589 = vld [vmem:[%s215 + $0x908] sm:$0xff]
        %v590 = vld [vmem:[%s215 + $0x910] sm:$0xff]
        %v591 = vld [vmem:[%s215 + $0x918] sm:$0xff]
        %v592 = vld [vmem:[%s215 + $0x920] sm:$0xff]
        %v593 = vld [vmem:[%s215 + $0x928] sm:$0xff]
        %v594 = vld [vmem:[%s215 + $0x930] sm:$0xff]
        %v595 = vld [vmem:[%s215 + $0x938] sm:$0xff]
        %v596 = vld [vmem:[%s215 + $0x940] sm:$0xff]
        %v597 = vld [vmem:[%s215 + $0x948] sm:$0xff]
        %v598 = vld [vmem:[%s215 + $0x950] sm:$0xff]
        %v599 = vld [vmem:[%s215 + $0x958] sm:$0xff]
        %v600 = vld [vmem:[%s215 + $0x960] sm:$0xff]
        %v601 = vld [vmem:[%s215 + $0x968] sm:$0xff]
        %v602 = vld [vmem:[%s215 + $0x970] sm:$0xff]
        %v603 = vld [vmem:[%s215 + $0x978] sm:$0xff]
        %v604 = vld [vmem:[%s215 + $0x980] sm:$0xff]
        %v605 = vld [vmem:[%s215 + $0x988] sm:$0xff]
        %v606 = vld [vmem:[%s215 + $0x990] sm:$0xff]
        %v607 = vld [vmem:[%s215 + $0x998] sm:$0xff]
        %v608 = vld [vmem:[%s215 + $0x9a0] sm:$0xff]
        %v609 = vld [vmem:[%s215 + $0x9a8] sm:$0xff]
        %v610 = vld [vmem:[%s215 + $0x9b0] sm:$0xff]
        %v611 = vld [vmem:[%s215 + $0x9b8] sm:$0xff]
        %v612 = vld [vmem:[%s215 + $0x9c0] sm:$0xff]
        %v613 = vld [vmem:[%s215 + $0x9c8] sm:$0xff]
        %v614 = vld [vmem:[%s215 + $0x9d0] sm:$0xff]
        %v615 = vld [vmem:[%s215 + $0x9d8] sm:$0xff]
        %v616 = vld [vmem:[%s215 + $0x9e0] sm:$0xff]
        %v617 = vld [vmem:[%s215 + $0x9e8] sm:$0xff]
        %v618 = vld [vmem:[%s215 + $0x9f0] sm:$0xff]
        %v619 = vld [vmem:[%s215 + $0x9f8] sm:$0xff]
        %v620 = vld [vmem:[%s215 + $0xa00] sm:$0xff]
        %v621 = vld [vmem:[%s215 + $0xa08] sm:$0xff]
        %v622 = vld [vmem:[%s215 + $0xa10] sm:$0xff]
        %v623 = vld [vmem:[%s215 + $0xa18] sm:$0xff]
        %v624 = vld [vmem:[%s215 + $0xa20] sm:$0xff]
        %v625 = vld [vmem:[%s215 + $0xa28] sm:$0xff]
        %v626 = vld [vmem:[%s215 + $0xa30] sm:$0xff]
        %v627 = vld [vmem:[%s215 + $0xa38] sm:$0xff]
        %v628 = vld [vmem:[%s215 + $0xa40] sm:$0xff]
        %v629 = vld [vmem:[%s215 + $0xa48] sm:$0xff]
        %v630 = vld [vmem:[%s215 + $0xa50] sm:$0xff]
        %v631 = vld [vmem:[%s215 + $0xa58] sm:$0xff]
        %v632 = vld [vmem:[%s215 + $0xa60] sm:$0xff]
        %v633 = vld [vmem:[%s215 + $0xa68] sm:$0xff]
        %v634 = vld [vmem:[%s215 + $0xa70] sm:$0xff]
        %v635 = vld [vmem:[%s215 + $0xa78] sm:$0xff]
        %v636 = vld [vmem:[%s215 + $0xa80] sm:$0xff]
        %v637 = vld [vmem:[%s215 + $0xa88] sm:$0xff]
        %v638 = vld [vmem:[%s215 + $0xa90] sm:$0xff]
        %v639 = vld [vmem:[%s215 + $0xa98] sm:$0xff]
        %v640 = vld [vmem:[%s215 + $0xaa0] sm:$0xff]
        %v641 = vld [vmem:[%s215 + $0xaa8] sm:$0xff]
        %v642 = vld [vmem:[%s215 + $0xab0] sm:$0xff]
        %v643 = vld [vmem:[%s215 + $0xab8] sm:$0xff]
        %v644 = vld [vmem:[%s215 + $0xac0] sm:$0xff]
        %v645 = vld [vmem:[%s215 + $0xac8] sm:$0xff]
        %v646 = vld [vmem:[%s215 + $0xad0] sm:$0xff]
        %v647 = vld [vmem:[%s215 + $0xad8] sm:$0xff]
        %v648 = vld [vmem:[%s215 + $0xae0] sm:$0xff]
        %v649 = vld [vmem:[%s215 + $0xae8] sm:$0xff]
        %v650 = vld [vmem:[%s215 + $0xaf0] sm:$0xff]
        %v651 = vld [vmem:[%s215 + $0xaf8] sm:$0xff]
        %v652 = vld [vmem:[%s215 + $0xb00] sm:$0xff]
        %v653 = vld [vmem:[%s215 + $0xb08] sm:$0xff]
        %v654 = vld [vmem:[%s215 + $0xb10] sm:$0xff]
        %v655 = vld [vmem:[%s215 + $0xb18] sm:$0xff]
        %v656 = vld [vmem:[%s215 + $0xb20] sm:$0xff]
        %v657 = vld [vmem:[%s215 + $0xb28] sm:$0xff]
        %v658 = vld [vmem:[%s215 + $0xb30] sm:$0xff]
        %v659 = vld [vmem:[%s215 + $0xb38] sm:$0xff]
        %v660 = vld [vmem:[%s215 + $0xb40] sm:$0xff]
        %v661 = vld [vmem:[%s215 + $0xb48] sm:$0xff]
        %v662 = vld [vmem:[%s215 + $0xb50] sm:$0xff]
        %v663 = vld [vmem:[%s215 + $0xb58] sm:$0xff]
        %v664 = vld [vmem:[%s215 + $0xb60] sm:$0xff]
        %v665 = vld [vmem:[%s215 + $0xb68] sm:$0xff]
        %v666 = vld [vmem:[%s215 + $0xb70] sm:$0xff]
        %v667 = vld [vmem:[%s215 + $0xb78] sm:$0xff]
        %v668 = vld [vmem:[%s215 + $0xb80] sm:$0xff]
        %v669 = vld [vmem:[%s215 + $0xb88] sm:$0xff]
        %v670 = vld [vmem:[%s215 + $0xb90] sm:$0xff]
        %v671 = vld [vmem:[%s215 + $0xb98] sm:$0xff]
        %v672 = vld [vmem:[%s215 + $0xba0] sm:$0xff]
        %v673 = vld [vmem:[%s215 + $0xba8] sm:$0xff]
        %v674 = vld [vmem:[%s215 + $0xbb0] sm:$0xff]
        %v675 = vld [vmem:[%s215 + $0xbb8] sm:$0xff]
        %v676 = vld [vmem:[%s215 + $0xbc0] sm:$0xff]
        %v677 = vld [vmem:[%s215 + $0xbc8] sm:$0xff]
        %v678 = vld [vmem:[%s215 + $0xbd0] sm:$0xff]
        %v679 = vld [vmem:[%s215 + $0xbd8] sm:$0xff]
        %v680 = vld [vmem:[%s215 + $0xbe0] sm:$0xff]
        %v681 = vld [vmem:[%s215 + $0xbe8] sm:$0xff]
        %v682 = vld [vmem:[%s215 + $0xbf0] sm:$0xff]
        %v683 = vld [vmem:[%s215 + $0xbf8] sm:$0xff]
        %v684 = vld [vmem:[%s215 + $0xc00] sm:$0xff]
        %v685 = vld [vmem:[%s215 + $0xc08] sm:$0xff]
        %v686 = vld [vmem:[%s215 + $0xc10] sm:$0xff]
        %v687 = vld [vmem:[%s215 + $0xc18] sm:$0xff]
        %v688 = vld [vmem:[%s215 + $0xc20] sm:$0xff]
        %v689 = vld [vmem:[%s215 + $0xc28] sm:$0xff]
        %v690 = vld [vmem:[%s215 + $0xc30] sm:$0xff]
        %v691 = vld [vmem:[%s215 + $0xc38] sm:$0xff]
        %v692 = vld [vmem:[%s215 + $0xc40] sm:$0xff]
        %v693 = vld [vmem:[%s215 + $0xc48] sm:$0xff]
        %v694 = vld [vmem:[%s215 + $0xc50] sm:$0xff]
        %v695 = vld [vmem:[%s215 + $0xc58] sm:$0xff]
        %v696 = vld [vmem:[%s215 + $0xc60] sm:$0xff]
        %v697 = vld [vmem:[%s215 + $0xc68] sm:$0xff]
        %v698 = vld [vmem:[%s215 + $0xc70] sm:$0xff]
        %v699 = vld [vmem:[%s215 + $0xc78] sm:$0xff]
        %v700 = vld [vmem:[%s215 + $0xc80] sm:$0xff]
        %v701 = vld [vmem:[%s215 + $0xc88] sm:$0xff]
        %v702 = vld [vmem:[%s215 + $0xc90] sm:$0xff]
        %v703 = vld [vmem:[%s215 + $0xc98] sm:$0xff]
        %v704 = vld [vmem:[%s215 + $0xca0] sm:$0xff]
        %v705 = vld [vmem:[%s215 + $0xca8] sm:$0xff]
        %v706 = vld [vmem:[%s215 + $0xcb0] sm:$0xff]
        %v707 = vld [vmem:[%s215 + $0xcb8] sm:$0xff]
        %v708 = vld [vmem:[%s215 + $0xcc0] sm:$0xff]
        %v709 = vld [vmem:[%s215 + $0xcc8] sm:$0xff]
        %v710 = vld [vmem:[%s215 + $0xcd0] sm:$0xff]
        %v711 = vld [vmem:[%s215 + $0xcd8] sm:$0xff]
        %v712 = vld [vmem:[%s215 + $0xce0] sm:$0xff]
        %v713 = vld [vmem:[%s215 + $0xce8] sm:$0xff]
        %v714 = vld [vmem:[%s215 + $0xcf0] sm:$0xff]
        %v715 = vld [vmem:[%s215 + $0xcf8] sm:$0xff]
        %v716 = vld [vmem:[%s215 + $0xd00] sm:$0xff]
        %v717 = vld [vmem:[%s215 + $0xd08] sm:$0xff]
        %v718 = vld [vmem:[%s215 + $0xd10] sm:$0xff]
        %v719 = vld [vmem:[%s215 + $0xd18] sm:$0xff]
        %v720 = vld [vmem:[%s215 + $0xd20] sm:$0xff]
        %v721 = vld [vmem:[%s215 + $0xd28] sm:$0xff]
        %v722 = vld [vmem:[%s215 + $0xd30] sm:$0xff]
        %v723 = vld [vmem:[%s215 + $0xd38] sm:$0xff]
        %v724 = vld [vmem:[%s215 + $0xd40] sm:$0xff]
        %v725 = vld [vmem:[%s215 + $0xd48] sm:$0xff]
        %v726 = vld [vmem:[%s215 + $0xd50] sm:$0xff]
        %v727 = vld [vmem:[%s215 + $0xd58] sm:$0xff]
        %v728 = vld [vmem:[%s215 + $0xd60] sm:$0xff]
        %v729 = vld [vmem:[%s215 + $0xd68] sm:$0xff]
        %v730 = vld [vmem:[%s215 + $0xd70] sm:$0xff]
        %v731 = vld [vmem:[%s215 + $0xd78] sm:$0xff]
        %v732 = vld [vmem:[%s215 + $0xd80] sm:$0xff]
        %v733 = vld [vmem:[%s215 + $0xd88] sm:$0xff]
        %v734 = vld [vmem:[%s215 + $0xd90] sm:$0xff]
        %v735 = vld [vmem:[%s215 + $0xd98] sm:$0xff]
        %v736 = vld [vmem:[%s215 + $0xda0] sm:$0xff]
        %v737 = vld [vmem:[%s215 + $0xda8] sm:$0xff]
        %v738 = vld [vmem:[%s215 + $0xdb0] sm:$0xff]
        %v739 = vld [vmem:[%s215 + $0xdb8] sm:$0xff]
        %v740 = vld [vmem:[%s215 + $0xdc0] sm:$0xff]
        %v741 = vld [vmem:[%s215 + $0xdc8] sm:$0xff]
        %v742 = vld [vmem:[%s215 + $0xdd0] sm:$0xff]
        %v743 = vld [vmem:[%s215 + $0xdd8] sm:$0xff]
        %v744 = vld [vmem:[%s215 + $0xde0] sm:$0xff]
        %v745 = vld [vmem:[%s215 + $0xde8] sm:$0xff]
        %v746 = vld [vmem:[%s215 + $0xdf0] sm:$0xff]
        %v747 = vld [vmem:[%s215 + $0xdf8] sm:$0xff]
        %v748 = vld [vmem:[%s215 + $0xe00] sm:$0xff]
        %v749 = vld [vmem:[%s215 + $0xe08] sm:$0xff]
        %v750 = vld [vmem:[%s215 + $0xe10] sm:$0xff]
        %v751 = vld [vmem:[%s215 + $0xe18] sm:$0xff]
        %v752 = vld [vmem:[%s215 + $0xe20] sm:$0xff]
        %v753 = vld [vmem:[%s215 + $0xe28] sm:$0xff]
        %v754 = vld [vmem:[%s215 + $0xe30] sm:$0xff]
        %v755 = vld [vmem:[%s215 + $0xe38] sm:$0xff]
        %v756 = vld [vmem:[%s215 + $0xe40] sm:$0xff]
        %v757 = vld [vmem:[%s215 + $0xe48] sm:$0xff]
        %v758 = vld [vmem:[%s215 + $0xe50] sm:$0xff]
        %v759 = vld [vmem:[%s215 + $0xe58] sm:$0xff]
        %v760 = vld [vmem:[%s215 + $0xe60] sm:$0xff]
        %v761 = vld [vmem:[%s215 + $0xe68] sm:$0xff]
        %v762 = vld [vmem:[%s215 + $0xe70] sm:$0xff]
        %v763 = vld [vmem:[%s215 + $0xe78] sm:$0xff]
        %v764 = vld [vmem:[%s215 + $0xe80] sm:$0xff]
        %v765 = vld [vmem:[%s215 + $0xe88] sm:$0xff]
        %v766 = vld [vmem:[%s215 + $0xe90] sm:$0xff]
        %v767 = vld [vmem:[%s215 + $0xe98] sm:$0xff]
        %v768 = vld [vmem:[%s215 + $0xea0] sm:$0xff]
        %v769 = vld [vmem:[%s215 + $0xea8] sm:$0xff]
        %v770 = vld [vmem:[%s215 + $0xeb0] sm:$0xff]
        %v771 = vld [vmem:[%s215 + $0xeb8] sm:$0xff]
        %v772 = vld [vmem:[%s215 + $0xec0] sm:$0xff]
        %v773 = vld [vmem:[%s215 + $0xec8] sm:$0xff]
        %v774 = vld [vmem:[%s215 + $0xed0] sm:$0xff]
        %v775 = vld [vmem:[%s215 + $0xed8] sm:$0xff]
        %v776 = vld [vmem:[%s215 + $0xee0] sm:$0xff]
        %v777 = vld [vmem:[%s215 + $0xee8] sm:$0xff]
        %v778 = vld [vmem:[%s215 + $0xef0] sm:$0xff]
        %v779 = vld [vmem:[%s215 + $0xef8] sm:$0xff]
        %v780 = vld [vmem:[%s215 + $0xf00] sm:$0xff]
        %v781 = vld [vmem:[%s215 + $0xf08] sm:$0xff]
        %v782 = vld [vmem:[%s215 + $0xf10] sm:$0xff]
        %v783 = vld [vmem:[%s215 + $0xf18] sm:$0xff]
        %v784 = vld [vmem:[%s215 + $0xf20] sm:$0xff]
        %v785 = vld [vmem:[%s215 + $0xf28] sm:$0xff]
        %v786 = vld [vmem:[%s215 + $0xf30] sm:$0xff]
        %v787 = vld [vmem:[%s215 + $0xf38] sm:$0xff]
        %v788 = vld [vmem:[%s215 + $0xf40] sm:$0xff]
        %v789 = vld [vmem:[%s215 + $0xf48] sm:$0xff]
        %v790 = vld [vmem:[%s215 + $0xf50] sm:$0xff]
        %v791 = vld [vmem:[%s215 + $0xf58] sm:$0xff]
        %v792 = vld [vmem:[%s215 + $0xf60] sm:$0xff]
        %v793 = vld [vmem:[%s215 + $0xf68] sm:$0xff]
        %v794 = vld [vmem:[%s215 + $0xf70] sm:$0xff]
        %v795 = vld [vmem:[%s215 + $0xf78] sm:$0xff]
        %v796 = vld [vmem:[%s215 + $0xf80] sm:$0xff]
        %v797 = vld [vmem:[%s215 + $0xf88] sm:$0xff]
        %v798 = vld [vmem:[%s215 + $0xf90] sm:$0xff]
        %v799 = vld [vmem:[%s215 + $0xf98] sm:$0xff]
        %v800 = vld [vmem:[%s215 + $0xfa0] sm:$0xff]
        %v801 = vld [vmem:[%s215 + $0xfa8] sm:$0xff]
        %v802 = vld [vmem:[%s215 + $0xfb0] sm:$0xff]
        %v803 = vld [vmem:[%s215 + $0xfb8] sm:$0xff]
        %v804 = vld [vmem:[%s215 + $0xfc0] sm:$0xff]
        %v805 = vld [vmem:[%s215 + $0xfc8] sm:$0xff]
        %v806 = vld [vmem:[%s215 + $0xfd0] sm:$0xff]
        %v807 = vld [vmem:[%s215 + $0xfd8] sm:$0xff]
        %v808 = vld [vmem:[%s215 + $0xfe0] sm:$0xff]
        %v809 = vld [vmem:[%s215 + $0xfe8] sm:$0xff]
        %v810 = vld [vmem:[%s215 + $0xff0] sm:$0xff]
        %v811 = vld [vmem:[%s215 + $0xff8] sm:$0xff]
        %v812 = vld [vmem:[%s215 + $0x1000] sm:$0xff]
        %v813 = vld [vmem:[%s215 + $0x1008] sm:$0xff]
        %v814 = vld [vmem:[%s215 + $0x1010] sm:$0xff]
        %v815 = vld [vmem:[%s215 + $0x1018] sm:$0xff]
        %v816 = vld [vmem:[%s215 + $0x1020] sm:$0xff]
        %v817 = vld [vmem:[%s215 + $0x1028] sm:$0xff]
        %v818 = vld [vmem:[%s215 + $0x1030] sm:$0xff]
        %v819 = vld [vmem:[%s215 + $0x1038] sm:$0xff]
        %v820 = vld [vmem:[%s215 + $0x1040] sm:$0xff]
        %v821 = vld [vmem:[%s215 + $0x1048] sm:$0xff]
        %v822 = vld [vmem:[%s215 + $0x1050] sm:$0xff]
        %v823 = vld [vmem:[%s215 + $0x1058] sm:$0xff]
        %v824 = vld [vmem:[%s215 + $0x1060] sm:$0xff]
        %v825 = vld [vmem:[%s215 + $0x1068] sm:$0xff]
        %v826 = vld [vmem:[%s215 + $0x1070] sm:$0xff]
        %v827 = vld [vmem:[%s215 + $0x1078] sm:$0xff]
        %v828 = vld [vmem:[%s215 + $0x1080] sm:$0xff]
        %v829 = vld [vmem:[%s215 + $0x1088] sm:$0xff]
        %v830 = vld [vmem:[%s215 + $0x1090] sm:$0xff]
        %v831 = vld [vmem:[%s215 + $0x1098] sm:$0xff]
        %v832 = vld [vmem:[%s215 + $0x10a0] sm:$0xff]
        %v833 = vld [vmem:[%s215 + $0x10a8] sm:$0xff]
        %v834 = vld [vmem:[%s215 + $0x10b0] sm:$0xff]
        %v835 = vld [vmem:[%s215 + $0x10b8] sm:$0xff]
        %v836 = vld [vmem:[%s215 + $0x10c0] sm:$0xff]
        %v837 = vld [vmem:[%s215 + $0x10c8] sm:$0xff]
        %v838 = vld [vmem:[%s215 + $0x10d0] sm:$0xff]
        %v839 = vld [vmem:[%s215 + $0x10d8] sm:$0xff]
        %v840 = vld [vmem:[%s215 + $0x10e0] sm:$0xff]
        %v841 = vld [vmem:[%s215 + $0x10e8] sm:$0xff]
        %v842 = vld [vmem:[%s215 + $0x10f0] sm:$0xff]
        %v843 = vld [vmem:[%s215 + $0x10f8] sm:$0xff]
        %v844 = vld [vmem:[%s215 + $0x1100] sm:$0xff]
        %v845 = vld [vmem:[%s215 + $0x1108] sm:$0xff]
        %v846 = vld [vmem:[%s215 + $0x1110] sm:$0xff]
        %v847 = vld [vmem:[%s215 + $0x1118] sm:$0xff]
        %v848 = vld [vmem:[%s215 + $0x1120] sm:$0xff]
        %v849 = vld [vmem:[%s215 + $0x1128] sm:$0xff]
        %v850 = vld [vmem:[%s215 + $0x1130] sm:$0xff]
        %v851 = vld [vmem:[%s215 + $0x1138] sm:$0xff]
        %v852 = vld [vmem:[%s215 + $0x1140] sm:$0xff]
        %v853 = vld [vmem:[%s215 + $0x1148] sm:$0xff]
        %v854 = vld [vmem:[%s215 + $0x1150] sm:$0xff]
        %v855 = vld [vmem:[%s215 + $0x1158] sm:$0xff]
        %v856 = vld [vmem:[%s215 + $0x1160] sm:$0xff]
        %v857 = vld [vmem:[%s215 + $0x1168] sm:$0xff]
        %v858 = vld [vmem:[%s215 + $0x1170] sm:$0xff]
        %v859 = vld [vmem:[%s215 + $0x1178] sm:$0xff]
        %v860 = vld [vmem:[%s215 + $0x1180] sm:$0xff]
        %v861 = vld [vmem:[%s215 + $0x1188] sm:$0xff]
        %v862 = vld [vmem:[%s215 + $0x1190] sm:$0xff]
        %v863 = vld [vmem:[%s215 + $0x1198] sm:$0xff]
        %v864 = vld [vmem:[%s215 + $0x11a0] sm:$0xff]
        %v865 = vld [vmem:[%s215 + $0x11a8] sm:$0xff]
        %v866 = vld [vmem:[%s215 + $0x11b0] sm:$0xff]
        %v867 = vld [vmem:[%s215 + $0x11b8] sm:$0xff]
        %v868 = vld [vmem:[%s215 + $0x11c0] sm:$0xff]
        %v869 = vld [vmem:[%s215 + $0x11c8] sm:$0xff]
        %v870 = vld [vmem:[%s215 + $0x11d0] sm:$0xff]
        %v871 = vld [vmem:[%s215 + $0x11d8] sm:$0xff]
        %v872 = vld [vmem:[%s215 + $0x11e0] sm:$0xff]
        %v873 = vld [vmem:[%s215 + $0x11e8] sm:$0xff]
        %v874 = vld [vmem:[%s215 + $0x11f0] sm:$0xff]
        %v875 = vld [vmem:[%s215 + $0x11f8] sm:$0xff]
        %v876 = vld [vmem:[%s215 + $0x1200] sm:$0xff]
        %v877 = vld [vmem:[%s215 + $0x1208] sm:$0xff]
        %v878 = vld [vmem:[%s215 + $0x1210] sm:$0xff]
        %v879 = vld [vmem:[%s215 + $0x1218] sm:$0xff]
        %v880 = vld [vmem:[%s215 + $0x1220] sm:$0xff]
        %v881 = vld [vmem:[%s215 + $0x1228] sm:$0xff]
        %v882 = vld [vmem:[%s215 + $0x1230] sm:$0xff]
        %v883 = vld [vmem:[%s215 + $0x1238] sm:$0xff]
        %v884 = vld [vmem:[%s215 + $0x1240] sm:$0xff]
        %v885 = vld [vmem:[%s215 + $0x1248] sm:$0xff]
        %v886 = vld [vmem:[%s215 + $0x1250] sm:$0xff]
        %v887 = vld [vmem:[%s215 + $0x1258] sm:$0xff]
        %v888 = vld [vmem:[%s215 + $0x1260] sm:$0xff]
        %v889 = vld [vmem:[%s215 + $0x1268] sm:$0xff]
        %v890 = vld [vmem:[%s215 + $0x1270] sm:$0xff]
        %v891 = vld [vmem:[%s215 + $0x1278] sm:$0xff]
        %v892 = vld [vmem:[%s215 + $0x1280] sm:$0xff]
        %v893 = vld [vmem:[%s215 + $0x1288] sm:$0xff]
        %v894 = vld [vmem:[%s215 + $0x1290] sm:$0xff]
        %v895 = vld [vmem:[%s215 + $0x1298] sm:$0xff]
        %v896 = vld [vmem:[%s215 + $0x12a0] sm:$0xff]
        %v897 = vld [vmem:[%s215 + $0x12a8] sm:$0xff]
        %v898 = vld [vmem:[%s215 + $0x12b0] sm:$0xff]
        %v899 = vld [vmem:[%s215 + $0x12b8] sm:$0xff]
        %v900 = vld [vmem:[%s215 + $0x12c0] sm:$0xff]
        %v901 = vld [vmem:[%s215 + $0x12c8] sm:$0xff]
        %v902 = vld [vmem:[%s215 + $0x12d0] sm:$0xff]
        %v903 = vld [vmem:[%s215 + $0x12d8] sm:$0xff]
        %v904 = vld [vmem:[%s215 + $0x12e0] sm:$0xff]
        %v905 = vld [vmem:[%s215 + $0x12e8] sm:$0xff]
        %v906 = vld [vmem:[%s215 + $0x12f0] sm:$0xff]
        %v907 = vld [vmem:[%s215 + $0x12f8] sm:$0xff]
        %v908 = vld [vmem:[%s215 + $0x1300] sm:$0xff]
        %v909 = vld [vmem:[%s215 + $0x1308] sm:$0xff]
        %v910 = vld [vmem:[%s215 + $0x1310] sm:$0xff]
        %v911 = vld [vmem:[%s215 + $0x1318] sm:$0xff]
        %v912 = vld [vmem:[%s215 + $0x1320] sm:$0xff]
        %v913 = vld [vmem:[%s215 + $0x1328] sm:$0xff]
        %v914 = vld [vmem:[%s215 + $0x1330] sm:$0xff]
        %v915 = vld [vmem:[%s215 + $0x1338] sm:$0xff]
        %v916 = vld [vmem:[%s215 + $0x1340] sm:$0xff]
        %v917 = vld [vmem:[%s215 + $0x1348] sm:$0xff]
        %v918 = vld [vmem:[%s215 + $0x1350] sm:$0xff]
        %v919 = vld [vmem:[%s215 + $0x1358] sm:$0xff]
        %v920 = vld [vmem:[%s215 + $0x1360] sm:$0xff]
        %v921 = vld [vmem:[%s215 + $0x1368] sm:$0xff]
        %v922 = vld [vmem:[%s215 + $0x1370] sm:$0xff]
        %v923 = vld [vmem:[%s215 + $0x1378] sm:$0xff]
        %v924 = vld [vmem:[%s215 + $0x1380] sm:$0xff]
        %v925 = vld [vmem:[%s215 + $0x1388] sm:$0xff]
        %v926 = vld [vmem:[%s215 + $0x1390] sm:$0xff]
        %v927 = vld [vmem:[%s215 + $0x1398] sm:$0xff]
        %v928 = vld [vmem:[%s215 + $0x13a0] sm:$0xff]
        %v929 = vld [vmem:[%s215 + $0x13a8] sm:$0xff]
        %v930 = vld [vmem:[%s215 + $0x13b0] sm:$0xff]
        %v931 = vld [vmem:[%s215 + $0x13b8] sm:$0xff]
        %v932 = vld [vmem:[%s215 + $0x13c0] sm:$0xff]
        %v933 = vld [vmem:[%s215 + $0x13c8] sm:$0xff]
        %v934 = vld [vmem:[%s215 + $0x13d0] sm:$0xff]
        %v935 = vld [vmem:[%s215 + $0x13d8] sm:$0xff]
        %v936 = vld [vmem:[%s215 + $0x13e0] sm:$0xff]
        %v937 = vld [vmem:[%s215 + $0x13e8] sm:$0xff]
        %v938 = vld [vmem:[%s215 + $0x13f0] sm:$0xff]
        %v939 = vld [vmem:[%s215 + $0x13f8] sm:$0xff]
        %v940 = vld [vmem:[%s215 + $0x1400] sm:$0xff]
        %v941 = vld [vmem:[%s215 + $0x1408] sm:$0xff]
        %v942 = vld [vmem:[%s215 + $0x1410] sm:$0xff]
        %v943 = vld [vmem:[%s215 + $0x1418] sm:$0xff]
        %v944 = vld [vmem:[%s215 + $0x1420] sm:$0xff]
        %v945 = vld [vmem:[%s215 + $0x1428] sm:$0xff]
        %v946 = vld [vmem:[%s215 + $0x1430] sm:$0xff]
        %v947 = vld [vmem:[%s215 + $0x1438] sm:$0xff]
        %v948 = vld [vmem:[%s215 + $0x1440] sm:$0xff]
        %v949 = vld [vmem:[%s215 + $0x1448] sm:$0xff]
        %v950 = vld [vmem:[%s215 + $0x1450] sm:$0xff]
        %v951 = vld [vmem:[%s215 + $0x1458] sm:$0xff]
        %v952 = vld [vmem:[%s215 + $0x1460] sm:$0xff]
        %v953 = vld [vmem:[%s215 + $0x1468] sm:$0xff]
        %v954 = vld [vmem:[%s215 + $0x1470] sm:$0xff]
        %v955 = vld [vmem:[%s215 + $0x1478] sm:$0xff]
        %v956 = vld [vmem:[%s215 + $0x1480] sm:$0xff]
        %v957 = vld [vmem:[%s215 + $0x1488] sm:$0xff]
        %v958 = vld [vmem:[%s215 + $0x1490] sm:$0xff]
        %v959 = vld [vmem:[%s215 + $0x1498] sm:$0xff]
        %v960 = vld [vmem:[%s215 + $0x14a0] sm:$0xff]
        %v961 = vld [vmem:[%s215 + $0x14a8] sm:$0xff]
        %v962 = vld [vmem:[%s215 + $0x14b0] sm:$0xff]
        %v963 = vld [vmem:[%s215 + $0x14b8] sm:$0xff]
        %v964 = vld [vmem:[%s215 + $0x14c0] sm:$0xff]
        %v965 = vld [vmem:[%s215 + $0x14c8] sm:$0xff]
        %v966 = vld [vmem:[%s215 + $0x14d0] sm:$0xff]
        %v967 = vld [vmem:[%s215 + $0x14d8] sm:$0xff]
        %v968 = vld [vmem:[%s215 + $0x14e0] sm:$0xff]
        %v969 = vld [vmem:[%s215 + $0x14e8] sm:$0xff]
        %v970 = vld [vmem:[%s215 + $0x14f0] sm:$0xff]
        %v971 = vld [vmem:[%s215 + $0x14f8] sm:$0xff]
        %v972 = vld [vmem:[%s215 + $0x1500] sm:$0xff]
        %v973 = vld [vmem:[%s215 + $0x1508] sm:$0xff]
        %v974 = vld [vmem:[%s215 + $0x1510] sm:$0xff]
        %v975 = vld [vmem:[%s215 + $0x1518] sm:$0xff]
        %v976 = vld [vmem:[%s215 + $0x1520] sm:$0xff]
        %v977 = vld [vmem:[%s215 + $0x1528] sm:$0xff]
        %v978 = vld [vmem:[%s215 + $0x1530] sm:$0xff]
        %v979 = vld [vmem:[%s215 + $0x1538] sm:$0xff]
        %v980 = vld [vmem:[%s215 + $0x1540] sm:$0xff]
        %v981 = vld [vmem:[%s215 + $0x1548] sm:$0xff]
        %v982 = vld [vmem:[%s215 + $0x1550] sm:$0xff]
        %v983 = vld [vmem:[%s215 + $0x1558] sm:$0xff]
        %v984 = vld [vmem:[%s215 + $0x1560] sm:$0xff]
        %v985 = vld [vmem:[%s215 + $0x1568] sm:$0xff]
        %v986 = vld [vmem:[%s215 + $0x1570] sm:$0xff]
        %v987 = vld [vmem:[%s215 + $0x1578] sm:$0xff]
        %v988 = vld [vmem:[%s215 + $0x1580] sm:$0xff]
        %v989 = vld [vmem:[%s215 + $0x1588] sm:$0xff]
        %v990 = vld [vmem:[%s215 + $0x1590] sm:$0xff]
        %v991 = vld [vmem:[%s215 + $0x1598] sm:$0xff]
        %v992 = vld [vmem:[%s215 + $0x15a0] sm:$0xff]
        %v993 = vld [vmem:[%s215 + $0x15a8] sm:$0xff]
        %v994 = vld [vmem:[%s215 + $0x15b0] sm:$0xff]
        %v995 = vld [vmem:[%s215 + $0x15b8] sm:$0xff]
        %v996 = vld [vmem:[%s215 + $0x15c0] sm:$0xff]
        %v997 = vld [vmem:[%s215 + $0x15c8] sm:$0xff]
        %v998 = vld [vmem:[%s215 + $0x15d0] sm:$0xff]
        %v999 = vld [vmem:[%s215 + $0x15d8] sm:$0xff]
        %v1000 = vld [vmem:[%s215 + $0x15e0] sm:$0xff]
        %v1001 = vld [vmem:[%s215 + $0x15e8] sm:$0xff]
        %v1002 = vld [vmem:[%s215 + $0x15f0] sm:$0xff]
        %v1003 = vld [vmem:[%s215 + $0x15f8] sm:$0xff]
        %v1004 = vld [vmem:[%s215 + $0x1600] sm:$0xff]
        %v1005 = vld [vmem:[%s215 + $0x1608] sm:$0xff]
        %v1006 = vld [vmem:[%s215 + $0x1610] sm:$0xff]
        %v1007 = vld [vmem:[%s215 + $0x1618] sm:$0xff]
        %v1008 = vld [vmem:[%s215 + $0x1620] sm:$0xff]
        %v1009 = vld [vmem:[%s215 + $0x1628] sm:$0xff]
        %v1010 = vld [vmem:[%s215 + $0x1630] sm:$0xff]
        %v1011 = vld [vmem:[%s215 + $0x1638] sm:$0xff]
        %v1012 = vld [vmem:[%s215 + $0x1640] sm:$0xff]
        %v1013 = vld [vmem:[%s215 + $0x1648] sm:$0xff]
        %v1014 = vld [vmem:[%s215 + $0x1650] sm:$0xff]
        %v1015 = vld [vmem:[%s215 + $0x1658] sm:$0xff]
        %v1016 = vld [vmem:[%s215 + $0x1660] sm:$0xff]
        %v1017 = vld [vmem:[%s215 + $0x1668] sm:$0xff]
        %v1018 = vld [vmem:[%s215 + $0x1670] sm:$0xff]
        %v1019 = vld [vmem:[%s215 + $0x1678] sm:$0xff]
        %v1020 = vld [vmem:[%s215 + $0x1680] sm:$0xff]
        %v1021 = vld [vmem:[%s215 + $0x1688] sm:$0xff]
        %v1022 = vld [vmem:[%s215 + $0x1690] sm:$0xff]
        %v1023 = vld [vmem:[%s215 + $0x1698] sm:$0xff]
        %v1024 = vld [vmem:[%s215 + $0x16a0] sm:$0xff]
        %v1025 = vld [vmem:[%s215 + $0x16a8] sm:$0xff]
        %v1026 = vld [vmem:[%s215 + $0x16b0] sm:$0xff]
        %v1027 = vld [vmem:[%s215 + $0x16b8] sm:$0xff]
        %v1028 = vld [vmem:[%s215 + $0x16c0] sm:$0xff]
        %v1029 = vld [vmem:[%s215 + $0x16c8] sm:$0xff]
        %v1030 = vld [vmem:[%s215 + $0x16d0] sm:$0xff]
        %v1031 = vld [vmem:[%s215 + $0x16d8] sm:$0xff]
        %v1032 = vld [vmem:[%s215 + $0x16e0] sm:$0xff]
        %v1033 = vld [vmem:[%s215 + $0x16e8] sm:$0xff]
        %v1034 = vld [vmem:[%s215 + $0x16f0] sm:$0xff]
        %v1035 = vld [vmem:[%s215 + $0x16f8] sm:$0xff]
        %v1036 = vld [vmem:[%s215 + $0x1700] sm:$0xff]
        %v1037 = vld [vmem:[%s215 + $0x1708] sm:$0xff]
        %v1038 = vld [vmem:[%s215 + $0x1710] sm:$0xff]
        %v1039 = vld [vmem:[%s215 + $0x1718] sm:$0xff]
        %v1040 = vld [vmem:[%s215 + $0x1720] sm:$0xff]
        %v1041 = vld [vmem:[%s215 + $0x1728] sm:$0xff]
        %v1042 = vld [vmem:[%s215 + $0x1730] sm:$0xff]
        %v1043 = vld [vmem:[%s215 + $0x1738] sm:$0xff]
        %v1044 = vld [vmem:[%s215 + $0x1740] sm:$0xff]
        %v1045 = vld [vmem:[%s215 + $0x1748] sm:$0xff]
        %v1046 = vld [vmem:[%s215 + $0x1750] sm:$0xff]
        %v1047 = vld [vmem:[%s215 + $0x1758] sm:$0xff]
        %v1048 = vld [vmem:[%s215 + $0x1760] sm:$0xff]
        %v1049 = vld [vmem:[%s215 + $0x1768] sm:$0xff]
        %v1050 = vld [vmem:[%s215 + $0x1770] sm:$0xff]
        %v1051 = vld [vmem:[%s215 + $0x1778] sm:$0xff]
        %v1052 = vld [vmem:[%s215 + $0x1780] sm:$0xff]
        %v1053 = vld [vmem:[%s215 + $0x1788] sm:$0xff]
        %v1054 = vld [vmem:[%s215 + $0x1790] sm:$0xff]
        %v1055 = vld [vmem:[%s215 + $0x1798] sm:$0xff]
        %v1056 = vld [vmem:[%s215 + $0x17a0] sm:$0xff]
        %v1057 = vld [vmem:[%s215 + $0x17a8] sm:$0xff]
        %v1058 = vld [vmem:[%s215 + $0x17b0] sm:$0xff]
        %v1059 = vld [vmem:[%s215 + $0x17b8] sm:$0xff]
        %v1060 = vld [vmem:[%s215 + $0x17c0] sm:$0xff]
        %v1061 = vld [vmem:[%s215 + $0x17c8] sm:$0xff]
        %v1062 = vld [vmem:[%s215 + $0x17d0] sm:$0xff]
        %v1063 = vld [vmem:[%s215 + $0x17d8] sm:$0xff]
        %v1064 = vld [vmem:[%s215 + $0x17e0] sm:$0xff]
        %v1065 = vld [vmem:[%s215 + $0x17e8] sm:$0xff]
        %v1066 = vld [vmem:[%s215 + $0x17f0] sm:$0xff]
        %v1067 = vld [vmem:[%s215 + $0x17f8] sm:$0xff]
        %v1068 = vld [vmem:[%s215 + $0x1800] sm:$0xff]
        %v1069 = vld [vmem:[%s215 + $0x1808] sm:$0xff]
        %v1070 = vld [vmem:[%s215 + $0x1810] sm:$0xff]
        %v1071 = vld [vmem:[%s215 + $0x1818] sm:$0xff]
        %v1072 = vld [vmem:[%s215 + $0x1820] sm:$0xff]
        %v1073 = vld [vmem:[%s215 + $0x1828] sm:$0xff]
        %v1074 = vld [vmem:[%s215 + $0x1830] sm:$0xff]
        %v1075 = vld [vmem:[%s215 + $0x1838] sm:$0xff]
        %v1076 = vld [vmem:[%s215 + $0x1840] sm:$0xff]
        %v1077 = vld [vmem:[%s215 + $0x1848] sm:$0xff]
        %v1078 = vld [vmem:[%s215 + $0x1850] sm:$0xff]
        %v1079 = vld [vmem:[%s215 + $0x1858] sm:$0xff]
        %v1080 = vld [vmem:[%s215 + $0x1860] sm:$0xff]
        %v1081 = vld [vmem:[%s215 + $0x1868] sm:$0xff]
        %v1082 = vld [vmem:[%s215 + $0x1870] sm:$0xff]
        %v1083 = vld [vmem:[%s215 + $0x1878] sm:$0xff]
        %v1084 = vld [vmem:[%s215 + $0x1880] sm:$0xff]
        %v1085 = vld [vmem:[%s215 + $0x1888] sm:$0xff]
        %v1086 = vld [vmem:[%s215 + $0x1890] sm:$0xff]
        %v1087 = vld [vmem:[%s215 + $0x1898] sm:$0xff]
        %v1088 = vld [vmem:[%s215 + $0x18a0] sm:$0xff]
        %v1089 = vld [vmem:[%s215 + $0x18a8] sm:$0xff]
        %v1090 = vld [vmem:[%s215 + $0x18b0] sm:$0xff]
        %v1091 = vld [vmem:[%s215 + $0x18b8] sm:$0xff]
        %v1092 = vld [vmem:[%s215 + $0x18c0] sm:$0xff]
        %v1093 = vld [vmem:[%s215 + $0x18c8] sm:$0xff]
        %v1094 = vld [vmem:[%s215 + $0x18d0] sm:$0xff]
        %v1095 = vld [vmem:[%s215 + $0x18d8] sm:$0xff]
        %v1096 = vld [vmem:[%s215 + $0x18e0] sm:$0xff]
        %v1097 = vld [vmem:[%s215 + $0x18e8] sm:$0xff]
        %v1098 = vld [vmem:[%s215 + $0x18f0] sm:$0xff]
        %v1099 = vld [vmem:[%s215 + $0x18f8] sm:$0xff]
        %v1100 = vld [vmem:[%s215 + $0x1900] sm:$0xff]
        %v1101 = vld [vmem:[%s215 + $0x1908] sm:$0xff]
        %v1102 = vld [vmem:[%s215 + $0x1910] sm:$0xff]
        %v1103 = vld [vmem:[%s215 + $0x1918] sm:$0xff]
        %v1104 = vld [vmem:[%s215 + $0x1920] sm:$0xff]
        %v1105 = vld [vmem:[%s215 + $0x1928] sm:$0xff]
        %v1106 = vld [vmem:[%s215 + $0x1930] sm:$0xff]
        %v1107 = vld [vmem:[%s215 + $0x1938] sm:$0xff]
        %v1108 = vld [vmem:[%s215 + $0x1940] sm:$0xff]
        %v1109 = vld [vmem:[%s215 + $0x1948] sm:$0xff]
        %v1110 = vld [vmem:[%s215 + $0x1950] sm:$0xff]
        %v1111 = vld [vmem:[%s215 + $0x1958] sm:$0xff]
        %v1112 = vld [vmem:[%s215 + $0x1960] sm:$0xff]
        %v1113 = vld [vmem:[%s215 + $0x1968] sm:$0xff]
        %v1114 = vld [vmem:[%s215 + $0x1970] sm:$0xff]
        %v1115 = vld [vmem:[%s215 + $0x1978] sm:$0xff]
        %v1116 = vld [vmem:[%s215 + $0x1980] sm:$0xff]
        %v1117 = vld [vmem:[%s215 + $0x1988] sm:$0xff]
        %v1118 = vld [vmem:[%s215 + $0x1990] sm:$0xff]
        %v1119 = vld [vmem:[%s215 + $0x1998] sm:$0xff]
        %v1120 = vld [vmem:[%s215 + $0x19a0] sm:$0xff]
        %v1121 = vld [vmem:[%s215 + $0x19a8] sm:$0xff]
        %v1122 = vld [vmem:[%s215 + $0x19b0] sm:$0xff]
        %v1123 = vld [vmem:[%s215 + $0x19b8] sm:$0xff]
        %v1124 = vld [vmem:[%s215 + $0x19c0] sm:$0xff]
        %v1125 = vld [vmem:[%s215 + $0x19c8] sm:$0xff]
        %v1126 = vld [vmem:[%s215 + $0x19d0] sm:$0xff]
        %v1127 = vld [vmem:[%s215 + $0x19d8] sm:$0xff]
        %v1128 = vld [vmem:[%s215 + $0x19e0] sm:$0xff]
        %v1129 = vld [vmem:[%s215 + $0x19e8] sm:$0xff]
        %v1130 = vld [vmem:[%s215 + $0x19f0] sm:$0xff]
        %v1131 = vld [vmem:[%s215 + $0x19f8] sm:$0xff]
        %v1132 = vld [vmem:[%s215 + $0x1a00] sm:$0xff]
        %v1133 = vld [vmem:[%s215 + $0x1a08] sm:$0xff]
        %v1134 = vld [vmem:[%s215 + $0x1a10] sm:$0xff]
        %v1135 = vld [vmem:[%s215 + $0x1a18] sm:$0xff]
        %v1136 = vld [vmem:[%s215 + $0x1a20] sm:$0xff]
        %v1137 = vld [vmem:[%s215 + $0x1a28] sm:$0xff]
        %v1138 = vld [vmem:[%s215 + $0x1a30] sm:$0xff]
        %v1139 = vld [vmem:[%s215 + $0x1a38] sm:$0xff]
        %v1140 = vld [vmem:[%s215 + $0x1a40] sm:$0xff]
        %v1141 = vld [vmem:[%s215 + $0x1a48] sm:$0xff]
        %v1142 = vld [vmem:[%s215 + $0x1a50] sm:$0xff]
        %v1143 = vld [vmem:[%s215 + $0x1a58] sm:$0xff]
        %v1144 = vld [vmem:[%s215 + $0x1a60] sm:$0xff]
        %v1145 = vld [vmem:[%s215 + $0x1a68] sm:$0xff]
        %v1146 = vld [vmem:[%s215 + $0x1a70] sm:$0xff]
        %v1147 = vld [vmem:[%s215 + $0x1a78] sm:$0xff]
        %v1148 = vld [vmem:[%s215 + $0x1a80] sm:$0xff]
        %v1149 = vld [vmem:[%s215 + $0x1a88] sm:$0xff]
        %v1150 = vld [vmem:[%s215 + $0x1a90] sm:$0xff]
        %v1151 = vld [vmem:[%s215 + $0x1a98] sm:$0xff]
        %v1152 = vld [vmem:[%s215 + $0x1aa0] sm:$0xff]
        %v1153 = vld [vmem:[%s215 + $0x1aa8] sm:$0xff]
        %v1154 = vld [vmem:[%s215 + $0x1ab0] sm:$0xff]
        %v1155 = vld [vmem:[%s215 + $0x1ab8] sm:$0xff]
        %v1156 = vld [vmem:[%s215 + $0x1ac0] sm:$0xff]
        %v1157 = vld [vmem:[%s215 + $0x1ac8] sm:$0xff]
        %v1158 = vld [vmem:[%s215 + $0x1ad0] sm:$0xff]
        %v1159 = vld [vmem:[%s215 + $0x1ad8] sm:$0xff]
        %v1160 = vld [vmem:[%s215 + $0x1ae0] sm:$0xff]
        %v1161 = vld [vmem:[%s215 + $0x1ae8] sm:$0xff]
        %v1162 = vld [vmem:[%s215 + $0x1af0] sm:$0xff]
        %v1163 = vld [vmem:[%s215 + $0x1af8] sm:$0xff]
        %v1164 = vld [vmem:[%s215 + $0x1b00] sm:$0xff]
        %v1165 = vld [vmem:[%s215 + $0x1b08] sm:$0xff]
        %v1166 = vld [vmem:[%s215 + $0x1b10] sm:$0xff]
        %v1167 = vld [vmem:[%s215 + $0x1b18] sm:$0xff]
        %v1168 = vld [vmem:[%s215 + $0x1b20] sm:$0xff]
        %v1169 = vld [vmem:[%s215 + $0x1b28] sm:$0xff]
        %v1170 = vld [vmem:[%s215 + $0x1b30] sm:$0xff]
        %v1171 = vld [vmem:[%s215 + $0x1b38] sm:$0xff]
        %v1172 = vld [vmem:[%s215 + $0x1b40] sm:$0xff]
        %v1173 = vld [vmem:[%s215 + $0x1b48] sm:$0xff]
        %v1174 = vld [vmem:[%s215 + $0x1b50] sm:$0xff]
        %v1175 = vld [vmem:[%s215 + $0x1b58] sm:$0xff]
        %v1176 = vld [vmem:[%s215 + $0x1b60] sm:$0xff]
        %v1177 = vld [vmem:[%s215 + $0x1b68] sm:$0xff]
        %v1178 = vld [vmem:[%s215 + $0x1b70] sm:$0xff]
        %v1179 = vld [vmem:[%s215 + $0x1b78] sm:$0xff]
        %v1180 = vld [vmem:[%s215 + $0x1b80] sm:$0xff]
        %v1181 = vld [vmem:[%s215 + $0x1b88] sm:$0xff]
        %v1182 = vld [vmem:[%s215 + $0x1b90] sm:$0xff]
        %v1183 = vld [vmem:[%s215 + $0x1b98] sm:$0xff]
        %v1184 = vld [vmem:[%s215 + $0x1ba0] sm:$0xff]
        %v1185 = vld [vmem:[%s215 + $0x1ba8] sm:$0xff]
        %v1186 = vld [vmem:[%s215 + $0x1bb0] sm:$0xff]
        %v1187 = vld [vmem:[%s215 + $0x1bb8] sm:$0xff]
        %v1188 = vld [vmem:[%s215 + $0x1bc0] sm:$0xff]
        %v1189 = vld [vmem:[%s215 + $0x1bc8] sm:$0xff]
        %v1190 = vld [vmem:[%s215 + $0x1bd0] sm:$0xff]
        %v1191 = vld [vmem:[%s215 + $0x1bd8] sm:$0xff]
        %v1192 = vld [vmem:[%s215 + $0x1be0] sm:$0xff]
        %v1193 = vld [vmem:[%s215 + $0x1be8] sm:$0xff]
        %v1194 = vld [vmem:[%s215 + $0x1bf0] sm:$0xff]
        %v1195 = vld [vmem:[%s215 + $0x1bf8] sm:$0xff]
        %v1196 = vld [vmem:[%s215 + $0x1c00] sm:$0xff]
        %v1197 = vld [vmem:[%s215 + $0x1c08] sm:$0xff]
        %v1198 = vld [vmem:[%s215 + $0x1c10] sm:$0xff]
        %v1199 = vld [vmem:[%s215 + $0x1c18] sm:$0xff]
        %v1200 = vld [vmem:[%s215 + $0x1c20] sm:$0xff]
        %v1201 = vld [vmem:[%s215 + $0x1c28] sm:$0xff]
        %v1202 = vld [vmem:[%s215 + $0x1c30] sm:$0xff]
        %v1203 = vld [vmem:[%s215 + $0x1c38] sm:$0xff]
        %v1204 = vld [vmem:[%s215 + $0x1c40] sm:$0xff]
        %v1205 = vld [vmem:[%s215 + $0x1c48] sm:$0xff]
        %v1206 = vld [vmem:[%s215 + $0x1c50] sm:$0xff]
        %v1207 = vld [vmem:[%s215 + $0x1c58] sm:$0xff]
        %v1208 = vld [vmem:[%s215 + $0x1c60] sm:$0xff]
        %v1209 = vld [vmem:[%s215 + $0x1c68] sm:$0xff]
        %v1210 = vld [vmem:[%s215 + $0x1c70] sm:$0xff]
        %v1211 = vld [vmem:[%s215 + $0x1c78] sm:$0xff]
        %v1212 = vld [vmem:[%s215 + $0x1c80] sm:$0xff]
        %v1213 = vld [vmem:[%s215 + $0x1c88] sm:$0xff]
        %v1214 = vld [vmem:[%s215 + $0x1c90] sm:$0xff]
        %v1215 = vld [vmem:[%s215 + $0x1c98] sm:$0xff]
        %v1216 = vld [vmem:[%s215 + $0x1ca0] sm:$0xff]
        %v1217 = vld [vmem:[%s215 + $0x1ca8] sm:$0xff]
        %v1218 = vld [vmem:[%s215 + $0x1cb0] sm:$0xff]
        %v1219 = vld [vmem:[%s215 + $0x1cb8] sm:$0xff]
        %v1220 = vld [vmem:[%s215 + $0x1cc0] sm:$0xff]
        %v1221 = vld [vmem:[%s215 + $0x1cc8] sm:$0xff]
        %v1222 = vld [vmem:[%s215 + $0x1cd0] sm:$0xff]
        %v1223 = vld [vmem:[%s215 + $0x1cd8] sm:$0xff]
        %v1224 = vld [vmem:[%s215 + $0x1ce0] sm:$0xff]
        %v1225 = vld [vmem:[%s215 + $0x1ce8] sm:$0xff]
        %v1226 = vld [vmem:[%s215 + $0x1cf0] sm:$0xff]
        %v1227 = vld [vmem:[%s215 + $0x1cf8] sm:$0xff]
        %v1228 = vld [vmem:[%s215 + $0x1d00] sm:$0xff]
        %v1229 = vld [vmem:[%s215 + $0x1d08] sm:$0xff]
        %v1230 = vld [vmem:[%s215 + $0x1d10] sm:$0xff]
        %v1231 = vld [vmem:[%s215 + $0x1d18] sm:$0xff]
        %v1232 = vld [vmem:[%s215 + $0x1d20] sm:$0xff]
        %v1233 = vld [vmem:[%s215 + $0x1d28] sm:$0xff]
        %v1234 = vld [vmem:[%s215 + $0x1d30] sm:$0xff]
        %v1235 = vld [vmem:[%s215 + $0x1d38] sm:$0xff]
        %v1236 = vld [vmem:[%s215 + $0x1d40] sm:$0xff]
        %v1237 = vld [vmem:[%s215 + $0x1d48] sm:$0xff]
        %v1238 = vld [vmem:[%s215 + $0x1d50] sm:$0xff]
        %v1239 = vld [vmem:[%s215 + $0x1d58] sm:$0xff]
        %v1240 = vld [vmem:[%s215 + $0x1d60] sm:$0xff]
        %v1241 = vld [vmem:[%s215 + $0x1d68] sm:$0xff]
        %v1242 = vld [vmem:[%s215 + $0x1d70] sm:$0xff]
        %v1243 = vld [vmem:[%s215 + $0x1d78] sm:$0xff]
        %v1244 = vld [vmem:[%s215 + $0x1d80] sm:$0xff]
        %v1245 = vld [vmem:[%s215 + $0x1d88] sm:$0xff]
        %v1246 = vld [vmem:[%s215 + $0x1d90] sm:$0xff]
        %v1247 = vld [vmem:[%s215 + $0x1d98] sm:$0xff]
        %v1248 = vld [vmem:[%s215 + $0x1da0] sm:$0xff]
        %v1249 = vld [vmem:[%s215 + $0x1da8] sm:$0xff]
        %v1250 = vld [vmem:[%s215 + $0x1db0] sm:$0xff]
        %v1251 = vld [vmem:[%s215 + $0x1db8] sm:$0xff]
        %v1252 = vld [vmem:[%s215 + $0x1dc0] sm:$0xff]
        %v1253 = vld [vmem:[%s215 + $0x1dc8] sm:$0xff]
        %v1254 = vld [vmem:[%s215 + $0x1dd0] sm:$0xff]
        %v1255 = vld [vmem:[%s215 + $0x1dd8] sm:$0xff]
        %v1256 = vld [vmem:[%s215 + $0x1de0] sm:$0xff]
        %v1257 = vld [vmem:[%s215 + $0x1de8] sm:$0xff]
        %v1258 = vld [vmem:[%s215 + $0x1df0] sm:$0xff]
        %v1259 = vld [vmem:[%s215 + $0x1df8] sm:$0xff]
        %v1260 = vld [vmem:[%s215 + $0x1e00] sm:$0xff]
        %v1261 = vld [vmem:[%s215 + $0x1e08] sm:$0xff]
        %v1262 = vld [vmem:[%s215 + $0x1e10] sm:$0xff]
        %v1263 = vld [vmem:[%s215 + $0x1e18] sm:$0xff]
        %v1264 = vld [vmem:[%s215 + $0x1e20] sm:$0xff]
        %v1265 = vld [vmem:[%s215 + $0x1e28] sm:$0xff]
        %v1266 = vld [vmem:[%s215 + $0x1e30] sm:$0xff]
        %v1267 = vld [vmem:[%s215 + $0x1e38] sm:$0xff]
        %v1268 = vld [vmem:[%s215 + $0x1e40] sm:$0xff]
        %v1269 = vld [vmem:[%s215 + $0x1e48] sm:$0xff]
        %v1270 = vld [vmem:[%s215 + $0x1e50] sm:$0xff]
        %v1271 = vld [vmem:[%s215 + $0x1e58] sm:$0xff]
        %v1272 = vld [vmem:[%s215 + $0x1e60] sm:$0xff]
        %v1273 = vld [vmem:[%s215 + $0x1e68] sm:$0xff]
        %v1274 = vld [vmem:[%s215 + $0x1e70] sm:$0xff]
        %v1275 = vld [vmem:[%s215 + $0x1e78] sm:$0xff]
        %v1276 = vld [vmem:[%s215 + $0x1e80] sm:$0xff]
        %v1277 = vld [vmem:[%s215 + $0x1e88] sm:$0xff]
        %v1278 = vld [vmem:[%s215 + $0x1e90] sm:$0xff]
        %v1279 = vld [vmem:[%s215 + $0x1e98] sm:$0xff]
        %v1280 = vld [vmem:[%s215 + $0x1ea0] sm:$0xff]
        %v1281 = vld [vmem:[%s215 + $0x1ea8] sm:$0xff]
        %v1282 = vld [vmem:[%s215 + $0x1eb0] sm:$0xff]
        %v1283 = vld [vmem:[%s215 + $0x1eb8] sm:$0xff]
        %v1284 = vld [vmem:[%s215 + $0x1ec0] sm:$0xff]
        %v1285 = vld [vmem:[%s215 + $0x1ec8] sm:$0xff]
        %v1286 = vld [vmem:[%s215 + $0x1ed0] sm:$0xff]
        %v1287 = vld [vmem:[%s215 + $0x1ed8] sm:$0xff]
        %v1288 = vld [vmem:[%s215 + $0x1ee0] sm:$0xff]
        %v1289 = vld [vmem:[%s215 + $0x1ee8] sm:$0xff]
        %v1290 = vld [vmem:[%s215 + $0x1ef0] sm:$0xff]
        %v1291 = vld [vmem:[%s215 + $0x1ef8] sm:$0xff]
        %v1292 = vld [vmem:[%s215 + $0x1f00] sm:$0xff]
        %v1293 = vld [vmem:[%s215 + $0x1f08] sm:$0xff]
        %v1294 = vld [vmem:[%s215 + $0x1f10] sm:$0xff]
        %v1295 = vld [vmem:[%s215 + $0x1f18] sm:$0xff]
        %v1296 = vld [vmem:[%s215 + $0x1f20] sm:$0xff]
        %v1297 = vld [vmem:[%s215 + $0x1f28] sm:$0xff]
        %v1298 = vld [vmem:[%s215 + $0x1f30] sm:$0xff]
        %v1299 = vld [vmem:[%s215 + $0x1f38] sm:$0xff]
        %v1300 = vld [vmem:[%s215 + $0x1f40] sm:$0xff]
        %v1301 = vld [vmem:[%s215 + $0x1f48] sm:$0xff]
        %v1302 = vld [vmem:[%s215 + $0x1f50] sm:$0xff]
        %v1303 = vld [vmem:[%s215 + $0x1f58] sm:$0xff]
        %v1304 = vld [vmem:[%s215 + $0x1f60] sm:$0xff]
        %v1305 = vld [vmem:[%s215 + $0x1f68] sm:$0xff]
        %v1306 = vld [vmem:[%s215 + $0x1f70] sm:$0xff]
        %v1307 = vld [vmem:[%s215 + $0x1f78] sm:$0xff]
        %v1308 = vld [vmem:[%s215 + $0x1f80] sm:$0xff]
        %v1309 = vld [vmem:[%s215 + $0x1f88] sm:$0xff]
        %v1310 = vld [vmem:[%s215 + $0x1f90] sm:$0xff]
        %v1311 = vld [vmem:[%s215 + $0x1f98] sm:$0xff]
        %v1312 = vld [vmem:[%s215 + $0x1fa0] sm:$0xff]
        %v1313 = vld [vmem:[%s215 + $0x1fa8] sm:$0xff]
        %v1314 = vld [vmem:[%s215 + $0x1fb0] sm:$0xff]
        %v1315 = vld [vmem:[%s215 + $0x1fb8] sm:$0xff]
        %v1316 = vld [vmem:[%s215 + $0x1fc0] sm:$0xff]
        %v1317 = vld [vmem:[%s215 + $0x1fc8] sm:$0xff]
        %v1318 = vld [vmem:[%s215 + $0x1fd0] sm:$0xff]
        %v1319 = vld [vmem:[%s215 + $0x1fd8] sm:$0xff]
        %v1320 = vld [vmem:[%s215 + $0x1fe0] sm:$0xff]
        %v1321 = vld [vmem:[%s215 + $0x1fe8] sm:$0xff]
        %v1322 = vld [vmem:[%s215 + $0x1ff0] sm:$0xff]
        %v1323 = vld [vmem:[%s215 + $0x1ff8] sm:$0xff]
        %v1332 = vunpack.c.l.b16 %v292
        %v1333 = vunpack.c.h.b16 %v292
        %v1334 = vunpack.c.l.b16 %v293
        %v1335 = vunpack.c.h.b16 %v293
        %v1336 = vunpack.c.l.b16 %v294
        %v1337 = vunpack.c.h.b16 %v294
        %v1338 = vunpack.c.l.b16 %v295
        %v1339 = vunpack.c.h.b16 %v295
        %v1340 = vunpack.c.l.b16 %v296
        %v1341 = vunpack.c.h.b16 %v296
        %v1342 = vunpack.c.l.b16 %v297
        %v1343 = vunpack.c.h.b16 %v297
        %v1344 = vunpack.c.l.b16 %v298
        %v1345 = vunpack.c.h.b16 %v298
        %v1346 = vunpack.c.l.b16 %v299
        %v1347 = vunpack.c.h.b16 %v299
        %v1348 = vpack.c.b16 %v1332, %v1332
        %v1349 = vpack.c.b16 %v1333, %v1333
        %v1350 = vpack.c.b16 %v1334, %v1334
        %v1351 = vpack.c.b16 %v1335, %v1335
        %v1352 = vpack.c.b16 %v1336, %v1336
        %v1353 = vpack.c.b16 %v1337, %v1337
        %v1354 = vpack.c.b16 %v1338, %v1338
        %v1355 = vpack.c.b16 %v1339, %v1339
        %v1356 = vpack.c.b16 %v1340, %v1340
        %v1357 = vpack.c.b16 %v1341, %v1341
        %v1358 = vpack.c.b16 %v1342, %v1342
        %v1359 = vpack.c.b16 %v1343, %v1343
        %v1360 = vpack.c.b16 %v1344, %v1344
        %v1361 = vpack.c.b16 %v1345, %v1345
        %v1362 = vpack.c.b16 %v1346, %v1346
        %v1363 = vpack.c.b16 %v1347, %v1347
        %v2404 = vunpack.c.l.b16 %v300
        %v2405 = vunpack.c.h.b16 %v300
        %v2406 = vunpack.c.l.b16 %v301
        %v2407 = vunpack.c.h.b16 %v301
        %v2408 = vunpack.c.l.b16 %v302
        %v2409 = vunpack.c.h.b16 %v302
        %v2410 = vunpack.c.l.b16 %v303
        %v2411 = vunpack.c.h.b16 %v303
        %v2412 = vunpack.c.l.b16 %v304
        %v2413 = vunpack.c.h.b16 %v304
        %v2414 = vunpack.c.l.b16 %v305
        %v2415 = vunpack.c.h.b16 %v305
        %v2416 = vunpack.c.l.b16 %v306
        %v2417 = vunpack.c.h.b16 %v306
        %v2418 = vunpack.c.l.b16 %v307
        %v2419 = vunpack.c.h.b16 %v307
        %v2420 = vunpack.c.l.b16 %v308
        %v2421 = vunpack.c.h.b16 %v308
        %v2422 = vunpack.c.l.b16 %v309
        %v2423 = vunpack.c.h.b16 %v309
        %v2424 = vunpack.c.l.b16 %v310
        %v2425 = vunpack.c.h.b16 %v310
        %v2426 = vunpack.c.l.b16 %v311
        %v2427 = vunpack.c.h.b16 %v311
        %v2428 = vunpack.c.l.b16 %v312
        %v2429 = vunpack.c.h.b16 %v312
        %v2430 = vunpack.c.l.b16 %v313
        %v2431 = vunpack.c.h.b16 %v313
        %v2432 = vunpack.c.l.b16 %v314
        %v2433 = vunpack.c.h.b16 %v314
        %v2434 = vunpack.c.l.b16 %v315
        %v2435 = vunpack.c.h.b16 %v315
        %v2436 = vunpack.c.l.b16 %v316
        %v2437 = vunpack.c.h.b16 %v316
        %v2438 = vunpack.c.l.b16 %v317
        %v2439 = vunpack.c.h.b16 %v317
        %v2440 = vunpack.c.l.b16 %v318
        %v2441 = vunpack.c.h.b16 %v318
        %v2442 = vunpack.c.l.b16 %v319
        %v2443 = vunpack.c.h.b16 %v319
        %v2444 = vunpack.c.l.b16 %v320
        %v2445 = vunpack.c.h.b16 %v320
        %v2446 = vunpack.c.l.b16 %v321
        %v2447 = vunpack.c.h.b16 %v321
        %v2448 = vunpack.c.l.b16 %v322
        %v2449 = vunpack.c.h.b16 %v322
        %v2450 = vunpack.c.l.b16 %v323
        %v2451 = vunpack.c.h.b16 %v323
        %v2452 = vunpack.c.l.b16 %v324
        %v2453 = vunpack.c.h.b16 %v324
        %v2454 = vunpack.c.l.b16 %v325
        %v2455 = vunpack.c.h.b16 %v325
        %v2456 = vunpack.c.l.b16 %v326
        %v2457 = vunpack.c.h.b16 %v326
        %v2458 = vunpack.c.l.b16 %v327
        %v2459 = vunpack.c.h.b16 %v327
        %v2460 = vunpack.c.l.b16 %v328
        %v2461 = vunpack.c.h.b16 %v328
        %v2462 = vunpack.c.l.b16 %v329
        %v2463 = vunpack.c.h.b16 %v329
        %v2464 = vunpack.c.l.b16 %v330
        %v2465 = vunpack.c.h.b16 %v330
        %v2466 = vunpack.c.l.b16 %v331
        %v2467 = vunpack.c.h.b16 %v331
        %v2468 = vunpack.c.l.b16 %v332
        %v2469 = vunpack.c.h.b16 %v332
        %v2470 = vunpack.c.l.b16 %v333
        %v2471 = vunpack.c.h.b16 %v333
        %v2472 = vunpack.c.l.b16 %v334
        %v2473 = vunpack.c.h.b16 %v334
        %v2474 = vunpack.c.l.b16 %v335
        %v2475 = vunpack.c.h.b16 %v335
        %v2476 = vunpack.c.l.b16 %v336
        %v2477 = vunpack.c.h.b16 %v336
        %v2478 = vunpack.c.l.b16 %v337
        %v2479 = vunpack.c.h.b16 %v337
        %v2480 = vunpack.c.l.b16 %v338
        %v2481 = vunpack.c.h.b16 %v338
        %v2482 = vunpack.c.l.b16 %v339
        %v2483 = vunpack.c.h.b16 %v339
        %v2484 = vunpack.c.l.b16 %v340
        %v2485 = vunpack.c.h.b16 %v340
        %v2486 = vunpack.c.l.b16 %v341
        %v2487 = vunpack.c.h.b16 %v341
        %v2488 = vunpack.c.l.b16 %v342
        %v2489 = vunpack.c.h.b16 %v342
        %v2490 = vunpack.c.l.b16 %v343
        %v2491 = vunpack.c.h.b16 %v343
        %v2492 = vunpack.c.l.b16 %v344
        %v2493 = vunpack.c.h.b16 %v344
        %v2494 = vunpack.c.l.b16 %v345
        %v2495 = vunpack.c.h.b16 %v345
        %v2496 = vunpack.c.l.b16 %v346
        %v2497 = vunpack.c.h.b16 %v346
        %v2498 = vunpack.c.l.b16 %v347
        %v2499 = vunpack.c.h.b16 %v347
        %v2500 = vunpack.c.l.b16 %v348
        %v2501 = vunpack.c.h.b16 %v348
        %v2502 = vunpack.c.l.b16 %v349
        %v2503 = vunpack.c.h.b16 %v349
        %v2504 = vunpack.c.l.b16 %v350
        %v2505 = vunpack.c.h.b16 %v350
        %v2506 = vunpack.c.l.b16 %v351
        %v2507 = vunpack.c.h.b16 %v351
        %v2508 = vunpack.c.l.b16 %v352
        %v2509 = vunpack.c.h.b16 %v352
        %v2510 = vunpack.c.l.b16 %v353
        %v2511 = vunpack.c.h.b16 %v353
        %v2512 = vunpack.c.l.b16 %v354
        %v2513 = vunpack.c.h.b16 %v354
        %v2514 = vunpack.c.l.b16 %v355
        %v2515 = vunpack.c.h.b16 %v355
        %v2516 = vunpack.c.l.b16 %v356
        %v2517 = vunpack.c.h.b16 %v356
        %v2518 = vunpack.c.l.b16 %v357
        %v2519 = vunpack.c.h.b16 %v357
        %v2520 = vunpack.c.l.b16 %v358
        %v2521 = vunpack.c.h.b16 %v358
        %v2522 = vunpack.c.l.b16 %v359
        %v2523 = vunpack.c.h.b16 %v359
        %v2524 = vunpack.c.l.b16 %v360
        %v2525 = vunpack.c.h.b16 %v360
        %v2526 = vunpack.c.l.b16 %v361
        %v2527 = vunpack.c.h.b16 %v361
        %v2528 = vunpack.c.l.b16 %v362
        %v2529 = vunpack.c.h.b16 %v362
        %v2530 = vunpack.c.l.b16 %v363
        %v2531 = vunpack.c.h.b16 %v363
        %v2532 = vunpack.c.l.b16 %v364
        %v2533 = vunpack.c.h.b16 %v364
        %v2534 = vunpack.c.l.b16 %v365
        %v2535 = vunpack.c.h.b16 %v365
        %v2536 = vunpack.c.l.b16 %v366
        %v2537 = vunpack.c.h.b16 %v366
        %v2538 = vunpack.c.l.b16 %v367
        %v2539 = vunpack.c.h.b16 %v367
        %v2540 = vunpack.c.l.b16 %v368
        %v2541 = vunpack.c.h.b16 %v368
        %v2542 = vunpack.c.l.b16 %v369
        %v2543 = vunpack.c.h.b16 %v369
        %v2544 = vunpack.c.l.b16 %v370
        %v2545 = vunpack.c.h.b16 %v370
        %v2546 = vunpack.c.l.b16 %v371
        %v2547 = vunpack.c.h.b16 %v371
        %v2548 = vunpack.c.l.b16 %v372
        %v2549 = vunpack.c.h.b16 %v372
        %v2550 = vunpack.c.l.b16 %v373
        %v2551 = vunpack.c.h.b16 %v373
        %v2552 = vunpack.c.l.b16 %v374
        %v2553 = vunpack.c.h.b16 %v374
        %v2554 = vunpack.c.l.b16 %v375
        %v2555 = vunpack.c.h.b16 %v375
        %v2556 = vunpack.c.l.b16 %v376
        %v2557 = vunpack.c.h.b16 %v376
        %v2558 = vunpack.c.l.b16 %v377
        %v2559 = vunpack.c.h.b16 %v377
        %v2560 = vunpack.c.l.b16 %v378
        %v2561 = vunpack.c.h.b16 %v378
        %v2562 = vunpack.c.l.b16 %v379
        %v2563 = vunpack.c.h.b16 %v379
        %v2564 = vunpack.c.l.b16 %v380
        %v2565 = vunpack.c.h.b16 %v380
        %v2566 = vunpack.c.l.b16 %v381
        %v2567 = vunpack.c.h.b16 %v381
        %v2568 = vunpack.c.l.b16 %v382
        %v2569 = vunpack.c.h.b16 %v382
        %v2570 = vunpack.c.l.b16 %v383
        %v2571 = vunpack.c.h.b16 %v383
        %v2572 = vunpack.c.l.b16 %v384
        %v2573 = vunpack.c.h.b16 %v384
        %v2574 = vunpack.c.l.b16 %v385
        %v2575 = vunpack.c.h.b16 %v385
        %v2576 = vunpack.c.l.b16 %v386
        %v2577 = vunpack.c.h.b16 %v386
        %v2578 = vunpack.c.l.b16 %v387
        %v2579 = vunpack.c.h.b16 %v387
        %v2580 = vunpack.c.l.b16 %v388
        %v2581 = vunpack.c.h.b16 %v388
        %v2582 = vunpack.c.l.b16 %v389
        %v2583 = vunpack.c.h.b16 %v389
        %v2584 = vunpack.c.l.b16 %v390
        %v2585 = vunpack.c.h.b16 %v390
        %v2586 = vunpack.c.l.b16 %v391
        %v2587 = vunpack.c.h.b16 %v391
        %v2588 = vunpack.c.l.b16 %v392
        %v2589 = vunpack.c.h.b16 %v392
        %v2590 = vunpack.c.l.b16 %v393
        %v2591 = vunpack.c.h.b16 %v393
        %v2592 = vunpack.c.l.b16 %v394
        %v2593 = vunpack.c.h.b16 %v394
        %v2594 = vunpack.c.l.b16 %v395
        %v2595 = vunpack.c.h.b16 %v395
        %v2596 = vunpack.c.l.b16 %v396
        %v2597 = vunpack.c.h.b16 %v396
        %v2598 = vunpack.c.l.b16 %v397
        %v2599 = vunpack.c.h.b16 %v397
        %v2600 = vunpack.c.l.b16 %v398
        %v2601 = vunpack.c.h.b16 %v398
        %v2602 = vunpack.c.l.b16 %v399
        %v2603 = vunpack.c.h.b16 %v399
        %v2604 = vunpack.c.l.b16 %v400
        %v2605 = vunpack.c.h.b16 %v400
        %v2606 = vunpack.c.l.b16 %v401
        %v2607 = vunpack.c.h.b16 %v401
        %v2608 = vunpack.c.l.b16 %v402
        %v2609 = vunpack.c.h.b16 %v402
        %v2610 = vunpack.c.l.b16 %v403
        %v2611 = vunpack.c.h.b16 %v403
        %v2612 = vunpack.c.l.b16 %v404
        %v2613 = vunpack.c.h.b16 %v404
        %v2614 = vunpack.c.l.b16 %v405
        %v2615 = vunpack.c.h.b16 %v405
        %v2616 = vunpack.c.l.b16 %v406
        %v2617 = vunpack.c.h.b16 %v406
        %v2618 = vunpack.c.l.b16 %v407
        %v2619 = vunpack.c.h.b16 %v407
        %v2620 = vunpack.c.l.b16 %v408
        %v2621 = vunpack.c.h.b16 %v408
        %v2622 = vunpack.c.l.b16 %v409
        %v2623 = vunpack.c.h.b16 %v409
        %v2624 = vunpack.c.l.b16 %v410
        %v2625 = vunpack.c.h.b16 %v410
        %v2626 = vunpack.c.l.b16 %v411
        %v2627 = vunpack.c.h.b16 %v411
        %v2628 = vunpack.c.l.b16 %v412
        %v2629 = vunpack.c.h.b16 %v412
        %v2630 = vunpack.c.l.b16 %v413
        %v2631 = vunpack.c.h.b16 %v413
        %v2632 = vunpack.c.l.b16 %v414
        %v2633 = vunpack.c.h.b16 %v414
        %v2634 = vunpack.c.l.b16 %v415
        %v2635 = vunpack.c.h.b16 %v415
        %v2636 = vunpack.c.l.b16 %v416
        %v2637 = vunpack.c.h.b16 %v416
        %v2638 = vunpack.c.l.b16 %v417
        %v2639 = vunpack.c.h.b16 %v417
        %v2640 = vunpack.c.l.b16 %v418
        %v2641 = vunpack.c.h.b16 %v418
        %v2642 = vunpack.c.l.b16 %v419
        %v2643 = vunpack.c.h.b16 %v419
        %v2644 = vunpack.c.l.b16 %v420
        %v2645 = vunpack.c.h.b16 %v420
        %v2646 = vunpack.c.l.b16 %v421
        %v2647 = vunpack.c.h.b16 %v421
        %v2648 = vunpack.c.l.b16 %v422
        %v2649 = vunpack.c.h.b16 %v422
        %v2650 = vunpack.c.l.b16 %v423
        %v2651 = vunpack.c.h.b16 %v423
        %v2652 = vunpack.c.l.b16 %v424
        %v2653 = vunpack.c.h.b16 %v424
        %v2654 = vunpack.c.l.b16 %v425
        %v2655 = vunpack.c.h.b16 %v425
        %v2656 = vunpack.c.l.b16 %v426
        %v2657 = vunpack.c.h.b16 %v426
        %v2658 = vunpack.c.l.b16 %v427
        %v2659 = vunpack.c.h.b16 %v427
        %v2660 = vunpack.c.l.b16 %v428
        %v2661 = vunpack.c.h.b16 %v428
        %v2662 = vunpack.c.l.b16 %v429
        %v2663 = vunpack.c.h.b16 %v429
        %v2664 = vunpack.c.l.b16 %v430
        %v2665 = vunpack.c.h.b16 %v430
        %v2666 = vunpack.c.l.b16 %v431
        %v2667 = vunpack.c.h.b16 %v431
        %v2668 = vunpack.c.l.b16 %v432
        %v2669 = vunpack.c.h.b16 %v432
        %v2670 = vunpack.c.l.b16 %v433
        %v2671 = vunpack.c.h.b16 %v433
        %v2672 = vunpack.c.l.b16 %v434
        %v2673 = vunpack.c.h.b16 %v434
        %v2674 = vunpack.c.l.b16 %v435
        %v2675 = vunpack.c.h.b16 %v435
        %v2676 = vunpack.c.l.b16 %v436
        %v2677 = vunpack.c.h.b16 %v436
        %v2678 = vunpack.c.l.b16 %v437
        %v2679 = vunpack.c.h.b16 %v437
        %v2680 = vunpack.c.l.b16 %v438
        %v2681 = vunpack.c.h.b16 %v438
        %v2682 = vunpack.c.l.b16 %v439
        %v2683 = vunpack.c.h.b16 %v439
        %v2684 = vunpack.c.l.b16 %v440
        %v2685 = vunpack.c.h.b16 %v440
        %v2686 = vunpack.c.l.b16 %v441
        %v2687 = vunpack.c.h.b16 %v441
        %v2688 = vunpack.c.l.b16 %v442
        %v2689 = vunpack.c.h.b16 %v442
        %v2690 = vunpack.c.l.b16 %v443
        %v2691 = vunpack.c.h.b16 %v443
        %v2692 = vunpack.c.l.b16 %v444
        %v2693 = vunpack.c.h.b16 %v444
        %v2694 = vunpack.c.l.b16 %v445
        %v2695 = vunpack.c.h.b16 %v445
        %v2696 = vunpack.c.l.b16 %v446
        %v2697 = vunpack.c.h.b16 %v446
        %v2698 = vunpack.c.l.b16 %v447
        %v2699 = vunpack.c.h.b16 %v447
        %v2700 = vunpack.c.l.b16 %v448
        %v2701 = vunpack.c.h.b16 %v448
        %v2702 = vunpack.c.l.b16 %v449
        %v2703 = vunpack.c.h.b16 %v449
        %v2704 = vunpack.c.l.b16 %v450
        %v2705 = vunpack.c.h.b16 %v450
        %v2706 = vunpack.c.l.b16 %v451
        %v2707 = vunpack.c.h.b16 %v451
        %v2708 = vunpack.c.l.b16 %v452
        %v2709 = vunpack.c.h.b16 %v452
        %v2710 = vunpack.c.l.b16 %v453
        %v2711 = vunpack.c.h.b16 %v453
        %v2712 = vunpack.c.l.b16 %v454
        %v2713 = vunpack.c.h.b16 %v454
        %v2714 = vunpack.c.l.b16 %v455
        %v2715 = vunpack.c.h.b16 %v455
        %v2716 = vunpack.c.l.b16 %v456
        %v2717 = vunpack.c.h.b16 %v456
        %v2718 = vunpack.c.l.b16 %v457
        %v2719 = vunpack.c.h.b16 %v457
        %v2720 = vunpack.c.l.b16 %v458
        %v2721 = vunpack.c.h.b16 %v458
        %v2722 = vunpack.c.l.b16 %v459
        %v2723 = vunpack.c.h.b16 %v459
        %v2724 = vunpack.c.l.b16 %v460
        %v2725 = vunpack.c.h.b16 %v460
        %v2726 = vunpack.c.l.b16 %v461
        %v2727 = vunpack.c.h.b16 %v461
        %v2728 = vunpack.c.l.b16 %v462
        %v2729 = vunpack.c.h.b16 %v462
        %v2730 = vunpack.c.l.b16 %v463
        %v2731 = vunpack.c.h.b16 %v463
        %v2732 = vunpack.c.l.b16 %v464
        %v2733 = vunpack.c.h.b16 %v464
        %v2734 = vunpack.c.l.b16 %v465
        %v2735 = vunpack.c.h.b16 %v465
        %v2736 = vunpack.c.l.b16 %v466
        %v2737 = vunpack.c.h.b16 %v466
        %v2738 = vunpack.c.l.b16 %v467
        %v2739 = vunpack.c.h.b16 %v467
        %v2740 = vunpack.c.l.b16 %v468
        %v2741 = vunpack.c.h.b16 %v468
        %v2742 = vunpack.c.l.b16 %v469
        %v2743 = vunpack.c.h.b16 %v469
        %v2744 = vunpack.c.l.b16 %v470
        %v2745 = vunpack.c.h.b16 %v470
        %v2746 = vunpack.c.l.b16 %v471
        %v2747 = vunpack.c.h.b16 %v471
        %v2748 = vunpack.c.l.b16 %v472
        %v2749 = vunpack.c.h.b16 %v472
        %v2750 = vunpack.c.l.b16 %v473
        %v2751 = vunpack.c.h.b16 %v473
        %v2752 = vunpack.c.l.b16 %v474
        %v2753 = vunpack.c.h.b16 %v474
        %v2754 = vunpack.c.l.b16 %v475
        %v2755 = vunpack.c.h.b16 %v475
        %v2756 = vunpack.c.l.b16 %v476
        %v2757 = vunpack.c.h.b16 %v476
        %v2758 = vunpack.c.l.b16 %v477
        %v2759 = vunpack.c.h.b16 %v477
        %v2760 = vunpack.c.l.b16 %v478
        %v2761 = vunpack.c.h.b16 %v478
        %v2762 = vunpack.c.l.b16 %v479
        %v2763 = vunpack.c.h.b16 %v479
        %v2764 = vunpack.c.l.b16 %v480
        %v2765 = vunpack.c.h.b16 %v480
        %v2766 = vunpack.c.l.b16 %v481
        %v2767 = vunpack.c.h.b16 %v481
        %v2768 = vunpack.c.l.b16 %v482
        %v2769 = vunpack.c.h.b16 %v482
        %v2770 = vunpack.c.l.b16 %v483
        %v2771 = vunpack.c.h.b16 %v483
        %v2772 = vunpack.c.l.b16 %v484
        %v2773 = vunpack.c.h.b16 %v484
        %v2774 = vunpack.c.l.b16 %v485
        %v2775 = vunpack.c.h.b16 %v485
        %v2776 = vunpack.c.l.b16 %v486
        %v2777 = vunpack.c.h.b16 %v486
        %v2778 = vunpack.c.l.b16 %v487
        %v2779 = vunpack.c.h.b16 %v487
        %v2780 = vunpack.c.l.b16 %v488
        %v2781 = vunpack.c.h.b16 %v488
        %v2782 = vunpack.c.l.b16 %v489
        %v2783 = vunpack.c.h.b16 %v489
        %v2784 = vunpack.c.l.b16 %v490
        %v2785 = vunpack.c.h.b16 %v490
        %v2786 = vunpack.c.l.b16 %v491
        %v2787 = vunpack.c.h.b16 %v491
        %v2788 = vunpack.c.l.b16 %v492
        %v2789 = vunpack.c.h.b16 %v492
        %v2790 = vunpack.c.l.b16 %v493
        %v2791 = vunpack.c.h.b16 %v493
        %v2792 = vunpack.c.l.b16 %v494
        %v2793 = vunpack.c.h.b16 %v494
        %v2794 = vunpack.c.l.b16 %v495
        %v2795 = vunpack.c.h.b16 %v495
        %v2796 = vunpack.c.l.b16 %v496
        %v2797 = vunpack.c.h.b16 %v496
        %v2798 = vunpack.c.l.b16 %v497
        %v2799 = vunpack.c.h.b16 %v497
        %v2800 = vunpack.c.l.b16 %v498
        %v2801 = vunpack.c.h.b16 %v498
        %v2802 = vunpack.c.l.b16 %v499
        %v2803 = vunpack.c.h.b16 %v499
        %v2804 = vunpack.c.l.b16 %v500
        %v2805 = vunpack.c.h.b16 %v500
        %v2806 = vunpack.c.l.b16 %v501
        %v2807 = vunpack.c.h.b16 %v501
        %v2808 = vunpack.c.l.b16 %v502
        %v2809 = vunpack.c.h.b16 %v502
        %v2810 = vunpack.c.l.b16 %v503
        %v2811 = vunpack.c.h.b16 %v503
        %v2812 = vunpack.c.l.b16 %v504
        %v2813 = vunpack.c.h.b16 %v504
        %v2814 = vunpack.c.l.b16 %v505
        %v2815 = vunpack.c.h.b16 %v505
        %v2816 = vunpack.c.l.b16 %v506
        %v2817 = vunpack.c.h.b16 %v506
        %v2818 = vunpack.c.l.b16 %v507
        %v2819 = vunpack.c.h.b16 %v507
        %v2820 = vunpack.c.l.b16 %v508
        %v2821 = vunpack.c.h.b16 %v508
        %v2822 = vunpack.c.l.b16 %v509
        %v2823 = vunpack.c.h.b16 %v509
        %v2824 = vunpack.c.l.b16 %v510
        %v2825 = vunpack.c.h.b16 %v510
        %v2826 = vunpack.c.l.b16 %v511
        %v2827 = vunpack.c.h.b16 %v511
        %v2828 = vunpack.c.l.b16 %v512
        %v2829 = vunpack.c.h.b16 %v512
        %v2830 = vunpack.c.l.b16 %v513
        %v2831 = vunpack.c.h.b16 %v513
        %v2832 = vunpack.c.l.b16 %v514
        %v2833 = vunpack.c.h.b16 %v514
        %v2834 = vunpack.c.l.b16 %v515
        %v2835 = vunpack.c.h.b16 %v515
        %v2836 = vunpack.c.l.b16 %v516
        %v2837 = vunpack.c.h.b16 %v516
        %v2838 = vunpack.c.l.b16 %v517
        %v2839 = vunpack.c.h.b16 %v517
        %v2840 = vunpack.c.l.b16 %v518
        %v2841 = vunpack.c.h.b16 %v518
        %v2842 = vunpack.c.l.b16 %v519
        %v2843 = vunpack.c.h.b16 %v519
        %v2844 = vunpack.c.l.b16 %v520
        %v2845 = vunpack.c.h.b16 %v520
        %v2846 = vunpack.c.l.b16 %v521
        %v2847 = vunpack.c.h.b16 %v521
        %v2848 = vunpack.c.l.b16 %v522
        %v2849 = vunpack.c.h.b16 %v522
        %v2850 = vunpack.c.l.b16 %v523
        %v2851 = vunpack.c.h.b16 %v523
        %v2852 = vunpack.c.l.b16 %v524
        %v2853 = vunpack.c.h.b16 %v524
        %v2854 = vunpack.c.l.b16 %v525
        %v2855 = vunpack.c.h.b16 %v525
        %v2856 = vunpack.c.l.b16 %v526
        %v2857 = vunpack.c.h.b16 %v526
        %v2858 = vunpack.c.l.b16 %v527
        %v2859 = vunpack.c.h.b16 %v527
        %v2860 = vunpack.c.l.b16 %v528
        %v2861 = vunpack.c.h.b16 %v528
        %v2862 = vunpack.c.l.b16 %v529
        %v2863 = vunpack.c.h.b16 %v529
        %v2864 = vunpack.c.l.b16 %v530
        %v2865 = vunpack.c.h.b16 %v530
        %v2866 = vunpack.c.l.b16 %v531
        %v2867 = vunpack.c.h.b16 %v531
        %v2868 = vunpack.c.l.b16 %v532
        %v2869 = vunpack.c.h.b16 %v532
        %v2870 = vunpack.c.l.b16 %v533
        %v2871 = vunpack.c.h.b16 %v533
        %v2872 = vunpack.c.l.b16 %v534
        %v2873 = vunpack.c.h.b16 %v534
        %v2874 = vunpack.c.l.b16 %v535
        %v2875 = vunpack.c.h.b16 %v535
        %v2876 = vunpack.c.l.b16 %v536
        %v2877 = vunpack.c.h.b16 %v536
        %v2878 = vunpack.c.l.b16 %v537
        %v2879 = vunpack.c.h.b16 %v537
        %v2880 = vunpack.c.l.b16 %v538
        %v2881 = vunpack.c.h.b16 %v538
        %v2882 = vunpack.c.l.b16 %v539
        %v2883 = vunpack.c.h.b16 %v539
        %v2884 = vunpack.c.l.b16 %v540
        %v2885 = vunpack.c.h.b16 %v540
        %v2886 = vunpack.c.l.b16 %v541
        %v2887 = vunpack.c.h.b16 %v541
        %v2888 = vunpack.c.l.b16 %v542
        %v2889 = vunpack.c.h.b16 %v542
        %v2890 = vunpack.c.l.b16 %v543
        %v2891 = vunpack.c.h.b16 %v543
        %v2892 = vunpack.c.l.b16 %v544
        %v2893 = vunpack.c.h.b16 %v544
        %v2894 = vunpack.c.l.b16 %v545
        %v2895 = vunpack.c.h.b16 %v545
        %v2896 = vunpack.c.l.b16 %v546
        %v2897 = vunpack.c.h.b16 %v546
        %v2898 = vunpack.c.l.b16 %v547
        %v2899 = vunpack.c.h.b16 %v547
        %v2900 = vunpack.c.l.b16 %v548
        %v2901 = vunpack.c.h.b16 %v548
        %v2902 = vunpack.c.l.b16 %v549
        %v2903 = vunpack.c.h.b16 %v549
        %v2904 = vunpack.c.l.b16 %v550
        %v2905 = vunpack.c.h.b16 %v550
        %v2906 = vunpack.c.l.b16 %v551
        %v2907 = vunpack.c.h.b16 %v551
        %v2908 = vunpack.c.l.b16 %v552
        %v2909 = vunpack.c.h.b16 %v552
        %v2910 = vunpack.c.l.b16 %v553
        %v2911 = vunpack.c.h.b16 %v553
        %v2912 = vunpack.c.l.b16 %v554
        %v2913 = vunpack.c.h.b16 %v554
        %v2914 = vunpack.c.l.b16 %v555
        %v2915 = vunpack.c.h.b16 %v555
        %v2916 = vunpack.c.l.b16 %v556
        %v2917 = vunpack.c.h.b16 %v556
        %v2918 = vunpack.c.l.b16 %v557
        %v2919 = vunpack.c.h.b16 %v557
        %v2920 = vunpack.c.l.b16 %v558
        %v2921 = vunpack.c.h.b16 %v558
        %v2922 = vunpack.c.l.b16 %v559
        %v2923 = vunpack.c.h.b16 %v559
        %v2924 = vunpack.c.l.b16 %v560
        %v2925 = vunpack.c.h.b16 %v560
        %v2926 = vunpack.c.l.b16 %v561
        %v2927 = vunpack.c.h.b16 %v561
        %v2928 = vunpack.c.l.b16 %v562
        %v2929 = vunpack.c.h.b16 %v562
        %v2930 = vunpack.c.l.b16 %v563
        %v2931 = vunpack.c.h.b16 %v563
        %v2932 = vunpack.c.l.b16 %v564
        %v2933 = vunpack.c.h.b16 %v564
        %v2934 = vunpack.c.l.b16 %v565
        %v2935 = vunpack.c.h.b16 %v565
        %v2936 = vunpack.c.l.b16 %v566
        %v2937 = vunpack.c.h.b16 %v566
        %v2938 = vunpack.c.l.b16 %v567
        %v2939 = vunpack.c.h.b16 %v567
        %v2940 = vunpack.c.l.b16 %v568
        %v2941 = vunpack.c.h.b16 %v568
        %v2942 = vunpack.c.l.b16 %v569
        %v2943 = vunpack.c.h.b16 %v569
        %v2944 = vunpack.c.l.b16 %v570
        %v2945 = vunpack.c.h.b16 %v570
        %v2946 = vunpack.c.l.b16 %v571
        %v2947 = vunpack.c.h.b16 %v571
        %v2948 = vunpack.c.l.b16 %v572
        %v2949 = vunpack.c.h.b16 %v572
        %v2950 = vunpack.c.l.b16 %v573
        %v2951 = vunpack.c.h.b16 %v573
        %v2952 = vunpack.c.l.b16 %v574
        %v2953 = vunpack.c.h.b16 %v574
        %v2954 = vunpack.c.l.b16 %v575
        %v2955 = vunpack.c.h.b16 %v575
        %v2956 = vunpack.c.l.b16 %v576
        %v2957 = vunpack.c.h.b16 %v576
        %v2958 = vunpack.c.l.b16 %v577
        %v2959 = vunpack.c.h.b16 %v577
        %v2960 = vunpack.c.l.b16 %v578
        %v2961 = vunpack.c.h.b16 %v578
        %v2962 = vunpack.c.l.b16 %v579
        %v2963 = vunpack.c.h.b16 %v579
        %v2964 = vunpack.c.l.b16 %v580
        %v2965 = vunpack.c.h.b16 %v580
        %v2966 = vunpack.c.l.b16 %v581
        %v2967 = vunpack.c.h.b16 %v581
        %v2968 = vunpack.c.l.b16 %v582
        %v2969 = vunpack.c.h.b16 %v582
        %v2970 = vunpack.c.l.b16 %v583
        %v2971 = vunpack.c.h.b16 %v583
        %v2972 = vunpack.c.l.b16 %v584
        %v2973 = vunpack.c.h.b16 %v584
        %v2974 = vunpack.c.l.b16 %v585
        %v2975 = vunpack.c.h.b16 %v585
        %v2976 = vunpack.c.l.b16 %v586
        %v2977 = vunpack.c.h.b16 %v586
        %v2978 = vunpack.c.l.b16 %v587
        %v2979 = vunpack.c.h.b16 %v587
        %v2980 = vunpack.c.l.b16 %v588
        %v2981 = vunpack.c.h.b16 %v588
        %v2982 = vunpack.c.l.b16 %v589
        %v2983 = vunpack.c.h.b16 %v589
        %v2984 = vunpack.c.l.b16 %v590
        %v2985 = vunpack.c.h.b16 %v590
        %v2986 = vunpack.c.l.b16 %v591
        %v2987 = vunpack.c.h.b16 %v591
        %v2988 = vunpack.c.l.b16 %v592
        %v2989 = vunpack.c.h.b16 %v592
        %v2990 = vunpack.c.l.b16 %v593
        %v2991 = vunpack.c.h.b16 %v593
        %v2992 = vunpack.c.l.b16 %v594
        %v2993 = vunpack.c.h.b16 %v594
        %v2994 = vunpack.c.l.b16 %v595
        %v2995 = vunpack.c.h.b16 %v595
        %v2996 = vunpack.c.l.b16 %v596
        %v2997 = vunpack.c.h.b16 %v596
        %v2998 = vunpack.c.l.b16 %v597
        %v2999 = vunpack.c.h.b16 %v597
        %v3000 = vunpack.c.l.b16 %v598
        %v3001 = vunpack.c.h.b16 %v598
        %v3002 = vunpack.c.l.b16 %v599
        %v3003 = vunpack.c.h.b16 %v599
        %v3004 = vunpack.c.l.b16 %v600
        %v3005 = vunpack.c.h.b16 %v600
        %v3006 = vunpack.c.l.b16 %v601
        %v3007 = vunpack.c.h.b16 %v601
        %v3008 = vunpack.c.l.b16 %v602
        %v3009 = vunpack.c.h.b16 %v602
        %v3010 = vunpack.c.l.b16 %v603
        %v3011 = vunpack.c.h.b16 %v603
        %v3012 = vunpack.c.l.b16 %v604
        %v3013 = vunpack.c.h.b16 %v604
        %v3014 = vunpack.c.l.b16 %v605
        %v3015 = vunpack.c.h.b16 %v605
        %v3016 = vunpack.c.l.b16 %v606
        %v3017 = vunpack.c.h.b16 %v606
        %v3018 = vunpack.c.l.b16 %v607
        %v3019 = vunpack.c.h.b16 %v607
        %v3020 = vunpack.c.l.b16 %v608
        %v3021 = vunpack.c.h.b16 %v608
        %v3022 = vunpack.c.l.b16 %v609
        %v3023 = vunpack.c.h.b16 %v609
        %v3024 = vunpack.c.l.b16 %v610
        %v3025 = vunpack.c.h.b16 %v610
        %v3026 = vunpack.c.l.b16 %v611
        %v3027 = vunpack.c.h.b16 %v611
        %v3028 = vunpack.c.l.b16 %v612
        %v3029 = vunpack.c.h.b16 %v612
        %v3030 = vunpack.c.l.b16 %v613
        %v3031 = vunpack.c.h.b16 %v613
        %v3032 = vunpack.c.l.b16 %v614
        %v3033 = vunpack.c.h.b16 %v614
        %v3034 = vunpack.c.l.b16 %v615
        %v3035 = vunpack.c.h.b16 %v615
        %v3036 = vunpack.c.l.b16 %v616
        %v3037 = vunpack.c.h.b16 %v616
        %v3038 = vunpack.c.l.b16 %v617
        %v3039 = vunpack.c.h.b16 %v617
        %v3040 = vunpack.c.l.b16 %v618
        %v3041 = vunpack.c.h.b16 %v618
        %v3042 = vunpack.c.l.b16 %v619
        %v3043 = vunpack.c.h.b16 %v619
        %v3044 = vunpack.c.l.b16 %v620
        %v3045 = vunpack.c.h.b16 %v620
        %v3046 = vunpack.c.l.b16 %v621
        %v3047 = vunpack.c.h.b16 %v621
        %v3048 = vunpack.c.l.b16 %v622
        %v3049 = vunpack.c.h.b16 %v622
        %v3050 = vunpack.c.l.b16 %v623
        %v3051 = vunpack.c.h.b16 %v623
        %v3052 = vunpack.c.l.b16 %v624
        %v3053 = vunpack.c.h.b16 %v624
        %v3054 = vunpack.c.l.b16 %v625
        %v3055 = vunpack.c.h.b16 %v625
        %v3056 = vunpack.c.l.b16 %v626
        %v3057 = vunpack.c.h.b16 %v626
        %v3058 = vunpack.c.l.b16 %v627
        %v3059 = vunpack.c.h.b16 %v627
        %v3060 = vunpack.c.l.b16 %v628
        %v3061 = vunpack.c.h.b16 %v628
        %v3062 = vunpack.c.l.b16 %v629
        %v3063 = vunpack.c.h.b16 %v629
        %v3064 = vunpack.c.l.b16 %v630
        %v3065 = vunpack.c.h.b16 %v630
        %v3066 = vunpack.c.l.b16 %v631
        %v3067 = vunpack.c.h.b16 %v631
        %v3068 = vunpack.c.l.b16 %v632
        %v3069 = vunpack.c.h.b16 %v632
        %v3070 = vunpack.c.l.b16 %v633
        %v3071 = vunpack.c.h.b16 %v633
        %v3072 = vunpack.c.l.b16 %v634
        %v3073 = vunpack.c.h.b16 %v634
        %v3074 = vunpack.c.l.b16 %v635
        %v3075 = vunpack.c.h.b16 %v635
        %v3076 = vunpack.c.l.b16 %v636
        %v3077 = vunpack.c.h.b16 %v636
        %v3078 = vunpack.c.l.b16 %v637
        %v3079 = vunpack.c.h.b16 %v637
        %v3080 = vunpack.c.l.b16 %v638
        %v3081 = vunpack.c.h.b16 %v638
        %v3082 = vunpack.c.l.b16 %v639
        %v3083 = vunpack.c.h.b16 %v639
        %v3084 = vunpack.c.l.b16 %v640
        %v3085 = vunpack.c.h.b16 %v640
        %v3086 = vunpack.c.l.b16 %v641
        %v3087 = vunpack.c.h.b16 %v641
        %v3088 = vunpack.c.l.b16 %v642
        %v3089 = vunpack.c.h.b16 %v642
        %v3090 = vunpack.c.l.b16 %v643
        %v3091 = vunpack.c.h.b16 %v643
        %v3092 = vunpack.c.l.b16 %v644
        %v3093 = vunpack.c.h.b16 %v644
        %v3094 = vunpack.c.l.b16 %v645
        %v3095 = vunpack.c.h.b16 %v645
        %v3096 = vunpack.c.l.b16 %v646
        %v3097 = vunpack.c.h.b16 %v646
        %v3098 = vunpack.c.l.b16 %v647
        %v3099 = vunpack.c.h.b16 %v647
        %v3100 = vunpack.c.l.b16 %v648
        %v3101 = vunpack.c.h.b16 %v648
        %v3102 = vunpack.c.l.b16 %v649
        %v3103 = vunpack.c.h.b16 %v649
        %v3104 = vunpack.c.l.b16 %v650
        %v3105 = vunpack.c.h.b16 %v650
        %v3106 = vunpack.c.l.b16 %v651
        %v3107 = vunpack.c.h.b16 %v651
        %v3108 = vunpack.c.l.b16 %v652
        %v3109 = vunpack.c.h.b16 %v652
        %v3110 = vunpack.c.l.b16 %v653
        %v3111 = vunpack.c.h.b16 %v653
        %v3112 = vunpack.c.l.b16 %v654
        %v3113 = vunpack.c.h.b16 %v654
        %v3114 = vunpack.c.l.b16 %v655
        %v3115 = vunpack.c.h.b16 %v655
        %v3116 = vunpack.c.l.b16 %v656
        %v3117 = vunpack.c.h.b16 %v656
        %v3118 = vunpack.c.l.b16 %v657
        %v3119 = vunpack.c.h.b16 %v657
        %v3120 = vunpack.c.l.b16 %v658
        %v3121 = vunpack.c.h.b16 %v658
        %v3122 = vunpack.c.l.b16 %v659
        %v3123 = vunpack.c.h.b16 %v659
        %v3124 = vunpack.c.l.b16 %v660
        %v3125 = vunpack.c.h.b16 %v660
        %v3126 = vunpack.c.l.b16 %v661
        %v3127 = vunpack.c.h.b16 %v661
        %v3128 = vunpack.c.l.b16 %v662
        %v3129 = vunpack.c.h.b16 %v662
        %v3130 = vunpack.c.l.b16 %v663
        %v3131 = vunpack.c.h.b16 %v663
        %v3132 = vunpack.c.l.b16 %v664
        %v3133 = vunpack.c.h.b16 %v664
        %v3134 = vunpack.c.l.b16 %v665
        %v3135 = vunpack.c.h.b16 %v665
        %v3136 = vunpack.c.l.b16 %v666
        %v3137 = vunpack.c.h.b16 %v666
        %v3138 = vunpack.c.l.b16 %v667
        %v3139 = vunpack.c.h.b16 %v667
        %v3140 = vunpack.c.l.b16 %v668
        %v3141 = vunpack.c.h.b16 %v668
        %v3142 = vunpack.c.l.b16 %v669
        %v3143 = vunpack.c.h.b16 %v669
        %v3144 = vunpack.c.l.b16 %v670
        %v3145 = vunpack.c.h.b16 %v670
        %v3146 = vunpack.c.l.b16 %v671
        %v3147 = vunpack.c.h.b16 %v671
        %v3148 = vunpack.c.l.b16 %v672
        %v3149 = vunpack.c.h.b16 %v672
        %v3150 = vunpack.c.l.b16 %v673
        %v3151 = vunpack.c.h.b16 %v673
        %v3152 = vunpack.c.l.b16 %v674
        %v3153 = vunpack.c.h.b16 %v674
        %v3154 = vunpack.c.l.b16 %v675
        %v3155 = vunpack.c.h.b16 %v675
        %v3156 = vunpack.c.l.b16 %v676
        %v3157 = vunpack.c.h.b16 %v676
        %v3158 = vunpack.c.l.b16 %v677
        %v3159 = vunpack.c.h.b16 %v677
        %v3160 = vunpack.c.l.b16 %v678
        %v3161 = vunpack.c.h.b16 %v678
        %v3162 = vunpack.c.l.b16 %v679
        %v3163 = vunpack.c.h.b16 %v679
        %v3164 = vunpack.c.l.b16 %v680
        %v3165 = vunpack.c.h.b16 %v680
        %v3166 = vunpack.c.l.b16 %v681
        %v3167 = vunpack.c.h.b16 %v681
        %v3168 = vunpack.c.l.b16 %v682
        %v3169 = vunpack.c.h.b16 %v682
        %v3170 = vunpack.c.l.b16 %v683
        %v3171 = vunpack.c.h.b16 %v683
        %v3172 = vunpack.c.l.b16 %v684
        %v3173 = vunpack.c.h.b16 %v684
        %v3174 = vunpack.c.l.b16 %v685
        %v3175 = vunpack.c.h.b16 %v685
        %v3176 = vunpack.c.l.b16 %v686
        %v3177 = vunpack.c.h.b16 %v686
        %v3178 = vunpack.c.l.b16 %v687
        %v3179 = vunpack.c.h.b16 %v687
        %v3180 = vunpack.c.l.b16 %v688
        %v3181 = vunpack.c.h.b16 %v688
        %v3182 = vunpack.c.l.b16 %v689
        %v3183 = vunpack.c.h.b16 %v689
        %v3184 = vunpack.c.l.b16 %v690
        %v3185 = vunpack.c.h.b16 %v690
        %v3186 = vunpack.c.l.b16 %v691
        %v3187 = vunpack.c.h.b16 %v691
        %v3188 = vunpack.c.l.b16 %v692
        %v3189 = vunpack.c.h.b16 %v692
        %v3190 = vunpack.c.l.b16 %v693
        %v3191 = vunpack.c.h.b16 %v693
        %v3192 = vunpack.c.l.b16 %v694
        %v3193 = vunpack.c.h.b16 %v694
        %v3194 = vunpack.c.l.b16 %v695
        %v3195 = vunpack.c.h.b16 %v695
        %v3196 = vunpack.c.l.b16 %v696
        %v3197 = vunpack.c.h.b16 %v696
        %v3198 = vunpack.c.l.b16 %v697
        %v3199 = vunpack.c.h.b16 %v697
        %v3200 = vunpack.c.l.b16 %v698
        %v3201 = vunpack.c.h.b16 %v698
        %v3202 = vunpack.c.l.b16 %v699
        %v3203 = vunpack.c.h.b16 %v699
        %v3204 = vunpack.c.l.b16 %v700
        %v3205 = vunpack.c.h.b16 %v700
        %v3206 = vunpack.c.l.b16 %v701
        %v3207 = vunpack.c.h.b16 %v701
        %v3208 = vunpack.c.l.b16 %v702
        %v3209 = vunpack.c.h.b16 %v702
        %v3210 = vunpack.c.l.b16 %v703
        %v3211 = vunpack.c.h.b16 %v703
        %v3212 = vunpack.c.l.b16 %v704
        %v3213 = vunpack.c.h.b16 %v704
        %v3214 = vunpack.c.l.b16 %v705
        %v3215 = vunpack.c.h.b16 %v705
        %v3216 = vunpack.c.l.b16 %v706
        %v3217 = vunpack.c.h.b16 %v706
        %v3218 = vunpack.c.l.b16 %v707
        %v3219 = vunpack.c.h.b16 %v707
        %v3220 = vunpack.c.l.b16 %v708
        %v3221 = vunpack.c.h.b16 %v708
        %v3222 = vunpack.c.l.b16 %v709
        %v3223 = vunpack.c.h.b16 %v709
        %v3224 = vunpack.c.l.b16 %v710
        %v3225 = vunpack.c.h.b16 %v710
        %v3226 = vunpack.c.l.b16 %v711
        %v3227 = vunpack.c.h.b16 %v711
        %v3228 = vunpack.c.l.b16 %v712
        %v3229 = vunpack.c.h.b16 %v712
        %v3230 = vunpack.c.l.b16 %v713
        %v3231 = vunpack.c.h.b16 %v713
        %v3232 = vunpack.c.l.b16 %v714
        %v3233 = vunpack.c.h.b16 %v714
        %v3234 = vunpack.c.l.b16 %v715
        %v3235 = vunpack.c.h.b16 %v715
        %v3236 = vunpack.c.l.b16 %v716
        %v3237 = vunpack.c.h.b16 %v716
        %v3238 = vunpack.c.l.b16 %v717
        %v3239 = vunpack.c.h.b16 %v717
        %v3240 = vunpack.c.l.b16 %v718
        %v3241 = vunpack.c.h.b16 %v718
        %v3242 = vunpack.c.l.b16 %v719
        %v3243 = vunpack.c.h.b16 %v719
        %v3244 = vunpack.c.l.b16 %v720
        %v3245 = vunpack.c.h.b16 %v720
        %v3246 = vunpack.c.l.b16 %v721
        %v3247 = vunpack.c.h.b16 %v721
        %v3248 = vunpack.c.l.b16 %v722
        %v3249 = vunpack.c.h.b16 %v722
        %v3250 = vunpack.c.l.b16 %v723
        %v3251 = vunpack.c.h.b16 %v723
        %v3252 = vunpack.c.l.b16 %v724
        %v3253 = vunpack.c.h.b16 %v724
        %v3254 = vunpack.c.l.b16 %v725
        %v3255 = vunpack.c.h.b16 %v725
        %v3256 = vunpack.c.l.b16 %v726
        %v3257 = vunpack.c.h.b16 %v726
        %v3258 = vunpack.c.l.b16 %v727
        %v3259 = vunpack.c.h.b16 %v727
        %v3260 = vunpack.c.l.b16 %v728
        %v3261 = vunpack.c.h.b16 %v728
        %v3262 = vunpack.c.l.b16 %v729
        %v3263 = vunpack.c.h.b16 %v729
        %v3264 = vunpack.c.l.b16 %v730
        %v3265 = vunpack.c.h.b16 %v730
        %v3266 = vunpack.c.l.b16 %v731
        %v3267 = vunpack.c.h.b16 %v731
        %v3268 = vunpack.c.l.b16 %v732
        %v3269 = vunpack.c.h.b16 %v732
        %v3270 = vunpack.c.l.b16 %v733
        %v3271 = vunpack.c.h.b16 %v733
        %v3272 = vunpack.c.l.b16 %v734
        %v3273 = vunpack.c.h.b16 %v734
        %v3274 = vunpack.c.l.b16 %v735
        %v3275 = vunpack.c.h.b16 %v735
        %v3276 = vunpack.c.l.b16 %v736
        %v3277 = vunpack.c.h.b16 %v736
        %v3278 = vunpack.c.l.b16 %v737
        %v3279 = vunpack.c.h.b16 %v737
        %v3280 = vunpack.c.l.b16 %v738
        %v3281 = vunpack.c.h.b16 %v738
        %v3282 = vunpack.c.l.b16 %v739
        %v3283 = vunpack.c.h.b16 %v739
        %v3284 = vunpack.c.l.b16 %v740
        %v3285 = vunpack.c.h.b16 %v740
        %v3286 = vunpack.c.l.b16 %v741
        %v3287 = vunpack.c.h.b16 %v741
        %v3288 = vunpack.c.l.b16 %v742
        %v3289 = vunpack.c.h.b16 %v742
        %v3290 = vunpack.c.l.b16 %v743
        %v3291 = vunpack.c.h.b16 %v743
        %v3292 = vunpack.c.l.b16 %v744
        %v3293 = vunpack.c.h.b16 %v744
        %v3294 = vunpack.c.l.b16 %v745
        %v3295 = vunpack.c.h.b16 %v745
        %v3296 = vunpack.c.l.b16 %v746
        %v3297 = vunpack.c.h.b16 %v746
        %v3298 = vunpack.c.l.b16 %v747
        %v3299 = vunpack.c.h.b16 %v747
        %v3300 = vunpack.c.l.b16 %v748
        %v3301 = vunpack.c.h.b16 %v748
        %v3302 = vunpack.c.l.b16 %v749
        %v3303 = vunpack.c.h.b16 %v749
        %v3304 = vunpack.c.l.b16 %v750
        %v3305 = vunpack.c.h.b16 %v750
        %v3306 = vunpack.c.l.b16 %v751
        %v3307 = vunpack.c.h.b16 %v751
        %v3308 = vunpack.c.l.b16 %v752
        %v3309 = vunpack.c.h.b16 %v752
        %v3310 = vunpack.c.l.b16 %v753
        %v3311 = vunpack.c.h.b16 %v753
        %v3312 = vunpack.c.l.b16 %v754
        %v3313 = vunpack.c.h.b16 %v754
        %v3314 = vunpack.c.l.b16 %v755
        %v3315 = vunpack.c.h.b16 %v755
        %v3316 = vunpack.c.l.b16 %v756
        %v3317 = vunpack.c.h.b16 %v756
        %v3318 = vunpack.c.l.b16 %v757
        %v3319 = vunpack.c.h.b16 %v757
        %v3320 = vunpack.c.l.b16 %v758
        %v3321 = vunpack.c.h.b16 %v758
        %v3322 = vunpack.c.l.b16 %v759
        %v3323 = vunpack.c.h.b16 %v759
        %v3324 = vunpack.c.l.b16 %v760
        %v3325 = vunpack.c.h.b16 %v760
        %v3326 = vunpack.c.l.b16 %v761
        %v3327 = vunpack.c.h.b16 %v761
        %v3328 = vunpack.c.l.b16 %v762
        %v3329 = vunpack.c.h.b16 %v762
        %v3330 = vunpack.c.l.b16 %v763
        %v3331 = vunpack.c.h.b16 %v763
        %v3332 = vunpack.c.l.b16 %v764
        %v3333 = vunpack.c.h.b16 %v764
        %v3334 = vunpack.c.l.b16 %v765
        %v3335 = vunpack.c.h.b16 %v765
        %v3336 = vunpack.c.l.b16 %v766
        %v3337 = vunpack.c.h.b16 %v766
        %v3338 = vunpack.c.l.b16 %v767
        %v3339 = vunpack.c.h.b16 %v767
        %v3340 = vunpack.c.l.b16 %v768
        %v3341 = vunpack.c.h.b16 %v768
        %v3342 = vunpack.c.l.b16 %v769
        %v3343 = vunpack.c.h.b16 %v769
        %v3344 = vunpack.c.l.b16 %v770
        %v3345 = vunpack.c.h.b16 %v770
        %v3346 = vunpack.c.l.b16 %v771
        %v3347 = vunpack.c.h.b16 %v771
        %v3348 = vunpack.c.l.b16 %v772
        %v3349 = vunpack.c.h.b16 %v772
        %v3350 = vunpack.c.l.b16 %v773
        %v3351 = vunpack.c.h.b16 %v773
        %v3352 = vunpack.c.l.b16 %v774
        %v3353 = vunpack.c.h.b16 %v774
        %v3354 = vunpack.c.l.b16 %v775
        %v3355 = vunpack.c.h.b16 %v775
        %v3356 = vunpack.c.l.b16 %v776
        %v3357 = vunpack.c.h.b16 %v776
        %v3358 = vunpack.c.l.b16 %v777
        %v3359 = vunpack.c.h.b16 %v777
        %v3360 = vunpack.c.l.b16 %v778
        %v3361 = vunpack.c.h.b16 %v778
        %v3362 = vunpack.c.l.b16 %v779
        %v3363 = vunpack.c.h.b16 %v779
        %v3364 = vunpack.c.l.b16 %v780
        %v3365 = vunpack.c.h.b16 %v780
        %v3366 = vunpack.c.l.b16 %v781
        %v3367 = vunpack.c.h.b16 %v781
        %v3368 = vunpack.c.l.b16 %v782
        %v3369 = vunpack.c.h.b16 %v782
        %v3370 = vunpack.c.l.b16 %v783
        %v3371 = vunpack.c.h.b16 %v783
        %v3372 = vunpack.c.l.b16 %v784
        %v3373 = vunpack.c.h.b16 %v784
        %v3374 = vunpack.c.l.b16 %v785
        %v3375 = vunpack.c.h.b16 %v785
        %v3376 = vunpack.c.l.b16 %v786
        %v3377 = vunpack.c.h.b16 %v786
        %v3378 = vunpack.c.l.b16 %v787
        %v3379 = vunpack.c.h.b16 %v787
        %v3380 = vunpack.c.l.b16 %v788
        %v3381 = vunpack.c.h.b16 %v788
        %v3382 = vunpack.c.l.b16 %v789
        %v3383 = vunpack.c.h.b16 %v789
        %v3384 = vunpack.c.l.b16 %v790
        %v3385 = vunpack.c.h.b16 %v790
        %v3386 = vunpack.c.l.b16 %v791
        %v3387 = vunpack.c.h.b16 %v791
        %v3388 = vunpack.c.l.b16 %v792
        %v3389 = vunpack.c.h.b16 %v792
        %v3390 = vunpack.c.l.b16 %v793
        %v3391 = vunpack.c.h.b16 %v793
        %v3392 = vunpack.c.l.b16 %v794
        %v3393 = vunpack.c.h.b16 %v794
        %v3394 = vunpack.c.l.b16 %v795
        %v3395 = vunpack.c.h.b16 %v795
        %v3396 = vunpack.c.l.b16 %v796
        %v3397 = vunpack.c.h.b16 %v796
        %v3398 = vunpack.c.l.b16 %v797
        %v3399 = vunpack.c.h.b16 %v797
        %v3400 = vunpack.c.l.b16 %v798
        %v3401 = vunpack.c.h.b16 %v798
        %v3402 = vunpack.c.l.b16 %v799
        %v3403 = vunpack.c.h.b16 %v799
        %v3404 = vunpack.c.l.b16 %v800
        %v3405 = vunpack.c.h.b16 %v800
        %v3406 = vunpack.c.l.b16 %v801
        %v3407 = vunpack.c.h.b16 %v801
        %v3408 = vunpack.c.l.b16 %v802
        %v3409 = vunpack.c.h.b16 %v802
        %v3410 = vunpack.c.l.b16 %v803
        %v3411 = vunpack.c.h.b16 %v803
        %v3412 = vunpack.c.l.b16 %v804
        %v3413 = vunpack.c.h.b16 %v804
        %v3414 = vunpack.c.l.b16 %v805
        %v3415 = vunpack.c.h.b16 %v805
        %v3416 = vunpack.c.l.b16 %v806
        %v3417 = vunpack.c.h.b16 %v806
        %v3418 = vunpack.c.l.b16 %v807
        %v3419 = vunpack.c.h.b16 %v807
        %v3420 = vunpack.c.l.b16 %v808
        %v3421 = vunpack.c.h.b16 %v808
        %v3422 = vunpack.c.l.b16 %v809
        %v3423 = vunpack.c.h.b16 %v809
        %v3424 = vunpack.c.l.b16 %v810
        %v3425 = vunpack.c.h.b16 %v810
        %v3426 = vunpack.c.l.b16 %v811
        %v3427 = vunpack.c.h.b16 %v811
        %v3428 = vunpack.c.l.b16 %v812
        %v3429 = vunpack.c.h.b16 %v812
        %v3430 = vunpack.c.l.b16 %v813
        %v3431 = vunpack.c.h.b16 %v813
        %v3432 = vunpack.c.l.b16 %v814
        %v3433 = vunpack.c.h.b16 %v814
        %v3434 = vunpack.c.l.b16 %v815
        %v3435 = vunpack.c.h.b16 %v815
        %v3436 = vunpack.c.l.b16 %v816
        %v3437 = vunpack.c.h.b16 %v816
        %v3438 = vunpack.c.l.b16 %v817
        %v3439 = vunpack.c.h.b16 %v817
        %v3440 = vunpack.c.l.b16 %v818
        %v3441 = vunpack.c.h.b16 %v818
        %v3442 = vunpack.c.l.b16 %v819
        %v3443 = vunpack.c.h.b16 %v819
        %v3444 = vunpack.c.l.b16 %v820
        %v3445 = vunpack.c.h.b16 %v820
        %v3446 = vunpack.c.l.b16 %v821
        %v3447 = vunpack.c.h.b16 %v821
        %v3448 = vunpack.c.l.b16 %v822
        %v3449 = vunpack.c.h.b16 %v822
        %v3450 = vunpack.c.l.b16 %v823
        %v3451 = vunpack.c.h.b16 %v823
        %v3452 = vunpack.c.l.b16 %v824
        %v3453 = vunpack.c.h.b16 %v824
        %v3454 = vunpack.c.l.b16 %v825
        %v3455 = vunpack.c.h.b16 %v825
        %v3456 = vunpack.c.l.b16 %v826
        %v3457 = vunpack.c.h.b16 %v826
        %v3458 = vunpack.c.l.b16 %v827
        %v3459 = vunpack.c.h.b16 %v827
        %v3460 = vunpack.c.l.b16 %v828
        %v3461 = vunpack.c.h.b16 %v828
        %v3462 = vunpack.c.l.b16 %v829
        %v3463 = vunpack.c.h.b16 %v829
        %v3464 = vunpack.c.l.b16 %v830
        %v3465 = vunpack.c.h.b16 %v830
        %v3466 = vunpack.c.l.b16 %v831
        %v3467 = vunpack.c.h.b16 %v831
        %v3468 = vunpack.c.l.b16 %v832
        %v3469 = vunpack.c.h.b16 %v832
        %v3470 = vunpack.c.l.b16 %v833
        %v3471 = vunpack.c.h.b16 %v833
        %v3472 = vunpack.c.l.b16 %v834
        %v3473 = vunpack.c.h.b16 %v834
        %v3474 = vunpack.c.l.b16 %v835
        %v3475 = vunpack.c.h.b16 %v835
        %v3476 = vunpack.c.l.b16 %v836
        %v3477 = vunpack.c.h.b16 %v836
        %v3478 = vunpack.c.l.b16 %v837
        %v3479 = vunpack.c.h.b16 %v837
        %v3480 = vunpack.c.l.b16 %v838
        %v3481 = vunpack.c.h.b16 %v838
        %v3482 = vunpack.c.l.b16 %v839
        %v3483 = vunpack.c.h.b16 %v839
        %v3484 = vunpack.c.l.b16 %v840
        %v3485 = vunpack.c.h.b16 %v840
        %v3486 = vunpack.c.l.b16 %v841
        %v3487 = vunpack.c.h.b16 %v841
        %v3488 = vunpack.c.l.b16 %v842
        %v3489 = vunpack.c.h.b16 %v842
        %v3490 = vunpack.c.l.b16 %v843
        %v3491 = vunpack.c.h.b16 %v843
        %v3492 = vunpack.c.l.b16 %v844
        %v3493 = vunpack.c.h.b16 %v844
        %v3494 = vunpack.c.l.b16 %v845
        %v3495 = vunpack.c.h.b16 %v845
        %v3496 = vunpack.c.l.b16 %v846
        %v3497 = vunpack.c.h.b16 %v846
        %v3498 = vunpack.c.l.b16 %v847
        %v3499 = vunpack.c.h.b16 %v847
        %v3500 = vunpack.c.l.b16 %v848
        %v3501 = vunpack.c.h.b16 %v848
        %v3502 = vunpack.c.l.b16 %v849
        %v3503 = vunpack.c.h.b16 %v849
        %v3504 = vunpack.c.l.b16 %v850
        %v3505 = vunpack.c.h.b16 %v850
        %v3506 = vunpack.c.l.b16 %v851
        %v3507 = vunpack.c.h.b16 %v851
        %v3508 = vunpack.c.l.b16 %v852
        %v3509 = vunpack.c.h.b16 %v852
        %v3510 = vunpack.c.l.b16 %v853
        %v3511 = vunpack.c.h.b16 %v853
        %v3512 = vunpack.c.l.b16 %v854
        %v3513 = vunpack.c.h.b16 %v854
        %v3514 = vunpack.c.l.b16 %v855
        %v3515 = vunpack.c.h.b16 %v855
        %v3516 = vunpack.c.l.b16 %v856
        %v3517 = vunpack.c.h.b16 %v856
        %v3518 = vunpack.c.l.b16 %v857
        %v3519 = vunpack.c.h.b16 %v857
        %v3520 = vunpack.c.l.b16 %v858
        %v3521 = vunpack.c.h.b16 %v858
        %v3522 = vunpack.c.l.b16 %v859
        %v3523 = vunpack.c.h.b16 %v859
        %v3524 = vunpack.c.l.b16 %v860
        %v3525 = vunpack.c.h.b16 %v860
        %v3526 = vunpack.c.l.b16 %v861
        %v3527 = vunpack.c.h.b16 %v861
        %v3528 = vunpack.c.l.b16 %v862
        %v3529 = vunpack.c.h.b16 %v862
        %v3530 = vunpack.c.l.b16 %v863
        %v3531 = vunpack.c.h.b16 %v863
        %v3532 = vunpack.c.l.b16 %v864
        %v3533 = vunpack.c.h.b16 %v864
        %v3534 = vunpack.c.l.b16 %v865
        %v3535 = vunpack.c.h.b16 %v865
        %v3536 = vunpack.c.l.b16 %v866
        %v3537 = vunpack.c.h.b16 %v866
        %v3538 = vunpack.c.l.b16 %v867
        %v3539 = vunpack.c.h.b16 %v867
        %v3540 = vunpack.c.l.b16 %v868
        %v3541 = vunpack.c.h.b16 %v868
        %v3542 = vunpack.c.l.b16 %v869
        %v3543 = vunpack.c.h.b16 %v869
        %v3544 = vunpack.c.l.b16 %v870
        %v3545 = vunpack.c.h.b16 %v870
        %v3546 = vunpack.c.l.b16 %v871
        %v3547 = vunpack.c.h.b16 %v871
        %v3548 = vunpack.c.l.b16 %v872
        %v3549 = vunpack.c.h.b16 %v872
        %v3550 = vunpack.c.l.b16 %v873
        %v3551 = vunpack.c.h.b16 %v873
        %v3552 = vunpack.c.l.b16 %v874
        %v3553 = vunpack.c.h.b16 %v874
        %v3554 = vunpack.c.l.b16 %v875
        %v3555 = vunpack.c.h.b16 %v875
        %v3556 = vunpack.c.l.b16 %v876
        %v3557 = vunpack.c.h.b16 %v876
        %v3558 = vunpack.c.l.b16 %v877
        %v3559 = vunpack.c.h.b16 %v877
        %v3560 = vunpack.c.l.b16 %v878
        %v3561 = vunpack.c.h.b16 %v878
        %v3562 = vunpack.c.l.b16 %v879
        %v3563 = vunpack.c.h.b16 %v879
        %v3564 = vunpack.c.l.b16 %v880
        %v3565 = vunpack.c.h.b16 %v880
        %v3566 = vunpack.c.l.b16 %v881
        %v3567 = vunpack.c.h.b16 %v881
        %v3568 = vunpack.c.l.b16 %v882
        %v3569 = vunpack.c.h.b16 %v882
        %v3570 = vunpack.c.l.b16 %v883
        %v3571 = vunpack.c.h.b16 %v883
        %v3572 = vunpack.c.l.b16 %v884
        %v3573 = vunpack.c.h.b16 %v884
        %v3574 = vunpack.c.l.b16 %v885
        %v3575 = vunpack.c.h.b16 %v885
        %v3576 = vunpack.c.l.b16 %v886
        %v3577 = vunpack.c.h.b16 %v886
        %v3578 = vunpack.c.l.b16 %v887
        %v3579 = vunpack.c.h.b16 %v887
        %v3580 = vunpack.c.l.b16 %v888
        %v3581 = vunpack.c.h.b16 %v888
        %v3582 = vunpack.c.l.b16 %v889
        %v3583 = vunpack.c.h.b16 %v889
        %v3584 = vunpack.c.l.b16 %v890
        %v3585 = vunpack.c.h.b16 %v890
        %v3586 = vunpack.c.l.b16 %v891
        %v3587 = vunpack.c.h.b16 %v891
        %v3588 = vunpack.c.l.b16 %v892
        %v3589 = vunpack.c.h.b16 %v892
        %v3590 = vunpack.c.l.b16 %v893
        %v3591 = vunpack.c.h.b16 %v893
        %v3592 = vunpack.c.l.b16 %v894
        %v3593 = vunpack.c.h.b16 %v894
        %v3594 = vunpack.c.l.b16 %v895
        %v3595 = vunpack.c.h.b16 %v895
        %v3596 = vunpack.c.l.b16 %v896
        %v3597 = vunpack.c.h.b16 %v896
        %v3598 = vunpack.c.l.b16 %v897
        %v3599 = vunpack.c.h.b16 %v897
        %v3600 = vunpack.c.l.b16 %v898
        %v3601 = vunpack.c.h.b16 %v898
        %v3602 = vunpack.c.l.b16 %v899
        %v3603 = vunpack.c.h.b16 %v899
        %v3604 = vunpack.c.l.b16 %v900
        %v3605 = vunpack.c.h.b16 %v900
        %v3606 = vunpack.c.l.b16 %v901
        %v3607 = vunpack.c.h.b16 %v901
        %v3608 = vunpack.c.l.b16 %v902
        %v3609 = vunpack.c.h.b16 %v902
        %v3610 = vunpack.c.l.b16 %v903
        %v3611 = vunpack.c.h.b16 %v903
        %v3612 = vunpack.c.l.b16 %v904
        %v3613 = vunpack.c.h.b16 %v904
        %v3614 = vunpack.c.l.b16 %v905
        %v3615 = vunpack.c.h.b16 %v905
        %v3616 = vunpack.c.l.b16 %v906
        %v3617 = vunpack.c.h.b16 %v906
        %v3618 = vunpack.c.l.b16 %v907
        %v3619 = vunpack.c.h.b16 %v907
        %v3620 = vunpack.c.l.b16 %v908
        %v3621 = vunpack.c.h.b16 %v908
        %v3622 = vunpack.c.l.b16 %v909
        %v3623 = vunpack.c.h.b16 %v909
        %v3624 = vunpack.c.l.b16 %v910
        %v3625 = vunpack.c.h.b16 %v910
        %v3626 = vunpack.c.l.b16 %v911
        %v3627 = vunpack.c.h.b16 %v911
        %v3628 = vunpack.c.l.b16 %v912
        %v3629 = vunpack.c.h.b16 %v912
        %v3630 = vunpack.c.l.b16 %v913
        %v3631 = vunpack.c.h.b16 %v913
        %v3632 = vunpack.c.l.b16 %v914
        %v3633 = vunpack.c.h.b16 %v914
        %v3634 = vunpack.c.l.b16 %v915
        %v3635 = vunpack.c.h.b16 %v915
        %v3636 = vunpack.c.l.b16 %v916
        %v3637 = vunpack.c.h.b16 %v916
        %v3638 = vunpack.c.l.b16 %v917
        %v3639 = vunpack.c.h.b16 %v917
        %v3640 = vunpack.c.l.b16 %v918
        %v3641 = vunpack.c.h.b16 %v918
        %v3642 = vunpack.c.l.b16 %v919
        %v3643 = vunpack.c.h.b16 %v919
        %v3644 = vunpack.c.l.b16 %v920
        %v3645 = vunpack.c.h.b16 %v920
        %v3646 = vunpack.c.l.b16 %v921
        %v3647 = vunpack.c.h.b16 %v921
        %v3648 = vunpack.c.l.b16 %v922
        %v3649 = vunpack.c.h.b16 %v922
        %v3650 = vunpack.c.l.b16 %v923
        %v3651 = vunpack.c.h.b16 %v923
        %v3652 = vunpack.c.l.b16 %v924
        %v3653 = vunpack.c.h.b16 %v924
        %v3654 = vunpack.c.l.b16 %v925
        %v3655 = vunpack.c.h.b16 %v925
        %v3656 = vunpack.c.l.b16 %v926
        %v3657 = vunpack.c.h.b16 %v926
        %v3658 = vunpack.c.l.b16 %v927
        %v3659 = vunpack.c.h.b16 %v927
        %v3660 = vunpack.c.l.b16 %v928
        %v3661 = vunpack.c.h.b16 %v928
        %v3662 = vunpack.c.l.b16 %v929
        %v3663 = vunpack.c.h.b16 %v929
        %v3664 = vunpack.c.l.b16 %v930
        %v3665 = vunpack.c.h.b16 %v930
        %v3666 = vunpack.c.l.b16 %v931
        %v3667 = vunpack.c.h.b16 %v931
        %v3668 = vunpack.c.l.b16 %v932
        %v3669 = vunpack.c.h.b16 %v932
        %v3670 = vunpack.c.l.b16 %v933
        %v3671 = vunpack.c.h.b16 %v933
        %v3672 = vunpack.c.l.b16 %v934
        %v3673 = vunpack.c.h.b16 %v934
        %v3674 = vunpack.c.l.b16 %v935
        %v3675 = vunpack.c.h.b16 %v935
        %v3676 = vunpack.c.l.b16 %v936
        %v3677 = vunpack.c.h.b16 %v936
        %v3678 = vunpack.c.l.b16 %v937
        %v3679 = vunpack.c.h.b16 %v937
        %v3680 = vunpack.c.l.b16 %v938
        %v3681 = vunpack.c.h.b16 %v938
        %v3682 = vunpack.c.l.b16 %v939
        %v3683 = vunpack.c.h.b16 %v939
        %v3684 = vunpack.c.l.b16 %v940
        %v3685 = vunpack.c.h.b16 %v940
        %v3686 = vunpack.c.l.b16 %v941
        %v3687 = vunpack.c.h.b16 %v941
        %v3688 = vunpack.c.l.b16 %v942
        %v3689 = vunpack.c.h.b16 %v942
        %v3690 = vunpack.c.l.b16 %v943
        %v3691 = vunpack.c.h.b16 %v943
        %v3692 = vunpack.c.l.b16 %v944
        %v3693 = vunpack.c.h.b16 %v944
        %v3694 = vunpack.c.l.b16 %v945
        %v3695 = vunpack.c.h.b16 %v945
        %v3696 = vunpack.c.l.b16 %v946
        %v3697 = vunpack.c.h.b16 %v946
        %v3698 = vunpack.c.l.b16 %v947
        %v3699 = vunpack.c.h.b16 %v947
        %v3700 = vunpack.c.l.b16 %v948
        %v3701 = vunpack.c.h.b16 %v948
        %v3702 = vunpack.c.l.b16 %v949
        %v3703 = vunpack.c.h.b16 %v949
        %v3704 = vunpack.c.l.b16 %v950
        %v3705 = vunpack.c.h.b16 %v950
        %v3706 = vunpack.c.l.b16 %v951
        %v3707 = vunpack.c.h.b16 %v951
        %v3708 = vunpack.c.l.b16 %v952
        %v3709 = vunpack.c.h.b16 %v952
        %v3710 = vunpack.c.l.b16 %v953
        %v3711 = vunpack.c.h.b16 %v953
        %v3712 = vunpack.c.l.b16 %v954
        %v3713 = vunpack.c.h.b16 %v954
        %v3714 = vunpack.c.l.b16 %v955
        %v3715 = vunpack.c.h.b16 %v955
        %v3716 = vunpack.c.l.b16 %v956
        %v3717 = vunpack.c.h.b16 %v956
        %v3718 = vunpack.c.l.b16 %v957
        %v3719 = vunpack.c.h.b16 %v957
        %v3720 = vunpack.c.l.b16 %v958
        %v3721 = vunpack.c.h.b16 %v958
        %v3722 = vunpack.c.l.b16 %v959
        %v3723 = vunpack.c.h.b16 %v959
        %v3724 = vunpack.c.l.b16 %v960
        %v3725 = vunpack.c.h.b16 %v960
        %v3726 = vunpack.c.l.b16 %v961
        %v3727 = vunpack.c.h.b16 %v961
        %v3728 = vunpack.c.l.b16 %v962
        %v3729 = vunpack.c.h.b16 %v962
        %v3730 = vunpack.c.l.b16 %v963
        %v3731 = vunpack.c.h.b16 %v963
        %v3732 = vunpack.c.l.b16 %v964
        %v3733 = vunpack.c.h.b16 %v964
        %v3734 = vunpack.c.l.b16 %v965
        %v3735 = vunpack.c.h.b16 %v965
        %v3736 = vunpack.c.l.b16 %v966
        %v3737 = vunpack.c.h.b16 %v966
        %v3738 = vunpack.c.l.b16 %v967
        %v3739 = vunpack.c.h.b16 %v967
        %v3740 = vunpack.c.l.b16 %v968
        %v3741 = vunpack.c.h.b16 %v968
        %v3742 = vunpack.c.l.b16 %v969
        %v3743 = vunpack.c.h.b16 %v969
        %v3744 = vunpack.c.l.b16 %v970
        %v3745 = vunpack.c.h.b16 %v970
        %v3746 = vunpack.c.l.b16 %v971
        %v3747 = vunpack.c.h.b16 %v971
        %v3748 = vunpack.c.l.b16 %v972
        %v3749 = vunpack.c.h.b16 %v972
        %v3750 = vunpack.c.l.b16 %v973
        %v3751 = vunpack.c.h.b16 %v973
        %v3752 = vunpack.c.l.b16 %v974
        %v3753 = vunpack.c.h.b16 %v974
        %v3754 = vunpack.c.l.b16 %v975
        %v3755 = vunpack.c.h.b16 %v975
        %v3756 = vunpack.c.l.b16 %v976
        %v3757 = vunpack.c.h.b16 %v976
        %v3758 = vunpack.c.l.b16 %v977
        %v3759 = vunpack.c.h.b16 %v977
        %v3760 = vunpack.c.l.b16 %v978
        %v3761 = vunpack.c.h.b16 %v978
        %v3762 = vunpack.c.l.b16 %v979
        %v3763 = vunpack.c.h.b16 %v979
        %v3764 = vunpack.c.l.b16 %v980
        %v3765 = vunpack.c.h.b16 %v980
        %v3766 = vunpack.c.l.b16 %v981
        %v3767 = vunpack.c.h.b16 %v981
        %v3768 = vunpack.c.l.b16 %v982
        %v3769 = vunpack.c.h.b16 %v982
        %v3770 = vunpack.c.l.b16 %v983
        %v3771 = vunpack.c.h.b16 %v983
        %v3772 = vunpack.c.l.b16 %v984
        %v3773 = vunpack.c.h.b16 %v984
        %v3774 = vunpack.c.l.b16 %v985
        %v3775 = vunpack.c.h.b16 %v985
        %v3776 = vunpack.c.l.b16 %v986
        %v3777 = vunpack.c.h.b16 %v986
        %v3778 = vunpack.c.l.b16 %v987
        %v3779 = vunpack.c.h.b16 %v987
        %v3780 = vunpack.c.l.b16 %v988
        %v3781 = vunpack.c.h.b16 %v988
        %v3782 = vunpack.c.l.b16 %v989
        %v3783 = vunpack.c.h.b16 %v989
        %v3784 = vunpack.c.l.b16 %v990
        %v3785 = vunpack.c.h.b16 %v990
        %v3786 = vunpack.c.l.b16 %v991
        %v3787 = vunpack.c.h.b16 %v991
        %v3788 = vunpack.c.l.b16 %v992
        %v3789 = vunpack.c.h.b16 %v992
        %v3790 = vunpack.c.l.b16 %v993
        %v3791 = vunpack.c.h.b16 %v993
        %v3792 = vunpack.c.l.b16 %v994
        %v3793 = vunpack.c.h.b16 %v994
        %v3794 = vunpack.c.l.b16 %v995
        %v3795 = vunpack.c.h.b16 %v995
        %v3796 = vunpack.c.l.b16 %v996
        %v3797 = vunpack.c.h.b16 %v996
        %v3798 = vunpack.c.l.b16 %v997
        %v3799 = vunpack.c.h.b16 %v997
        %v3800 = vunpack.c.l.b16 %v998
        %v3801 = vunpack.c.h.b16 %v998
        %v3802 = vunpack.c.l.b16 %v999
        %v3803 = vunpack.c.h.b16 %v999
        %v3804 = vunpack.c.l.b16 %v1000
        %v3805 = vunpack.c.h.b16 %v1000
        %v3806 = vunpack.c.l.b16 %v1001
        %v3807 = vunpack.c.h.b16 %v1001
        %v3808 = vunpack.c.l.b16 %v1002
        %v3809 = vunpack.c.h.b16 %v1002
        %v3810 = vunpack.c.l.b16 %v1003
        %v3811 = vunpack.c.h.b16 %v1003
        %v3812 = vunpack.c.l.b16 %v1004
        %v3813 = vunpack.c.h.b16 %v1004
        %v3814 = vunpack.c.l.b16 %v1005
        %v3815 = vunpack.c.h.b16 %v1005
        %v3816 = vunpack.c.l.b16 %v1006
        %v3817 = vunpack.c.h.b16 %v1006
        %v3818 = vunpack.c.l.b16 %v1007
        %v3819 = vunpack.c.h.b16 %v1007
        %v3820 = vunpack.c.l.b16 %v1008
        %v3821 = vunpack.c.h.b16 %v1008
        %v3822 = vunpack.c.l.b16 %v1009
        %v3823 = vunpack.c.h.b16 %v1009
        %v3824 = vunpack.c.l.b16 %v1010
        %v3825 = vunpack.c.h.b16 %v1010
        %v3826 = vunpack.c.l.b16 %v1011
        %v3827 = vunpack.c.h.b16 %v1011
        %v3828 = vunpack.c.l.b16 %v1012
        %v3829 = vunpack.c.h.b16 %v1012
        %v3830 = vunpack.c.l.b16 %v1013
        %v3831 = vunpack.c.h.b16 %v1013
        %v3832 = vunpack.c.l.b16 %v1014
        %v3833 = vunpack.c.h.b16 %v1014
        %v3834 = vunpack.c.l.b16 %v1015
        %v3835 = vunpack.c.h.b16 %v1015
        %v3836 = vunpack.c.l.b16 %v1016
        %v3837 = vunpack.c.h.b16 %v1016
        %v3838 = vunpack.c.l.b16 %v1017
        %v3839 = vunpack.c.h.b16 %v1017
        %v3840 = vunpack.c.l.b16 %v1018
        %v3841 = vunpack.c.h.b16 %v1018
        %v3842 = vunpack.c.l.b16 %v1019
        %v3843 = vunpack.c.h.b16 %v1019
        %v3844 = vunpack.c.l.b16 %v1020
        %v3845 = vunpack.c.h.b16 %v1020
        %v3846 = vunpack.c.l.b16 %v1021
        %v3847 = vunpack.c.h.b16 %v1021
        %v3848 = vunpack.c.l.b16 %v1022
        %v3849 = vunpack.c.h.b16 %v1022
        %v3850 = vunpack.c.l.b16 %v1023
        %v3851 = vunpack.c.h.b16 %v1023
        %v3852 = vunpack.c.l.b16 %v1024
        %v3853 = vunpack.c.h.b16 %v1024
        %v3854 = vunpack.c.l.b16 %v1025
        %v3855 = vunpack.c.h.b16 %v1025
        %v3856 = vunpack.c.l.b16 %v1026
        %v3857 = vunpack.c.h.b16 %v1026
        %v3858 = vunpack.c.l.b16 %v1027
        %v3859 = vunpack.c.h.b16 %v1027
        %v3860 = vunpack.c.l.b16 %v1028
        %v3861 = vunpack.c.h.b16 %v1028
        %v3862 = vunpack.c.l.b16 %v1029
        %v3863 = vunpack.c.h.b16 %v1029
        %v3864 = vunpack.c.l.b16 %v1030
        %v3865 = vunpack.c.h.b16 %v1030
        %v3866 = vunpack.c.l.b16 %v1031
        %v3867 = vunpack.c.h.b16 %v1031
        %v3868 = vunpack.c.l.b16 %v1032
        %v3869 = vunpack.c.h.b16 %v1032
        %v3870 = vunpack.c.l.b16 %v1033
        %v3871 = vunpack.c.h.b16 %v1033
        %v3872 = vunpack.c.l.b16 %v1034
        %v3873 = vunpack.c.h.b16 %v1034
        %v3874 = vunpack.c.l.b16 %v1035
        %v3875 = vunpack.c.h.b16 %v1035
        %v3876 = vunpack.c.l.b16 %v1036
        %v3877 = vunpack.c.h.b16 %v1036
        %v3878 = vunpack.c.l.b16 %v1037
        %v3879 = vunpack.c.h.b16 %v1037
        %v3880 = vunpack.c.l.b16 %v1038
        %v3881 = vunpack.c.h.b16 %v1038
        %v3882 = vunpack.c.l.b16 %v1039
        %v3883 = vunpack.c.h.b16 %v1039
        %v3884 = vunpack.c.l.b16 %v1040
        %v3885 = vunpack.c.h.b16 %v1040
        %v3886 = vunpack.c.l.b16 %v1041
        %v3887 = vunpack.c.h.b16 %v1041
        %v3888 = vunpack.c.l.b16 %v1042
        %v3889 = vunpack.c.h.b16 %v1042
        %v3890 = vunpack.c.l.b16 %v1043
        %v3891 = vunpack.c.h.b16 %v1043
        %v3892 = vunpack.c.l.b16 %v1044
        %v3893 = vunpack.c.h.b16 %v1044
        %v3894 = vunpack.c.l.b16 %v1045
        %v3895 = vunpack.c.h.b16 %v1045
        %v3896 = vunpack.c.l.b16 %v1046
        %v3897 = vunpack.c.h.b16 %v1046
        %v3898 = vunpack.c.l.b16 %v1047
        %v3899 = vunpack.c.h.b16 %v1047
        %v3900 = vunpack.c.l.b16 %v1048
        %v3901 = vunpack.c.h.b16 %v1048
        %v3902 = vunpack.c.l.b16 %v1049
        %v3903 = vunpack.c.h.b16 %v1049
        %v3904 = vunpack.c.l.b16 %v1050
        %v3905 = vunpack.c.h.b16 %v1050
        %v3906 = vunpack.c.l.b16 %v1051
        %v3907 = vunpack.c.h.b16 %v1051
        %v3908 = vunpack.c.l.b16 %v1052
        %v3909 = vunpack.c.h.b16 %v1052
        %v3910 = vunpack.c.l.b16 %v1053
        %v3911 = vunpack.c.h.b16 %v1053
        %v3912 = vunpack.c.l.b16 %v1054
        %v3913 = vunpack.c.h.b16 %v1054
        %v3914 = vunpack.c.l.b16 %v1055
        %v3915 = vunpack.c.h.b16 %v1055
        %v3916 = vunpack.c.l.b16 %v1056
        %v3917 = vunpack.c.h.b16 %v1056
        %v3918 = vunpack.c.l.b16 %v1057
        %v3919 = vunpack.c.h.b16 %v1057
        %v3920 = vunpack.c.l.b16 %v1058
        %v3921 = vunpack.c.h.b16 %v1058
        %v3922 = vunpack.c.l.b16 %v1059
        %v3923 = vunpack.c.h.b16 %v1059
        %v3924 = vunpack.c.l.b16 %v1060
        %v3925 = vunpack.c.h.b16 %v1060
        %v3926 = vunpack.c.l.b16 %v1061
        %v3927 = vunpack.c.h.b16 %v1061
        %v3928 = vunpack.c.l.b16 %v1062
        %v3929 = vunpack.c.h.b16 %v1062
        %v3930 = vunpack.c.l.b16 %v1063
        %v3931 = vunpack.c.h.b16 %v1063
        %v3932 = vunpack.c.l.b16 %v1064
        %v3933 = vunpack.c.h.b16 %v1064
        %v3934 = vunpack.c.l.b16 %v1065
        %v3935 = vunpack.c.h.b16 %v1065
        %v3936 = vunpack.c.l.b16 %v1066
        %v3937 = vunpack.c.h.b16 %v1066
        %v3938 = vunpack.c.l.b16 %v1067
        %v3939 = vunpack.c.h.b16 %v1067
        %v3940 = vunpack.c.l.b16 %v1068
        %v3941 = vunpack.c.h.b16 %v1068
        %v3942 = vunpack.c.l.b16 %v1069
        %v3943 = vunpack.c.h.b16 %v1069
        %v3944 = vunpack.c.l.b16 %v1070
        %v3945 = vunpack.c.h.b16 %v1070
        %v3946 = vunpack.c.l.b16 %v1071
        %v3947 = vunpack.c.h.b16 %v1071
        %v3948 = vunpack.c.l.b16 %v1072
        %v3949 = vunpack.c.h.b16 %v1072
        %v3950 = vunpack.c.l.b16 %v1073
        %v3951 = vunpack.c.h.b16 %v1073
        %v3952 = vunpack.c.l.b16 %v1074
        %v3953 = vunpack.c.h.b16 %v1074
        %v3954 = vunpack.c.l.b16 %v1075
        %v3955 = vunpack.c.h.b16 %v1075
        %v3956 = vunpack.c.l.b16 %v1076
        %v3957 = vunpack.c.h.b16 %v1076
        %v3958 = vunpack.c.l.b16 %v1077
        %v3959 = vunpack.c.h.b16 %v1077
        %v3960 = vunpack.c.l.b16 %v1078
        %v3961 = vunpack.c.h.b16 %v1078
        %v3962 = vunpack.c.l.b16 %v1079
        %v3963 = vunpack.c.h.b16 %v1079
        %v3964 = vunpack.c.l.b16 %v1080
        %v3965 = vunpack.c.h.b16 %v1080
        %v3966 = vunpack.c.l.b16 %v1081
        %v3967 = vunpack.c.h.b16 %v1081
        %v3968 = vunpack.c.l.b16 %v1082
        %v3969 = vunpack.c.h.b16 %v1082
        %v3970 = vunpack.c.l.b16 %v1083
        %v3971 = vunpack.c.h.b16 %v1083
        %v3972 = vunpack.c.l.b16 %v1084
        %v3973 = vunpack.c.h.b16 %v1084
        %v3974 = vunpack.c.l.b16 %v1085
        %v3975 = vunpack.c.h.b16 %v1085
        %v3976 = vunpack.c.l.b16 %v1086
        %v3977 = vunpack.c.h.b16 %v1086
        %v3978 = vunpack.c.l.b16 %v1087
        %v3979 = vunpack.c.h.b16 %v1087
        %v3980 = vunpack.c.l.b16 %v1088
        %v3981 = vunpack.c.h.b16 %v1088
        %v3982 = vunpack.c.l.b16 %v1089
        %v3983 = vunpack.c.h.b16 %v1089
        %v3984 = vunpack.c.l.b16 %v1090
        %v3985 = vunpack.c.h.b16 %v1090
        %v3986 = vunpack.c.l.b16 %v1091
        %v3987 = vunpack.c.h.b16 %v1091
        %v3988 = vunpack.c.l.b16 %v1092
        %v3989 = vunpack.c.h.b16 %v1092
        %v3990 = vunpack.c.l.b16 %v1093
        %v3991 = vunpack.c.h.b16 %v1093
        %v3992 = vunpack.c.l.b16 %v1094
        %v3993 = vunpack.c.h.b16 %v1094
        %v3994 = vunpack.c.l.b16 %v1095
        %v3995 = vunpack.c.h.b16 %v1095
        %v3996 = vunpack.c.l.b16 %v1096
        %v3997 = vunpack.c.h.b16 %v1096
        %v3998 = vunpack.c.l.b16 %v1097
        %v3999 = vunpack.c.h.b16 %v1097
        %v4000 = vunpack.c.l.b16 %v1098
        %v4001 = vunpack.c.h.b16 %v1098
        %v4002 = vunpack.c.l.b16 %v1099
        %v4003 = vunpack.c.h.b16 %v1099
        %v4004 = vunpack.c.l.b16 %v1100
        %v4005 = vunpack.c.h.b16 %v1100
        %v4006 = vunpack.c.l.b16 %v1101
        %v4007 = vunpack.c.h.b16 %v1101
        %v4008 = vunpack.c.l.b16 %v1102
        %v4009 = vunpack.c.h.b16 %v1102
        %v4010 = vunpack.c.l.b16 %v1103
        %v4011 = vunpack.c.h.b16 %v1103
        %v4012 = vunpack.c.l.b16 %v1104
        %v4013 = vunpack.c.h.b16 %v1104
        %v4014 = vunpack.c.l.b16 %v1105
        %v4015 = vunpack.c.h.b16 %v1105
        %v4016 = vunpack.c.l.b16 %v1106
        %v4017 = vunpack.c.h.b16 %v1106
        %v4018 = vunpack.c.l.b16 %v1107
        %v4019 = vunpack.c.h.b16 %v1107
        %v4020 = vunpack.c.l.b16 %v1108
        %v4021 = vunpack.c.h.b16 %v1108
        %v4022 = vunpack.c.l.b16 %v1109
        %v4023 = vunpack.c.h.b16 %v1109
        %v4024 = vunpack.c.l.b16 %v1110
        %v4025 = vunpack.c.h.b16 %v1110
        %v4026 = vunpack.c.l.b16 %v1111
        %v4027 = vunpack.c.h.b16 %v1111
        %v4028 = vunpack.c.l.b16 %v1112
        %v4029 = vunpack.c.h.b16 %v1112
        %v4030 = vunpack.c.l.b16 %v1113
        %v4031 = vunpack.c.h.b16 %v1113
        %v4032 = vunpack.c.l.b16 %v1114
        %v4033 = vunpack.c.h.b16 %v1114
        %v4034 = vunpack.c.l.b16 %v1115
        %v4035 = vunpack.c.h.b16 %v1115
        %v4036 = vunpack.c.l.b16 %v1116
        %v4037 = vunpack.c.h.b16 %v1116
        %v4038 = vunpack.c.l.b16 %v1117
        %v4039 = vunpack.c.h.b16 %v1117
        %v4040 = vunpack.c.l.b16 %v1118
        %v4041 = vunpack.c.h.b16 %v1118
        %v4042 = vunpack.c.l.b16 %v1119
        %v4043 = vunpack.c.h.b16 %v1119
        %v4044 = vunpack.c.l.b16 %v1120
        %v4045 = vunpack.c.h.b16 %v1120
        %v4046 = vunpack.c.l.b16 %v1121
        %v4047 = vunpack.c.h.b16 %v1121
        %v4048 = vunpack.c.l.b16 %v1122
        %v4049 = vunpack.c.h.b16 %v1122
        %v4050 = vunpack.c.l.b16 %v1123
        %v4051 = vunpack.c.h.b16 %v1123
        %v4052 = vunpack.c.l.b16 %v1124
        %v4053 = vunpack.c.h.b16 %v1124
        %v4054 = vunpack.c.l.b16 %v1125
        %v4055 = vunpack.c.h.b16 %v1125
        %v4056 = vunpack.c.l.b16 %v1126
        %v4057 = vunpack.c.h.b16 %v1126
        %v4058 = vunpack.c.l.b16 %v1127
        %v4059 = vunpack.c.h.b16 %v1127
        %v4060 = vunpack.c.l.b16 %v1128
        %v4061 = vunpack.c.h.b16 %v1128
        %v4062 = vunpack.c.l.b16 %v1129
        %v4063 = vunpack.c.h.b16 %v1129
        %v4064 = vunpack.c.l.b16 %v1130
        %v4065 = vunpack.c.h.b16 %v1130
        %v4066 = vunpack.c.l.b16 %v1131
        %v4067 = vunpack.c.h.b16 %v1131
        %v4068 = vunpack.c.l.b16 %v1132
        %v4069 = vunpack.c.h.b16 %v1132
        %v4070 = vunpack.c.l.b16 %v1133
        %v4071 = vunpack.c.h.b16 %v1133
        %v4072 = vunpack.c.l.b16 %v1134
        %v4073 = vunpack.c.h.b16 %v1134
        %v4074 = vunpack.c.l.b16 %v1135
        %v4075 = vunpack.c.h.b16 %v1135
        %v4076 = vunpack.c.l.b16 %v1136
        %v4077 = vunpack.c.h.b16 %v1136
        %v4078 = vunpack.c.l.b16 %v1137
        %v4079 = vunpack.c.h.b16 %v1137
        %v4080 = vunpack.c.l.b16 %v1138
        %v4081 = vunpack.c.h.b16 %v1138
        %v4082 = vunpack.c.l.b16 %v1139
        %v4083 = vunpack.c.h.b16 %v1139
        %v4084 = vunpack.c.l.b16 %v1140
        %v4085 = vunpack.c.h.b16 %v1140
        %v4086 = vunpack.c.l.b16 %v1141
        %v4087 = vunpack.c.h.b16 %v1141
        %v4088 = vunpack.c.l.b16 %v1142
        %v4089 = vunpack.c.h.b16 %v1142
        %v4090 = vunpack.c.l.b16 %v1143
        %v4091 = vunpack.c.h.b16 %v1143
        %v4092 = vunpack.c.l.b16 %v1144
        %v4093 = vunpack.c.h.b16 %v1144
        %v4094 = vunpack.c.l.b16 %v1145
        %v4095 = vunpack.c.h.b16 %v1145
        %v4096 = vunpack.c.l.b16 %v1146
        %v4097 = vunpack.c.h.b16 %v1146
        %v4098 = vunpack.c.l.b16 %v1147
        %v4099 = vunpack.c.h.b16 %v1147
        %v4100 = vunpack.c.l.b16 %v1148
        %v4101 = vunpack.c.h.b16 %v1148
        %v4102 = vunpack.c.l.b16 %v1149
        %v4103 = vunpack.c.h.b16 %v1149
        %v4104 = vunpack.c.l.b16 %v1150
        %v4105 = vunpack.c.h.b16 %v1150
        %v4106 = vunpack.c.l.b16 %v1151
        %v4107 = vunpack.c.h.b16 %v1151
        %v4108 = vunpack.c.l.b16 %v1152
        %v4109 = vunpack.c.h.b16 %v1152
        %v4110 = vunpack.c.l.b16 %v1153
        %v4111 = vunpack.c.h.b16 %v1153
        %v4112 = vunpack.c.l.b16 %v1154
        %v4113 = vunpack.c.h.b16 %v1154
        %v4114 = vunpack.c.l.b16 %v1155
        %v4115 = vunpack.c.h.b16 %v1155
        %v4116 = vunpack.c.l.b16 %v1156
        %v4117 = vunpack.c.h.b16 %v1156
        %v4118 = vunpack.c.l.b16 %v1157
        %v4119 = vunpack.c.h.b16 %v1157
        %v4120 = vunpack.c.l.b16 %v1158
        %v4121 = vunpack.c.h.b16 %v1158
        %v4122 = vunpack.c.l.b16 %v1159
        %v4123 = vunpack.c.h.b16 %v1159
        %v4124 = vunpack.c.l.b16 %v1160
        %v4125 = vunpack.c.h.b16 %v1160
        %v4126 = vunpack.c.l.b16 %v1161
        %v4127 = vunpack.c.h.b16 %v1161
        %v4128 = vunpack.c.l.b16 %v1162
        %v4129 = vunpack.c.h.b16 %v1162
        %v4130 = vunpack.c.l.b16 %v1163
        %v4131 = vunpack.c.h.b16 %v1163
        %v4132 = vunpack.c.l.b16 %v1164
        %v4133 = vunpack.c.h.b16 %v1164
        %v4134 = vunpack.c.l.b16 %v1165
        %v4135 = vunpack.c.h.b16 %v1165
        %v4136 = vunpack.c.l.b16 %v1166
        %v4137 = vunpack.c.h.b16 %v1166
        %v4138 = vunpack.c.l.b16 %v1167
        %v4139 = vunpack.c.h.b16 %v1167
        %v4140 = vunpack.c.l.b16 %v1168
        %v4141 = vunpack.c.h.b16 %v1168
        %v4142 = vunpack.c.l.b16 %v1169
        %v4143 = vunpack.c.h.b16 %v1169
        %v4144 = vunpack.c.l.b16 %v1170
        %v4145 = vunpack.c.h.b16 %v1170
        %v4146 = vunpack.c.l.b16 %v1171
        %v4147 = vunpack.c.h.b16 %v1171
        %v4148 = vunpack.c.l.b16 %v1172
        %v4149 = vunpack.c.h.b16 %v1172
        %v4150 = vunpack.c.l.b16 %v1173
        %v4151 = vunpack.c.h.b16 %v1173
        %v4152 = vunpack.c.l.b16 %v1174
        %v4153 = vunpack.c.h.b16 %v1174
        %v4154 = vunpack.c.l.b16 %v1175
        %v4155 = vunpack.c.h.b16 %v1175
        %v4156 = vunpack.c.l.b16 %v1176
        %v4157 = vunpack.c.h.b16 %v1176
        %v4158 = vunpack.c.l.b16 %v1177
        %v4159 = vunpack.c.h.b16 %v1177
        %v4160 = vunpack.c.l.b16 %v1178
        %v4161 = vunpack.c.h.b16 %v1178
        %v4162 = vunpack.c.l.b16 %v1179
        %v4163 = vunpack.c.h.b16 %v1179
        %v4164 = vunpack.c.l.b16 %v1180
        %v4165 = vunpack.c.h.b16 %v1180
        %v4166 = vunpack.c.l.b16 %v1181
        %v4167 = vunpack.c.h.b16 %v1181
        %v4168 = vunpack.c.l.b16 %v1182
        %v4169 = vunpack.c.h.b16 %v1182
        %v4170 = vunpack.c.l.b16 %v1183
        %v4171 = vunpack.c.h.b16 %v1183
        %v4172 = vunpack.c.l.b16 %v1184
        %v4173 = vunpack.c.h.b16 %v1184
        %v4174 = vunpack.c.l.b16 %v1185
        %v4175 = vunpack.c.h.b16 %v1185
        %v4176 = vunpack.c.l.b16 %v1186
        %v4177 = vunpack.c.h.b16 %v1186
        %v4178 = vunpack.c.l.b16 %v1187
        %v4179 = vunpack.c.h.b16 %v1187
        %v4180 = vunpack.c.l.b16 %v1188
        %v4181 = vunpack.c.h.b16 %v1188
        %v4182 = vunpack.c.l.b16 %v1189
        %v4183 = vunpack.c.h.b16 %v1189
        %v4184 = vunpack.c.l.b16 %v1190
        %v4185 = vunpack.c.h.b16 %v1190
        %v4186 = vunpack.c.l.b16 %v1191
        %v4187 = vunpack.c.h.b16 %v1191
        %v4188 = vunpack.c.l.b16 %v1192
        %v4189 = vunpack.c.h.b16 %v1192
        %v4190 = vunpack.c.l.b16 %v1193
        %v4191 = vunpack.c.h.b16 %v1193
        %v4192 = vunpack.c.l.b16 %v1194
        %v4193 = vunpack.c.h.b16 %v1194
        %v4194 = vunpack.c.l.b16 %v1195
        %v4195 = vunpack.c.h.b16 %v1195
        %v4196 = vunpack.c.l.b16 %v1196
        %v4197 = vunpack.c.h.b16 %v1196
        %v4198 = vunpack.c.l.b16 %v1197
        %v4199 = vunpack.c.h.b16 %v1197
        %v4200 = vunpack.c.l.b16 %v1198
        %v4201 = vunpack.c.h.b16 %v1198
        %v4202 = vunpack.c.l.b16 %v1199
        %v4203 = vunpack.c.h.b16 %v1199
        %v4204 = vunpack.c.l.b16 %v1200
        %v4205 = vunpack.c.h.b16 %v1200
        %v4206 = vunpack.c.l.b16 %v1201
        %v4207 = vunpack.c.h.b16 %v1201
        %v4208 = vunpack.c.l.b16 %v1202
        %v4209 = vunpack.c.h.b16 %v1202
        %v4210 = vunpack.c.l.b16 %v1203
        %v4211 = vunpack.c.h.b16 %v1203
        %v4212 = vunpack.c.l.b16 %v1204
        %v4213 = vunpack.c.h.b16 %v1204
        %v4214 = vunpack.c.l.b16 %v1205
        %v4215 = vunpack.c.h.b16 %v1205
        %v4216 = vunpack.c.l.b16 %v1206
        %v4217 = vunpack.c.h.b16 %v1206
        %v4218 = vunpack.c.l.b16 %v1207
        %v4219 = vunpack.c.h.b16 %v1207
        %v4220 = vunpack.c.l.b16 %v1208
        %v4221 = vunpack.c.h.b16 %v1208
        %v4222 = vunpack.c.l.b16 %v1209
        %v4223 = vunpack.c.h.b16 %v1209
        %v4224 = vunpack.c.l.b16 %v1210
        %v4225 = vunpack.c.h.b16 %v1210
        %v4226 = vunpack.c.l.b16 %v1211
        %v4227 = vunpack.c.h.b16 %v1211
        %v4228 = vunpack.c.l.b16 %v1212
        %v4229 = vunpack.c.h.b16 %v1212
        %v4230 = vunpack.c.l.b16 %v1213
        %v4231 = vunpack.c.h.b16 %v1213
        %v4232 = vunpack.c.l.b16 %v1214
        %v4233 = vunpack.c.h.b16 %v1214
        %v4234 = vunpack.c.l.b16 %v1215
        %v4235 = vunpack.c.h.b16 %v1215
        %v4236 = vunpack.c.l.b16 %v1216
        %v4237 = vunpack.c.h.b16 %v1216
        %v4238 = vunpack.c.l.b16 %v1217
        %v4239 = vunpack.c.h.b16 %v1217
        %v4240 = vunpack.c.l.b16 %v1218
        %v4241 = vunpack.c.h.b16 %v1218
        %v4242 = vunpack.c.l.b16 %v1219
        %v4243 = vunpack.c.h.b16 %v1219
        %v4244 = vunpack.c.l.b16 %v1220
        %v4245 = vunpack.c.h.b16 %v1220
        %v4246 = vunpack.c.l.b16 %v1221
        %v4247 = vunpack.c.h.b16 %v1221
        %v4248 = vunpack.c.l.b16 %v1222
        %v4249 = vunpack.c.h.b16 %v1222
        %v4250 = vunpack.c.l.b16 %v1223
        %v4251 = vunpack.c.h.b16 %v1223
        %v4252 = vunpack.c.l.b16 %v1224
        %v4253 = vunpack.c.h.b16 %v1224
        %v4254 = vunpack.c.l.b16 %v1225
        %v4255 = vunpack.c.h.b16 %v1225
        %v4256 = vunpack.c.l.b16 %v1226
        %v4257 = vunpack.c.h.b16 %v1226
        %v4258 = vunpack.c.l.b16 %v1227
        %v4259 = vunpack.c.h.b16 %v1227
        %v4260 = vunpack.c.l.b16 %v1228
        %v4261 = vunpack.c.h.b16 %v1228
        %v4262 = vunpack.c.l.b16 %v1229
        %v4263 = vunpack.c.h.b16 %v1229
        %v4264 = vunpack.c.l.b16 %v1230
        %v4265 = vunpack.c.h.b16 %v1230
        %v4266 = vunpack.c.l.b16 %v1231
        %v4267 = vunpack.c.h.b16 %v1231
        %v4268 = vunpack.c.l.b16 %v1232
        %v4269 = vunpack.c.h.b16 %v1232
        %v4270 = vunpack.c.l.b16 %v1233
        %v4271 = vunpack.c.h.b16 %v1233
        %v4272 = vunpack.c.l.b16 %v1234
        %v4273 = vunpack.c.h.b16 %v1234
        %v4274 = vunpack.c.l.b16 %v1235
        %v4275 = vunpack.c.h.b16 %v1235
        %v4276 = vunpack.c.l.b16 %v1236
        %v4277 = vunpack.c.h.b16 %v1236
        %v4278 = vunpack.c.l.b16 %v1237
        %v4279 = vunpack.c.h.b16 %v1237
        %v4280 = vunpack.c.l.b16 %v1238
        %v4281 = vunpack.c.h.b16 %v1238
        %v4282 = vunpack.c.l.b16 %v1239
        %v4283 = vunpack.c.h.b16 %v1239
        %v4284 = vunpack.c.l.b16 %v1240
        %v4285 = vunpack.c.h.b16 %v1240
        %v4286 = vunpack.c.l.b16 %v1241
        %v4287 = vunpack.c.h.b16 %v1241
        %v4288 = vunpack.c.l.b16 %v1242
        %v4289 = vunpack.c.h.b16 %v1242
        %v4290 = vunpack.c.l.b16 %v1243
        %v4291 = vunpack.c.h.b16 %v1243
        %v4292 = vunpack.c.l.b16 %v1244
        %v4293 = vunpack.c.h.b16 %v1244
        %v4294 = vunpack.c.l.b16 %v1245
        %v4295 = vunpack.c.h.b16 %v1245
        %v4296 = vunpack.c.l.b16 %v1246
        %v4297 = vunpack.c.h.b16 %v1246
        %v4298 = vunpack.c.l.b16 %v1247
        %v4299 = vunpack.c.h.b16 %v1247
        %v4300 = vunpack.c.l.b16 %v1248
        %v4301 = vunpack.c.h.b16 %v1248
        %v4302 = vunpack.c.l.b16 %v1249
        %v4303 = vunpack.c.h.b16 %v1249
        %v4304 = vunpack.c.l.b16 %v1250
        %v4305 = vunpack.c.h.b16 %v1250
        %v4306 = vunpack.c.l.b16 %v1251
        %v4307 = vunpack.c.h.b16 %v1251
        %v4308 = vunpack.c.l.b16 %v1252
        %v4309 = vunpack.c.h.b16 %v1252
        %v4310 = vunpack.c.l.b16 %v1253
        %v4311 = vunpack.c.h.b16 %v1253
        %v4312 = vunpack.c.l.b16 %v1254
        %v4313 = vunpack.c.h.b16 %v1254
        %v4314 = vunpack.c.l.b16 %v1255
        %v4315 = vunpack.c.h.b16 %v1255
        %v4316 = vunpack.c.l.b16 %v1256
        %v4317 = vunpack.c.h.b16 %v1256
        %v4318 = vunpack.c.l.b16 %v1257
        %v4319 = vunpack.c.h.b16 %v1257
        %v4320 = vunpack.c.l.b16 %v1258
        %v4321 = vunpack.c.h.b16 %v1258
        %v4322 = vunpack.c.l.b16 %v1259
        %v4323 = vunpack.c.h.b16 %v1259
        %v4324 = vunpack.c.l.b16 %v1260
        %v4325 = vunpack.c.h.b16 %v1260
        %v4326 = vunpack.c.l.b16 %v1261
        %v4327 = vunpack.c.h.b16 %v1261
        %v4328 = vunpack.c.l.b16 %v1262
        %v4329 = vunpack.c.h.b16 %v1262
        %v4330 = vunpack.c.l.b16 %v1263
        %v4331 = vunpack.c.h.b16 %v1263
        %v4332 = vunpack.c.l.b16 %v1264
        %v4333 = vunpack.c.h.b16 %v1264
        %v4334 = vunpack.c.l.b16 %v1265
        %v4335 = vunpack.c.h.b16 %v1265
        %v4336 = vunpack.c.l.b16 %v1266
        %v4337 = vunpack.c.h.b16 %v1266
        %v4338 = vunpack.c.l.b16 %v1267
        %v4339 = vunpack.c.h.b16 %v1267
        %v4340 = vunpack.c.l.b16 %v1268
        %v4341 = vunpack.c.h.b16 %v1268
        %v4342 = vunpack.c.l.b16 %v1269
        %v4343 = vunpack.c.h.b16 %v1269
        %v4344 = vunpack.c.l.b16 %v1270
        %v4345 = vunpack.c.h.b16 %v1270
        %v4346 = vunpack.c.l.b16 %v1271
        %v4347 = vunpack.c.h.b16 %v1271
        %v4348 = vunpack.c.l.b16 %v1272
        %v4349 = vunpack.c.h.b16 %v1272
        %v4350 = vunpack.c.l.b16 %v1273
        %v4351 = vunpack.c.h.b16 %v1273
        %v4352 = vunpack.c.l.b16 %v1274
        %v4353 = vunpack.c.h.b16 %v1274
        %v4354 = vunpack.c.l.b16 %v1275
        %v4355 = vunpack.c.h.b16 %v1275
        %v4356 = vunpack.c.l.b16 %v1276
        %v4357 = vunpack.c.h.b16 %v1276
        %v4358 = vunpack.c.l.b16 %v1277
        %v4359 = vunpack.c.h.b16 %v1277
        %v4360 = vunpack.c.l.b16 %v1278
        %v4361 = vunpack.c.h.b16 %v1278
        %v4362 = vunpack.c.l.b16 %v1279
        %v4363 = vunpack.c.h.b16 %v1279
        %v4364 = vunpack.c.l.b16 %v1280
        %v4365 = vunpack.c.h.b16 %v1280
        %v4366 = vunpack.c.l.b16 %v1281
        %v4367 = vunpack.c.h.b16 %v1281
        %v4368 = vunpack.c.l.b16 %v1282
        %v4369 = vunpack.c.h.b16 %v1282
        %v4370 = vunpack.c.l.b16 %v1283
        %v4371 = vunpack.c.h.b16 %v1283
        %v4372 = vunpack.c.l.b16 %v1284
        %v4373 = vunpack.c.h.b16 %v1284
        %v4374 = vunpack.c.l.b16 %v1285
        %v4375 = vunpack.c.h.b16 %v1285
        %v4376 = vunpack.c.l.b16 %v1286
        %v4377 = vunpack.c.h.b16 %v1286
        %v4378 = vunpack.c.l.b16 %v1287
        %v4379 = vunpack.c.h.b16 %v1287
        %v4380 = vunpack.c.l.b16 %v1288
        %v4381 = vunpack.c.h.b16 %v1288
        %v4382 = vunpack.c.l.b16 %v1289
        %v4383 = vunpack.c.h.b16 %v1289
        %v4384 = vunpack.c.l.b16 %v1290
        %v4385 = vunpack.c.h.b16 %v1290
        %v4386 = vunpack.c.l.b16 %v1291
        %v4387 = vunpack.c.h.b16 %v1291
        %v4388 = vunpack.c.l.b16 %v1292
        %v4389 = vunpack.c.h.b16 %v1292
        %v4390 = vunpack.c.l.b16 %v1293
        %v4391 = vunpack.c.h.b16 %v1293
        %v4392 = vunpack.c.l.b16 %v1294
        %v4393 = vunpack.c.h.b16 %v1294
        %v4394 = vunpack.c.l.b16 %v1295
        %v4395 = vunpack.c.h.b16 %v1295
        %v4396 = vunpack.c.l.b16 %v1296
        %v4397 = vunpack.c.h.b16 %v1296
        %v4398 = vunpack.c.l.b16 %v1297
        %v4399 = vunpack.c.h.b16 %v1297
        %v4400 = vunpack.c.l.b16 %v1298
        %v4401 = vunpack.c.h.b16 %v1298
        %v4402 = vunpack.c.l.b16 %v1299
        %v4403 = vunpack.c.h.b16 %v1299
        %v4404 = vunpack.c.l.b16 %v1300
        %v4405 = vunpack.c.h.b16 %v1300
        %v4406 = vunpack.c.l.b16 %v1301
        %v4407 = vunpack.c.h.b16 %v1301
        %v4408 = vunpack.c.l.b16 %v1302
        %v4409 = vunpack.c.h.b16 %v1302
        %v4410 = vunpack.c.l.b16 %v1303
        %v4411 = vunpack.c.h.b16 %v1303
        %v4412 = vunpack.c.l.b16 %v1304
        %v4413 = vunpack.c.h.b16 %v1304
        %v4414 = vunpack.c.l.b16 %v1305
        %v4415 = vunpack.c.h.b16 %v1305
        %v4416 = vunpack.c.l.b16 %v1306
        %v4417 = vunpack.c.h.b16 %v1306
        %v4418 = vunpack.c.l.b16 %v1307
        %v4419 = vunpack.c.h.b16 %v1307
        %v4420 = vunpack.c.l.b16 %v1308
        %v4421 = vunpack.c.h.b16 %v1308
        %v4422 = vunpack.c.l.b16 %v1309
        %v4423 = vunpack.c.h.b16 %v1309
        %v4424 = vunpack.c.l.b16 %v1310
        %v4425 = vunpack.c.h.b16 %v1310
        %v4426 = vunpack.c.l.b16 %v1311
        %v4427 = vunpack.c.h.b16 %v1311
        %v4428 = vunpack.c.l.b16 %v1312
        %v4429 = vunpack.c.h.b16 %v1312
        %v4430 = vunpack.c.l.b16 %v1313
        %v4431 = vunpack.c.h.b16 %v1313
        %v4432 = vunpack.c.l.b16 %v1314
        %v4433 = vunpack.c.h.b16 %v1314
        %v4434 = vunpack.c.l.b16 %v1315
        %v4435 = vunpack.c.h.b16 %v1315
        %v4436 = vunpack.c.l.b16 %v1316
        %v4437 = vunpack.c.h.b16 %v1316
        %v4438 = vunpack.c.l.b16 %v1317
        %v4439 = vunpack.c.h.b16 %v1317
        %v4440 = vunpack.c.l.b16 %v1318
        %v4441 = vunpack.c.h.b16 %v1318
        %v4442 = vunpack.c.l.b16 %v1319
        %v4443 = vunpack.c.h.b16 %v1319
        %v4444 = vunpack.c.l.b16 %v1320
        %v4445 = vunpack.c.h.b16 %v1320
        %v4446 = vunpack.c.l.b16 %v1321
        %v4447 = vunpack.c.h.b16 %v1321
        %v4448 = vunpack.c.l.b16 %v1322
        %v4449 = vunpack.c.h.b16 %v1322
        %v4450 = vunpack.c.l.b16 %v1323
        %v4451 = vunpack.c.h.b16 %v1323
        %v4452 = vpack.c.b16 %v2412, %v2404
        %v4453 = vpack.c.b16 %v2413, %v2405
        %v4454 = vpack.c.b16 %v2414, %v2406
        %v4455 = vpack.c.b16 %v2415, %v2407
        %v4456 = vpack.c.b16 %v2416, %v2408
        %v4457 = vpack.c.b16 %v2417, %v2409
        %v4458 = vpack.c.b16 %v2418, %v2410
        %v4459 = vpack.c.b16 %v2419, %v2411
        %v4460 = vpack.c.b16 %v2428, %v2420
        %v4461 = vpack.c.b16 %v2429, %v2421
        %v4462 = vpack.c.b16 %v2430, %v2422
        %v4463 = vpack.c.b16 %v2431, %v2423
        %v4464 = vpack.c.b16 %v2432, %v2424
        %v4465 = vpack.c.b16 %v2433, %v2425
        %v4466 = vpack.c.b16 %v2434, %v2426
        %v4467 = vpack.c.b16 %v2435, %v2427
        %v4468 = vpack.c.b16 %v2444, %v2436
        %v4469 = vpack.c.b16 %v2445, %v2437
        %v4470 = vpack.c.b16 %v2446, %v2438
        %v4471 = vpack.c.b16 %v2447, %v2439
        %v4472 = vpack.c.b16 %v2448, %v2440
        %v4473 = vpack.c.b16 %v2449, %v2441
        %v4474 = vpack.c.b16 %v2450, %v2442
        %v4475 = vpack.c.b16 %v2451, %v2443
        %v4476 = vpack.c.b16 %v2460, %v2452
        %v4477 = vpack.c.b16 %v2461, %v2453
        %v4478 = vpack.c.b16 %v2462, %v2454
        %v4479 = vpack.c.b16 %v2463, %v2455
        %v4480 = vpack.c.b16 %v2464, %v2456
        %v4481 = vpack.c.b16 %v2465, %v2457
        %v4482 = vpack.c.b16 %v2466, %v2458
        %v4483 = vpack.c.b16 %v2467, %v2459
        %v4484 = vpack.c.b16 %v2476, %v2468
        %v4485 = vpack.c.b16 %v2477, %v2469
        %v4486 = vpack.c.b16 %v2478, %v2470
        %v4487 = vpack.c.b16 %v2479, %v2471
        %v4488 = vpack.c.b16 %v2480, %v2472
        %v4489 = vpack.c.b16 %v2481, %v2473
        %v4490 = vpack.c.b16 %v2482, %v2474
        %v4491 = vpack.c.b16 %v2483, %v2475
        %v4492 = vpack.c.b16 %v2492, %v2484
        %v4493 = vpack.c.b16 %v2493, %v2485
        %v4494 = vpack.c.b16 %v2494, %v2486
        %v4495 = vpack.c.b16 %v2495, %v2487
        %v4496 = vpack.c.b16 %v2496, %v2488
        %v4497 = vpack.c.b16 %v2497, %v2489
        %v4498 = vpack.c.b16 %v2498, %v2490
        %v4499 = vpack.c.b16 %v2499, %v2491
        %v4500 = vpack.c.b16 %v2508, %v2500
        %v4501 = vpack.c.b16 %v2509, %v2501
        %v4502 = vpack.c.b16 %v2510, %v2502
        %v4503 = vpack.c.b16 %v2511, %v2503
        %v4504 = vpack.c.b16 %v2512, %v2504
        %v4505 = vpack.c.b16 %v2513, %v2505
        %v4506 = vpack.c.b16 %v2514, %v2506
        %v4507 = vpack.c.b16 %v2515, %v2507
        %v4508 = vpack.c.b16 %v2524, %v2516
        %v4509 = vpack.c.b16 %v2525, %v2517
        %v4510 = vpack.c.b16 %v2526, %v2518
        %v4511 = vpack.c.b16 %v2527, %v2519
        %v4512 = vpack.c.b16 %v2528, %v2520
        %v4513 = vpack.c.b16 %v2529, %v2521
        %v4514 = vpack.c.b16 %v2530, %v2522
        %v4515 = vpack.c.b16 %v2531, %v2523
        %v4516 = vpack.c.b16 %v2540, %v2532
        %v4517 = vpack.c.b16 %v2541, %v2533
        %v4518 = vpack.c.b16 %v2542, %v2534
        %v4519 = vpack.c.b16 %v2543, %v2535
        %v4520 = vpack.c.b16 %v2544, %v2536
        %v4521 = vpack.c.b16 %v2545, %v2537
        %v4522 = vpack.c.b16 %v2546, %v2538
        %v4523 = vpack.c.b16 %v2547, %v2539
        %v4524 = vpack.c.b16 %v2556, %v2548
        %v4525 = vpack.c.b16 %v2557, %v2549
        %v4526 = vpack.c.b16 %v2558, %v2550
        %v4527 = vpack.c.b16 %v2559, %v2551
        %v4528 = vpack.c.b16 %v2560, %v2552
        %v4529 = vpack.c.b16 %v2561, %v2553
        %v4530 = vpack.c.b16 %v2562, %v2554
        %v4531 = vpack.c.b16 %v2563, %v2555
        %v4532 = vpack.c.b16 %v2572, %v2564
        %v4533 = vpack.c.b16 %v2573, %v2565
        %v4534 = vpack.c.b16 %v2574, %v2566
        %v4535 = vpack.c.b16 %v2575, %v2567
        %v4536 = vpack.c.b16 %v2576, %v2568
        %v4537 = vpack.c.b16 %v2577, %v2569
        %v4538 = vpack.c.b16 %v2578, %v2570
        %v4539 = vpack.c.b16 %v2579, %v2571
        %v4540 = vpack.c.b16 %v2588, %v2580
        %v4541 = vpack.c.b16 %v2589, %v2581
        %v4542 = vpack.c.b16 %v2590, %v2582
        %v4543 = vpack.c.b16 %v2591, %v2583
        %v4544 = vpack.c.b16 %v2592, %v2584
        %v4545 = vpack.c.b16 %v2593, %v2585
        %v4546 = vpack.c.b16 %v2594, %v2586
        %v4547 = vpack.c.b16 %v2595, %v2587
        %v4548 = vpack.c.b16 %v2604, %v2596
        %v4549 = vpack.c.b16 %v2605, %v2597
        %v4550 = vpack.c.b16 %v2606, %v2598
        %v4551 = vpack.c.b16 %v2607, %v2599
        %v4552 = vpack.c.b16 %v2608, %v2600
        %v4553 = vpack.c.b16 %v2609, %v2601
        %v4554 = vpack.c.b16 %v2610, %v2602
        %v4555 = vpack.c.b16 %v2611, %v2603
        %v4556 = vpack.c.b16 %v2620, %v2612
        %v4557 = vpack.c.b16 %v2621, %v2613
        %v4558 = vpack.c.b16 %v2622, %v2614
        %v4559 = vpack.c.b16 %v2623, %v2615
        %v4560 = vpack.c.b16 %v2624, %v2616
        %v4561 = vpack.c.b16 %v2625, %v2617
        %v4562 = vpack.c.b16 %v2626, %v2618
        %v4563 = vpack.c.b16 %v2627, %v2619
        %v4564 = vpack.c.b16 %v2636, %v2628
        %v4565 = vpack.c.b16 %v2637, %v2629
        %v4566 = vpack.c.b16 %v2638, %v2630
        %v4567 = vpack.c.b16 %v2639, %v2631
        %v4568 = vpack.c.b16 %v2640, %v2632
        %v4569 = vpack.c.b16 %v2641, %v2633
        %v4570 = vpack.c.b16 %v2642, %v2634
        %v4571 = vpack.c.b16 %v2643, %v2635
        %v4572 = vpack.c.b16 %v2652, %v2644
        %v4573 = vpack.c.b16 %v2653, %v2645
        %v4574 = vpack.c.b16 %v2654, %v2646
        %v4575 = vpack.c.b16 %v2655, %v2647
        %v4576 = vpack.c.b16 %v2656, %v2648
        %v4577 = vpack.c.b16 %v2657, %v2649
        %v4578 = vpack.c.b16 %v2658, %v2650
        %v4579 = vpack.c.b16 %v2659, %v2651
        %v4580 = vpack.c.b16 %v2668, %v2660
        %v4581 = vpack.c.b16 %v2669, %v2661
        %v4582 = vpack.c.b16 %v2670, %v2662
        %v4583 = vpack.c.b16 %v2671, %v2663
        %v4584 = vpack.c.b16 %v2672, %v2664
        %v4585 = vpack.c.b16 %v2673, %v2665
        %v4586 = vpack.c.b16 %v2674, %v2666
        %v4587 = vpack.c.b16 %v2675, %v2667
        %v4588 = vpack.c.b16 %v2684, %v2676
        %v4589 = vpack.c.b16 %v2685, %v2677
        %v4590 = vpack.c.b16 %v2686, %v2678
        %v4591 = vpack.c.b16 %v2687, %v2679
        %v4592 = vpack.c.b16 %v2688, %v2680
        %v4593 = vpack.c.b16 %v2689, %v2681
        %v4594 = vpack.c.b16 %v2690, %v2682
        %v4595 = vpack.c.b16 %v2691, %v2683
        %v4596 = vpack.c.b16 %v2700, %v2692
        %v4597 = vpack.c.b16 %v2701, %v2693
        %v4598 = vpack.c.b16 %v2702, %v2694
        %v4599 = vpack.c.b16 %v2703, %v2695
        %v4600 = vpack.c.b16 %v2704, %v2696
        %v4601 = vpack.c.b16 %v2705, %v2697
        %v4602 = vpack.c.b16 %v2706, %v2698
        %v4603 = vpack.c.b16 %v2707, %v2699
        %v4604 = vpack.c.b16 %v2716, %v2708
        %v4605 = vpack.c.b16 %v2717, %v2709
        %v4606 = vpack.c.b16 %v2718, %v2710
        %v4607 = vpack.c.b16 %v2719, %v2711
        %v4608 = vpack.c.b16 %v2720, %v2712
        %v4609 = vpack.c.b16 %v2721, %v2713
        %v4610 = vpack.c.b16 %v2722, %v2714
        %v4611 = vpack.c.b16 %v2723, %v2715
        %v4612 = vpack.c.b16 %v2732, %v2724
        %v4613 = vpack.c.b16 %v2733, %v2725
        %v4614 = vpack.c.b16 %v2734, %v2726
        %v4615 = vpack.c.b16 %v2735, %v2727
        %v4616 = vpack.c.b16 %v2736, %v2728
        %v4617 = vpack.c.b16 %v2737, %v2729
        %v4618 = vpack.c.b16 %v2738, %v2730
        %v4619 = vpack.c.b16 %v2739, %v2731
        %v4620 = vpack.c.b16 %v2748, %v2740
        %v4621 = vpack.c.b16 %v2749, %v2741
        %v4622 = vpack.c.b16 %v2750, %v2742
        %v4623 = vpack.c.b16 %v2751, %v2743
        %v4624 = vpack.c.b16 %v2752, %v2744
        %v4625 = vpack.c.b16 %v2753, %v2745
        %v4626 = vpack.c.b16 %v2754, %v2746
        %v4627 = vpack.c.b16 %v2755, %v2747
        %v4628 = vpack.c.b16 %v2764, %v2756
        %v4629 = vpack.c.b16 %v2765, %v2757
        %v4630 = vpack.c.b16 %v2766, %v2758
        %v4631 = vpack.c.b16 %v2767, %v2759
        %v4632 = vpack.c.b16 %v2768, %v2760
        %v4633 = vpack.c.b16 %v2769, %v2761
        %v4634 = vpack.c.b16 %v2770, %v2762
        %v4635 = vpack.c.b16 %v2771, %v2763
        %v4636 = vpack.c.b16 %v2780, %v2772
        %v4637 = vpack.c.b16 %v2781, %v2773
        %v4638 = vpack.c.b16 %v2782, %v2774
        %v4639 = vpack.c.b16 %v2783, %v2775
        %v4640 = vpack.c.b16 %v2784, %v2776
        %v4641 = vpack.c.b16 %v2785, %v2777
        %v4642 = vpack.c.b16 %v2786, %v2778
        %v4643 = vpack.c.b16 %v2787, %v2779
        %v4644 = vpack.c.b16 %v2796, %v2788
        %v4645 = vpack.c.b16 %v2797, %v2789
        %v4646 = vpack.c.b16 %v2798, %v2790
        %v4647 = vpack.c.b16 %v2799, %v2791
        %v4648 = vpack.c.b16 %v2800, %v2792
        %v4649 = vpack.c.b16 %v2801, %v2793
        %v4650 = vpack.c.b16 %v2802, %v2794
        %v4651 = vpack.c.b16 %v2803, %v2795
        %v4652 = vpack.c.b16 %v2812, %v2804
        %v4653 = vpack.c.b16 %v2813, %v2805
        %v4654 = vpack.c.b16 %v2814, %v2806
        %v4655 = vpack.c.b16 %v2815, %v2807
        %v4656 = vpack.c.b16 %v2816, %v2808
        %v4657 = vpack.c.b16 %v2817, %v2809
        %v4658 = vpack.c.b16 %v2818, %v2810
        %v4659 = vpack.c.b16 %v2819, %v2811
        %v4660 = vpack.c.b16 %v2828, %v2820
        %v4661 = vpack.c.b16 %v2829, %v2821
        %v4662 = vpack.c.b16 %v2830, %v2822
        %v4663 = vpack.c.b16 %v2831, %v2823
        %v4664 = vpack.c.b16 %v2832, %v2824
        %v4665 = vpack.c.b16 %v2833, %v2825
        %v4666 = vpack.c.b16 %v2834, %v2826
        %v4667 = vpack.c.b16 %v2835, %v2827
        %v4668 = vpack.c.b16 %v2844, %v2836
        %v4669 = vpack.c.b16 %v2845, %v2837
        %v4670 = vpack.c.b16 %v2846, %v2838
        %v4671 = vpack.c.b16 %v2847, %v2839
        %v4672 = vpack.c.b16 %v2848, %v2840
        %v4673 = vpack.c.b16 %v2849, %v2841
        %v4674 = vpack.c.b16 %v2850, %v2842
        %v4675 = vpack.c.b16 %v2851, %v2843
        %v4676 = vpack.c.b16 %v2860, %v2852
        %v4677 = vpack.c.b16 %v2861, %v2853
        %v4678 = vpack.c.b16 %v2862, %v2854
        %v4679 = vpack.c.b16 %v2863, %v2855
        %v4680 = vpack.c.b16 %v2864, %v2856
        %v4681 = vpack.c.b16 %v2865, %v2857
        %v4682 = vpack.c.b16 %v2866, %v2858
        %v4683 = vpack.c.b16 %v2867, %v2859
        %v4684 = vpack.c.b16 %v2876, %v2868
        %v4685 = vpack.c.b16 %v2877, %v2869
        %v4686 = vpack.c.b16 %v2878, %v2870
        %v4687 = vpack.c.b16 %v2879, %v2871
        %v4688 = vpack.c.b16 %v2880, %v2872
        %v4689 = vpack.c.b16 %v2881, %v2873
        %v4690 = vpack.c.b16 %v2882, %v2874
        %v4691 = vpack.c.b16 %v2883, %v2875
        %v4692 = vpack.c.b16 %v2892, %v2884
        %v4693 = vpack.c.b16 %v2893, %v2885
        %v4694 = vpack.c.b16 %v2894, %v2886
        %v4695 = vpack.c.b16 %v2895, %v2887
        %v4696 = vpack.c.b16 %v2896, %v2888
        %v4697 = vpack.c.b16 %v2897, %v2889
        %v4698 = vpack.c.b16 %v2898, %v2890
        %v4699 = vpack.c.b16 %v2899, %v2891
        %v4700 = vpack.c.b16 %v2908, %v2900
        %v4701 = vpack.c.b16 %v2909, %v2901
        %v4702 = vpack.c.b16 %v2910, %v2902
        %v4703 = vpack.c.b16 %v2911, %v2903
        %v4704 = vpack.c.b16 %v2912, %v2904
        %v4705 = vpack.c.b16 %v2913, %v2905
        %v4706 = vpack.c.b16 %v2914, %v2906
        %v4707 = vpack.c.b16 %v2915, %v2907
        %v4708 = vpack.c.b16 %v2924, %v2916
        %v4709 = vpack.c.b16 %v2925, %v2917
        %v4710 = vpack.c.b16 %v2926, %v2918
        %v4711 = vpack.c.b16 %v2927, %v2919
        %v4712 = vpack.c.b16 %v2928, %v2920
        %v4713 = vpack.c.b16 %v2929, %v2921
        %v4714 = vpack.c.b16 %v2930, %v2922
        %v4715 = vpack.c.b16 %v2931, %v2923
        %v4716 = vpack.c.b16 %v2940, %v2932
        %v4717 = vpack.c.b16 %v2941, %v2933
        %v4718 = vpack.c.b16 %v2942, %v2934
        %v4719 = vpack.c.b16 %v2943, %v2935
        %v4720 = vpack.c.b16 %v2944, %v2936
        %v4721 = vpack.c.b16 %v2945, %v2937
        %v4722 = vpack.c.b16 %v2946, %v2938
        %v4723 = vpack.c.b16 %v2947, %v2939
        %v4724 = vpack.c.b16 %v2956, %v2948
        %v4725 = vpack.c.b16 %v2957, %v2949
        %v4726 = vpack.c.b16 %v2958, %v2950
        %v4727 = vpack.c.b16 %v2959, %v2951
        %v4728 = vpack.c.b16 %v2960, %v2952
        %v4729 = vpack.c.b16 %v2961, %v2953
        %v4730 = vpack.c.b16 %v2962, %v2954
        %v4731 = vpack.c.b16 %v2963, %v2955
        %v4732 = vpack.c.b16 %v2972, %v2964
        %v4733 = vpack.c.b16 %v2973, %v2965
        %v4734 = vpack.c.b16 %v2974, %v2966
        %v4735 = vpack.c.b16 %v2975, %v2967
        %v4736 = vpack.c.b16 %v2976, %v2968
        %v4737 = vpack.c.b16 %v2977, %v2969
        %v4738 = vpack.c.b16 %v2978, %v2970
        %v4739 = vpack.c.b16 %v2979, %v2971
        %v4740 = vpack.c.b16 %v2988, %v2980
        %v4741 = vpack.c.b16 %v2989, %v2981
        %v4742 = vpack.c.b16 %v2990, %v2982
        %v4743 = vpack.c.b16 %v2991, %v2983
        %v4744 = vpack.c.b16 %v2992, %v2984
        %v4745 = vpack.c.b16 %v2993, %v2985
        %v4746 = vpack.c.b16 %v2994, %v2986
        %v4747 = vpack.c.b16 %v2995, %v2987
        %v4748 = vpack.c.b16 %v3004, %v2996
        %v4749 = vpack.c.b16 %v3005, %v2997
        %v4750 = vpack.c.b16 %v3006, %v2998
        %v4751 = vpack.c.b16 %v3007, %v2999
        %v4752 = vpack.c.b16 %v3008, %v3000
        %v4753 = vpack.c.b16 %v3009, %v3001
        %v4754 = vpack.c.b16 %v3010, %v3002
        %v4755 = vpack.c.b16 %v3011, %v3003
        %v4756 = vpack.c.b16 %v3020, %v3012
        %v4757 = vpack.c.b16 %v3021, %v3013
        %v4758 = vpack.c.b16 %v3022, %v3014
        %v4759 = vpack.c.b16 %v3023, %v3015
        %v4760 = vpack.c.b16 %v3024, %v3016
        %v4761 = vpack.c.b16 %v3025, %v3017
        %v4762 = vpack.c.b16 %v3026, %v3018
        %v4763 = vpack.c.b16 %v3027, %v3019
        %v4764 = vpack.c.b16 %v3036, %v3028
        %v4765 = vpack.c.b16 %v3037, %v3029
        %v4766 = vpack.c.b16 %v3038, %v3030
        %v4767 = vpack.c.b16 %v3039, %v3031
        %v4768 = vpack.c.b16 %v3040, %v3032
        %v4769 = vpack.c.b16 %v3041, %v3033
        %v4770 = vpack.c.b16 %v3042, %v3034
        %v4771 = vpack.c.b16 %v3043, %v3035
        %v4772 = vpack.c.b16 %v3052, %v3044
        %v4773 = vpack.c.b16 %v3053, %v3045
        %v4774 = vpack.c.b16 %v3054, %v3046
        %v4775 = vpack.c.b16 %v3055, %v3047
        %v4776 = vpack.c.b16 %v3056, %v3048
        %v4777 = vpack.c.b16 %v3057, %v3049
        %v4778 = vpack.c.b16 %v3058, %v3050
        %v4779 = vpack.c.b16 %v3059, %v3051
        %v4780 = vpack.c.b16 %v3068, %v3060
        %v4781 = vpack.c.b16 %v3069, %v3061
        %v4782 = vpack.c.b16 %v3070, %v3062
        %v4783 = vpack.c.b16 %v3071, %v3063
        %v4784 = vpack.c.b16 %v3072, %v3064
        %v4785 = vpack.c.b16 %v3073, %v3065
        %v4786 = vpack.c.b16 %v3074, %v3066
        %v4787 = vpack.c.b16 %v3075, %v3067
        %v4788 = vpack.c.b16 %v3084, %v3076
        %v4789 = vpack.c.b16 %v3085, %v3077
        %v4790 = vpack.c.b16 %v3086, %v3078
        %v4791 = vpack.c.b16 %v3087, %v3079
        %v4792 = vpack.c.b16 %v3088, %v3080
        %v4793 = vpack.c.b16 %v3089, %v3081
        %v4794 = vpack.c.b16 %v3090, %v3082
        %v4795 = vpack.c.b16 %v3091, %v3083
        %v4796 = vpack.c.b16 %v3100, %v3092
        %v4797 = vpack.c.b16 %v3101, %v3093
        %v4798 = vpack.c.b16 %v3102, %v3094
        %v4799 = vpack.c.b16 %v3103, %v3095
        %v4800 = vpack.c.b16 %v3104, %v3096
        %v4801 = vpack.c.b16 %v3105, %v3097
        %v4802 = vpack.c.b16 %v3106, %v3098
        %v4803 = vpack.c.b16 %v3107, %v3099
        %v4804 = vpack.c.b16 %v3116, %v3108
        %v4805 = vpack.c.b16 %v3117, %v3109
        %v4806 = vpack.c.b16 %v3118, %v3110
        %v4807 = vpack.c.b16 %v3119, %v3111
        %v4808 = vpack.c.b16 %v3120, %v3112
        %v4809 = vpack.c.b16 %v3121, %v3113
        %v4810 = vpack.c.b16 %v3122, %v3114
        %v4811 = vpack.c.b16 %v3123, %v3115
        %v4812 = vpack.c.b16 %v3132, %v3124
        %v4813 = vpack.c.b16 %v3133, %v3125
        %v4814 = vpack.c.b16 %v3134, %v3126
        %v4815 = vpack.c.b16 %v3135, %v3127
        %v4816 = vpack.c.b16 %v3136, %v3128
        %v4817 = vpack.c.b16 %v3137, %v3129
        %v4818 = vpack.c.b16 %v3138, %v3130
        %v4819 = vpack.c.b16 %v3139, %v3131
        %v4820 = vpack.c.b16 %v3148, %v3140
        %v4821 = vpack.c.b16 %v3149, %v3141
        %v4822 = vpack.c.b16 %v3150, %v3142
        %v4823 = vpack.c.b16 %v3151, %v3143
        %v4824 = vpack.c.b16 %v3152, %v3144
        %v4825 = vpack.c.b16 %v3153, %v3145
        %v4826 = vpack.c.b16 %v3154, %v3146
        %v4827 = vpack.c.b16 %v3155, %v3147
        %v4828 = vpack.c.b16 %v3164, %v3156
        %v4829 = vpack.c.b16 %v3165, %v3157
        %v4830 = vpack.c.b16 %v3166, %v3158
        %v4831 = vpack.c.b16 %v3167, %v3159
        %v4832 = vpack.c.b16 %v3168, %v3160
        %v4833 = vpack.c.b16 %v3169, %v3161
        %v4834 = vpack.c.b16 %v3170, %v3162
        %v4835 = vpack.c.b16 %v3171, %v3163
        %v4836 = vpack.c.b16 %v3180, %v3172
        %v4837 = vpack.c.b16 %v3181, %v3173
        %v4838 = vpack.c.b16 %v3182, %v3174
        %v4839 = vpack.c.b16 %v3183, %v3175
        %v4840 = vpack.c.b16 %v3184, %v3176
        %v4841 = vpack.c.b16 %v3185, %v3177
        %v4842 = vpack.c.b16 %v3186, %v3178
        %v4843 = vpack.c.b16 %v3187, %v3179
        %v4844 = vpack.c.b16 %v3196, %v3188
        %v4845 = vpack.c.b16 %v3197, %v3189
        %v4846 = vpack.c.b16 %v3198, %v3190
        %v4847 = vpack.c.b16 %v3199, %v3191
        %v4848 = vpack.c.b16 %v3200, %v3192
        %v4849 = vpack.c.b16 %v3201, %v3193
        %v4850 = vpack.c.b16 %v3202, %v3194
        %v4851 = vpack.c.b16 %v3203, %v3195
        %v4852 = vpack.c.b16 %v3212, %v3204
        %v4853 = vpack.c.b16 %v3213, %v3205
        %v4854 = vpack.c.b16 %v3214, %v3206
        %v4855 = vpack.c.b16 %v3215, %v3207
        %v4856 = vpack.c.b16 %v3216, %v3208
        %v4857 = vpack.c.b16 %v3217, %v3209
        %v4858 = vpack.c.b16 %v3218, %v3210
        %v4859 = vpack.c.b16 %v3219, %v3211
        %v4860 = vpack.c.b16 %v3228, %v3220
        %v4861 = vpack.c.b16 %v3229, %v3221
        %v4862 = vpack.c.b16 %v3230, %v3222
        %v4863 = vpack.c.b16 %v3231, %v3223
        %v4864 = vpack.c.b16 %v3232, %v3224
        %v4865 = vpack.c.b16 %v3233, %v3225
        %v4866 = vpack.c.b16 %v3234, %v3226
        %v4867 = vpack.c.b16 %v3235, %v3227
        %v4868 = vpack.c.b16 %v3244, %v3236
        %v4869 = vpack.c.b16 %v3245, %v3237
        %v4870 = vpack.c.b16 %v3246, %v3238
        %v4871 = vpack.c.b16 %v3247, %v3239
        %v4872 = vpack.c.b16 %v3248, %v3240
        %v4873 = vpack.c.b16 %v3249, %v3241
        %v4874 = vpack.c.b16 %v3250, %v3242
        %v4875 = vpack.c.b16 %v3251, %v3243
        %v4876 = vpack.c.b16 %v3260, %v3252
        %v4877 = vpack.c.b16 %v3261, %v3253
        %v4878 = vpack.c.b16 %v3262, %v3254
        %v4879 = vpack.c.b16 %v3263, %v3255
        %v4880 = vpack.c.b16 %v3264, %v3256
        %v4881 = vpack.c.b16 %v3265, %v3257
        %v4882 = vpack.c.b16 %v3266, %v3258
        %v4883 = vpack.c.b16 %v3267, %v3259
        %v4884 = vpack.c.b16 %v3276, %v3268
        %v4885 = vpack.c.b16 %v3277, %v3269
        %v4886 = vpack.c.b16 %v3278, %v3270
        %v4887 = vpack.c.b16 %v3279, %v3271
        %v4888 = vpack.c.b16 %v3280, %v3272
        %v4889 = vpack.c.b16 %v3281, %v3273
        %v4890 = vpack.c.b16 %v3282, %v3274
        %v4891 = vpack.c.b16 %v3283, %v3275
        %v4892 = vpack.c.b16 %v3292, %v3284
        %v4893 = vpack.c.b16 %v3293, %v3285
        %v4894 = vpack.c.b16 %v3294, %v3286
        %v4895 = vpack.c.b16 %v3295, %v3287
        %v4896 = vpack.c.b16 %v3296, %v3288
        %v4897 = vpack.c.b16 %v3297, %v3289
        %v4898 = vpack.c.b16 %v3298, %v3290
        %v4899 = vpack.c.b16 %v3299, %v3291
        %v4900 = vpack.c.b16 %v3308, %v3300
        %v4901 = vpack.c.b16 %v3309, %v3301
        %v4902 = vpack.c.b16 %v3310, %v3302
        %v4903 = vpack.c.b16 %v3311, %v3303
        %v4904 = vpack.c.b16 %v3312, %v3304
        %v4905 = vpack.c.b16 %v3313, %v3305
        %v4906 = vpack.c.b16 %v3314, %v3306
        %v4907 = vpack.c.b16 %v3315, %v3307
        %v4908 = vpack.c.b16 %v3324, %v3316
        %v4909 = vpack.c.b16 %v3325, %v3317
        %v4910 = vpack.c.b16 %v3326, %v3318
        %v4911 = vpack.c.b16 %v3327, %v3319
        %v4912 = vpack.c.b16 %v3328, %v3320
        %v4913 = vpack.c.b16 %v3329, %v3321
        %v4914 = vpack.c.b16 %v3330, %v3322
        %v4915 = vpack.c.b16 %v3331, %v3323
        %v4916 = vpack.c.b16 %v3340, %v3332
        %v4917 = vpack.c.b16 %v3341, %v3333
        %v4918 = vpack.c.b16 %v3342, %v3334
        %v4919 = vpack.c.b16 %v3343, %v3335
        %v4920 = vpack.c.b16 %v3344, %v3336
        %v4921 = vpack.c.b16 %v3345, %v3337
        %v4922 = vpack.c.b16 %v3346, %v3338
        %v4923 = vpack.c.b16 %v3347, %v3339
        %v4924 = vpack.c.b16 %v3356, %v3348
        %v4925 = vpack.c.b16 %v3357, %v3349
        %v4926 = vpack.c.b16 %v3358, %v3350
        %v4927 = vpack.c.b16 %v3359, %v3351
        %v4928 = vpack.c.b16 %v3360, %v3352
        %v4929 = vpack.c.b16 %v3361, %v3353
        %v4930 = vpack.c.b16 %v3362, %v3354
        %v4931 = vpack.c.b16 %v3363, %v3355
        %v4932 = vpack.c.b16 %v3372, %v3364
        %v4933 = vpack.c.b16 %v3373, %v3365
        %v4934 = vpack.c.b16 %v3374, %v3366
        %v4935 = vpack.c.b16 %v3375, %v3367
        %v4936 = vpack.c.b16 %v3376, %v3368
        %v4937 = vpack.c.b16 %v3377, %v3369
        %v4938 = vpack.c.b16 %v3378, %v3370
        %v4939 = vpack.c.b16 %v3379, %v3371
        %v4940 = vpack.c.b16 %v3388, %v3380
        %v4941 = vpack.c.b16 %v3389, %v3381
        %v4942 = vpack.c.b16 %v3390, %v3382
        %v4943 = vpack.c.b16 %v3391, %v3383
        %v4944 = vpack.c.b16 %v3392, %v3384
        %v4945 = vpack.c.b16 %v3393, %v3385
        %v4946 = vpack.c.b16 %v3394, %v3386
        %v4947 = vpack.c.b16 %v3395, %v3387
        %v4948 = vpack.c.b16 %v3404, %v3396
        %v4949 = vpack.c.b16 %v3405, %v3397
        %v4950 = vpack.c.b16 %v3406, %v3398
        %v4951 = vpack.c.b16 %v3407, %v3399
        %v4952 = vpack.c.b16 %v3408, %v3400
        %v4953 = vpack.c.b16 %v3409, %v3401
        %v4954 = vpack.c.b16 %v3410, %v3402
        %v4955 = vpack.c.b16 %v3411, %v3403
        %v4956 = vpack.c.b16 %v3420, %v3412
        %v4957 = vpack.c.b16 %v3421, %v3413
        %v4958 = vpack.c.b16 %v3422, %v3414
        %v4959 = vpack.c.b16 %v3423, %v3415
        %v4960 = vpack.c.b16 %v3424, %v3416
        %v4961 = vpack.c.b16 %v3425, %v3417
        %v4962 = vpack.c.b16 %v3426, %v3418
        %v4963 = vpack.c.b16 %v3427, %v3419
        %v4964 = vpack.c.b16 %v3436, %v3428
        %v4965 = vpack.c.b16 %v3437, %v3429
        %v4966 = vpack.c.b16 %v3438, %v3430
        %v4967 = vpack.c.b16 %v3439, %v3431
        %v4968 = vpack.c.b16 %v3440, %v3432
        %v4969 = vpack.c.b16 %v3441, %v3433
        %v4970 = vpack.c.b16 %v3442, %v3434
        %v4971 = vpack.c.b16 %v3443, %v3435
        %v4972 = vpack.c.b16 %v3452, %v3444
        %v4973 = vpack.c.b16 %v3453, %v3445
        %v4974 = vpack.c.b16 %v3454, %v3446
        %v4975 = vpack.c.b16 %v3455, %v3447
        %v4976 = vpack.c.b16 %v3456, %v3448
        %v4977 = vpack.c.b16 %v3457, %v3449
        %v4978 = vpack.c.b16 %v3458, %v3450
        %v4979 = vpack.c.b16 %v3459, %v3451
        %v4980 = vpack.c.b16 %v3468, %v3460
        %v4981 = vpack.c.b16 %v3469, %v3461
        %v4982 = vpack.c.b16 %v3470, %v3462
        %v4983 = vpack.c.b16 %v3471, %v3463
        %v4984 = vpack.c.b16 %v3472, %v3464
        %v4985 = vpack.c.b16 %v3473, %v3465
        %v4986 = vpack.c.b16 %v3474, %v3466
        %v4987 = vpack.c.b16 %v3475, %v3467
        %v4988 = vpack.c.b16 %v3484, %v3476
        %v4989 = vpack.c.b16 %v3485, %v3477
        %v4990 = vpack.c.b16 %v3486, %v3478
        %v4991 = vpack.c.b16 %v3487, %v3479
        %v4992 = vpack.c.b16 %v3488, %v3480
        %v4993 = vpack.c.b16 %v3489, %v3481
        %v4994 = vpack.c.b16 %v3490, %v3482
        %v4995 = vpack.c.b16 %v3491, %v3483
        %v4996 = vpack.c.b16 %v3500, %v3492
        %v4997 = vpack.c.b16 %v3501, %v3493
        %v4998 = vpack.c.b16 %v3502, %v3494
        %v4999 = vpack.c.b16 %v3503, %v3495
        %v5000 = vpack.c.b16 %v3504, %v3496
        %v5001 = vpack.c.b16 %v3505, %v3497
        %v5002 = vpack.c.b16 %v3506, %v3498
        %v5003 = vpack.c.b16 %v3507, %v3499
        %v5004 = vpack.c.b16 %v3516, %v3508
        %v5005 = vpack.c.b16 %v3517, %v3509
        %v5006 = vpack.c.b16 %v3518, %v3510
        %v5007 = vpack.c.b16 %v3519, %v3511
        %v5008 = vpack.c.b16 %v3520, %v3512
        %v5009 = vpack.c.b16 %v3521, %v3513
        %v5010 = vpack.c.b16 %v3522, %v3514
        %v5011 = vpack.c.b16 %v3523, %v3515
        %v5012 = vpack.c.b16 %v3532, %v3524
        %v5013 = vpack.c.b16 %v3533, %v3525
        %v5014 = vpack.c.b16 %v3534, %v3526
        %v5015 = vpack.c.b16 %v3535, %v3527
        %v5016 = vpack.c.b16 %v3536, %v3528
        %v5017 = vpack.c.b16 %v3537, %v3529
        %v5018 = vpack.c.b16 %v3538, %v3530
        %v5019 = vpack.c.b16 %v3539, %v3531
        %v5020 = vpack.c.b16 %v3548, %v3540
        %v5021 = vpack.c.b16 %v3549, %v3541
        %v5022 = vpack.c.b16 %v3550, %v3542
        %v5023 = vpack.c.b16 %v3551, %v3543
        %v5024 = vpack.c.b16 %v3552, %v3544
        %v5025 = vpack.c.b16 %v3553, %v3545
        %v5026 = vpack.c.b16 %v3554, %v3546
        %v5027 = vpack.c.b16 %v3555, %v3547
        %v5028 = vpack.c.b16 %v3564, %v3556
        %v5029 = vpack.c.b16 %v3565, %v3557
        %v5030 = vpack.c.b16 %v3566, %v3558
        %v5031 = vpack.c.b16 %v3567, %v3559
        %v5032 = vpack.c.b16 %v3568, %v3560
        %v5033 = vpack.c.b16 %v3569, %v3561
        %v5034 = vpack.c.b16 %v3570, %v3562
        %v5035 = vpack.c.b16 %v3571, %v3563
        %v5036 = vpack.c.b16 %v3580, %v3572
        %v5037 = vpack.c.b16 %v3581, %v3573
        %v5038 = vpack.c.b16 %v3582, %v3574
        %v5039 = vpack.c.b16 %v3583, %v3575
        %v5040 = vpack.c.b16 %v3584, %v3576
        %v5041 = vpack.c.b16 %v3585, %v3577
        %v5042 = vpack.c.b16 %v3586, %v3578
        %v5043 = vpack.c.b16 %v3587, %v3579
        %v5044 = vpack.c.b16 %v3596, %v3588
        %v5045 = vpack.c.b16 %v3597, %v3589
        %v5046 = vpack.c.b16 %v3598, %v3590
        %v5047 = vpack.c.b16 %v3599, %v3591
        %v5048 = vpack.c.b16 %v3600, %v3592
        %v5049 = vpack.c.b16 %v3601, %v3593
        %v5050 = vpack.c.b16 %v3602, %v3594
        %v5051 = vpack.c.b16 %v3603, %v3595
        %v5052 = vpack.c.b16 %v3612, %v3604
        %v5053 = vpack.c.b16 %v3613, %v3605
        %v5054 = vpack.c.b16 %v3614, %v3606
        %v5055 = vpack.c.b16 %v3615, %v3607
        %v5056 = vpack.c.b16 %v3616, %v3608
        %v5057 = vpack.c.b16 %v3617, %v3609
        %v5058 = vpack.c.b16 %v3618, %v3610
        %v5059 = vpack.c.b16 %v3619, %v3611
        %v5060 = vpack.c.b16 %v3628, %v3620
        %v5061 = vpack.c.b16 %v3629, %v3621
        %v5062 = vpack.c.b16 %v3630, %v3622
        %v5063 = vpack.c.b16 %v3631, %v3623
        %v5064 = vpack.c.b16 %v3632, %v3624
        %v5065 = vpack.c.b16 %v3633, %v3625
        %v5066 = vpack.c.b16 %v3634, %v3626
        %v5067 = vpack.c.b16 %v3635, %v3627
        %v5068 = vpack.c.b16 %v3644, %v3636
        %v5069 = vpack.c.b16 %v3645, %v3637
        %v5070 = vpack.c.b16 %v3646, %v3638
        %v5071 = vpack.c.b16 %v3647, %v3639
        %v5072 = vpack.c.b16 %v3648, %v3640
        %v5073 = vpack.c.b16 %v3649, %v3641
        %v5074 = vpack.c.b16 %v3650, %v3642
        %v5075 = vpack.c.b16 %v3651, %v3643
        %v5076 = vpack.c.b16 %v3660, %v3652
        %v5077 = vpack.c.b16 %v3661, %v3653
        %v5078 = vpack.c.b16 %v3662, %v3654
        %v5079 = vpack.c.b16 %v3663, %v3655
        %v5080 = vpack.c.b16 %v3664, %v3656
        %v5081 = vpack.c.b16 %v3665, %v3657
        %v5082 = vpack.c.b16 %v3666, %v3658
        %v5083 = vpack.c.b16 %v3667, %v3659
        %v5084 = vpack.c.b16 %v3676, %v3668
        %v5085 = vpack.c.b16 %v3677, %v3669
        %v5086 = vpack.c.b16 %v3678, %v3670
        %v5087 = vpack.c.b16 %v3679, %v3671
        %v5088 = vpack.c.b16 %v3680, %v3672
        %v5089 = vpack.c.b16 %v3681, %v3673
        %v5090 = vpack.c.b16 %v3682, %v3674
        %v5091 = vpack.c.b16 %v3683, %v3675
        %v5092 = vpack.c.b16 %v3692, %v3684
        %v5093 = vpack.c.b16 %v3693, %v3685
        %v5094 = vpack.c.b16 %v3694, %v3686
        %v5095 = vpack.c.b16 %v3695, %v3687
        %v5096 = vpack.c.b16 %v3696, %v3688
        %v5097 = vpack.c.b16 %v3697, %v3689
        %v5098 = vpack.c.b16 %v3698, %v3690
        %v5099 = vpack.c.b16 %v3699, %v3691
        %v5100 = vpack.c.b16 %v3708, %v3700
        %v5101 = vpack.c.b16 %v3709, %v3701
        %v5102 = vpack.c.b16 %v3710, %v3702
        %v5103 = vpack.c.b16 %v3711, %v3703
        %v5104 = vpack.c.b16 %v3712, %v3704
        %v5105 = vpack.c.b16 %v3713, %v3705
        %v5106 = vpack.c.b16 %v3714, %v3706
        %v5107 = vpack.c.b16 %v3715, %v3707
        %v5108 = vpack.c.b16 %v3724, %v3716
        %v5109 = vpack.c.b16 %v3725, %v3717
        %v5110 = vpack.c.b16 %v3726, %v3718
        %v5111 = vpack.c.b16 %v3727, %v3719
        %v5112 = vpack.c.b16 %v3728, %v3720
        %v5113 = vpack.c.b16 %v3729, %v3721
        %v5114 = vpack.c.b16 %v3730, %v3722
        %v5115 = vpack.c.b16 %v3731, %v3723
        %v5116 = vpack.c.b16 %v3740, %v3732
        %v5117 = vpack.c.b16 %v3741, %v3733
        %v5118 = vpack.c.b16 %v3742, %v3734
        %v5119 = vpack.c.b16 %v3743, %v3735
        %v5120 = vpack.c.b16 %v3744, %v3736
        %v5121 = vpack.c.b16 %v3745, %v3737
        %v5122 = vpack.c.b16 %v3746, %v3738
        %v5123 = vpack.c.b16 %v3747, %v3739
        %v5124 = vpack.c.b16 %v3756, %v3748
        %v5125 = vpack.c.b16 %v3757, %v3749
        %v5126 = vpack.c.b16 %v3758, %v3750
        %v5127 = vpack.c.b16 %v3759, %v3751
        %v5128 = vpack.c.b16 %v3760, %v3752
        %v5129 = vpack.c.b16 %v3761, %v3753
        %v5130 = vpack.c.b16 %v3762, %v3754
        %v5131 = vpack.c.b16 %v3763, %v3755
        %v5132 = vpack.c.b16 %v3772, %v3764
        %v5133 = vpack.c.b16 %v3773, %v3765
        %v5134 = vpack.c.b16 %v3774, %v3766
        %v5135 = vpack.c.b16 %v3775, %v3767
        %v5136 = vpack.c.b16 %v3776, %v3768
        %v5137 = vpack.c.b16 %v3777, %v3769
        %v5138 = vpack.c.b16 %v3778, %v3770
        %v5139 = vpack.c.b16 %v3779, %v3771
        %v5140 = vpack.c.b16 %v3788, %v3780
        %v5141 = vpack.c.b16 %v3789, %v3781
        %v5142 = vpack.c.b16 %v3790, %v3782
        %v5143 = vpack.c.b16 %v3791, %v3783
        %v5144 = vpack.c.b16 %v3792, %v3784
        %v5145 = vpack.c.b16 %v3793, %v3785
        %v5146 = vpack.c.b16 %v3794, %v3786
        %v5147 = vpack.c.b16 %v3795, %v3787
        %v5148 = vpack.c.b16 %v3804, %v3796
        %v5149 = vpack.c.b16 %v3805, %v3797
        %v5150 = vpack.c.b16 %v3806, %v3798
        %v5151 = vpack.c.b16 %v3807, %v3799
        %v5152 = vpack.c.b16 %v3808, %v3800
        %v5153 = vpack.c.b16 %v3809, %v3801
        %v5154 = vpack.c.b16 %v3810, %v3802
        %v5155 = vpack.c.b16 %v3811, %v3803
        %v5156 = vpack.c.b16 %v3820, %v3812
        %v5157 = vpack.c.b16 %v3821, %v3813
        %v5158 = vpack.c.b16 %v3822, %v3814
        %v5159 = vpack.c.b16 %v3823, %v3815
        %v5160 = vpack.c.b16 %v3824, %v3816
        %v5161 = vpack.c.b16 %v3825, %v3817
        %v5162 = vpack.c.b16 %v3826, %v3818
        %v5163 = vpack.c.b16 %v3827, %v3819
        %v5164 = vpack.c.b16 %v3836, %v3828
        %v5165 = vpack.c.b16 %v3837, %v3829
        %v5166 = vpack.c.b16 %v3838, %v3830
        %v5167 = vpack.c.b16 %v3839, %v3831
        %v5168 = vpack.c.b16 %v3840, %v3832
        %v5169 = vpack.c.b16 %v3841, %v3833
        %v5170 = vpack.c.b16 %v3842, %v3834
        %v5171 = vpack.c.b16 %v3843, %v3835
        %v5172 = vpack.c.b16 %v3852, %v3844
        %v5173 = vpack.c.b16 %v3853, %v3845
        %v5174 = vpack.c.b16 %v3854, %v3846
        %v5175 = vpack.c.b16 %v3855, %v3847
        %v5176 = vpack.c.b16 %v3856, %v3848
        %v5177 = vpack.c.b16 %v3857, %v3849
        %v5178 = vpack.c.b16 %v3858, %v3850
        %v5179 = vpack.c.b16 %v3859, %v3851
        %v5180 = vpack.c.b16 %v3868, %v3860
        %v5181 = vpack.c.b16 %v3869, %v3861
        %v5182 = vpack.c.b16 %v3870, %v3862
        %v5183 = vpack.c.b16 %v3871, %v3863
        %v5184 = vpack.c.b16 %v3872, %v3864
        %v5185 = vpack.c.b16 %v3873, %v3865
        %v5186 = vpack.c.b16 %v3874, %v3866
        %v5187 = vpack.c.b16 %v3875, %v3867
        %v5188 = vpack.c.b16 %v3884, %v3876
        %v5189 = vpack.c.b16 %v3885, %v3877
        %v5190 = vpack.c.b16 %v3886, %v3878
        %v5191 = vpack.c.b16 %v3887, %v3879
        %v5192 = vpack.c.b16 %v3888, %v3880
        %v5193 = vpack.c.b16 %v3889, %v3881
        %v5194 = vpack.c.b16 %v3890, %v3882
        %v5195 = vpack.c.b16 %v3891, %v3883
        %v5196 = vpack.c.b16 %v3900, %v3892
        %v5197 = vpack.c.b16 %v3901, %v3893
        %v5198 = vpack.c.b16 %v3902, %v3894
        %v5199 = vpack.c.b16 %v3903, %v3895
        %v5200 = vpack.c.b16 %v3904, %v3896
        %v5201 = vpack.c.b16 %v3905, %v3897
        %v5202 = vpack.c.b16 %v3906, %v3898
        %v5203 = vpack.c.b16 %v3907, %v3899
        %v5204 = vpack.c.b16 %v3916, %v3908
        %v5205 = vpack.c.b16 %v3917, %v3909
        %v5206 = vpack.c.b16 %v3918, %v3910
        %v5207 = vpack.c.b16 %v3919, %v3911
        %v5208 = vpack.c.b16 %v3920, %v3912
        %v5209 = vpack.c.b16 %v3921, %v3913
        %v5210 = vpack.c.b16 %v3922, %v3914
        %v5211 = vpack.c.b16 %v3923, %v3915
        %v5212 = vpack.c.b16 %v3932, %v3924
        %v5213 = vpack.c.b16 %v3933, %v3925
        %v5214 = vpack.c.b16 %v3934, %v3926
        %v5215 = vpack.c.b16 %v3935, %v3927
        %v5216 = vpack.c.b16 %v3936, %v3928
        %v5217 = vpack.c.b16 %v3937, %v3929
        %v5218 = vpack.c.b16 %v3938, %v3930
        %v5219 = vpack.c.b16 %v3939, %v3931
        %v5220 = vpack.c.b16 %v3948, %v3940
        %v5221 = vpack.c.b16 %v3949, %v3941
        %v5222 = vpack.c.b16 %v3950, %v3942
        %v5223 = vpack.c.b16 %v3951, %v3943
        %v5224 = vpack.c.b16 %v3952, %v3944
        %v5225 = vpack.c.b16 %v3953, %v3945
        %v5226 = vpack.c.b16 %v3954, %v3946
        %v5227 = vpack.c.b16 %v3955, %v3947
        %v5228 = vpack.c.b16 %v3964, %v3956
        %v5229 = vpack.c.b16 %v3965, %v3957
        %v5230 = vpack.c.b16 %v3966, %v3958
        %v5231 = vpack.c.b16 %v3967, %v3959
        %v5232 = vpack.c.b16 %v3968, %v3960
        %v5233 = vpack.c.b16 %v3969, %v3961
        %v5234 = vpack.c.b16 %v3970, %v3962
        %v5235 = vpack.c.b16 %v3971, %v3963
        %v5236 = vpack.c.b16 %v3980, %v3972
        %v5237 = vpack.c.b16 %v3981, %v3973
        %v5238 = vpack.c.b16 %v3982, %v3974
        %v5239 = vpack.c.b16 %v3983, %v3975
        %v5240 = vpack.c.b16 %v3984, %v3976
        %v5241 = vpack.c.b16 %v3985, %v3977
        %v5242 = vpack.c.b16 %v3986, %v3978
        %v5243 = vpack.c.b16 %v3987, %v3979
        %v5244 = vpack.c.b16 %v3996, %v3988
        %v5245 = vpack.c.b16 %v3997, %v3989
        %v5246 = vpack.c.b16 %v3998, %v3990
        %v5247 = vpack.c.b16 %v3999, %v3991
        %v5248 = vpack.c.b16 %v4000, %v3992
        %v5249 = vpack.c.b16 %v4001, %v3993
        %v5250 = vpack.c.b16 %v4002, %v3994
        %v5251 = vpack.c.b16 %v4003, %v3995
        %v5252 = vpack.c.b16 %v4012, %v4004
        %v5253 = vpack.c.b16 %v4013, %v4005
        %v5254 = vpack.c.b16 %v4014, %v4006
        %v5255 = vpack.c.b16 %v4015, %v4007
        %v5256 = vpack.c.b16 %v4016, %v4008
        %v5257 = vpack.c.b16 %v4017, %v4009
        %v5258 = vpack.c.b16 %v4018, %v4010
        %v5259 = vpack.c.b16 %v4019, %v4011
        %v5260 = vpack.c.b16 %v4028, %v4020
        %v5261 = vpack.c.b16 %v4029, %v4021
        %v5262 = vpack.c.b16 %v4030, %v4022
        %v5263 = vpack.c.b16 %v4031, %v4023
        %v5264 = vpack.c.b16 %v4032, %v4024
        %v5265 = vpack.c.b16 %v4033, %v4025
        %v5266 = vpack.c.b16 %v4034, %v4026
        %v5267 = vpack.c.b16 %v4035, %v4027
        %v5268 = vpack.c.b16 %v4044, %v4036
        %v5269 = vpack.c.b16 %v4045, %v4037
        %v5270 = vpack.c.b16 %v4046, %v4038
        %v5271 = vpack.c.b16 %v4047, %v4039
        %v5272 = vpack.c.b16 %v4048, %v4040
        %v5273 = vpack.c.b16 %v4049, %v4041
        %v5274 = vpack.c.b16 %v4050, %v4042
        %v5275 = vpack.c.b16 %v4051, %v4043
        %v5276 = vpack.c.b16 %v4060, %v4052
        %v5277 = vpack.c.b16 %v4061, %v4053
        %v5278 = vpack.c.b16 %v4062, %v4054
        %v5279 = vpack.c.b16 %v4063, %v4055
        %v5280 = vpack.c.b16 %v4064, %v4056
        %v5281 = vpack.c.b16 %v4065, %v4057
        %v5282 = vpack.c.b16 %v4066, %v4058
        %v5283 = vpack.c.b16 %v4067, %v4059
        %v5284 = vpack.c.b16 %v4076, %v4068
        %v5285 = vpack.c.b16 %v4077, %v4069
        %v5286 = vpack.c.b16 %v4078, %v4070
        %v5287 = vpack.c.b16 %v4079, %v4071
        %v5288 = vpack.c.b16 %v4080, %v4072
        %v5289 = vpack.c.b16 %v4081, %v4073
        %v5290 = vpack.c.b16 %v4082, %v4074
        %v5291 = vpack.c.b16 %v4083, %v4075
        %v5292 = vpack.c.b16 %v4092, %v4084
        %v5293 = vpack.c.b16 %v4093, %v4085
        %v5294 = vpack.c.b16 %v4094, %v4086
        %v5295 = vpack.c.b16 %v4095, %v4087
        %v5296 = vpack.c.b16 %v4096, %v4088
        %v5297 = vpack.c.b16 %v4097, %v4089
        %v5298 = vpack.c.b16 %v4098, %v4090
        %v5299 = vpack.c.b16 %v4099, %v4091
        %v5300 = vpack.c.b16 %v4108, %v4100
        %v5301 = vpack.c.b16 %v4109, %v4101
        %v5302 = vpack.c.b16 %v4110, %v4102
        %v5303 = vpack.c.b16 %v4111, %v4103
        %v5304 = vpack.c.b16 %v4112, %v4104
        %v5305 = vpack.c.b16 %v4113, %v4105
        %v5306 = vpack.c.b16 %v4114, %v4106
        %v5307 = vpack.c.b16 %v4115, %v4107
        %v5308 = vpack.c.b16 %v4124, %v4116
        %v5309 = vpack.c.b16 %v4125, %v4117
        %v5310 = vpack.c.b16 %v4126, %v4118
        %v5311 = vpack.c.b16 %v4127, %v4119
        %v5312 = vpack.c.b16 %v4128, %v4120
        %v5313 = vpack.c.b16 %v4129, %v4121
        %v5314 = vpack.c.b16 %v4130, %v4122
        %v5315 = vpack.c.b16 %v4131, %v4123
        %v5316 = vpack.c.b16 %v4140, %v4132
        %v5317 = vpack.c.b16 %v4141, %v4133
        %v5318 = vpack.c.b16 %v4142, %v4134
        %v5319 = vpack.c.b16 %v4143, %v4135
        %v5320 = vpack.c.b16 %v4144, %v4136
        %v5321 = vpack.c.b16 %v4145, %v4137
        %v5322 = vpack.c.b16 %v4146, %v4138
        %v5323 = vpack.c.b16 %v4147, %v4139
        %v5324 = vpack.c.b16 %v4156, %v4148
        %v5325 = vpack.c.b16 %v4157, %v4149
        %v5326 = vpack.c.b16 %v4158, %v4150
        %v5327 = vpack.c.b16 %v4159, %v4151
        %v5328 = vpack.c.b16 %v4160, %v4152
        %v5329 = vpack.c.b16 %v4161, %v4153
        %v5330 = vpack.c.b16 %v4162, %v4154
        %v5331 = vpack.c.b16 %v4163, %v4155
        %v5332 = vpack.c.b16 %v4172, %v4164
        %v5333 = vpack.c.b16 %v4173, %v4165
        %v5334 = vpack.c.b16 %v4174, %v4166
        %v5335 = vpack.c.b16 %v4175, %v4167
        %v5336 = vpack.c.b16 %v4176, %v4168
        %v5337 = vpack.c.b16 %v4177, %v4169
        %v5338 = vpack.c.b16 %v4178, %v4170
        %v5339 = vpack.c.b16 %v4179, %v4171
        %v5340 = vpack.c.b16 %v4188, %v4180
        %v5341 = vpack.c.b16 %v4189, %v4181
        %v5342 = vpack.c.b16 %v4190, %v4182
        %v5343 = vpack.c.b16 %v4191, %v4183
        %v5344 = vpack.c.b16 %v4192, %v4184
        %v5345 = vpack.c.b16 %v4193, %v4185
        %v5346 = vpack.c.b16 %v4194, %v4186
        %v5347 = vpack.c.b16 %v4195, %v4187
        %v5348 = vpack.c.b16 %v4204, %v4196
        %v5349 = vpack.c.b16 %v4205, %v4197
        %v5350 = vpack.c.b16 %v4206, %v4198
        %v5351 = vpack.c.b16 %v4207, %v4199
        %v5352 = vpack.c.b16 %v4208, %v4200
        %v5353 = vpack.c.b16 %v4209, %v4201
        %v5354 = vpack.c.b16 %v4210, %v4202
        %v5355 = vpack.c.b16 %v4211, %v4203
        %v5356 = vpack.c.b16 %v4220, %v4212
        %v5357 = vpack.c.b16 %v4221, %v4213
        %v5358 = vpack.c.b16 %v4222, %v4214
        %v5359 = vpack.c.b16 %v4223, %v4215
        %v5360 = vpack.c.b16 %v4224, %v4216
        %v5361 = vpack.c.b16 %v4225, %v4217
        %v5362 = vpack.c.b16 %v4226, %v4218
        %v5363 = vpack.c.b16 %v4227, %v4219
        %v5364 = vpack.c.b16 %v4236, %v4228
        %v5365 = vpack.c.b16 %v4237, %v4229
        %v5366 = vpack.c.b16 %v4238, %v4230
        %v5367 = vpack.c.b16 %v4239, %v4231
        %v5368 = vpack.c.b16 %v4240, %v4232
        %v5369 = vpack.c.b16 %v4241, %v4233
        %v5370 = vpack.c.b16 %v4242, %v4234
        %v5371 = vpack.c.b16 %v4243, %v4235
        %v5372 = vpack.c.b16 %v4252, %v4244
        %v5373 = vpack.c.b16 %v4253, %v4245
        %v5374 = vpack.c.b16 %v4254, %v4246
        %v5375 = vpack.c.b16 %v4255, %v4247
        %v5376 = vpack.c.b16 %v4256, %v4248
        %v5377 = vpack.c.b16 %v4257, %v4249
        %v5378 = vpack.c.b16 %v4258, %v4250
        %v5379 = vpack.c.b16 %v4259, %v4251
        %v5380 = vpack.c.b16 %v4268, %v4260
        %v5381 = vpack.c.b16 %v4269, %v4261
        %v5382 = vpack.c.b16 %v4270, %v4262
        %v5383 = vpack.c.b16 %v4271, %v4263
        %v5384 = vpack.c.b16 %v4272, %v4264
        %v5385 = vpack.c.b16 %v4273, %v4265
        %v5386 = vpack.c.b16 %v4274, %v4266
        %v5387 = vpack.c.b16 %v4275, %v4267
        %v5388 = vpack.c.b16 %v4284, %v4276
        %v5389 = vpack.c.b16 %v4285, %v4277
        %v5390 = vpack.c.b16 %v4286, %v4278
        %v5391 = vpack.c.b16 %v4287, %v4279
        %v5392 = vpack.c.b16 %v4288, %v4280
        %v5393 = vpack.c.b16 %v4289, %v4281
        %v5394 = vpack.c.b16 %v4290, %v4282
        %v5395 = vpack.c.b16 %v4291, %v4283
        %v5396 = vpack.c.b16 %v4300, %v4292
        %v5397 = vpack.c.b16 %v4301, %v4293
        %v5398 = vpack.c.b16 %v4302, %v4294
        %v5399 = vpack.c.b16 %v4303, %v4295
        %v5400 = vpack.c.b16 %v4304, %v4296
        %v5401 = vpack.c.b16 %v4305, %v4297
        %v5402 = vpack.c.b16 %v4306, %v4298
        %v5403 = vpack.c.b16 %v4307, %v4299
        %v5404 = vpack.c.b16 %v4316, %v4308
        %v5405 = vpack.c.b16 %v4317, %v4309
        %v5406 = vpack.c.b16 %v4318, %v4310
        %v5407 = vpack.c.b16 %v4319, %v4311
        %v5408 = vpack.c.b16 %v4320, %v4312
        %v5409 = vpack.c.b16 %v4321, %v4313
        %v5410 = vpack.c.b16 %v4322, %v4314
        %v5411 = vpack.c.b16 %v4323, %v4315
        %v5412 = vpack.c.b16 %v4332, %v4324
        %v5413 = vpack.c.b16 %v4333, %v4325
        %v5414 = vpack.c.b16 %v4334, %v4326
        %v5415 = vpack.c.b16 %v4335, %v4327
        %v5416 = vpack.c.b16 %v4336, %v4328
        %v5417 = vpack.c.b16 %v4337, %v4329
        %v5418 = vpack.c.b16 %v4338, %v4330
        %v5419 = vpack.c.b16 %v4339, %v4331
        %v5420 = vpack.c.b16 %v4348, %v4340
        %v5421 = vpack.c.b16 %v4349, %v4341
        %v5422 = vpack.c.b16 %v4350, %v4342
        %v5423 = vpack.c.b16 %v4351, %v4343
        %v5424 = vpack.c.b16 %v4352, %v4344
        %v5425 = vpack.c.b16 %v4353, %v4345
        %v5426 = vpack.c.b16 %v4354, %v4346
        %v5427 = vpack.c.b16 %v4355, %v4347
        %v5428 = vpack.c.b16 %v4364, %v4356
        %v5429 = vpack.c.b16 %v4365, %v4357
        %v5430 = vpack.c.b16 %v4366, %v4358
        %v5431 = vpack.c.b16 %v4367, %v4359
        %v5432 = vpack.c.b16 %v4368, %v4360
        %v5433 = vpack.c.b16 %v4369, %v4361
        %v5434 = vpack.c.b16 %v4370, %v4362
        %v5435 = vpack.c.b16 %v4371, %v4363
        %v5436 = vpack.c.b16 %v4380, %v4372
        %v5437 = vpack.c.b16 %v4381, %v4373
        %v5438 = vpack.c.b16 %v4382, %v4374
        %v5439 = vpack.c.b16 %v4383, %v4375
        %v5440 = vpack.c.b16 %v4384, %v4376
        %v5441 = vpack.c.b16 %v4385, %v4377
        %v5442 = vpack.c.b16 %v4386, %v4378
        %v5443 = vpack.c.b16 %v4387, %v4379
        %v5444 = vpack.c.b16 %v4396, %v4388
        %v5445 = vpack.c.b16 %v4397, %v4389
        %v5446 = vpack.c.b16 %v4398, %v4390
        %v5447 = vpack.c.b16 %v4399, %v4391
        %v5448 = vpack.c.b16 %v4400, %v4392
        %v5449 = vpack.c.b16 %v4401, %v4393
        %v5450 = vpack.c.b16 %v4402, %v4394
        %v5451 = vpack.c.b16 %v4403, %v4395
        %v5452 = vpack.c.b16 %v4412, %v4404
        %v5453 = vpack.c.b16 %v4413, %v4405
        %v5454 = vpack.c.b16 %v4414, %v4406
        %v5455 = vpack.c.b16 %v4415, %v4407
        %v5456 = vpack.c.b16 %v4416, %v4408
        %v5457 = vpack.c.b16 %v4417, %v4409
        %v5458 = vpack.c.b16 %v4418, %v4410
        %v5459 = vpack.c.b16 %v4419, %v4411
        %v5460 = vpack.c.b16 %v4428, %v4420
        %v5461 = vpack.c.b16 %v4429, %v4421
        %v5462 = vpack.c.b16 %v4430, %v4422
        %v5463 = vpack.c.b16 %v4431, %v4423
        %v5464 = vpack.c.b16 %v4432, %v4424
        %v5465 = vpack.c.b16 %v4433, %v4425
        %v5466 = vpack.c.b16 %v4434, %v4426
        %v5467 = vpack.c.b16 %v4435, %v4427
        %v5468 = vpack.c.b16 %v4444, %v4436
        %v5469 = vpack.c.b16 %v4445, %v4437
        %v5470 = vpack.c.b16 %v4446, %v4438
        %v5471 = vpack.c.b16 %v4447, %v4439
        %v5472 = vpack.c.b16 %v4448, %v4440
        %v5473 = vpack.c.b16 %v4449, %v4441
        %v5474 = vpack.c.b16 %v4450, %v4442
        %v5475 = vpack.c.b16 %v4451, %v4443
        %6500 = vmatprep.subr.bf16.mxu0 %v4453
        %6501 = vmatpush1.bf16.msra.mxu0 %v4452
        %6502 = vmatprep.subr.bf16.mxu0 %v4461
        %6503 = vmatpush1.bf16.msra.mxu0 %v4460
        %6504 = vmatprep.subr.bf16.mxu0 %v4469
        %6505 = vmatpush1.bf16.msra.mxu0 %v4468
        %6506 = vmatprep.subr.bf16.mxu0 %v4477
        %6507 = vmatpush1.bf16.msra.mxu0 %v4476
        %6508 = vmatprep.subr.bf16.mxu0 %v4485
        %6509 = vmatpush1.bf16.msra.mxu0 %v4484
        %6510 = vmatprep.subr.bf16.mxu0 %v4493
        %6511 = vmatpush1.bf16.msra.mxu0 %v4492
        %6512 = vmatprep.subr.bf16.mxu0 %v4501
        %6513 = vmatpush1.bf16.msra.mxu0 %v4500
        %6514 = vmatprep.subr.bf16.mxu0 %v4509
        %6515 = vmatpush1.bf16.msra.mxu0 %v4508
        %6516 = vmatprep.subr.bf16.mxu0 %v4517
        %6517 = vmatpush1.bf16.msra.mxu0 %v4516
        %6518 = vmatprep.subr.bf16.mxu0 %v4525
        %6519 = vmatpush1.bf16.msra.mxu0 %v4524
        %6520 = vmatprep.subr.bf16.mxu0 %v4533
        %6521 = vmatpush1.bf16.msra.mxu0 %v4532
        %6522 = vmatprep.subr.bf16.mxu0 %v4541
        %6523 = vmatpush1.bf16.msra.mxu0 %v4540
        %6524 = vmatprep.subr.bf16.mxu0 %v4549
        %6525 = vmatpush1.bf16.msra.mxu0 %v4548
        %6526 = vmatprep.subr.bf16.mxu0 %v4557
        %6527 = vmatpush1.bf16.msra.mxu0 %v4556
        %6528 = vmatprep.subr.bf16.mxu0 %v4565
        %6529 = vmatpush1.bf16.msra.mxu0 %v4564
        %6530 = vmatprep.subr.bf16.mxu0 %v4573
        %6531 = vmatpush1.bf16.msra.mxu0 %v4572
        %6532 = vmatprep.mubr.bf16.mxu0 %v1349
        %6533 = vmatmul.mubr.bf16.gmra.mrb[0].mxu0 %v1348
        %v6534 = vpop.f32.mrb[0].mxu0
        %v6535 = vadd.f32 0.0, %v6534
        %v6536 = vpop.f32.mrb[0].mxu0
        %v6537 = vadd.f32 0.0, %v6536
        %v6538 = vpop.f32.mrb[0].mxu0
        %v6539 = vpop.f32.mrb[0].mxu0
        %6540 = vdwg.mxu0
        %6541 = vmatprep.subr.bf16.mxu0 %v4581
        %6542 = vmatpush1.bf16.msra.mxu0 %v4580
        %6543 = vmatprep.subr.bf16.mxu0 %v4589
        %6544 = vmatpush1.bf16.msra.mxu0 %v4588
        %6545 = vmatprep.subr.bf16.mxu0 %v4597
        %6546 = vmatpush1.bf16.msra.mxu0 %v4596
        %6547 = vmatprep.subr.bf16.mxu0 %v4605
        %6548 = vmatpush1.bf16.msra.mxu0 %v4604
        %6549 = vmatprep.subr.bf16.mxu0 %v4613
        %6550 = vmatpush1.bf16.msra.mxu0 %v4612
        %6551 = vmatprep.subr.bf16.mxu0 %v4621
        %6552 = vmatpush1.bf16.msra.mxu0 %v4620
        %6553 = vmatprep.subr.bf16.mxu0 %v4629
        %6554 = vmatpush1.bf16.msra.mxu0 %v4628
        %6555 = vmatprep.subr.bf16.mxu0 %v4637
        %6556 = vmatpush1.bf16.msra.mxu0 %v4636
        %6557 = vmatprep.subr.bf16.mxu0 %v4645
        %6558 = vmatpush1.bf16.msra.mxu0 %v4644
        %6559 = vmatprep.subr.bf16.mxu0 %v4653
        %6560 = vmatpush1.bf16.msra.mxu0 %v4652
        %6561 = vmatprep.subr.bf16.mxu0 %v4661
        %6562 = vmatpush1.bf16.msra.mxu0 %v4660
        %6563 = vmatprep.subr.bf16.mxu0 %v4669
        %6564 = vmatpush1.bf16.msra.mxu0 %v4668
        %6565 = vmatprep.subr.bf16.mxu0 %v4677
        %6566 = vmatpush1.bf16.msra.mxu0 %v4676
        %6567 = vmatprep.subr.bf16.mxu0 %v4685
        %6568 = vmatpush1.bf16.msra.mxu0 %v4684
        %6569 = vmatprep.subr.bf16.mxu0 %v4693
        %6570 = vmatpush1.bf16.msra.mxu0 %v4692
        %6571 = vmatprep.subr.bf16.mxu0 %v4701
        %6572 = vmatpush1.bf16.msra.mxu0 %v4700
        %6573 = vmatprep.mubr.bf16.mxu0 %v1351
        %6574 = vmatmul.mubr.bf16.gmra.mrb[0].mxu0 %v1350
        %v6575 = vpop.f32.mrb[0].mxu0
        %v6576 = vadd.f32 %v6535, %v6575
        %v6577 = vpop.f32.mrb[0].mxu0
        %v6578 = vadd.f32 %v6537, %v6577
        %v6579 = vpop.f32.mrb[0].mxu0
        %v6580 = vpop.f32.mrb[0].mxu0
        %6581 = vdwg.mxu0
        %6582 = vmatprep.subr.bf16.mxu0 %v4709
        %6583 = vmatpush1.bf16.msra.mxu0 %v4708
        %6584 = vmatprep.subr.bf16.mxu0 %v4717
        %6585 = vmatpush1.bf16.msra.mxu0 %v4716
        %6586 = vmatprep.subr.bf16.mxu0 %v4725
        %6587 = vmatpush1.bf16.msra.mxu0 %v4724
        %6588 = vmatprep.subr.bf16.mxu0 %v4733
        %6589 = vmatpush1.bf16.msra.mxu0 %v4732
        %6590 = vmatprep.subr.bf16.mxu0 %v4741
        %6591 = vmatpush1.bf16.msra.mxu0 %v4740
        %6592 = vmatprep.subr.bf16.mxu0 %v4749
        %6593 = vmatpush1.bf16.msra.mxu0 %v4748
        %6594 = vmatprep.subr.bf16.mxu0 %v4757
        %6595 = vmatpush1.bf16.msra.mxu0 %v4756
        %6596 = vmatprep.subr.bf16.mxu0 %v4765
        %6597 = vmatpush1.bf16.msra.mxu0 %v4764
        %6598 = vmatprep.subr.bf16.mxu0 %v4773
        %6599 = vmatpush1.bf16.msra.mxu0 %v4772
        %6600 = vmatprep.subr.bf16.mxu0 %v4781
        %6601 = vmatpush1.bf16.msra.mxu0 %v4780
        %6602 = vmatprep.subr.bf16.mxu0 %v4789
        %6603 = vmatpush1.bf16.msra.mxu0 %v4788
        %6604 = vmatprep.subr.bf16.mxu0 %v4797
        %6605 = vmatpush1.bf16.msra.mxu0 %v4796
        %6606 = vmatprep.subr.bf16.mxu0 %v4805
        %6607 = vmatpush1.bf16.msra.mxu0 %v4804
        %6608 = vmatprep.subr.bf16.mxu0 %v4813
        %6609 = vmatpush1.bf16.msra.mxu0 %v4812
        %6610 = vmatprep.subr.bf16.mxu0 %v4821
        %6611 = vmatpush1.bf16.msra.mxu0 %v4820
        %6612 = vmatprep.subr.bf16.mxu0 %v4829
        %6613 = vmatpush1.bf16.msra.mxu0 %v4828
        %6614 = vmatprep.mubr.bf16.mxu0 %v1353
        %6615 = vmatmul.mubr.bf16.gmra.mrb[0].mxu0 %v1352
        %v6616 = vpop.f32.mrb[0].mxu0
        %v6617 = vadd.f32 %v6576, %v6616
        %v6618 = vpop.f32.mrb[0].mxu0
        %v6619 = vadd.f32 %v6578, %v6618
        %v6620 = vpop.f32.mrb[0].mxu0
        %v6621 = vpop.f32.mrb[0].mxu0
        %6622 = vdwg.mxu0
        %6623 = vmatprep.subr.bf16.mxu0 %v4837
        %6624 = vmatpush1.bf16.msra.mxu0 %v4836
        %6625 = vmatprep.subr.bf16.mxu0 %v4845
        %6626 = vmatpush1.bf16.msra.mxu0 %v4844
        %6627 = vmatprep.subr.bf16.mxu0 %v4853
        %6628 = vmatpush1.bf16.msra.mxu0 %v4852
        %6629 = vmatprep.subr.bf16.mxu0 %v4861
        %6630 = vmatpush1.bf16.msra.mxu0 %v4860
        %6631 = vmatprep.subr.bf16.mxu0 %v4869
        %6632 = vmatpush1.bf16.msra.mxu0 %v4868
        %6633 = vmatprep.subr.bf16.mxu0 %v4877
        %6634 = vmatpush1.bf16.msra.mxu0 %v4876
        %6635 = vmatprep.subr.bf16.mxu0 %v4885
        %6636 = vmatpush1.bf16.msra.mxu0 %v4884
        %6637 = vmatprep.subr.bf16.mxu0 %v4893
        %6638 = vmatpush1.bf16.msra.mxu0 %v4892
        %6639 = vmatprep.subr.bf16.mxu0 %v4901
        %6640 = vmatpush1.bf16.msra.mxu0 %v4900
        %6641 = vmatprep.subr.bf16.mxu0 %v4909
        %6642 = vmatpush1.bf16.msra.mxu0 %v4908
        %6643 = vmatprep.subr.bf16.mxu0 %v4917
        %6644 = vmatpush1.bf16.msra.mxu0 %v4916
        %6645 = vmatprep.subr.bf16.mxu0 %v4925
        %6646 = vmatpush1.bf16.msra.mxu0 %v4924
        %6647 = vmatprep.subr.bf16.mxu0 %v4933
        %6648 = vmatpush1.bf16.msra.mxu0 %v4932
        %6649 = vmatprep.subr.bf16.mxu0 %v4941
        %6650 = vmatpush1.bf16.msra.mxu0 %v4940
        %6651 = vmatprep.subr.bf16.mxu0 %v4949
        %6652 = vmatpush1.bf16.msra.mxu0 %v4948
        %6653 = vmatprep.subr.bf16.mxu0 %v4957
        %6654 = vmatpush1.bf16.msra.mxu0 %v4956
        %6655 = vmatprep.mubr.bf16.mxu0 %v1355
        %6656 = vmatmul.mubr.bf16.gmra.mrb[0].mxu0 %v1354
        %v6657 = vpop.f32.mrb[0].mxu0
        %v6658 = vadd.f32 %v6617, %v6657
        %v6659 = vpop.f32.mrb[0].mxu0
        %v6660 = vadd.f32 %v6619, %v6659
        %v6661 = vpop.f32.mrb[0].mxu0
        %v6662 = vpop.f32.mrb[0].mxu0
        %6663 = vdwg.mxu0
        %6664 = vmatprep.subr.bf16.mxu0 %v4965
        %6665 = vmatpush1.bf16.msra.mxu0 %v4964
        %6666 = vmatprep.subr.bf16.mxu0 %v4973
        %6667 = vmatpush1.bf16.msra.mxu0 %v4972
        %6668 = vmatprep.subr.bf16.mxu0 %v4981
        %6669 = vmatpush1.bf16.msra.mxu0 %v4980
        %6670 = vmatprep.subr.bf16.mxu0 %v4989
        %6671 = vmatpush1.bf16.msra.mxu0 %v4988
        %6672 = vmatprep.subr.bf16.mxu0 %v4997
        %6673 = vmatpush1.bf16.msra.mxu0 %v4996
        %6674 = vmatprep.subr.bf16.mxu0 %v5005
        %6675 = vmatpush1.bf16.msra.mxu0 %v5004
        %6676 = vmatprep.subr.bf16.mxu0 %v5013
        %6677 = vmatpush1.bf16.msra.mxu0 %v5012
        %6678 = vmatprep.subr.bf16.mxu0 %v5021
        %6679 = vmatpush1.bf16.msra.mxu0 %v5020
        %6680 = vmatprep.subr.bf16.mxu0 %v5029
        %6681 = vmatpush1.bf16.msra.mxu0 %v5028
        %6682 = vmatprep.subr.bf16.mxu0 %v5037
        %6683 = vmatpush1.bf16.msra.mxu0 %v5036
        %6684 = vmatprep.subr.bf16.mxu0 %v5045
        %6685 = vmatpush1.bf16.msra.mxu0 %v5044
        %6686 = vmatprep.subr.bf16.mxu0 %v5053
        %6687 = vmatpush1.bf16.msra.mxu0 %v5052
        %6688 = vmatprep.subr.bf16.mxu0 %v5061
        %6689 = vmatpush1.bf16.msra.mxu0 %v5060
        %6690 = vmatprep.subr.bf16.mxu0 %v5069
        %6691 = vmatpush1.bf16.msra.mxu0 %v5068
        %6692 = vmatprep.subr.bf16.mxu0 %v5077
        %6693 = vmatpush1.bf16.msra.mxu0 %v5076
        %6694 = vmatprep.subr.bf16.mxu0 %v5085
        %6695 = vmatpush1.bf16.msra.mxu0 %v5084
        %6696 = vmatprep.mubr.bf16.mxu0 %v1357
        %6697 = vmatmul.mubr.bf16.gmra.mrb[0].mxu0 %v1356
        %v6698 = vpop.f32.mrb[0].mxu0
        %v6699 = vadd.f32 %v6658, %v6698
        %v6700 = vpop.f32.mrb[0].mxu0
        %v6701 = vadd.f32 %v6660, %v6700
        %v6702 = vpop.f32.mrb[0].mxu0
        %v6703 = vpop.f32.mrb[0].mxu0
        %6704 = vdwg.mxu0
        %6705 = vmatprep.subr.bf16.mxu0 %v5093
        %6706 = vmatpush1.bf16.msra.mxu0 %v5092
        %6707 = vmatprep.subr.bf16.mxu0 %v5101
        %6708 = vmatpush1.bf16.msra.mxu0 %v5100
        %6709 = vmatprep.subr.bf16.mxu0 %v5109
        %6710 = vmatpush1.bf16.msra.mxu0 %v5108
        %6711 = vmatprep.subr.bf16.mxu0 %v5117
        %6712 = vmatpush1.bf16.msra.mxu0 %v5116
        %6713 = vmatprep.subr.bf16.mxu0 %v5125
        %6714 = vmatpush1.bf16.msra.mxu0 %v5124
        %6715 = vmatprep.subr.bf16.mxu0 %v5133
        %6716 = vmatpush1.bf16.msra.mxu0 %v5132
        %6717 = vmatprep.subr.bf16.mxu0 %v5141
        %6718 = vmatpush1.bf16.msra.mxu0 %v5140
        %6719 = vmatprep.subr.bf16.mxu0 %v5149
        %6720 = vmatpush1.bf16.msra.mxu0 %v5148
        %6721 = vmatprep.subr.bf16.mxu0 %v5157
        %6722 = vmatpush1.bf16.msra.mxu0 %v5156
        %6723 = vmatprep.subr.bf16.mxu0 %v5165
        %6724 = vmatpush1.bf16.msra.mxu0 %v5164
        %6725 = vmatprep.subr.bf16.mxu0 %v5173
        %6726 = vmatpush1.bf16.msra.mxu0 %v5172
        %6727 = vmatprep.subr.bf16.mxu0 %v5181
        %6728 = vmatpush1.bf16.msra.mxu0 %v5180
        %6729 = vmatprep.subr.bf16.mxu0 %v5189
        %6730 = vmatpush1.bf16.msra.mxu0 %v5188
        %6731 = vmatprep.subr.bf16.mxu0 %v5197
        %6732 = vmatpush1.bf16.msra.mxu0 %v5196
        %6733 = vmatprep.subr.bf16.mxu0 %v5205
        %6734 = vmatpush1.bf16.msra.mxu0 %v5204
        %6735 = vmatprep.subr.bf16.mxu0 %v5213
        %6736 = vmatpush1.bf16.msra.mxu0 %v5212
        %6737 = vmatprep.mubr.bf16.mxu0 %v1359
        %6738 = vmatmul.mubr.bf16.gmra.mrb[0].mxu0 %v1358
        %v6739 = vpop.f32.mrb[0].mxu0
        %v6740 = vadd.f32 %v6699, %v6739
        %v6741 = vpop.f32.mrb[0].mxu0
        %v6742 = vadd.f32 %v6701, %v6741
        %v6743 = vpop.f32.mrb[0].mxu0
        %v6744 = vpop.f32.mrb[0].mxu0
        %6745 = vdwg.mxu0
        %6746 = vmatprep.subr.bf16.mxu0 %v5221
        %6747 = vmatpush1.bf16.msra.mxu0 %v5220
        %6748 = vmatprep.subr.bf16.mxu0 %v5229
        %6749 = vmatpush1.bf16.msra.mxu0 %v5228
        %6750 = vmatprep.subr.bf16.mxu0 %v5237
        %6751 = vmatpush1.bf16.msra.mxu0 %v5236
        %6752 = vmatprep.subr.bf16.mxu0 %v5245
        %6753 = vmatpush1.bf16.msra.mxu0 %v5244
        %6754 = vmatprep.subr.bf16.mxu0 %v5253
        %6755 = vmatpush1.bf16.msra.mxu0 %v5252
        %6756 = vmatprep.subr.bf16.mxu0 %v5261
        %6757 = vmatpush1.bf16.msra.mxu0 %v5260
        %6758 = vmatprep.subr.bf16.mxu0 %v5269
        %6759 = vmatpush1.bf16.msra.mxu0 %v5268
        %6760 = vmatprep.subr.bf16.mxu0 %v5277
        %6761 = vmatpush1.bf16.msra.mxu0 %v5276
        %6762 = vmatprep.subr.bf16.mxu0 %v5285
        %6763 = vmatpush1.bf16.msra.mxu0 %v5284
        %6764 = vmatprep.subr.bf16.mxu0 %v5293
        %6765 = vmatpush1.bf16.msra.mxu0 %v5292
        %6766 = vmatprep.subr.bf16.mxu0 %v5301
        %6767 = vmatpush1.bf16.msra.mxu0 %v5300
        %6768 = vmatprep.subr.bf16.mxu0 %v5309
        %6769 = vmatpush1.bf16.msra.mxu0 %v5308
        %6770 = vmatprep.subr.bf16.mxu0 %v5317
        %6771 = vmatpush1.bf16.msra.mxu0 %v5316
        %6772 = vmatprep.subr.bf16.mxu0 %v5325
        %6773 = vmatpush1.bf16.msra.mxu0 %v5324
        %6774 = vmatprep.subr.bf16.mxu0 %v5333
        %6775 = vmatpush1.bf16.msra.mxu0 %v5332
        %6776 = vmatprep.subr.bf16.mxu0 %v5341
        %6777 = vmatpush1.bf16.msra.mxu0 %v5340
        %6778 = vmatprep.mubr.bf16.mxu0 %v1361
        %6779 = vmatmul.mubr.bf16.gmra.mrb[0].mxu0 %v1360
        %v6780 = vpop.f32.mrb[0].mxu0
        %v6781 = vadd.f32 %v6740, %v6780
        %v6782 = vpop.f32.mrb[0].mxu0
        %v6783 = vadd.f32 %v6742, %v6782
        %v6784 = vpop.f32.mrb[0].mxu0
        %v6785 = vpop.f32.mrb[0].mxu0
        %6786 = vdwg.mxu0
        %6787 = vmatprep.subr.bf16.mxu0 %v5349
        %6788 = vmatpush1.bf16.msra.mxu0 %v5348
        %6789 = vmatprep.subr.bf16.mxu0 %v5357
        %6790 = vmatpush1.bf16.msra.mxu0 %v5356
        %6791 = vmatprep.subr.bf16.mxu0 %v5365
        %6792 = vmatpush1.bf16.msra.mxu0 %v5364
        %6793 = vmatprep.subr.bf16.mxu0 %v5373
        %6794 = vmatpush1.bf16.msra.mxu0 %v5372
        %6795 = vmatprep.subr.bf16.mxu0 %v5381
        %6796 = vmatpush1.bf16.msra.mxu0 %v5380
        %6797 = vmatprep.subr.bf16.mxu0 %v5389
        %6798 = vmatpush1.bf16.msra.mxu0 %v5388
        %6799 = vmatprep.subr.bf16.mxu0 %v5397
        %6800 = vmatpush1.bf16.msra.mxu0 %v5396
        %6801 = vmatprep.subr.bf16.mxu0 %v5405
        %6802 = vmatpush1.bf16.msra.mxu0 %v5404
        %6803 = vmatprep.subr.bf16.mxu0 %v5413
        %6804 = vmatpush1.bf16.msra.mxu0 %v5412
        %6805 = vmatprep.subr.bf16.mxu0 %v5421
        %6806 = vmatpush1.bf16.msra.mxu0 %v5420
        %6807 = vmatprep.subr.bf16.mxu0 %v5429
        %6808 = vmatpush1.bf16.msra.mxu0 %v5428
        %6809 = vmatprep.subr.bf16.mxu0 %v5437
        %6810 = vmatpush1.bf16.msra.mxu0 %v5436
        %6811 = vmatprep.subr.bf16.mxu0 %v5445
        %6812 = vmatpush1.bf16.msra.mxu0 %v5444
        %6813 = vmatprep.subr.bf16.mxu0 %v5453
        %6814 = vmatpush1.bf16.msra.mxu0 %v5452
        %6815 = vmatprep.subr.bf16.mxu0 %v5461
        %6816 = vmatpush1.bf16.msra.mxu0 %v5460
        %6817 = vmatprep.subr.bf16.mxu0 %v5469
        %6818 = vmatpush1.bf16.msra.mxu0 %v5468
        %6819 = vmatprep.mubr.bf16.mxu0 %v1363
        %6820 = vmatmul.mubr.bf16.gmra.mrb[0].mxu0 %v1362
        %v6821 = vpop.f32.mrb[0].mxu0
        %v6822 = vadd.f32 %v6781, %v6821
        %v6823 = vpop.f32.mrb[0].mxu0
        %v6824 = vadd.f32 %v6783, %v6823
        %v6825 = vpop.f32.mrb[0].mxu0
        %v6826 = vpop.f32.mrb[0].mxu0
        %6827 = vdwg.mxu0
        %6828 = vmatprep.subr.bf16.mxu0 %v4455
        %6829 = vmatpush1.bf16.msra.mxu0 %v4454
        %6830 = vmatprep.subr.bf16.mxu0 %v4463
        %6831 = vmatpush1.bf16.msra.mxu0 %v4462
        %6832 = vmatprep.subr.bf16.mxu0 %v4471
        %6833 = vmatpush1.bf16.msra.mxu0 %v4470
        %6834 = vmatprep.subr.bf16.mxu0 %v4479
        %6835 = vmatpush1.bf16.msra.mxu0 %v4478
        %6836 = vmatprep.subr.bf16.mxu0 %v4487
        %6837 = vmatpush1.bf16.msra.mxu0 %v4486
        %6838 = vmatprep.subr.bf16.mxu0 %v4495
        %6839 = vmatpush1.bf16.msra.mxu0 %v4494
        %6840 = vmatprep.subr.bf16.mxu0 %v4503
        %6841 = vmatpush1.bf16.msra.mxu0 %v4502
        %6842 = vmatprep.subr.bf16.mxu0 %v4511
        %6843 = vmatpush1.bf16.msra.mxu0 %v4510
        %6844 = vmatprep.subr.bf16.mxu0 %v4519
        %6845 = vmatpush1.bf16.msra.mxu0 %v4518
        %6846 = vmatprep.subr.bf16.mxu0 %v4527
        %6847 = vmatpush1.bf16.msra.mxu0 %v4526
        %6848 = vmatprep.subr.bf16.mxu0 %v4535
        %6849 = vmatpush1.bf16.msra.mxu0 %v4534
        %6850 = vmatprep.subr.bf16.mxu0 %v4543
        %6851 = vmatpush1.bf16.msra.mxu0 %v4542
        %6852 = vmatprep.subr.bf16.mxu0 %v4551
        %6853 = vmatpush1.bf16.msra.mxu0 %v4550
        %6854 = vmatprep.subr.bf16.mxu0 %v4559
        %6855 = vmatpush1.bf16.msra.mxu0 %v4558
        %6856 = vmatprep.subr.bf16.mxu0 %v4567
        %6857 = vmatpush1.bf16.msra.mxu0 %v4566
        %6858 = vmatprep.subr.bf16.mxu0 %v4575
        %6859 = vmatpush1.bf16.msra.mxu0 %v4574
        %6860 = vmatprep.mubr.bf16.mxu0 %v1349
        %6861 = vmatmul.mubr.bf16.gmra.mrb[0].mxu0 %v1348
        %v6862 = vpop.f32.mrb[0].mxu0
        %v6863 = vadd.f32 0.0, %v6862
        %v6864 = vpop.f32.mrb[0].mxu0
        %v6865 = vadd.f32 0.0, %v6864
        %v6866 = vpop.f32.mrb[0].mxu0
        %v6867 = vpop.f32.mrb[0].mxu0
        %6868 = vdwg.mxu0
        %6869 = vmatprep.subr.bf16.mxu0 %v4583
        %6870 = vmatpush1.bf16.msra.mxu0 %v4582
        %6871 = vmatprep.subr.bf16.mxu0 %v4591
        %6872 = vmatpush1.bf16.msra.mxu0 %v4590
        %6873 = vmatprep.subr.bf16.mxu0 %v4599
        %6874 = vmatpush1.bf16.msra.mxu0 %v4598
        %6875 = vmatprep.subr.bf16.mxu0 %v4607
        %6876 = vmatpush1.bf16.msra.mxu0 %v4606
        %6877 = vmatprep.subr.bf16.mxu0 %v4615
        %6878 = vmatpush1.bf16.msra.mxu0 %v4614
        %6879 = vmatprep.subr.bf16.mxu0 %v4623
        %6880 = vmatpush1.bf16.msra.mxu0 %v4622
        %6881 = vmatprep.subr.bf16.mxu0 %v4631
        %6882 = vmatpush1.bf16.msra.mxu0 %v4630
        %6883 = vmatprep.subr.bf16.mxu0 %v4639
        %6884 = vmatpush1.bf16.msra.mxu0 %v4638
        %6885 = vmatprep.subr.bf16.mxu0 %v4647
        %6886 = vmatpush1.bf16.msra.mxu0 %v4646
        %6887 = vmatprep.subr.bf16.mxu0 %v4655
        %6888 = vmatpush1.bf16.msra.mxu0 %v4654
        %6889 = vmatprep.subr.bf16.mxu0 %v4663
        %6890 = vmatpush1.bf16.msra.mxu0 %v4662
        %6891 = vmatprep.subr.bf16.mxu0 %v4671
        %6892 = vmatpush1.bf16.msra.mxu0 %v4670
        %6893 = vmatprep.subr.bf16.mxu0 %v4679
        %6894 = vmatpush1.bf16.msra.mxu0 %v4678
        %6895 = vmatprep.subr.bf16.mxu0 %v4687
        %6896 = vmatpush1.bf16.msra.mxu0 %v4686
        %6897 = vmatprep.subr.bf16.mxu0 %v4695
        %6898 = vmatpush1.bf16.msra.mxu0 %v4694
        %6899 = vmatprep.subr.bf16.mxu0 %v4703
        %6900 = vmatpush1.bf16.msra.mxu0 %v4702
        %6901 = vmatprep.mubr.bf16.mxu0 %v1351
        %6902 = vmatmul.mubr.bf16.gmra.mrb[0].mxu0 %v1350
        %v6903 = vpop.f32.mrb[0].mxu0
        %v6904 = vadd.f32 %v6863, %v6903
        %v6905 = vpop.f32.mrb[0].mxu0
        %v6906 = vadd.f32 %v6865, %v6905
        %v6907 = vpop.f32.mrb[0].mxu0
        %v6908 = vpop.f32.mrb[0].mxu0
        %6909 = vdwg.mxu0
        %6910 = vmatprep.subr.bf16.mxu0 %v4711
        %6911 = vmatpush1.bf16.msra.mxu0 %v4710
        %6912 = vmatprep.subr.bf16.mxu0 %v4719
        %6913 = vmatpush1.bf16.msra.mxu0 %v4718
        %6914 = vmatprep.subr.bf16.mxu0 %v4727
        %6915 = vmatpush1.bf16.msra.mxu0 %v4726
        %6916 = vmatprep.subr.bf16.mxu0 %v4735
        %6917 = vmatpush1.bf16.msra.mxu0 %v4734
        %6918 = vmatprep.subr.bf16.mxu0 %v4743
        %6919 = vmatpush1.bf16.msra.mxu0 %v4742
        %6920 = vmatprep.subr.bf16.mxu0 %v4751
        %6921 = vmatpush1.bf16.msra.mxu0 %v4750
        %6922 = vmatprep.subr.bf16.mxu0 %v4759
        %6923 = vmatpush1.bf16.msra.mxu0 %v4758
        %6924 = vmatprep.subr.bf16.mxu0 %v4767
        %6925 = vmatpush1.bf16.msra.mxu0 %v4766
        %6926 = vmatprep.subr.bf16.mxu0 %v4775
        %6927 = vmatpush1.bf16.msra.mxu0 %v4774
        %6928 = vmatprep.subr.bf16.mxu0 %v4783
        %6929 = vmatpush1.bf16.msra.mxu0 %v4782
        %6930 = vmatprep.subr.bf16.mxu0 %v4791
        %6931 = vmatpush1.bf16.msra.mxu0 %v4790
        %6932 = vmatprep.subr.bf16.mxu0 %v4799
        %6933 = vmatpush1.bf16.msra.mxu0 %v4798
        %6934 = vmatprep.subr.bf16.mxu0 %v4807
        %6935 = vmatpush1.bf16.msra.mxu0 %v4806
        %6936 = vmatprep.subr.bf16.mxu0 %v4815
        %6937 = vmatpush1.bf16.msra.mxu0 %v4814
        %6938 = vmatprep.subr.bf16.mxu0 %v4823
        %6939 = vmatpush1.bf16.msra.mxu0 %v4822
        %6940 = vmatprep.subr.bf16.mxu0 %v4831
        %6941 = vmatpush1.bf16.msra.mxu0 %v4830
        %6942 = vmatprep.mubr.bf16.mxu0 %v1353
        %6943 = vmatmul.mubr.bf16.gmra.mrb[0].mxu0 %v1352
        %v6944 = vpop.f32.mrb[0].mxu0
        %v6945 = vadd.f32 %v6904, %v6944
        %v6946 = vpop.f32.mrb[0].mxu0
        %v6947 = vadd.f32 %v6906, %v6946
        %v6948 = vpop.f32.mrb[0].mxu0
        %v6949 = vpop.f32.mrb[0].mxu0
        %6950 = vdwg.mxu0
        %6951 = vmatprep.subr.bf16.mxu0 %v4839
        %6952 = vmatpush1.bf16.msra.mxu0 %v4838
        %6953 = vmatprep.subr.bf16.mxu0 %v4847
        %6954 = vmatpush1.bf16.msra.mxu0 %v4846
        %6955 = vmatprep.subr.bf16.mxu0 %v4855
        %6956 = vmatpush1.bf16.msra.mxu0 %v4854
        %6957 = vmatprep.subr.bf16.mxu0 %v4863
        %6958 = vmatpush1.bf16.msra.mxu0 %v4862
        %6959 = vmatprep.subr.bf16.mxu0 %v4871
        %6960 = vmatpush1.bf16.msra.mxu0 %v4870
        %6961 = vmatprep.subr.bf16.mxu0 %v4879
        %6962 = vmatpush1.bf16.msra.mxu0 %v4878
        %6963 = vmatprep.subr.bf16.mxu0 %v4887
        %6964 = vmatpush1.bf16.msra.mxu0 %v4886
        %6965 = vmatprep.subr.bf16.mxu0 %v4895
        %6966 = vmatpush1.bf16.msra.mxu0 %v4894
        %6967 = vmatprep.subr.bf16.mxu0 %v4903
        %6968 = vmatpush1.bf16.msra.mxu0 %v4902
        %6969 = vmatprep.subr.bf16.mxu0 %v4911
        %6970 = vmatpush1.bf16.msra.mxu0 %v4910
        %6971 = vmatprep.subr.bf16.mxu0 %v4919
        %6972 = vmatpush1.bf16.msra.mxu0 %v4918
        %6973 = vmatprep.subr.bf16.mxu0 %v4927
        %6974 = vmatpush1.bf16.msra.mxu0 %v4926
        %6975 = vmatprep.subr.bf16.mxu0 %v4935
        %6976 = vmatpush1.bf16.msra.mxu0 %v4934
        %6977 = vmatprep.subr.bf16.mxu0 %v4943
        %6978 = vmatpush1.bf16.msra.mxu0 %v4942
        %6979 = vmatprep.subr.bf16.mxu0 %v4951
        %6980 = vmatpush1.bf16.msra.mxu0 %v4950
        %6981 = vmatprep.subr.bf16.mxu0 %v4959
        %6982 = vmatpush1.bf16.msra.mxu0 %v4958
        %6983 = vmatprep.mubr.bf16.mxu0 %v1355
        %6984 = vmatmul.mubr.bf16.gmra.mrb[0].mxu0 %v1354
        %v6985 = vpop.f32.mrb[0].mxu0
        %v6986 = vadd.f32 %v6945, %v6985
        %v6987 = vpop.f32.mrb[0].mxu0
        %v6988 = vadd.f32 %v6947, %v6987
        %v6989 = vpop.f32.mrb[0].mxu0
        %v6990 = vpop.f32.mrb[0].mxu0
        %6991 = vdwg.mxu0
        %6992 = vmatprep.subr.bf16.mxu0 %v4967
        %6993 = vmatpush1.bf16.msra.mxu0 %v4966
        %6994 = vmatprep.subr.bf16.mxu0 %v4975
        %6995 = vmatpush1.bf16.msra.mxu0 %v4974
        %6996 = vmatprep.subr.bf16.mxu0 %v4983
        %6997 = vmatpush1.bf16.msra.mxu0 %v4982
        %6998 = vmatprep.subr.bf16.mxu0 %v4991
        %6999 = vmatpush1.bf16.msra.mxu0 %v4990
        %7000 = vmatprep.subr.bf16.mxu0 %v4999
        %7001 = vmatpush1.bf16.msra.mxu0 %v4998
        %7002 = vmatprep.subr.bf16.mxu0 %v5007
        %7003 = vmatpush1.bf16.msra.mxu0 %v5006
        %7004 = vmatprep.subr.bf16.mxu0 %v5015
        %7005 = vmatpush1.bf16.msra.mxu0 %v5014
        %7006 = vmatprep.subr.bf16.mxu0 %v5023
        %7007 = vmatpush1.bf16.msra.mxu0 %v5022
        %7008 = vmatprep.subr.bf16.mxu0 %v5031
        %7009 = vmatpush1.bf16.msra.mxu0 %v5030
        %7010 = vmatprep.subr.bf16.mxu0 %v5039
        %7011 = vmatpush1.bf16.msra.mxu0 %v5038
        %7012 = vmatprep.subr.bf16.mxu0 %v5047
        %7013 = vmatpush1.bf16.msra.mxu0 %v5046
        %7014 = vmatprep.subr.bf16.mxu0 %v5055
        %7015 = vmatpush1.bf16.msra.mxu0 %v5054
        %7016 = vmatprep.subr.bf16.mxu0 %v5063
        %7017 = vmatpush1.bf16.msra.mxu0 %v5062
        %7018 = vmatprep.subr.bf16.mxu0 %v5071
        %7019 = vmatpush1.bf16.msra.mxu0 %v5070
        %7020 = vmatprep.subr.bf16.mxu0 %v5079
        %7021 = vmatpush1.bf16.msra.mxu0 %v5078
        %7022 = vmatprep.subr.bf16.mxu0 %v5087
        %7023 = vmatpush1.bf16.msra.mxu0 %v5086
        %7024 = vmatprep.mubr.bf16.mxu0 %v1357
        %7025 = vmatmul.mubr.bf16.gmra.mrb[0].mxu0 %v1356
        %v7026 = vpop.f32.mrb[0].mxu0
        %v7027 = vadd.f32 %v6986, %v7026
        %v7028 = vpop.f32.mrb[0].mxu0
        %v7029 = vadd.f32 %v6988, %v7028
        %v7030 = vpop.f32.mrb[0].mxu0
        %v7031 = vpop.f32.mrb[0].mxu0
        %7032 = vdwg.mxu0
        %7033 = vmatprep.subr.bf16.mxu0 %v5095
        %7034 = vmatpush1.bf16.msra.mxu0 %v5094
        %7035 = vmatprep.subr.bf16.mxu0 %v5103
        %7036 = vmatpush1.bf16.msra.mxu0 %v5102
        %7037 = vmatprep.subr.bf16.mxu0 %v5111
        %7038 = vmatpush1.bf16.msra.mxu0 %v5110
        %7039 = vmatprep.subr.bf16.mxu0 %v5119
        %7040 = vmatpush1.bf16.msra.mxu0 %v5118
        %7041 = vmatprep.subr.bf16.mxu0 %v5127
        %7042 = vmatpush1.bf16.msra.mxu0 %v5126
        %7043 = vmatprep.subr.bf16.mxu0 %v5135
        %7044 = vmatpush1.bf16.msra.mxu0 %v5134
        %7045 = vmatprep.subr.bf16.mxu0 %v5143
        %7046 = vmatpush1.bf16.msra.mxu0 %v5142
        %7047 = vmatprep.subr.bf16.mxu0 %v5151
        %7048 = vmatpush1.bf16.msra.mxu0 %v5150
        %7049 = vmatprep.subr.bf16.mxu0 %v5159
        %7050 = vmatpush1.bf16.msra.mxu0 %v5158
        %7051 = vmatprep.subr.bf16.mxu0 %v5167
        %7052 = vmatpush1.bf16.msra.mxu0 %v5166
        %7053 = vmatprep.subr.bf16.mxu0 %v5175
        %7054 = vmatpush1.bf16.msra.mxu0 %v5174
        %7055 = vmatprep.subr.bf16.mxu0 %v5183
        %7056 = vmatpush1.bf16.msra.mxu0 %v5182
        %7057 = vmatprep.subr.bf16.mxu0 %v5191
        %7058 = vmatpush1.bf16.msra.mxu0 %v5190
        %7059 = vmatprep.subr.bf16.mxu0 %v5199
        %7060 = vmatpush1.bf16.msra.mxu0 %v5198
        %7061 = vmatprep.subr.bf16.mxu0 %v5207
        %7062 = vmatpush1.bf16.msra.mxu0 %v5206
        %7063 = vmatprep.subr.bf16.mxu0 %v5215
        %7064 = vmatpush1.bf16.msra.mxu0 %v5214
        %7065 = vmatprep.mubr.bf16.mxu0 %v1359
        %7066 = vmatmul.mubr.bf16.gmra.mrb[0].mxu0 %v1358
        %v7067 = vpop.f32.mrb[0].mxu0
        %v7068 = vadd.f32 %v7027, %v7067
        %v7069 = vpop.f32.mrb[0].mxu0
        %v7070 = vadd.f32 %v7029, %v7069
        %v7071 = vpop.f32.mrb[0].mxu0
        %v7072 = vpop.f32.mrb[0].mxu0
        %7073 = vdwg.mxu0
        %7074 = vmatprep.subr.bf16.mxu0 %v5223
        %7075 = vmatpush1.bf16.msra.mxu0 %v5222
        %7076 = vmatprep.subr.bf16.mxu0 %v5231
        %7077 = vmatpush1.bf16.msra.mxu0 %v5230
        %7078 = vmatprep.subr.bf16.mxu0 %v5239
        %7079 = vmatpush1.bf16.msra.mxu0 %v5238
        %7080 = vmatprep.subr.bf16.mxu0 %v5247
        %7081 = vmatpush1.bf16.msra.mxu0 %v5246
        %7082 = vmatprep.subr.bf16.mxu0 %v5255
        %7083 = vmatpush1.bf16.msra.mxu0 %v5254
        %7084 = vmatprep.subr.bf16.mxu0 %v5263
        %7085 = vmatpush1.bf16.msra.mxu0 %v5262
        %7086 = vmatprep.subr.bf16.mxu0 %v5271
        %7087 = vmatpush1.bf16.msra.mxu0 %v5270
        %7088 = vmatprep.subr.bf16.mxu0 %v5279
        %7089 = vmatpush1.bf16.msra.mxu0 %v5278
        %7090 = vmatprep.subr.bf16.mxu0 %v5287
        %7091 = vmatpush1.bf16.msra.mxu0 %v5286
        %7092 = vmatprep.subr.bf16.mxu0 %v5295
        %7093 = vmatpush1.bf16.msra.mxu0 %v5294
        %7094 = vmatprep.subr.bf16.mxu0 %v5303
        %7095 = vmatpush1.bf16.msra.mxu0 %v5302
        %7096 = vmatprep.subr.bf16.mxu0 %v5311
        %7097 = vmatpush1.bf16.msra.mxu0 %v5310
        %7098 = vmatprep.subr.bf16.mxu0 %v5319
        %7099 = vmatpush1.bf16.msra.mxu0 %v5318
        %7100 = vmatprep.subr.bf16.mxu0 %v5327
        %7101 = vmatpush1.bf16.msra.mxu0 %v5326
        %7102 = vmatprep.subr.bf16.mxu0 %v5335
        %7103 = vmatpush1.bf16.msra.mxu0 %v5334
        %7104 = vmatprep.subr.bf16.mxu0 %v5343
        %7105 = vmatpush1.bf16.msra.mxu0 %v5342
        %7106 = vmatprep.mubr.bf16.mxu0 %v1361
        %7107 = vmatmul.mubr.bf16.gmra.mrb[0].mxu0 %v1360
        %v7108 = vpop.f32.mrb[0].mxu0
        %v7109 = vadd.f32 %v7068, %v7108
        %v7110 = vpop.f32.mrb[0].mxu0
        %v7111 = vadd.f32 %v7070, %v7110
        %v7112 = vpop.f32.mrb[0].mxu0
        %v7113 = vpop.f32.mrb[0].mxu0
        %7114 = vdwg.mxu0
        %7115 = vmatprep.subr.bf16.mxu0 %v5351
        %7116 = vmatpush1.bf16.msra.mxu0 %v5350
        %7117 = vmatprep.subr.bf16.mxu0 %v5359
        %7118 = vmatpush1.bf16.msra.mxu0 %v5358
        %7119 = vmatprep.subr.bf16.mxu0 %v5367
        %7120 = vmatpush1.bf16.msra.mxu0 %v5366
        %7121 = vmatprep.subr.bf16.mxu0 %v5375
        %7122 = vmatpush1.bf16.msra.mxu0 %v5374
        %7123 = vmatprep.subr.bf16.mxu0 %v5383
        %7124 = vmatpush1.bf16.msra.mxu0 %v5382
        %7125 = vmatprep.subr.bf16.mxu0 %v5391
        %7126 = vmatpush1.bf16.msra.mxu0 %v5390
        %7127 = vmatprep.subr.bf16.mxu0 %v5399
        %7128 = vmatpush1.bf16.msra.mxu0 %v5398
        %7129 = vmatprep.subr.bf16.mxu0 %v5407
        %7130 = vmatpush1.bf16.msra.mxu0 %v5406
        %7131 = vmatprep.subr.bf16.mxu0 %v5415
        %7132 = vmatpush1.bf16.msra.mxu0 %v5414
        %7133 = vmatprep.subr.bf16.mxu0 %v5423
        %7134 = vmatpush1.bf16.msra.mxu0 %v5422
        %7135 = vmatprep.subr.bf16.mxu0 %v5431
        %7136 = vmatpush1.bf16.msra.mxu0 %v5430
        %7137 = vmatprep.subr.bf16.mxu0 %v5439
        %7138 = vmatpush1.bf16.msra.mxu0 %v5438
        %7139 = vmatprep.subr.bf16.mxu0 %v5447
        %7140 = vmatpush1.bf16.msra.mxu0 %v5446
        %7141 = vmatprep.subr.bf16.mxu0 %v5455
        %7142 = vmatpush1.bf16.msra.mxu0 %v5454
        %7143 = vmatprep.subr.bf16.mxu0 %v5463
        %7144 = vmatpush1.bf16.msra.mxu0 %v5462
        %7145 = vmatprep.subr.bf16.mxu0 %v5471
        %7146 = vmatpush1.bf16.msra.mxu0 %v5470
        %7147 = vmatprep.mubr.bf16.mxu0 %v1363
        %7148 = vmatmul.mubr.bf16.gmra.mrb[0].mxu0 %v1362
        %v7149 = vpop.f32.mrb[0].mxu0
        %v7150 = vadd.f32 %v7109, %v7149
        %v7151 = vpop.f32.mrb[0].mxu0
        %v7152 = vadd.f32 %v7111, %v7151
        %v7153 = vpop.f32.mrb[0].mxu0
        %v7154 = vpop.f32.mrb[0].mxu0
        %7155 = vdwg.mxu0
        %7156 = vmatprep.subr.bf16.mxu0 %v4457
        %7157 = vmatpush1.bf16.msra.mxu0 %v4456
        %7158 = vmatprep.subr.bf16.mxu0 %v4465
        %7159 = vmatpush1.bf16.msra.mxu0 %v4464
        %7160 = vmatprep.subr.bf16.mxu0 %v4473
        %7161 = vmatpush1.bf16.msra.mxu0 %v4472
        %7162 = vmatprep.subr.bf16.mxu0 %v4481
        %7163 = vmatpush1.bf16.msra.mxu0 %v4480
        %7164 = vmatprep.subr.bf16.mxu0 %v4489
        %7165 = vmatpush1.bf16.msra.mxu0 %v4488
        %7166 = vmatprep.subr.bf16.mxu0 %v4497
        %7167 = vmatpush1.bf16.msra.mxu0 %v4496
        %7168 = vmatprep.subr.bf16.mxu0 %v4505
        %7169 = vmatpush1.bf16.msra.mxu0 %v4504
        %7170 = vmatprep.subr.bf16.mxu0 %v4513
        %7171 = vmatpush1.bf16.msra.mxu0 %v4512
        %7172 = vmatprep.subr.bf16.mxu0 %v4521
        %7173 = vmatpush1.bf16.msra.mxu0 %v4520
        %7174 = vmatprep.subr.bf16.mxu0 %v4529
        %7175 = vmatpush1.bf16.msra.mxu0 %v4528
        %7176 = vmatprep.subr.bf16.mxu0 %v4537
        %7177 = vmatpush1.bf16.msra.mxu0 %v4536
        %7178 = vmatprep.subr.bf16.mxu0 %v4545
        %7179 = vmatpush1.bf16.msra.mxu0 %v4544
        %7180 = vmatprep.subr.bf16.mxu0 %v4553
        %7181 = vmatpush1.bf16.msra.mxu0 %v4552
        %7182 = vmatprep.subr.bf16.mxu0 %v4561
        %7183 = vmatpush1.bf16.msra.mxu0 %v4560
        %7184 = vmatprep.subr.bf16.mxu0 %v4569
        %7185 = vmatpush1.bf16.msra.mxu0 %v4568
        %7186 = vmatprep.subr.bf16.mxu0 %v4577
        %7187 = vmatpush1.bf16.msra.mxu0 %v4576
        %7188 = vmatprep.mubr.bf16.mxu0 %v1349
        %7189 = vmatmul.mubr.bf16.gmra.mrb[0].mxu0 %v1348
        %v7190 = vpop.f32.mrb[0].mxu0
        %v7191 = vadd.f32 0.0, %v7190
        %v7192 = vpop.f32.mrb[0].mxu0
        %v7193 = vadd.f32 0.0, %v7192
        %v7194 = vpop.f32.mrb[0].mxu0
        %v7195 = vpop.f32.mrb[0].mxu0
        %7196 = vdwg.mxu0
        %7197 = vmatprep.subr.bf16.mxu0 %v4585
        %7198 = vmatpush1.bf16.msra.mxu0 %v4584
        %7199 = vmatprep.subr.bf16.mxu0 %v4593
        %7200 = vmatpush1.bf16.msra.mxu0 %v4592
        %7201 = vmatprep.subr.bf16.mxu0 %v4601
        %7202 = vmatpush1.bf16.msra.mxu0 %v4600
        %7203 = vmatprep.subr.bf16.mxu0 %v4609
        %7204 = vmatpush1.bf16.msra.mxu0 %v4608
        %7205 = vmatprep.subr.bf16.mxu0 %v4617
        %7206 = vmatpush1.bf16.msra.mxu0 %v4616
        %7207 = vmatprep.subr.bf16.mxu0 %v4625
        %7208 = vmatpush1.bf16.msra.mxu0 %v4624
        %7209 = vmatprep.subr.bf16.mxu0 %v4633
        %7210 = vmatpush1.bf16.msra.mxu0 %v4632
        %7211 = vmatprep.subr.bf16.mxu0 %v4641
        %7212 = vmatpush1.bf16.msra.mxu0 %v4640
        %7213 = vmatprep.subr.bf16.mxu0 %v4649
        %7214 = vmatpush1.bf16.msra.mxu0 %v4648
        %7215 = vmatprep.subr.bf16.mxu0 %v4657
        %7216 = vmatpush1.bf16.msra.mxu0 %v4656
        %7217 = vmatprep.subr.bf16.mxu0 %v4665
        %7218 = vmatpush1.bf16.msra.mxu0 %v4664
        %7219 = vmatprep.subr.bf16.mxu0 %v4673
        %7220 = vmatpush1.bf16.msra.mxu0 %v4672
        %7221 = vmatprep.subr.bf16.mxu0 %v4681
        %7222 = vmatpush1.bf16.msra.mxu0 %v4680
        %7223 = vmatprep.subr.bf16.mxu0 %v4689
        %7224 = vmatpush1.bf16.msra.mxu0 %v4688
        %7225 = vmatprep.subr.bf16.mxu0 %v4697
        %7226 = vmatpush1.bf16.msra.mxu0 %v4696
        %7227 = vmatprep.subr.bf16.mxu0 %v4705
        %7228 = vmatpush1.bf16.msra.mxu0 %v4704
        %7229 = vmatprep.mubr.bf16.mxu0 %v1351
        %7230 = vmatmul.mubr.bf16.gmra.mrb[0].mxu0 %v1350
        %v7231 = vpop.f32.mrb[0].mxu0
        %v7232 = vadd.f32 %v7191, %v7231
        %v7233 = vpop.f32.mrb[0].mxu0
        %v7234 = vadd.f32 %v7193, %v7233
        %v7235 = vpop.f32.mrb[0].mxu0
        %v7236 = vpop.f32.mrb[0].mxu0
        %7237 = vdwg.mxu0
        %7238 = vmatprep.subr.bf16.mxu0 %v4713
        %7239 = vmatpush1.bf16.msra.mxu0 %v4712
        %7240 = vmatprep.subr.bf16.mxu0 %v4721
        %7241 = vmatpush1.bf16.msra.mxu0 %v4720
        %7242 = vmatprep.subr.bf16.mxu0 %v4729
        %7243 = vmatpush1.bf16.msra.mxu0 %v4728
        %7244 = vmatprep.subr.bf16.mxu0 %v4737
        %7245 = vmatpush1.bf16.msra.mxu0 %v4736
        %7246 = vmatprep.subr.bf16.mxu0 %v4745
        %7247 = vmatpush1.bf16.msra.mxu0 %v4744
        %7248 = vmatprep.subr.bf16.mxu0 %v4753
        %7249 = vmatpush1.bf16.msra.mxu0 %v4752
        %7250 = vmatprep.subr.bf16.mxu0 %v4761
        %7251 = vmatpush1.bf16.msra.mxu0 %v4760
        %7252 = vmatprep.subr.bf16.mxu0 %v4769
        %7253 = vmatpush1.bf16.msra.mxu0 %v4768
        %7254 = vmatprep.subr.bf16.mxu0 %v4777
        %7255 = vmatpush1.bf16.msra.mxu0 %v4776
        %7256 = vmatprep.subr.bf16.mxu0 %v4785
        %7257 = vmatpush1.bf16.msra.mxu0 %v4784
        %7258 = vmatprep.subr.bf16.mxu0 %v4793
        %7259 = vmatpush1.bf16.msra.mxu0 %v4792
        %7260 = vmatprep.subr.bf16.mxu0 %v4801
        %7261 = vmatpush1.bf16.msra.mxu0 %v4800
        %7262 = vmatprep.subr.bf16.mxu0 %v4809
        %7263 = vmatpush1.bf16.msra.mxu0 %v4808
        %7264 = vmatprep.subr.bf16.mxu0 %v4817
        %7265 = vmatpush1.bf16.msra.mxu0 %v4816
        %7266 = vmatprep.subr.bf16.mxu0 %v4825
        %7267 = vmatpush1.bf16.msra.mxu0 %v4824
        %7268 = vmatprep.subr.bf16.mxu0 %v4833
        %7269 = vmatpush1.bf16.msra.mxu0 %v4832
        %7270 = vmatprep.mubr.bf16.mxu0 %v1353
        %7271 = vmatmul.mubr.bf16.gmra.mrb[0].mxu0 %v1352
        %v7272 = vpop.f32.mrb[0].mxu0
        %v7273 = vadd.f32 %v7232, %v7272
        %v7274 = vpop.f32.mrb[0].mxu0
        %v7275 = vadd.f32 %v7234, %v7274
        %v7276 = vpop.f32.mrb[0].mxu0
        %v7277 = vpop.f32.mrb[0].mxu0
        %7278 = vdwg.mxu0
        %7279 = vmatprep.subr.bf16.mxu0 %v4841
        %7280 = vmatpush1.bf16.msra.mxu0 %v4840
        %7281 = vmatprep.subr.bf16.mxu0 %v4849
        %7282 = vmatpush1.bf16.msra.mxu0 %v4848
        %7283 = vmatprep.subr.bf16.mxu0 %v4857
        %7284 = vmatpush1.bf16.msra.mxu0 %v4856
        %7285 = vmatprep.subr.bf16.mxu0 %v4865
        %7286 = vmatpush1.bf16.msra.mxu0 %v4864
        %7287 = vmatprep.subr.bf16.mxu0 %v4873
        %7288 = vmatpush1.bf16.msra.mxu0 %v4872
        %7289 = vmatprep.subr.bf16.mxu0 %v4881
        %7290 = vmatpush1.bf16.msra.mxu0 %v4880
        %7291 = vmatprep.subr.bf16.mxu0 %v4889
        %7292 = vmatpush1.bf16.msra.mxu0 %v4888
        %7293 = vmatprep.subr.bf16.mxu0 %v4897
        %7294 = vmatpush1.bf16.msra.mxu0 %v4896
        %7295 = vmatprep.subr.bf16.mxu0 %v4905
        %7296 = vmatpush1.bf16.msra.mxu0 %v4904
        %7297 = vmatprep.subr.bf16.mxu0 %v4913
        %7298 = vmatpush1.bf16.msra.mxu0 %v4912
        %7299 = vmatprep.subr.bf16.mxu0 %v4921
        %7300 = vmatpush1.bf16.msra.mxu0 %v4920
        %7301 = vmatprep.subr.bf16.mxu0 %v4929
        %7302 = vmatpush1.bf16.msra.mxu0 %v4928
        %7303 = vmatprep.subr.bf16.mxu0 %v4937
        %7304 = vmatpush1.bf16.msra.mxu0 %v4936
        %7305 = vmatprep.subr.bf16.mxu0 %v4945
        %7306 = vmatpush1.bf16.msra.mxu0 %v4944
        %7307 = vmatprep.subr.bf16.mxu0 %v4953
        %7308 = vmatpush1.bf16.msra.mxu0 %v4952
        %7309 = vmatprep.subr.bf16.mxu0 %v4961
        %7310 = vmatpush1.bf16.msra.mxu0 %v4960
        %7311 = vmatprep.mubr.bf16.mxu0 %v1355
        %7312 = vmatmul.mubr.bf16.gmra.mrb[0].mxu0 %v1354
        %v7313 = vpop.f32.mrb[0].mxu0
        %v7314 = vadd.f32 %v7273, %v7313
        %v7315 = vpop.f32.mrb[0].mxu0
        %v7316 = vadd.f32 %v7275, %v7315
        %v7317 = vpop.f32.mrb[0].mxu0
        %v7318 = vpop.f32.mrb[0].mxu0
        %7319 = vdwg.mxu0
        %7320 = vmatprep.subr.bf16.mxu0 %v4969
        %7321 = vmatpush1.bf16.msra.mxu0 %v4968
        %7322 = vmatprep.subr.bf16.mxu0 %v4977
        %7323 = vmatpush1.bf16.msra.mxu0 %v4976
        %7324 = vmatprep.subr.bf16.mxu0 %v4985
        %7325 = vmatpush1.bf16.msra.mxu0 %v4984
        %7326 = vmatprep.subr.bf16.mxu0 %v4993
        %7327 = vmatpush1.bf16.msra.mxu0 %v4992
        %7328 = vmatprep.subr.bf16.mxu0 %v5001
        %7329 = vmatpush1.bf16.msra.mxu0 %v5000
        %7330 = vmatprep.subr.bf16.mxu0 %v5009
        %7331 = vmatpush1.bf16.msra.mxu0 %v5008
        %7332 = vmatprep.subr.bf16.mxu0 %v5017
        %7333 = vmatpush1.bf16.msra.mxu0 %v5016
        %7334 = vmatprep.subr.bf16.mxu0 %v5025
        %7335 = vmatpush1.bf16.msra.mxu0 %v5024
        %7336 = vmatprep.subr.bf16.mxu0 %v5033
        %7337 = vmatpush1.bf16.msra.mxu0 %v5032
        %7338 = vmatprep.subr.bf16.mxu0 %v5041
        %7339 = vmatpush1.bf16.msra.mxu0 %v5040
        %7340 = vmatprep.subr.bf16.mxu0 %v5049
        %7341 = vmatpush1.bf16.msra.mxu0 %v5048
        %7342 = vmatprep.subr.bf16.mxu0 %v5057
        %7343 = vmatpush1.bf16.msra.mxu0 %v5056
        %7344 = vmatprep.subr.bf16.mxu0 %v5065
        %7345 = vmatpush1.bf16.msra.mxu0 %v5064
        %7346 = vmatprep.subr.bf16.mxu0 %v5073
        %7347 = vmatpush1.bf16.msra.mxu0 %v5072
        %7348 = vmatprep.subr.bf16.mxu0 %v5081
        %7349 = vmatpush1.bf16.msra.mxu0 %v5080
        %7350 = vmatprep.subr.bf16.mxu0 %v5089
        %7351 = vmatpush1.bf16.msra.mxu0 %v5088
        %7352 = vmatprep.mubr.bf16.mxu0 %v1357
        %7353 = vmatmul.mubr.bf16.gmra.mrb[0].mxu0 %v1356
        %v7354 = vpop.f32.mrb[0].mxu0
        %v7355 = vadd.f32 %v7314, %v7354
        %v7356 = vpop.f32.mrb[0].mxu0
        %v7357 = vadd.f32 %v7316, %v7356
        %v7358 = vpop.f32.mrb[0].mxu0
        %v7359 = vpop.f32.mrb[0].mxu0
        %7360 = vdwg.mxu0
        %7361 = vmatprep.subr.bf16.mxu0 %v5097
        %7362 = vmatpush1.bf16.msra.mxu0 %v5096
        %7363 = vmatprep.subr.bf16.mxu0 %v5105
        %7364 = vmatpush1.bf16.msra.mxu0 %v5104
        %7365 = vmatprep.subr.bf16.mxu0 %v5113
        %7366 = vmatpush1.bf16.msra.mxu0 %v5112
        %7367 = vmatprep.subr.bf16.mxu0 %v5121
        %7368 = vmatpush1.bf16.msra.mxu0 %v5120
        %7369 = vmatprep.subr.bf16.mxu0 %v5129
        %7370 = vmatpush1.bf16.msra.mxu0 %v5128
        %7371 = vmatprep.subr.bf16.mxu0 %v5137
        %7372 = vmatpush1.bf16.msra.mxu0 %v5136
        %7373 = vmatprep.subr.bf16.mxu0 %v5145
        %7374 = vmatpush1.bf16.msra.mxu0 %v5144
        %7375 = vmatprep.subr.bf16.mxu0 %v5153
        %7376 = vmatpush1.bf16.msra.mxu0 %v5152
        %7377 = vmatprep.subr.bf16.mxu0 %v5161
        %7378 = vmatpush1.bf16.msra.mxu0 %v5160
        %7379 = vmatprep.subr.bf16.mxu0 %v5169
        %7380 = vmatpush1.bf16.msra.mxu0 %v5168
        %7381 = vmatprep.subr.bf16.mxu0 %v5177
        %7382 = vmatpush1.bf16.msra.mxu0 %v5176
        %7383 = vmatprep.subr.bf16.mxu0 %v5185
        %7384 = vmatpush1.bf16.msra.mxu0 %v5184
        %7385 = vmatprep.subr.bf16.mxu0 %v5193
        %7386 = vmatpush1.bf16.msra.mxu0 %v5192
        %7387 = vmatprep.subr.bf16.mxu0 %v5201
        %7388 = vmatpush1.bf16.msra.mxu0 %v5200
        %7389 = vmatprep.subr.bf16.mxu0 %v5209
        %7390 = vmatpush1.bf16.msra.mxu0 %v5208
        %7391 = vmatprep.subr.bf16.mxu0 %v5217
        %7392 = vmatpush1.bf16.msra.mxu0 %v5216
        %7393 = vmatprep.mubr.bf16.mxu0 %v1359
        %7394 = vmatmul.mubr.bf16.gmra.mrb[0].mxu0 %v1358
        %v7395 = vpop.f32.mrb[0].mxu0
        %v7396 = vadd.f32 %v7355, %v7395
        %v7397 = vpop.f32.mrb[0].mxu0
        %v7398 = vadd.f32 %v7357, %v7397
        %v7399 = vpop.f32.mrb[0].mxu0
        %v7400 = vpop.f32.mrb[0].mxu0
        %7401 = vdwg.mxu0
        %7402 = vmatprep.subr.bf16.mxu0 %v5225
        %7403 = vmatpush1.bf16.msra.mxu0 %v5224
        %7404 = vmatprep.subr.bf16.mxu0 %v5233
        %7405 = vmatpush1.bf16.msra.mxu0 %v5232
        %7406 = vmatprep.subr.bf16.mxu0 %v5241
        %7407 = vmatpush1.bf16.msra.mxu0 %v5240
        %7408 = vmatprep.subr.bf16.mxu0 %v5249
        %7409 = vmatpush1.bf16.msra.mxu0 %v5248
        %7410 = vmatprep.subr.bf16.mxu0 %v5257
        %7411 = vmatpush1.bf16.msra.mxu0 %v5256
        %7412 = vmatprep.subr.bf16.mxu0 %v5265
        %7413 = vmatpush1.bf16.msra.mxu0 %v5264
        %7414 = vmatprep.subr.bf16.mxu0 %v5273
        %7415 = vmatpush1.bf16.msra.mxu0 %v5272
        %7416 = vmatprep.subr.bf16.mxu0 %v5281
        %7417 = vmatpush1.bf16.msra.mxu0 %v5280
        %7418 = vmatprep.subr.bf16.mxu0 %v5289
        %7419 = vmatpush1.bf16.msra.mxu0 %v5288
        %7420 = vmatprep.subr.bf16.mxu0 %v5297
        %7421 = vmatpush1.bf16.msra.mxu0 %v5296
        %7422 = vmatprep.subr.bf16.mxu0 %v5305
        %7423 = vmatpush1.bf16.msra.mxu0 %v5304
        %7424 = vmatprep.subr.bf16.mxu0 %v5313
        %7425 = vmatpush1.bf16.msra.mxu0 %v5312
        %7426 = vmatprep.subr.bf16.mxu0 %v5321
        %7427 = vmatpush1.bf16.msra.mxu0 %v5320
        %7428 = vmatprep.subr.bf16.mxu0 %v5329
        %7429 = vmatpush1.bf16.msra.mxu0 %v5328
        %7430 = vmatprep.subr.bf16.mxu0 %v5337
        %7431 = vmatpush1.bf16.msra.mxu0 %v5336
        %7432 = vmatprep.subr.bf16.mxu0 %v5345
        %7433 = vmatpush1.bf16.msra.mxu0 %v5344
        %7434 = vmatprep.mubr.bf16.mxu0 %v1361
        %7435 = vmatmul.mubr.bf16.gmra.mrb[0].mxu0 %v1360
        %v7436 = vpop.f32.mrb[0].mxu0
        %v7437 = vadd.f32 %v7396, %v7436
        %v7438 = vpop.f32.mrb[0].mxu0
        %v7439 = vadd.f32 %v7398, %v7438
        %v7440 = vpop.f32.mrb[0].mxu0
        %v7441 = vpop.f32.mrb[0].mxu0
        %7442 = vdwg.mxu0
        %7443 = vmatprep.subr.bf16.mxu0 %v5353
        %7444 = vmatpush1.bf16.msra.mxu0 %v5352
        %7445 = vmatprep.subr.bf16.mxu0 %v5361
        %7446 = vmatpush1.bf16.msra.mxu0 %v5360
        %7447 = vmatprep.subr.bf16.mxu0 %v5369
        %7448 = vmatpush1.bf16.msra.mxu0 %v5368
        %7449 = vmatprep.subr.bf16.mxu0 %v5377
        %7450 = vmatpush1.bf16.msra.mxu0 %v5376
        %7451 = vmatprep.subr.bf16.mxu0 %v5385
        %7452 = vmatpush1.bf16.msra.mxu0 %v5384
        %7453 = vmatprep.subr.bf16.mxu0 %v5393
        %7454 = vmatpush1.bf16.msra.mxu0 %v5392
        %7455 = vmatprep.subr.bf16.mxu0 %v5401
        %7456 = vmatpush1.bf16.msra.mxu0 %v5400
        %7457 = vmatprep.subr.bf16.mxu0 %v5409
        %7458 = vmatpush1.bf16.msra.mxu0 %v5408
        %7459 = vmatprep.subr.bf16.mxu0 %v5417
        %7460 = vmatpush1.bf16.msra.mxu0 %v5416
        %7461 = vmatprep.subr.bf16.mxu0 %v5425
        %7462 = vmatpush1.bf16.msra.mxu0 %v5424
        %7463 = vmatprep.subr.bf16.mxu0 %v5433
        %7464 = vmatpush1.bf16.msra.mxu0 %v5432
        %7465 = vmatprep.subr.bf16.mxu0 %v5441
        %7466 = vmatpush1.bf16.msra.mxu0 %v5440
        %7467 = vmatprep.subr.bf16.mxu0 %v5449
        %7468 = vmatpush1.bf16.msra.mxu0 %v5448
        %7469 = vmatprep.subr.bf16.mxu0 %v5457
        %7470 = vmatpush1.bf16.msra.mxu0 %v5456
        %7471 = vmatprep.subr.bf16.mxu0 %v5465
        %7472 = vmatpush1.bf16.msra.mxu0 %v5464
        %7473 = vmatprep.subr.bf16.mxu0 %v5473
        %7474 = vmatpush1.bf16.msra.mxu0 %v5472
        %7475 = vmatprep.mubr.bf16.mxu0 %v1363
        %7476 = vmatmul.mubr.bf16.gmra.mrb[0].mxu0 %v1362
        %v7477 = vpop.f32.mrb[0].mxu0
        %v7478 = vadd.f32 %v7437, %v7477
        %v7479 = vpop.f32.mrb[0].mxu0
        %v7480 = vadd.f32 %v7439, %v7479
        %v7481 = vpop.f32.mrb[0].mxu0
        %v7482 = vpop.f32.mrb[0].mxu0
        %7483 = vdwg.mxu0
        %7484 = vmatprep.subr.bf16.mxu0 %v4459
        %7485 = vmatpush1.bf16.msra.mxu0 %v4458
        %7486 = vmatprep.subr.bf16.mxu0 %v4467
        %7487 = vmatpush1.bf16.msra.mxu0 %v4466
        %7488 = vmatprep.subr.bf16.mxu0 %v4475
        %7489 = vmatpush1.bf16.msra.mxu0 %v4474
        %7490 = vmatprep.subr.bf16.mxu0 %v4483
        %7491 = vmatpush1.bf16.msra.mxu0 %v4482
        %7492 = vmatprep.subr.bf16.mxu0 %v4491
        %7493 = vmatpush1.bf16.msra.mxu0 %v4490
        %7494 = vmatprep.subr.bf16.mxu0 %v4499
        %7495 = vmatpush1.bf16.msra.mxu0 %v4498
        %7496 = vmatprep.subr.bf16.mxu0 %v4507
        %7497 = vmatpush1.bf16.msra.mxu0 %v4506
        %7498 = vmatprep.subr.bf16.mxu0 %v4515
        %7499 = vmatpush1.bf16.msra.mxu0 %v4514
        %7500 = vmatprep.subr.bf16.mxu0 %v4523
        %7501 = vmatpush1.bf16.msra.mxu0 %v4522
        %7502 = vmatprep.subr.bf16.mxu0 %v4531
        %7503 = vmatpush1.bf16.msra.mxu0 %v4530
        %7504 = vmatprep.subr.bf16.mxu0 %v4539
        %7505 = vmatpush1.bf16.msra.mxu0 %v4538
        %7506 = vmatprep.subr.bf16.mxu0 %v4547
        %7507 = vmatpush1.bf16.msra.mxu0 %v4546
        %7508 = vmatprep.subr.bf16.mxu0 %v4555
        %7509 = vmatpush1.bf16.msra.mxu0 %v4554
        %7510 = vmatprep.subr.bf16.mxu0 %v4563
        %7511 = vmatpush1.bf16.msra.mxu0 %v4562
        %7512 = vmatprep.subr.bf16.mxu0 %v4571
        %7513 = vmatpush1.bf16.msra.mxu0 %v4570
        %7514 = vmatprep.subr.bf16.mxu0 %v4579
        %7515 = vmatpush1.bf16.msra.mxu0 %v4578
        %7516 = vmatprep.mubr.bf16.mxu0 %v1349
        %7517 = vmatmul.mubr.bf16.gmra.mrb[0].mxu0 %v1348
        %v7518 = vpop.f32.mrb[0].mxu0
        %v7519 = vadd.f32 0.0, %v7518
        %v7520 = vpop.f32.mrb[0].mxu0
        %v7521 = vadd.f32 0.0, %v7520
        %v7522 = vpop.f32.mrb[0].mxu0
        %v7523 = vpop.f32.mrb[0].mxu0
        %7524 = vdwg.mxu0
        %7525 = vmatprep.subr.bf16.mxu0 %v4587
        %7526 = vmatpush1.bf16.msra.mxu0 %v4586
        %7527 = vmatprep.subr.bf16.mxu0 %v4595
        %7528 = vmatpush1.bf16.msra.mxu0 %v4594
        %7529 = vmatprep.subr.bf16.mxu0 %v4603
        %7530 = vmatpush1.bf16.msra.mxu0 %v4602
        %7531 = vmatprep.subr.bf16.mxu0 %v4611
        %7532 = vmatpush1.bf16.msra.mxu0 %v4610
        %7533 = vmatprep.subr.bf16.mxu0 %v4619
        %7534 = vmatpush1.bf16.msra.mxu0 %v4618
        %7535 = vmatprep.subr.bf16.mxu0 %v4627
        %7536 = vmatpush1.bf16.msra.mxu0 %v4626
        %7537 = vmatprep.subr.bf16.mxu0 %v4635
        %7538 = vmatpush1.bf16.msra.mxu0 %v4634
        %7539 = vmatprep.subr.bf16.mxu0 %v4643
        %7540 = vmatpush1.bf16.msra.mxu0 %v4642
        %7541 = vmatprep.subr.bf16.mxu0 %v4651
        %7542 = vmatpush1.bf16.msra.mxu0 %v4650
        %7543 = vmatprep.subr.bf16.mxu0 %v4659
        %7544 = vmatpush1.bf16.msra.mxu0 %v4658
        %7545 = vmatprep.subr.bf16.mxu0 %v4667
        %7546 = vmatpush1.bf16.msra.mxu0 %v4666
        %7547 = vmatprep.subr.bf16.mxu0 %v4675
        %7548 = vmatpush1.bf16.msra.mxu0 %v4674
        %7549 = vmatprep.subr.bf16.mxu0 %v4683
        %7550 = vmatpush1.bf16.msra.mxu0 %v4682
        %7551 = vmatprep.subr.bf16.mxu0 %v4691
        %7552 = vmatpush1.bf16.msra.mxu0 %v4690
        %7553 = vmatprep.subr.bf16.mxu0 %v4699
        %7554 = vmatpush1.bf16.msra.mxu0 %v4698
        %7555 = vmatprep.subr.bf16.mxu0 %v4707
        %7556 = vmatpush1.bf16.msra.mxu0 %v4706
        %7557 = vmatprep.mubr.bf16.mxu0 %v1351
        %7558 = vmatmul.mubr.bf16.gmra.mrb[0].mxu0 %v1350
        %v7559 = vpop.f32.mrb[0].mxu0
        %v7560 = vadd.f32 %v7519, %v7559
        %v7561 = vpop.f32.mrb[0].mxu0
        %v7562 = vadd.f32 %v7521, %v7561
        %v7563 = vpop.f32.mrb[0].mxu0
        %v7564 = vpop.f32.mrb[0].mxu0
        %7565 = vdwg.mxu0
        %7566 = vmatprep.subr.bf16.mxu0 %v4715
        %7567 = vmatpush1.bf16.msra.mxu0 %v4714
        %7568 = vmatprep.subr.bf16.mxu0 %v4723
        %7569 = vmatpush1.bf16.msra.mxu0 %v4722
        %7570 = vmatprep.subr.bf16.mxu0 %v4731
        %7571 = vmatpush1.bf16.msra.mxu0 %v4730
        %7572 = vmatprep.subr.bf16.mxu0 %v4739
        %7573 = vmatpush1.bf16.msra.mxu0 %v4738
        %7574 = vmatprep.subr.bf16.mxu0 %v4747
        %7575 = vmatpush1.bf16.msra.mxu0 %v4746
        %7576 = vmatprep.subr.bf16.mxu0 %v4755
        %7577 = vmatpush1.bf16.msra.mxu0 %v4754
        %7578 = vmatprep.subr.bf16.mxu0 %v4763
        %7579 = vmatpush1.bf16.msra.mxu0 %v4762
        %7580 = vmatprep.subr.bf16.mxu0 %v4771
        %7581 = vmatpush1.bf16.msra.mxu0 %v4770
        %7582 = vmatprep.subr.bf16.mxu0 %v4779
        %7583 = vmatpush1.bf16.msra.mxu0 %v4778
        %7584 = vmatprep.subr.bf16.mxu0 %v4787
        %7585 = vmatpush1.bf16.msra.mxu0 %v4786
        %7586 = vmatprep.subr.bf16.mxu0 %v4795
        %7587 = vmatpush1.bf16.msra.mxu0 %v4794
        %7588 = vmatprep.subr.bf16.mxu0 %v4803
        %7589 = vmatpush1.bf16.msra.mxu0 %v4802
        %7590 = vmatprep.subr.bf16.mxu0 %v4811
        %7591 = vmatpush1.bf16.msra.mxu0 %v4810
        %7592 = vmatprep.subr.bf16.mxu0 %v4819
        %7593 = vmatpush1.bf16.msra.mxu0 %v4818
        %7594 = vmatprep.subr.bf16.mxu0 %v4827
        %7595 = vmatpush1.bf16.msra.mxu0 %v4826
        %7596 = vmatprep.subr.bf16.mxu0 %v4835
        %7597 = vmatpush1.bf16.msra.mxu0 %v4834
        %7598 = vmatprep.mubr.bf16.mxu0 %v1353
        %7599 = vmatmul.mubr.bf16.gmra.mrb[0].mxu0 %v1352
        %v7600 = vpop.f32.mrb[0].mxu0
        %v7601 = vadd.f32 %v7560, %v7600
        %v7602 = vpop.f32.mrb[0].mxu0
        %v7603 = vadd.f32 %v7562, %v7602
        %v7604 = vpop.f32.mrb[0].mxu0
        %v7605 = vpop.f32.mrb[0].mxu0
        %7606 = vdwg.mxu0
        %7607 = vmatprep.subr.bf16.mxu0 %v4843
        %7608 = vmatpush1.bf16.msra.mxu0 %v4842
        %7609 = vmatprep.subr.bf16.mxu0 %v4851
        %7610 = vmatpush1.bf16.msra.mxu0 %v4850
        %7611 = vmatprep.subr.bf16.mxu0 %v4859
        %7612 = vmatpush1.bf16.msra.mxu0 %v4858
        %7613 = vmatprep.subr.bf16.mxu0 %v4867
        %7614 = vmatpush1.bf16.msra.mxu0 %v4866
        %7615 = vmatprep.subr.bf16.mxu0 %v4875
        %7616 = vmatpush1.bf16.msra.mxu0 %v4874
        %7617 = vmatprep.subr.bf16.mxu0 %v4883
        %7618 = vmatpush1.bf16.msra.mxu0 %v4882
        %7619 = vmatprep.subr.bf16.mxu0 %v4891
        %7620 = vmatpush1.bf16.msra.mxu0 %v4890
        %7621 = vmatprep.subr.bf16.mxu0 %v4899
        %7622 = vmatpush1.bf16.msra.mxu0 %v4898
        %7623 = vmatprep.subr.bf16.mxu0 %v4907
        %7624 = vmatpush1.bf16.msra.mxu0 %v4906
        %7625 = vmatprep.subr.bf16.mxu0 %v4915
        %7626 = vmatpush1.bf16.msra.mxu0 %v4914
        %7627 = vmatprep.subr.bf16.mxu0 %v4923
        %7628 = vmatpush1.bf16.msra.mxu0 %v4922
        %7629 = vmatprep.subr.bf16.mxu0 %v4931
        %7630 = vmatpush1.bf16.msra.mxu0 %v4930
        %7631 = vmatprep.subr.bf16.mxu0 %v4939
        %7632 = vmatpush1.bf16.msra.mxu0 %v4938
        %7633 = vmatprep.subr.bf16.mxu0 %v4947
        %7634 = vmatpush1.bf16.msra.mxu0 %v4946
        %7635 = vmatprep.subr.bf16.mxu0 %v4955
        %7636 = vmatpush1.bf16.msra.mxu0 %v4954
        %7637 = vmatprep.subr.bf16.mxu0 %v4963
        %7638 = vmatpush1.bf16.msra.mxu0 %v4962
        %7639 = vmatprep.mubr.bf16.mxu0 %v1355
        %7640 = vmatmul.mubr.bf16.gmra.mrb[0].mxu0 %v1354
        %v7641 = vpop.f32.mrb[0].mxu0
        %v7642 = vadd.f32 %v7601, %v7641
        %v7643 = vpop.f32.mrb[0].mxu0
        %v7644 = vadd.f32 %v7603, %v7643
        %v7645 = vpop.f32.mrb[0].mxu0
        %v7646 = vpop.f32.mrb[0].mxu0
        %7647 = vdwg.mxu0
        %7648 = vmatprep.subr.bf16.mxu0 %v4971
        %7649 = vmatpush1.bf16.msra.mxu0 %v4970
        %7650 = vmatprep.subr.bf16.mxu0 %v4979
        %7651 = vmatpush1.bf16.msra.mxu0 %v4978
        %7652 = vmatprep.subr.bf16.mxu0 %v4987
        %7653 = vmatpush1.bf16.msra.mxu0 %v4986
        %7654 = vmatprep.subr.bf16.mxu0 %v4995
        %7655 = vmatpush1.bf16.msra.mxu0 %v4994
        %7656 = vmatprep.subr.bf16.mxu0 %v5003
        %7657 = vmatpush1.bf16.msra.mxu0 %v5002
        %7658 = vmatprep.subr.bf16.mxu0 %v5011
        %7659 = vmatpush1.bf16.msra.mxu0 %v5010
        %7660 = vmatprep.subr.bf16.mxu0 %v5019
        %7661 = vmatpush1.bf16.msra.mxu0 %v5018
        %7662 = vmatprep.subr.bf16.mxu0 %v5027
        %7663 = vmatpush1.bf16.msra.mxu0 %v5026
        %7664 = vmatprep.subr.bf16.mxu0 %v5035
        %7665 = vmatpush1.bf16.msra.mxu0 %v5034
        %7666 = vmatprep.subr.bf16.mxu0 %v5043
        %7667 = vmatpush1.bf16.msra.mxu0 %v5042
        %7668 = vmatprep.subr.bf16.mxu0 %v5051
        %7669 = vmatpush1.bf16.msra.mxu0 %v5050
        %7670 = vmatprep.subr.bf16.mxu0 %v5059
        %7671 = vmatpush1.bf16.msra.mxu0 %v5058
        %7672 = vmatprep.subr.bf16.mxu0 %v5067
        %7673 = vmatpush1.bf16.msra.mxu0 %v5066
        %7674 = vmatprep.subr.bf16.mxu0 %v5075
        %7675 = vmatpush1.bf16.msra.mxu0 %v5074
        %7676 = vmatprep.subr.bf16.mxu0 %v5083
        %7677 = vmatpush1.bf16.msra.mxu0 %v5082
        %7678 = vmatprep.subr.bf16.mxu0 %v5091
        %7679 = vmatpush1.bf16.msra.mxu0 %v5090
        %7680 = vmatprep.mubr.bf16.mxu0 %v1357
        %7681 = vmatmul.mubr.bf16.gmra.mrb[0].mxu0 %v1356
        %v7682 = vpop.f32.mrb[0].mxu0
        %v7683 = vadd.f32 %v7642, %v7682
        %v7684 = vpop.f32.mrb[0].mxu0
        %v7685 = vadd.f32 %v7644, %v7684
        %v7686 = vpop.f32.mrb[0].mxu0
        %v7687 = vpop.f32.mrb[0].mxu0
        %7688 = vdwg.mxu0
        %7689 = vmatprep.subr.bf16.mxu0 %v5099
        %7690 = vmatpush1.bf16.msra.mxu0 %v5098
        %7691 = vmatprep.subr.bf16.mxu0 %v5107
        %7692 = vmatpush1.bf16.msra.mxu0 %v5106
        %7693 = vmatprep.subr.bf16.mxu0 %v5115
        %7694 = vmatpush1.bf16.msra.mxu0 %v5114
        %7695 = vmatprep.subr.bf16.mxu0 %v5123
        %7696 = vmatpush1.bf16.msra.mxu0 %v5122
        %7697 = vmatprep.subr.bf16.mxu0 %v5131
        %7698 = vmatpush1.bf16.msra.mxu0 %v5130
        %7699 = vmatprep.subr.bf16.mxu0 %v5139
        %7700 = vmatpush1.bf16.msra.mxu0 %v5138
        %7701 = vmatprep.subr.bf16.mxu0 %v5147
        %7702 = vmatpush1.bf16.msra.mxu0 %v5146
        %7703 = vmatprep.subr.bf16.mxu0 %v5155
        %7704 = vmatpush1.bf16.msra.mxu0 %v5154
        %7705 = vmatprep.subr.bf16.mxu0 %v5163
        %7706 = vmatpush1.bf16.msra.mxu0 %v5162
        %7707 = vmatprep.subr.bf16.mxu0 %v5171
        %7708 = vmatpush1.bf16.msra.mxu0 %v5170
        %7709 = vmatprep.subr.bf16.mxu0 %v5179
        %7710 = vmatpush1.bf16.msra.mxu0 %v5178
        %7711 = vmatprep.subr.bf16.mxu0 %v5187
        %7712 = vmatpush1.bf16.msra.mxu0 %v5186
        %7713 = vmatprep.subr.bf16.mxu0 %v5195
        %7714 = vmatpush1.bf16.msra.mxu0 %v5194
        %7715 = vmatprep.subr.bf16.mxu0 %v5203
        %7716 = vmatpush1.bf16.msra.mxu0 %v5202
        %7717 = vmatprep.subr.bf16.mxu0 %v5211
        %7718 = vmatpush1.bf16.msra.mxu0 %v5210
        %7719 = vmatprep.subr.bf16.mxu0 %v5219
        %7720 = vmatpush1.bf16.msra.mxu0 %v5218
        %7721 = vmatprep.mubr.bf16.mxu0 %v1359
        %7722 = vmatmul.mubr.bf16.gmra.mrb[0].mxu0 %v1358
        %v7723 = vpop.f32.mrb[0].mxu0
        %v7724 = vadd.f32 %v7683, %v7723
        %v7725 = vpop.f32.mrb[0].mxu0
        %v7726 = vadd.f32 %v7685, %v7725
        %v7727 = vpop.f32.mrb[0].mxu0
        %v7728 = vpop.f32.mrb[0].mxu0
        %7729 = vdwg.mxu0
        %7730 = vmatprep.subr.bf16.mxu0 %v5227
        %7731 = vmatpush1.bf16.msra.mxu0 %v5226
        %7732 = vmatprep.subr.bf16.mxu0 %v5235
        %7733 = vmatpush1.bf16.msra.mxu0 %v5234
        %7734 = vmatprep.subr.bf16.mxu0 %v5243
        %7735 = vmatpush1.bf16.msra.mxu0 %v5242
        %7736 = vmatprep.subr.bf16.mxu0 %v5251
        %7737 = vmatpush1.bf16.msra.mxu0 %v5250
        %7738 = vmatprep.subr.bf16.mxu0 %v5259
        %7739 = vmatpush1.bf16.msra.mxu0 %v5258
        %7740 = vmatprep.subr.bf16.mxu0 %v5267
        %7741 = vmatpush1.bf16.msra.mxu0 %v5266
        %7742 = vmatprep.subr.bf16.mxu0 %v5275
        %7743 = vmatpush1.bf16.msra.mxu0 %v5274
        %7744 = vmatprep.subr.bf16.mxu0 %v5283
        %7745 = vmatpush1.bf16.msra.mxu0 %v5282
        %7746 = vmatprep.subr.bf16.mxu0 %v5291
        %7747 = vmatpush1.bf16.msra.mxu0 %v5290
        %7748 = vmatprep.subr.bf16.mxu0 %v5299
        %7749 = vmatpush1.bf16.msra.mxu0 %v5298
        %7750 = vmatprep.subr.bf16.mxu0 %v5307
        %7751 = vmatpush1.bf16.msra.mxu0 %v5306
        %7752 = vmatprep.subr.bf16.mxu0 %v5315
        %7753 = vmatpush1.bf16.msra.mxu0 %v5314
        %7754 = vmatprep.subr.bf16.mxu0 %v5323
        %7755 = vmatpush1.bf16.msra.mxu0 %v5322
        %7756 = vmatprep.subr.bf16.mxu0 %v5331
        %7757 = vmatpush1.bf16.msra.mxu0 %v5330
        %7758 = vmatprep.subr.bf16.mxu0 %v5339
        %7759 = vmatpush1.bf16.msra.mxu0 %v5338
        %7760 = vmatprep.subr.bf16.mxu0 %v5347
        %7761 = vmatpush1.bf16.msra.mxu0 %v5346
        %7762 = vmatprep.mubr.bf16.mxu0 %v1361
        %7763 = vmatmul.mubr.bf16.gmra.mrb[0].mxu0 %v1360
        %v7764 = vpop.f32.mrb[0].mxu0
        %v7765 = vadd.f32 %v7724, %v7764
        %v7766 = vpop.f32.mrb[0].mxu0
        %v7767 = vadd.f32 %v7726, %v7766
        %v7768 = vpop.f32.mrb[0].mxu0
        %v7769 = vpop.f32.mrb[0].mxu0
        %7770 = vdwg.mxu0
        %7771 = vmatprep.subr.bf16.mxu0 %v5355
        %7772 = vmatpush1.bf16.msra.mxu0 %v5354
        %7773 = vmatprep.subr.bf16.mxu0 %v5363
        %7774 = vmatpush1.bf16.msra.mxu0 %v5362
        %7775 = vmatprep.subr.bf16.mxu0 %v5371
        %7776 = vmatpush1.bf16.msra.mxu0 %v5370
        %7777 = vmatprep.subr.bf16.mxu0 %v5379
        %7778 = vmatpush1.bf16.msra.mxu0 %v5378
        %7779 = vmatprep.subr.bf16.mxu0 %v5387
        %7780 = vmatpush1.bf16.msra.mxu0 %v5386
        %7781 = vmatprep.subr.bf16.mxu0 %v5395
        %7782 = vmatpush1.bf16.msra.mxu0 %v5394
        %7783 = vmatprep.subr.bf16.mxu0 %v5403
        %7784 = vmatpush1.bf16.msra.mxu0 %v5402
        %7785 = vmatprep.subr.bf16.mxu0 %v5411
        %7786 = vmatpush1.bf16.msra.mxu0 %v5410
        %7787 = vmatprep.subr.bf16.mxu0 %v5419
        %7788 = vmatpush1.bf16.msra.mxu0 %v5418
        %7789 = vmatprep.subr.bf16.mxu0 %v5427
        %7790 = vmatpush1.bf16.msra.mxu0 %v5426
        %7791 = vmatprep.subr.bf16.mxu0 %v5435
        %7792 = vmatpush1.bf16.msra.mxu0 %v5434
        %7793 = vmatprep.subr.bf16.mxu0 %v5443
        %7794 = vmatpush1.bf16.msra.mxu0 %v5442
        %7795 = vmatprep.subr.bf16.mxu0 %v5451
        %7796 = vmatpush1.bf16.msra.mxu0 %v5450
        %7797 = vmatprep.subr.bf16.mxu0 %v5459
        %7798 = vmatpush1.bf16.msra.mxu0 %v5458
        %7799 = vmatprep.subr.bf16.mxu0 %v5467
        %7800 = vmatpush1.bf16.msra.mxu0 %v5466
        %7801 = vmatprep.subr.bf16.mxu0 %v5475
        %7802 = vmatpush1.bf16.msra.mxu0 %v5474
        %7803 = vmatprep.mubr.bf16.mxu0 %v1363
        %7804 = vmatmul.mubr.bf16.gmra.mrb[0].mxu0 %v1362
        %v7805 = vpop.f32.mrb[0].mxu0
        %v7806 = vadd.f32 %v7765, %v7805
        %v7807 = vpop.f32.mrb[0].mxu0
        %v7808 = vadd.f32 %v7767, %v7807
        %v7809 = vpop.f32.mrb[0].mxu0
        %v7810 = vpop.f32.mrb[0].mxu0
        %7811 = vdwg.mxu0
        %v7812 = vadd.f32 %v284, %v6822
        %v7813 = vadd.f32 %v285, %v6824
        %v7814 = vadd.f32 %v286, %v7150
        %v7815 = vadd.f32 %v287, %v7152
        %v7816 = vadd.f32 %v288, %v7478
        %v7817 = vadd.f32 %v289, %v7480
        %v7818 = vadd.f32 %v290, %v7806
        %v7819 = vadd.f32 %v291, %v7808
        %7820 = vst [vmem:[#allocation2] sm:$0xff] %v7812
        %7821 = vst [vmem:[#allocation2 + $0x8] sm:$0xff] %v7813
        %7822 = vst [vmem:[#allocation2 + $0x10] sm:$0xff] %v7814
        %7823 = vst [vmem:[#allocation2 + $0x18] sm:$0xff] %v7815
        %7824 = vst [vmem:[#allocation2 + $0x20] sm:$0xff] %v7816
        %7825 = vst [vmem:[#allocation2 + $0x28] sm:$0xff] %v7817
        %7826 = vst [vmem:[#allocation2 + $0x30] sm:$0xff] %v7818
        %7827 = vst [vmem:[#allocation2 + $0x38] sm:$0xff] %v7819
        // Predicated region
        $region45: #{convnet_forward.4} parent=31 // pred_check
          %p7828 = pneg %p272
        $region46: #{convnet_forward.4} parent=31 // pred_check_branch
          %7830 = sbr.rel (%p7828) target = $region48
        $region47: #{convnet_forward.4} parent=31 // pred_region
          %v7831 = vld [vmem:[#allocation2] sm:$0xff]
          %v7832 = vld [vmem:[#allocation2 + $0x8] sm:$0xff]
          %v7833 = vld [vmem:[#allocation2 + $0x10] sm:$0xff]
          %v7834 = vld [vmem:[#allocation2 + $0x18] sm:$0xff]
          %v7835 = vld [vmem:[#allocation2 + $0x20] sm:$0xff]
          %v7836 = vld [vmem:[#allocation2 + $0x28] sm:$0xff]
          %v7837 = vld [vmem:[#allocation2 + $0x30] sm:$0xff]
          %v7838 = vld [vmem:[#allocation2 + $0x38] sm:$0xff]
          %v7839 = vld [vmem:[%s224] sm:$0xff]
          %v7841 = vlaneseq
          %v7842 = vshrl.u32 %v7841, 7
          %v7843 = vsub.s32 0, %v7842
          %v7844 = vrot.slane %v7839, %v7843
          %v7845 = vlaneseq
          %v7846 = vshrl.u32 %v7845, 7
          %v7847 = vsub.s32 1, %v7846
          %v7848 = vrot.slane %v7839, %v7847
          %v7849 = vlaneseq
          %v7850 = vshrl.u32 %v7849, 7
          %v7851 = vsub.s32 2, %v7850
          %v7852 = vrot.slane %v7839, %v7851
          %v7853 = vlaneseq
          %v7854 = vshrl.u32 %v7853, 7
          %v7855 = vsub.s32 3, %v7854
          %v7856 = vrot.slane %v7839, %v7855
          %v7857 = vlaneseq
          %v7858 = vshrl.u32 %v7857, 7
          %v7859 = vsub.s32 4, %v7858
          %v7860 = vrot.slane %v7839, %v7859
          %v7861 = vlaneseq
          %v7862 = vshrl.u32 %v7861, 7
          %v7863 = vsub.s32 5, %v7862
          %v7864 = vrot.slane %v7839, %v7863
          %v7865 = vlaneseq
          %v7866 = vshrl.u32 %v7865, 7
          %v7867 = vsub.s32 6, %v7866
          %v7868 = vrot.slane %v7839, %v7867
          %v7869 = vlaneseq
          %v7870 = vshrl.u32 %v7869, 7
          %v7871 = vsub.s32 7, %v7870
          %v7872 = vrot.slane %v7839, %v7871
          %v7881 = vadd.f32 %v7831, %v7844
          %v7882 = vadd.f32 %v7832, %v7848
          %v7883 = vadd.f32 %v7833, %v7852
          %v7884 = vadd.f32 %v7834, %v7856
          %v7885 = vadd.f32 %v7835, %v7860
          %v7886 = vadd.f32 %v7836, %v7864
          %v7887 = vadd.f32 %v7837, %v7868
          %v7888 = vadd.f32 %v7838, %v7872
          %7889 = vst [vmem:[%s270] sm:$0xff] %v7881
          %7890 = vst [vmem:[%s270 + $0x8] sm:$0xff] %v7882
          %7891 = vst [vmem:[%s270 + $0x10] sm:$0xff] %v7883
          %7892 = vst [vmem:[%s270 + $0x18] sm:$0xff] %v7884
          %7893 = vst [vmem:[%s270 + $0x20] sm:$0xff] %v7885
          %7894 = vst [vmem:[%s270 + $0x28] sm:$0xff] %v7886
          %7895 = vst [vmem:[%s270 + $0x30] sm:$0xff] %v7887
          %7896 = vst [vmem:[%s270 + $0x38] sm:$0xff] %v7888
        $region48: #{convnet_forward.4} parent=31 // pred_fallthru
          _
        %s7897 = smul.u32 8, %s24
        %p7898 = scmp.lt.s32.totalorder %s7897, 31
        %s7899 = scalar_select %p7898, %s7897, 31
        %s7900 = smul.addr %s7899, 8
        %s7901 = scalar_lea.vmem %s3, %s7900
        // Predicated region
        $region49: #{convnet_forward.4} parent=31 // pred_check
          %p7902 = pneg %p130
        $region50: #{convnet_forward.4} parent=31 // pred_check_branch
          %7904 = sbr.rel (%p7902) target = $region52
        $region51: #{convnet_forward.4} parent=31 // pred_region
          %s7905 = smul.u32 8, %s24
        $region52: #{convnet_forward.4} parent=31 // pred_fallthru
          _
      $region32: #{convnet_forward.4} parent=5 // pred_fallthru
        _
      %p7906 = scmp.le.s32.totalorder 2, %s15
      // Predicated region
      $region53: #{convnet_forward.4} parent=5 // pred_check
        %p7907 = pneg %p7906
      $region54: #{convnet_forward.4} parent=5 // pred_check_branch
        %7909 = sbr.rel (%p7907) target = $region56
      $region55: #{convnet_forward.4} parent=5 // pred_region
        %s7910 = ssub.s32 %s15, 2
        // Predicated region
        $region57: #{convnet_forward.4} parent=55 // pred_check
          %p7911 = pneg %p136
        $region58: #{convnet_forward.4} parent=55 // pred_check_branch
          %7913 = sbr.rel (%p7911) target = $region60
        $region59: #{convnet_forward.4} parent=55 // pred_region
          %s7914 = smul.u32 8, %s26
          %p7915 = scmp.lt.s32.totalorder %s7914, 31
          %s7916 = scalar_select %p7915, %s7914, 31
          %s7917 = smul.addr %s7916, 8
          %s7918 = scalar_lea.vmem %s3, %s7917
        $region60: #{convnet_forward.4} parent=55 // pred_fallthru
          _
      $region56: #{convnet_forward.4} parent=5 // pred_fallthru
        _
    $region6: #{convnet_forward.4} parent=1 // loop_footer
      %s19 = sadd.s32 1, %s15
    $region7: #{convnet_forward.4} parent=1 // loop_footer_branch
      %14 = sbr.rel target = $region3
    $region8: #{convnet_forward.4} parent=1 // loop_exit
      _
    %7919 = vsyncpa [#allocation4], 1
    %s7920 = scalar_lea.sflag [#allocation4], 1
    %7921 = vsyncpa %s7920, 1
    %7922 = vsyncpa [#allocation6], 1
    %s7923 = scalar_lea.sflag [#allocation6], 1
    %7924 = vsyncpa %s7923, 1

</llo_original>
